<compile_context>
chip_gen: v6e
topology: v6e:2x2x1
jax: 0.10.0
libtpu: 0.0.40
codegen_flags: <defaults>
</compile_context>

<pallas_src>
import math
import functools

import jax
import jax.numpy as jnp
from jax import lax
from jax.experimental import pallas as pl
from jax.experimental.pallas import tpu as pltpu

NUM_GROUPS = 8


# ----------------------------------------------------------------------------
# Fused per-level kernel
# ----------------------------------------------------------------------------
def _gfocal_level_kernel(x_ref, tw_ref, tb_ref, tg_ref, tbeta_ref,
                         chw_ref, chb_ref, rhw_ref, rhb_ref,
                         gmat_ref, scale_ref,
                         fw1_ref, fb1_ref, fw2_ref, fb2_ref,
                         out_ref,
                         pad_ref,
                         *, H, W, cin, inner, num_convs, num_cls,
                         reg_max, m_top_k, out_width):
    HW = H * W
    R = reg_max + 1

    # Zero the halo scratch once; borders are never written afterwards.
    pad_ref[...] = jnp.zeros((H + 2, W + 2, inner), jnp.float32)

    def im2col(act):
        """act: (H, W, inner) -> patch matrix (HW, 9*inner) via the halo scratch."""
        pad_ref[1:H + 1, 1:W + 1, :] = act
        cols = []
        for ky in range(3):
            for kx in range(3):
                cols.append(pad_ref[ky:ky + H, kx:kx + W, :].reshape(HW, inner))
        return jnp.concatenate(cols, axis=-1)            # (HW, 9*inner)

    def gn_relu(acc, gamma, beta):
        # GroupNorm via precomputed group-average matrix (1/(HW*cpg) folded in).
        csum = jnp.sum(acc, axis=0, keepdims=True)                            # (1, inner)
        mean_c = jnp.dot(csum, gmat_ref[...], preferred_element_type=jnp.float32)
        d = acc - mean_c
        csq = jnp.sum(d * d, axis=0, keepdims=True)
        var_c = jnp.dot(csq, gmat_ref[...], preferred_element_type=jnp.float32)
        out = d * lax.rsqrt(var_c + 1e-5)
        return jnp.maximum(out * gamma + beta, 0.0)

    def cgr_block(act, idx):
        # conv bias is added before GN (it cancels under mean subtraction) to
        # keep 1:1 fidelity with the PyTorch block.
        acc = jnp.dot(im2col(act), tw_ref[idx],
                      preferred_element_type=jnp.float32) + tb_ref[idx]
        return gn_relu(acc, tg_ref[idx], tbeta_ref[idx]).reshape(H, W, inner)

    # Input, channel-padded to `inner` so every tower matmul shares K = 9*inner
    # (padded weight rows are zero, so the extra channels are inert).
    x0 = x_ref[0]
    if cin < inner:
        x0 = jnp.concatenate(
            [x0, jnp.zeros((H, W, inner - cin), jnp.float32)], axis=-1)

    act = x0
    for i in range(num_convs):
        act = cgr_block(act, i)
    cls_tower = act

    act = x0
    for i in range(num_convs):
        act = cgr_block(act, num_convs + i)
    reg_tower = act

    # Head convs: one im2col matmul each.
    cls_logits = (jnp.dot(im2col(cls_tower), chw_ref[...],
                          preferred_element_type=jnp.float32) + chb_ref[...])      # (HW, num_cls)
    reg_logits = (jnp.dot(im2col(reg_tower), rhw_ref[...],
                          preferred_element_type=jnp.float32)
                  + rhb_ref[...]) * scale_ref[0, 0]                                # (HW, 4R)

    # DFL statistics: stack the 4 box sides along the sublane axis so softmax and
    # the iterative top-k run once instead of four times.
    logits_all = jnp.concatenate(
        [reg_logits[:, s * R:(s + 1) * R] for s in range(4)], axis=0)              # (4*HW, R)
    mx0 = jnp.max(logits_all, axis=-1, keepdims=True)
    e = jnp.exp(logits_all - mx0)
    p = e * pl.reciprocal(jnp.sum(e, axis=-1, keepdims=True), approx=True)         # softmax

    iota = lax.broadcasted_iota(jnp.int32, p.shape, 1)
    cur = p
    vals = []
    for _ in range(m_top_k):                                                       # iterative top-k
        mx = jnp.max(cur, axis=-1, keepdims=True)
        vals.append(mx)
        idx = jnp.min(jnp.where(cur == mx, iota, R), axis=-1, keepdims=True)
        cur = jnp.where(iota == idx, -1.0, cur)          # probs are >= 0, so -1 never wins
    topk = jnp.concatenate(vals, axis=-1)                                          # (4*HW, k)
    stat_all = jnp.concatenate(
        [topk, jnp.mean(topk, axis=-1, keepdims=True)], axis=-1)                   # (4*HW, k+1)
    stat = jnp.concatenate(
        [stat_all[s * HW:(s + 1) * HW] for s in range(4)], axis=-1)                # (HW, 4*(k+1))

    # SubNetFC (Linear -> ReLU -> Linear) + sigmoid combine.
    h = jnp.maximum(jnp.dot(stat, fw1_ref[...],
                            preferred_element_type=jnp.float32) + fb1_ref[...], 0.0)
    q = jnp.dot(h, fw2_ref[...], preferred_element_type=jnp.float32) + fb2_ref[...]  # (HW, 1)
    cls_score = jax.nn.sigmoid(cls_logits) * jax.nn.sigmoid(q)

    # Lane-dense combined output slab: [cls_score | reg_logits | zero pad].
    pieces = [cls_score, reg_logits]
    pad_cols = out_width - (num_cls + 4 * R)
    if pad_cols > 0:
        pieces.append(jnp.zeros((HW, pad_cols), jnp.float32))
    out_ref[0] = jnp.concatenate(pieces, axis=-1)


def gfocal_level_forward(x_nhwc, params, scale, cfg):
    B, H, W, cin = x_nhwc.shape
    inner = cfg["inner_channel"]
    num_convs = cfg["num_convs"]
    num_cls = cfg["num_cls"]
    reg_max = cfg["reg_max"]
    m_top_k = cfg["m_top_k"]
    A = cfg["anchor_nums"]
    # TODO(synk): anchor_nums > 1 needs an (h, w, A)-interleaved row layout inside the
    # kernel; only the A == 1 configuration (len(scales)*len(ratios) == 1) is fused.
    assert A == 1
    assert cin <= inner and inner % NUM_GROUPS == 0
    R = reg_max + 1
    N = H * W
    out_width = ((num_cls + 4 * R + 127) // 128) * 128

    cpg = inner // NUM_GROUPS
    gidx = jnp.arange(inner) // cpg
    gmat = (gidx[:, None] == gidx[None, :]).astype(jnp.float32) / float(H * W * cpg)

    kernel = functools.partial(
        _gfocal_level_kernel, H=H, W=W, cin=cin, inner=inner,
        num_convs=num_convs, num_cls=num_cls, reg_max=reg_max,
        m_top_k=m_top_k, out_width=out_width)

    def full(shape):
        return pl.BlockSpec(tuple(shape), lambda b: (0,) * len(shape))

    combined = pl.pallas_call(
        kernel,
        out_shape=jax.ShapeDtypeStruct((B, N, out_width), jnp.float32),
        grid=(B,),
        in_specs=[
            pl.BlockSpec((1, H, W, cin), lambda b: (b, 0, 0, 0)),
            full(params["tower_w"].shape),
            full(params["tower_b"].shape),
            full(params["tower_g"].shape),
            full(params["tower_beta"].shape),
            full(params["cls_head_w"].shape),
            full(params["cls_head_b"].shape),
            full(params["reg_head_w"].shape),
            full(params["reg_head_b"].shape),
            full(gmat.shape),
            full((1, 1)),
            full(params["fc_w1"].shape),
            full(params["fc_b1"].shape),
            full(params["fc_w2"].shape),
            full(params["fc_b2"].shape),
        ],
        out_specs=pl.BlockSpec((1, N, out_width), lambda b: (b, 0, 0)),
        scratch_shapes=[pltpu.VMEM((H + 2, W + 2, inner), jnp.float32)],
        compiler_params=pltpu.CompilerParams(dimension_semantics=("parallel",)),
    )(x_nhwc, params["tower_w"], params["tower_b"], params["tower_g"],
      params["tower_beta"], params["cls_head_w"], params["cls_head_b"],
      params["reg_head_w"], params["reg_head_b"], gmat, scale,
      params["fc_w1"], params["fc_b1"], params["fc_w2"], params["fc_b2"])

    cls_out = combined[:, :, :num_cls]
    reg_out = combined[:, :, num_cls:num_cls + 4 * R]
    return cls_out, reg_out


# ----------------------------------------------------------------------------
# Anchor construction (plain JAX glue, identical math to build_anchors)
# ----------------------------------------------------------------------------
def build_anchors_delta(size, anchor_scales, anchor_ratios):
    scales = jnp.asarray(anchor_scales, jnp.float32)
    ratios = jnp.asarray(anchor_ratios, jnp.float32)
    scale_size = scales * size
    w = (scale_size[:, None] * jnp.sqrt(ratios)[None, :]).reshape(-1) / 2.0
    h = (scale_size[:, None] / jnp.sqrt(ratios)[None, :]).reshape(-1) / 2.0
    return jnp.stack([-w, -h, w, h], axis=1)


def build_anchors(feat_shapes, strides, sizes, anchor_scales, anchor_ratios):
    anchors = []
    for (ny, nx), stride, size in zip(feat_shapes, strides, sizes):
        delta = build_anchors_delta(size, anchor_scales, anchor_ratios)
        yv, xv = jnp.meshgrid(jnp.arange(ny), jnp.arange(nx), indexing="ij")
        grid = jnp.stack([xv, yv, xv, yv], axis=2).astype(jnp.float32)
        anchor = (grid[:, :, None, :] + 0.5) * stride + delta[None, None, :, :]
        anchors.append(anchor.reshape(-1, 4))
    return anchors


# ----------------------------------------------------------------------------
# Parameter init (deterministic, shapes match the PyTorch __init__; conv weights
# are stored flattened in im2col (ky, kx, cin)-major row order)
# ----------------------------------------------------------------------------
def init_params(key, cfg):
    in_ch, inner = cfg["in_channel"], cfg["inner_channel"]
    num_convs, A = cfg["num_convs"], cfg["anchor_nums"]
    num_cls, reg_max = cfg["num_cls"], cfg["reg_max"]
    subnet_dim, m_top_k = cfg["subnet_dim"], cfg["m_top_k"]
    keys = iter(jax.random.split(key, 64))

    def conv_w_flat(cin, cout, cin_pad):
        w = 0.01 * jax.random.normal(next(keys), (3, 3, cin, cout), jnp.float32)
        if cin_pad > cin:  # zero rows for padded input channels -> inert
            w = jnp.concatenate(
                [w, jnp.zeros((3, 3, cin_pad - cin, cout), jnp.float32)], axis=2)
        return w.reshape(9 * cin_pad, cout)

    params = {}
    tw, tb, tg, tbeta = [], [], [], []
    for _tower in range(2):                      # 0 = cls tower, 1 = reg tower
        for i in range(num_convs):
            cin = in_ch if i == 0 else inner
            tw.append(conv_w_flat(cin, inner, inner))
            tb.append(jnp.zeros((1, inner), jnp.float32))     # conv bias (init 0)
            tg.append(jnp.ones((1, inner), jnp.float32))      # GN gamma
            tbeta.append(jnp.zeros((1, inner), jnp.float32))  # GN beta
    params["tower_w"] = jnp.stack(tw)            # (2*num_convs, 9*inner, inner)
    params["tower_b"] = jnp.stack(tb)            # (2*num_convs, 1, inner)
    params["tower_g"] = jnp.stack(tg)
    params["tower_beta"] = jnp.stack(tbeta)

    prior_bias = -math.log((1.0 - 0.01) / 0.01)
    params["cls_head_w"] = conv_w_flat(inner, A * num_cls, inner)
    params["cls_head_b"] = jnp.full((1, A * num_cls), prior_bias, jnp.float32)
    params["reg_head_w"] = conv_w_flat(inner, A * 4 * (reg_max + 1), inner)
    params["reg_head_b"] = jnp.zeros((1, A * 4 * (reg_max + 1)), jnp.float32)

    total_dim = (m_top_k + 1) * 4                # add_mean=True
    params["fc_w1"] = 0.01 * jax.random.normal(next(keys), (total_dim, subnet_dim), jnp.float32)
    params["fc_b1"] = jnp.zeros((1, subnet_dim), jnp.float32)
    params["fc_w2"] = 0.01 * jax.random.normal(next(keys), (subnet_dim, 1), jnp.float32)
    params["fc_b2"] = jnp.zeros((1, 1), jnp.float32)
    params["scales"] = [jnp.ones((1, 1), jnp.float32) for _ in range(cfg["layer_num"])]
    return params


# ----------------------------------------------------------------------------
# GFocalHead.forward (training mode: returns cls_outputs, reg_outputs, anchors)
# ----------------------------------------------------------------------------
def gfocal_head_forward(xs_nchw, params, cfg):
    cls_outputs, reg_outputs, feat_shapes = [], [], []
    for j, x_nchw in enumerate(xs_nchw):
        x = jnp.transpose(x_nchw, (0, 2, 3, 1)).astype(jnp.float32)   # NCHW -> NHWC
        feat_shapes.append((x.shape[1], x.shape[2]))
        cls_out, reg_out = gfocal_level_forward(x, params, params["scales"][j], cfg)
        cls_outputs.append(cls_out)
        reg_outputs.append(reg_out)
    anchors = build_anchors(feat_shapes, cfg["strides"], cfg["anchor_sizes"],
                            cfg["anchor_scales"], cfg["anchor_ratios"])
    return cls_outputs, reg_outputs, anchors


if __name__ == "__main__":
    cfg = dict(
        in_channel=16, inner_channel=32, num_convs=2, layer_num=2,
        num_cls=16, reg_max=16, m_top_k=4, subnet_dim=32,
        anchor_sizes=[32.0, 64.0], anchor_scales=[1.0], anchor_ratios=[1.0],
        strides=[8, 16],
    )
    cfg["anchor_nums"] = len(cfg["anchor_scales"]) * len(cfg["anchor_ratios"])

    key = jax.random.PRNGKey(0)
    pkey, k0, k1 = jax.random.split(key, 3)
    params = init_params(pkey, cfg)

    # Two FPN levels, NCHW like the PyTorch module's inputs.
    xs = [jax.random.normal(k0, (2, cfg["in_channel"], 8, 8), jnp.float32),
          jax.random.normal(k1, (2, cfg["in_channel"], 4, 4), jnp.float32)]

    cls_outs, reg_outs, anchors = gfocal_head_forward(xs, params, cfg)
    jax.block_until_ready((cls_outs, reg_outs, anchors))

    assert cls_outs[0].shape == (2, 64, cfg["num_cls"])
    assert reg_outs[0].shape == (2, 64, 4 * (cfg["reg_max"] + 1))
    assert cls_outs[1].shape == (2, 16, cfg["num_cls"])
    assert reg_outs[1].shape == (2, 16, 4 * (cfg["reg_max"] + 1))
    assert anchors[0].shape == (64, 4) and anchors[1].shape == (16, 4)
    assert all(bool(jnp.all(jnp.isfinite(o))) for o in cls_outs + reg_outs)

    print("KERNEL_OK")
</pallas_src>

<mosaic_0001>
module attributes {stable_mosaic.version = 11 : i64} {
  func.func @_gfocal_level_kernel(%arg0: i32, %arg1: memref<1x8x8x16xf32, #tpu.memory_space<vmem>>, %arg2: memref<4x288x32xf32, #tpu.memory_space<vmem>>, %arg3: memref<4x1x32xf32, #tpu.memory_space<vmem>>, %arg4: memref<4x1x32xf32, #tpu.memory_space<vmem>>, %arg5: memref<4x1x32xf32, #tpu.memory_space<vmem>>, %arg6: memref<288x16xf32, #tpu.memory_space<vmem>>, %arg7: memref<1x16xf32, #tpu.memory_space<vmem>>, %arg8: memref<288x68xf32, #tpu.memory_space<vmem>>, %arg9: memref<1x68xf32, #tpu.memory_space<vmem>>, %arg10: memref<32x32xf32, #tpu.memory_space<vmem>>, %arg11: memref<1x1xf32, #tpu.memory_space<vmem>>, %arg12: memref<20x32xf32, #tpu.memory_space<vmem>>, %arg13: memref<1x32xf32, #tpu.memory_space<vmem>>, %arg14: memref<32x1xf32, #tpu.memory_space<vmem>>, %arg15: memref<1x1xf32, #tpu.memory_space<vmem>>, %arg16: memref<1x64x128xf32, #tpu.memory_space<vmem>>, %arg17: memref<10x10x32xf32, #tpu.memory_space<vmem>>) attributes {dimension_semantics = [#tpu.dimension_semantics<parallel>], iteration_bounds = array<i64: 2>, scalar_prefetch = 0 : i64, scratch_operands = 1 : i64, tpu.core_type = #tpu.core_type<tc>, window_params = [{transform_indices = @transform_0, window_bounds = array<i64: 1, 8, 8, 16>}, {pipeline_mode = #tpu.pipeline_mode<synchronous>, transform_indices = @transform_1, window_bounds = array<i64: 4, 288, 32>}, {pipeline_mode = #tpu.pipeline_mode<synchronous>, transform_indices = @transform_2, window_bounds = array<i64: 4, 1, 32>}, {pipeline_mode = #tpu.pipeline_mode<synchronous>, transform_indices = @transform_3, window_bounds = array<i64: 4, 1, 32>}, {pipeline_mode = #tpu.pipeline_mode<synchronous>, transform_indices = @transform_4, window_bounds = array<i64: 4, 1, 32>}, {pipeline_mode = #tpu.pipeline_mode<synchronous>, transform_indices = @transform_5, window_bounds = array<i64: 288, 16>}, {pipeline_mode = #tpu.pipeline_mode<synchronous>, transform_indices = @transform_6, window_bounds = array<i64: 1, 16>}, {pipeline_mode = #tpu.pipeline_mode<synchronous>, transform_indices = @transform_7, window_bounds = array<i64: 288, 68>}, {pipeline_mode = #tpu.pipeline_mode<synchronous>, transform_indices = @transform_8, window_bounds = array<i64: 1, 68>}, {pipeline_mode = #tpu.pipeline_mode<synchronous>, transform_indices = @transform_9, window_bounds = array<i64: 32, 32>}, {pipeline_mode = #tpu.pipeline_mode<synchronous>, transform_indices = @transform_10, window_bounds = array<i64: 1, 1>}, {pipeline_mode = #tpu.pipeline_mode<synchronous>, transform_indices = @transform_11, window_bounds = array<i64: 20, 32>}, {pipeline_mode = #tpu.pipeline_mode<synchronous>, transform_indices = @transform_12, window_bounds = array<i64: 1, 32>}, {pipeline_mode = #tpu.pipeline_mode<synchronous>, transform_indices = @transform_13, window_bounds = array<i64: 32, 1>}, {pipeline_mode = #tpu.pipeline_mode<synchronous>, transform_indices = @transform_14, window_bounds = array<i64: 1, 1>}, {transform_indices = @transform_15, window_bounds = array<i64: 1, 64, 128>}]} {
    %cst = arith.constant 0.000000e+00 : f32
    %0 = vector.broadcast %cst : f32 to vector<10x10x32xf32>
    %c0 = arith.constant 0 : index
    %c0_0 = arith.constant 0 : index
    %c0_1 = arith.constant 0 : index
    %1 = vector.load %arg17[%c0, %c0_0, %c0_1] : memref<10x10x32xf32, #tpu.memory_space<vmem>>, vector<10x10x32xf32>
    tpu.vector_store %arg17[%c0, %c0_0, %c0_1], %0 {strides = array<i32>} : memref<10x10x32xf32, #tpu.memory_space<vmem>>, vector<10x10x32xf32>,
    %c0_2 = arith.constant 0 : index
    %c0_3 = arith.constant 0 : index
    %c0_4 = arith.constant 0 : index
    %c0_5 = arith.constant 0 : index
    %2 = vector.load %arg1[%c0_2, %c0_3, %c0_4, %c0_5] : memref<1x8x8x16xf32, #tpu.memory_space<vmem>>, vector<1x8x8x16xf32>
    %3 = vector.shape_cast %2 : vector<1x8x8x16xf32> to vector<8x8x16xf32>
    %cst_6 = arith.constant 0.000000e+00 : f32
    %4 = vector.broadcast %cst_6 : f32 to vector<8x8x16xf32>
    %5 = tpu.concatenate %3, %4 in 2 : vector<8x8x16xf32>, vector<8x8x16xf32> -> vector<8x8x32xf32>
    %c1 = arith.constant 1 : index
    %c1_7 = arith.constant 1 : index
    %c0_8 = arith.constant 0 : index
    %6 = vector.load %arg17[%c1, %c1_7, %c0_8] : memref<10x10x32xf32, #tpu.memory_space<vmem>>, vector<8x8x32xf32>
    tpu.vector_store %arg17[%c1, %c1_7, %c0_8], %5 {strides = array<i32>} : memref<10x10x32xf32, #tpu.memory_space<vmem>>, vector<8x8x32xf32>,
    %c0_9 = arith.constant 0 : index
    %c0_10 = arith.constant 0 : index
    %c0_11 = arith.constant 0 : index
    %7 = vector.load %arg17[%c0_9, %c0_10, %c0_11] : memref<10x10x32xf32, #tpu.memory_space<vmem>>, vector<8x8x32xf32>
    %8 = vector.shape_cast %7 : vector<8x8x32xf32> to vector<64x32xf32>
    %c0_12 = arith.constant 0 : index
    %c1_13 = arith.constant 1 : index
    %c0_14 = arith.constant 0 : index
    %9 = vector.load %arg17[%c0_12, %c1_13, %c0_14] : memref<10x10x32xf32, #tpu.memory_space<vmem>>, vector<8x8x32xf32>
    %10 = vector.shape_cast %9 : vector<8x8x32xf32> to vector<64x32xf32>
    %c0_15 = arith.constant 0 : index
    %c2 = arith.constant 2 : index
    %c0_16 = arith.constant 0 : index
    %11 = vector.load %arg17[%c0_15, %c2, %c0_16] : memref<10x10x32xf32, #tpu.memory_space<vmem>>, vector<8x8x32xf32>
    %12 = vector.shape_cast %11 : vector<8x8x32xf32> to vector<64x32xf32>
    %c1_17 = arith.constant 1 : index
    %c0_18 = arith.constant 0 : index
    %c0_19 = arith.constant 0 : index
    %13 = vector.load %arg17[%c1_17, %c0_18, %c0_19] : memref<10x10x32xf32, #tpu.memory_space<vmem>>, vector<8x8x32xf32>
    %14 = vector.shape_cast %13 : vector<8x8x32xf32> to vector<64x32xf32>
    %c1_20 = arith.constant 1 : index
    %c1_21 = arith.constant 1 : index
    %c0_22 = arith.constant 0 : index
    %15 = vector.load %arg17[%c1_20, %c1_21, %c0_22] : memref<10x10x32xf32, #tpu.memory_space<vmem>>, vector<8x8x32xf32>
    %16 = vector.shape_cast %15 : vector<8x8x32xf32> to vector<64x32xf32>
    %c1_23 = arith.constant 1 : index
    %c2_24 = arith.constant 2 : index
    %c0_25 = arith.constant 0 : index
    %17 = vector.load %arg17[%c1_23, %c2_24, %c0_25] : memref<10x10x32xf32, #tpu.memory_space<vmem>>, vector<8x8x32xf32>
    %18 = vector.shape_cast %17 : vector<8x8x32xf32> to vector<64x32xf32>
    %c2_26 = arith.constant 2 : index
    %c0_27 = arith.constant 0 : index
    %c0_28 = arith.constant 0 : index
    %19 = vector.load %arg17[%c2_26, %c0_27, %c0_28] : memref<10x10x32xf32, #tpu.memory_space<vmem>>, vector<8x8x32xf32>
    %20 = vector.shape_cast %19 : vector<8x8x32xf32> to vector<64x32xf32>
    %c2_29 = arith.constant 2 : index
    %c1_30 = arith.constant 1 : index
    %c0_31 = arith.constant 0 : index
    %21 = vector.load %arg17[%c2_29, %c1_30, %c0_31] : memref<10x10x32xf32, #tpu.memory_space<vmem>>, vector<8x8x32xf32>
    %22 = vector.shape_cast %21 : vector<8x8x32xf32> to vector<64x32xf32>
    %c2_32 = arith.constant 2 : index
    %c2_33 = arith.constant 2 : index
    %c0_34 = arith.constant 0 : index
    %23 = vector.load %arg17[%c2_32, %c2_33, %c0_34] : memref<10x10x32xf32, #tpu.memory_space<vmem>>, vector<8x8x32xf32>
    %24 = vector.shape_cast %23 : vector<8x8x32xf32> to vector<64x32xf32>
    %25 = tpu.concatenate %8, %10, %12, %14, %16, %18, %20, %22, %24 in 1 : vector<64x32xf32>, vector<64x32xf32>, vector<64x32xf32>, vector<64x32xf32>, vector<64x32xf32>, vector<64x32xf32>, vector<64x32xf32>, vector<64x32xf32>, vector<64x32xf32> -> vector<64x288xf32>
    %c0_35 = arith.constant 0 : index
    %c0_36 = arith.constant 0 : index
    %c0_37 = arith.constant 0 : index
    %26 = vector.load %arg2[%c0_35, %c0_36, %c0_37] : memref<4x288x32xf32, #tpu.memory_space<vmem>>, vector<1x288x32xf32>
    %27 = vector.shape_cast %26 : vector<1x288x32xf32> to vector<288x32xf32>
    %cst_38 = arith.constant dense<0.000000e+00> : vector<64x32xf32>
    %28 = tpu.matmul %25, %27, %cst_38 {dimension_numbers = #tpu.dot_dimension_numbers<[1], [0], [0], [1], [0, 0, 1, 1], [], []>} : vector<64x288xf32>, vector<288x32xf32>, vector<64x32xf32> -> vector<64x32xf32>
    %c0_39 = arith.constant 0 : index
    %c0_40 = arith.constant 0 : index
    %c0_41 = arith.constant 0 : index
    %29 = vector.load %arg3[%c0_39, %c0_40, %c0_41] : memref<4x1x32xf32, #tpu.memory_space<vmem>>, vector<1x1x32xf32>
    %30 = vector.shape_cast %29 : vector<1x1x32xf32> to vector<1x32xf32>
    %31 = vector.broadcast %30 : vector<1x32xf32> to vector<64x32xf32>
    %32 = arith.addf %28, %31 : vector<64x32xf32>
    %c0_42 = arith.constant 0 : index
    %c0_43 = arith.constant 0 : index
    %c0_44 = arith.constant 0 : index
    %33 = vector.load %arg4[%c0_42, %c0_43, %c0_44] : memref<4x1x32xf32, #tpu.memory_space<vmem>>, vector<1x1x32xf32>
    %34 = vector.shape_cast %33 : vector<1x1x32xf32> to vector<1x32xf32>
    %c0_45 = arith.constant 0 : index
    %c0_46 = arith.constant 0 : index
    %c0_47 = arith.constant 0 : index
    %35 = vector.load %arg5[%c0_45, %c0_46, %c0_47] : memref<4x1x32xf32, #tpu.memory_space<vmem>>, vector<1x1x32xf32>
    %36 = vector.shape_cast %35 : vector<1x1x32xf32> to vector<1x32xf32>
    %cst_48 = arith.constant dense<0.000000e+00> : vector<32xf32>
    %37 = vector.multi_reduction <add>, %32, %cst_48 [0] : vector<64x32xf32> to vector<32xf32>
    %38 = vector.shape_cast %37 : vector<32xf32> to vector<1x32xf32>
    %c0_49 = arith.constant 0 : index
    %c0_50 = arith.constant 0 : index
    %39 = vector.load %arg10[%c0_49, %c0_50] : memref<32x32xf32, #tpu.memory_space<vmem>>, vector<32x32xf32>
    %cst_51 = arith.constant dense<0.000000e+00> : vector<1x32xf32>
    %40 = tpu.matmul %38, %39, %cst_51 {dimension_numbers = #tpu.dot_dimension_numbers<[1], [0], [0], [1], [0, 0, 1, 1], [], []>} : vector<1x32xf32>, vector<32x32xf32>, vector<1x32xf32> -> vector<1x32xf32>
    %41 = vector.broadcast %40 : vector<1x32xf32> to vector<64x32xf32>
    %42 = arith.subf %32, %41 : vector<64x32xf32>
    %43 = arith.mulf %42, %42 : vector<64x32xf32>
    %cst_52 = arith.constant dense<0.000000e+00> : vector<32xf32>
    %44 = vector.multi_reduction <add>, %43, %cst_52 [0] : vector<64x32xf32> to vector<32xf32>
    %45 = vector.shape_cast %44 : vector<32xf32> to vector<1x32xf32>
    %c0_53 = arith.constant 0 : index
    %c0_54 = arith.constant 0 : index
    %46 = vector.load %arg10[%c0_53, %c0_54] : memref<32x32xf32, #tpu.memory_space<vmem>>, vector<32x32xf32>
    %cst_55 = arith.constant dense<0.000000e+00> : vector<1x32xf32>
    %47 = tpu.matmul %45, %46, %cst_55 {dimension_numbers = #tpu.dot_dimension_numbers<[1], [0], [0], [1], [0, 0, 1, 1], [], []>} : vector<1x32xf32>, vector<32x32xf32>, vector<1x32xf32> -> vector<1x32xf32>
    %cst_56 = arith.constant 9.99999974E-6 : f32
    %48 = vector.broadcast %cst_56 : f32 to vector<1x32xf32>
    %49 = arith.addf %47, %48 : vector<1x32xf32>
    %50 = math.rsqrt %49 : vector<1x32xf32>
    %51 = vector.broadcast %50 : vector<1x32xf32> to vector<64x32xf32>
    %52 = arith.mulf %42, %51 : vector<64x32xf32>
    %53 = vector.broadcast %34 : vector<1x32xf32> to vector<64x32xf32>
    %54 = arith.mulf %52, %53 : vector<64x32xf32>
    %55 = vector.broadcast %36 : vector<1x32xf32> to vector<64x32xf32>
    %56 = arith.addf %54, %55 : vector<64x32xf32>
    %cst_57 = arith.constant 0.000000e+00 : f32
    %57 = vector.broadcast %cst_57 : f32 to vector<64x32xf32>
    %58 = arith.maximumf %56, %57 : vector<64x32xf32>
    %59 = vector.shape_cast %58 : vector<64x32xf32> to vector<8x8x32xf32>
    %c1_58 = arith.constant 1 : index
    %c1_59 = arith.constant 1 : index
    %c0_60 = arith.constant 0 : index
    %60 = vector.load %arg17[%c1_58, %c1_59, %c0_60] : memref<10x10x32xf32, #tpu.memory_space<vmem>>, vector<8x8x32xf32>
    tpu.vector_store %arg17[%c1_58, %c1_59, %c0_60], %59 {strides = array<i32>} : memref<10x10x32xf32, #tpu.memory_space<vmem>>, vector<8x8x32xf32>,
    %c0_61 = arith.constant 0 : index
    %c0_62 = arith.constant 0 : index
    %c0_63 = arith.constant 0 : index
    %61 = vector.load %arg17[%c0_61, %c0_62, %c0_63] : memref<10x10x32xf32, #tpu.memory_space<vmem>>, vector<8x8x32xf32>
    %62 = vector.shape_cast %61 : vector<8x8x32xf32> to vector<64x32xf32>
    %c0_64 = arith.constant 0 : index
    %c1_65 = arith.constant 1 : index
    %c0_66 = arith.constant 0 : index
    %63 = vector.load %arg17[%c0_64, %c1_65, %c0_66] : memref<10x10x32xf32, #tpu.memory_space<vmem>>, vector<8x8x32xf32>
    %64 = vector.shape_cast %63 : vector<8x8x32xf32> to vector<64x32xf32>
    %c0_67 = arith.constant 0 : index
    %c2_68 = arith.constant 2 : index
    %c0_69 = arith.constant 0 : index
    %65 = vector.load %arg17[%c0_67, %c2_68, %c0_69] : memref<10x10x32xf32, #tpu.memory_space<vmem>>, vector<8x8x32xf32>
    %66 = vector.shape_cast %65 : vector<8x8x32xf32> to vector<64x32xf32>
    %c1_70 = arith.constant 1 : index
    %c0_71 = arith.constant 0 : index
    %c0_72 = arith.constant 0 : index
    %67 = vector.load %arg17[%c1_70, %c0_71, %c0_72] : memref<10x10x32xf32, #tpu.memory_space<vmem>>, vector<8x8x32xf32>
    %68 = vector.shape_cast %67 : vector<8x8x32xf32> to vector<64x32xf32>
    %c1_73 = arith.constant 1 : index
    %c1_74 = arith.constant 1 : index
    %c0_75 = arith.constant 0 : index
    %69 = vector.load %arg17[%c1_73, %c1_74, %c0_75] : memref<10x10x32xf32, #tpu.memory_space<vmem>>, vector<8x8x32xf32>
    %70 = vector.shape_cast %69 : vector<8x8x32xf32> to vector<64x32xf32>
    %c1_76 = arith.constant 1 : index
    %c2_77 = arith.constant 2 : index
    %c0_78 = arith.constant 0 : index
    %71 = vector.load %arg17[%c1_76, %c2_77, %c0_78] : memref<10x10x32xf32, #tpu.memory_space<vmem>>, vector<8x8x32xf32>
    %72 = vector.shape_cast %71 : vector<8x8x32xf32> to vector<64x32xf32>
    %c2_79 = arith.constant 2 : index
    %c0_80 = arith.constant 0 : index
    %c0_81 = arith.constant 0 : index
    %73 = vector.load %arg17[%c2_79, %c0_80, %c0_81] : memref<10x10x32xf32, #tpu.memory_space<vmem>>, vector<8x8x32xf32>
    %74 = vector.shape_cast %73 : vector<8x8x32xf32> to vector<64x32xf32>
    %c2_82 = arith.constant 2 : index
    %c1_83 = arith.constant 1 : index
    %c0_84 = arith.constant 0 : index
    %75 = vector.load %arg17[%c2_82, %c1_83, %c0_84] : memref<10x10x32xf32, #tpu.memory_space<vmem>>, vector<8x8x32xf32>
    %76 = vector.shape_cast %75 : vector<8x8x32xf32> to vector<64x32xf32>
    %c2_85 = arith.constant 2 : index
    %c2_86 = arith.constant 2 : index
    %c0_87 = arith.constant 0 : index
    %77 = vector.load %arg17[%c2_85, %c2_86, %c0_87] : memref<10x10x32xf32, #tpu.memory_space<vmem>>, vector<8x8x32xf32>
    %78 = vector.shape_cast %77 : vector<8x8x32xf32> to vector<64x32xf32>
    %79 = tpu.concatenate %62, %64, %66, %68, %70, %72, %74, %76, %78 in 1 : vector<64x32xf32>, vector<64x32xf32>, vector<64x32xf32>, vector<64x32xf32>, vector<64x32xf32>, vector<64x32xf32>, vector<64x32xf32>, vector<64x32xf32>, vector<64x32xf32> -> vector<64x288xf32>
    %c1_88 = arith.constant 1 : index
    %c0_89 = arith.constant 0 : index
    %c0_90 = arith.constant 0 : index
    %80 = vector.load %arg2[%c1_88, %c0_89, %c0_90] : memref<4x288x32xf32, #tpu.memory_space<vmem>>, vector<1x288x32xf32>
    %81 = vector.shape_cast %80 : vector<1x288x32xf32> to vector<288x32xf32>
    %cst_91 = arith.constant dense<0.000000e+00> : vector<64x32xf32>
    %82 = tpu.matmul %79, %81, %cst_91 {dimension_numbers = #tpu.dot_dimension_numbers<[1], [0], [0], [1], [0, 0, 1, 1], [], []>} : vector<64x288xf32>, vector<288x32xf32>, vector<64x32xf32> -> vector<64x32xf32>
    %c1_92 = arith.constant 1 : index
    %c0_93 = arith.constant 0 : index
    %c0_94 = arith.constant 0 : index
    %83 = vector.load %arg3[%c1_92, %c0_93, %c0_94] : memref<4x1x32xf32, #tpu.memory_space<vmem>>, vector<1x1x32xf32>
    %84 = vector.shape_cast %83 : vector<1x1x32xf32> to vector<1x32xf32>
    %85 = vector.broadcast %84 : vector<1x32xf32> to vector<64x32xf32>
    %86 = arith.addf %82, %85 : vector<64x32xf32>
    %c1_95 = arith.constant 1 : index
    %c0_96 = arith.constant 0 : index
    %c0_97 = arith.constant 0 : index
    %87 = vector.load %arg4[%c1_95, %c0_96, %c0_97] : memref<4x1x32xf32, #tpu.memory_space<vmem>>, vector<1x1x32xf32>
    %88 = vector.shape_cast %87 : vector<1x1x32xf32> to vector<1x32xf32>
    %c1_98 = arith.constant 1 : index
    %c0_99 = arith.constant 0 : index
    %c0_100 = arith.constant 0 : index
    %89 = vector.load %arg5[%c1_98, %c0_99, %c0_100] : memref<4x1x32xf32, #tpu.memory_space<vmem>>, vector<1x1x32xf32>
    %90 = vector.shape_cast %89 : vector<1x1x32xf32> to vector<1x32xf32>
    %cst_101 = arith.constant dense<0.000000e+00> : vector<32xf32>
    %91 = vector.multi_reduction <add>, %86, %cst_101 [0] : vector<64x32xf32> to vector<32xf32>
    %92 = vector.shape_cast %91 : vector<32xf32> to vector<1x32xf32>
    %c0_102 = arith.constant 0 : index
    %c0_103 = arith.constant 0 : index
    %93 = vector.load %arg10[%c0_102, %c0_103] : memref<32x32xf32, #tpu.memory_space<vmem>>, vector<32x32xf32>
    %cst_104 = arith.constant dense<0.000000e+00> : vector<1x32xf32>
    %94 = tpu.matmul %92, %93, %cst_104 {dimension_numbers = #tpu.dot_dimension_numbers<[1], [0], [0], [1], [0, 0, 1, 1], [], []>} : vector<1x32xf32>, vector<32x32xf32>, vector<1x32xf32> -> vector<1x32xf32>
    %95 = vector.broadcast %94 : vector<1x32xf32> to vector<64x32xf32>
    %96 = arith.subf %86, %95 : vector<64x32xf32>
    %97 = arith.mulf %96, %96 : vector<64x32xf32>
    %cst_105 = arith.constant dense<0.000000e+00> : vector<32xf32>
    %98 = vector.multi_reduction <add>, %97, %cst_105 [0] : vector<64x32xf32> to vector<32xf32>
    %99 = vector.shape_cast %98 : vector<32xf32> to vector<1x32xf32>
    %c0_106 = arith.constant 0 : index
    %c0_107 = arith.constant 0 : index
    %100 = vector.load %arg10[%c0_106, %c0_107] : memref<32x32xf32, #tpu.memory_space<vmem>>, vector<32x32xf32>
    %cst_108 = arith.constant dense<0.000000e+00> : vector<1x32xf32>
    %101 = tpu.matmul %99, %100, %cst_108 {dimension_numbers = #tpu.dot_dimension_numbers<[1], [0], [0], [1], [0, 0, 1, 1], [], []>} : vector<1x32xf32>, vector<32x32xf32>, vector<1x32xf32> -> vector<1x32xf32>
    %cst_109 = arith.constant 9.99999974E-6 : f32
    %102 = vector.broadcast %cst_109 : f32 to vector<1x32xf32>
    %103 = arith.addf %101, %102 : vector<1x32xf32>
    %104 = math.rsqrt %103 : vector<1x32xf32>
    %105 = vector.broadcast %104 : vector<1x32xf32> to vector<64x32xf32>
    %106 = arith.mulf %96, %105 : vector<64x32xf32>
    %107 = vector.broadcast %88 : vector<1x32xf32> to vector<64x32xf32>
    %108 = arith.mulf %106, %107 : vector<64x32xf32>
    %109 = vector.broadcast %90 : vector<1x32xf32> to vector<64x32xf32>
    %110 = arith.addf %108, %109 : vector<64x32xf32>
    %cst_110 = arith.constant 0.000000e+00 : f32
    %111 = vector.broadcast %cst_110 : f32 to vector<64x32xf32>
    %112 = arith.maximumf %110, %111 : vector<64x32xf32>
    %113 = vector.shape_cast %112 : vector<64x32xf32> to vector<8x8x32xf32>
    %c1_111 = arith.constant 1 : index
    %c1_112 = arith.constant 1 : index
    %c0_113 = arith.constant 0 : index
    %114 = vector.load %arg17[%c1_111, %c1_112, %c0_113] : memref<10x10x32xf32, #tpu.memory_space<vmem>>, vector<8x8x32xf32>
    tpu.vector_store %arg17[%c1_111, %c1_112, %c0_113], %5 {strides = array<i32>} : memref<10x10x32xf32, #tpu.memory_space<vmem>>, vector<8x8x32xf32>,
    %c0_114 = arith.constant 0 : index
    %c0_115 = arith.constant 0 : index
    %c0_116 = arith.constant 0 : index
    %115 = vector.load %arg17[%c0_114, %c0_115, %c0_116] : memref<10x10x32xf32, #tpu.memory_space<vmem>>, vector<8x8x32xf32>
    %116 = vector.shape_cast %115 : vector<8x8x32xf32> to vector<64x32xf32>
    %c0_117 = arith.constant 0 : index
    %c1_118 = arith.constant 1 : index
    %c0_119 = arith.constant 0 : index
    %117 = vector.load %arg17[%c0_117, %c1_118, %c0_119] : memref<10x10x32xf32, #tpu.memory_space<vmem>>, vector<8x8x32xf32>
    %118 = vector.shape_cast %117 : vector<8x8x32xf32> to vector<64x32xf32>
    %c0_120 = arith.constant 0 : index
    %c2_121 = arith.constant 2 : index
    %c0_122 = arith.constant 0 : index
    %119 = vector.load %arg17[%c0_120, %c2_121, %c0_122] : memref<10x10x32xf32, #tpu.memory_space<vmem>>, vector<8x8x32xf32>
    %120 = vector.shape_cast %119 : vector<8x8x32xf32> to vector<64x32xf32>
    %c1_123 = arith.constant 1 : index
    %c0_124 = arith.constant 0 : index
    %c0_125 = arith.constant 0 : index
    %121 = vector.load %arg17[%c1_123, %c0_124, %c0_125] : memref<10x10x32xf32, #tpu.memory_space<vmem>>, vector<8x8x32xf32>
    %122 = vector.shape_cast %121 : vector<8x8x32xf32> to vector<64x32xf32>
    %c1_126 = arith.constant 1 : index
    %c1_127 = arith.constant 1 : index
    %c0_128 = arith.constant 0 : index
    %123 = vector.load %arg17[%c1_126, %c1_127, %c0_128] : memref<10x10x32xf32, #tpu.memory_space<vmem>>, vector<8x8x32xf32>
    %124 = vector.shape_cast %123 : vector<8x8x32xf32> to vector<64x32xf32>
    %c1_129 = arith.constant 1 : index
    %c2_130 = arith.constant 2 : index
    %c0_131 = arith.constant 0 : index
    %125 = vector.load %arg17[%c1_129, %c2_130, %c0_131] : memref<10x10x32xf32, #tpu.memory_space<vmem>>, vector<8x8x32xf32>
    %126 = vector.shape_cast %125 : vector<8x8x32xf32> to vector<64x32xf32>
    %c2_132 = arith.constant 2 : index
    %c0_133 = arith.constant 0 : index
    %c0_134 = arith.constant 0 : index
    %127 = vector.load %arg17[%c2_132, %c0_133, %c0_134] : memref<10x10x32xf32, #tpu.memory_space<vmem>>, vector<8x8x32xf32>
    %128 = vector.shape_cast %127 : vector<8x8x32xf32> to vector<64x32xf32>
    %c2_135 = arith.constant 2 : index
    %c1_136 = arith.constant 1 : index
    %c0_137 = arith.constant 0 : index
    %129 = vector.load %arg17[%c2_135, %c1_136, %c0_137] : memref<10x10x32xf32, #tpu.memory_space<vmem>>, vector<8x8x32xf32>
    %130 = vector.shape_cast %129 : vector<8x8x32xf32> to vector<64x32xf32>
    %c2_138 = arith.constant 2 : index
    %c2_139 = arith.constant 2 : index
    %c0_140 = arith.constant 0 : index
    %131 = vector.load %arg17[%c2_138, %c2_139, %c0_140] : memref<10x10x32xf32, #tpu.memory_space<vmem>>, vector<8x8x32xf32>
    %132 = vector.shape_cast %131 : vector<8x8x32xf32> to vector<64x32xf32>
    %133 = tpu.concatenate %116, %118, %120, %122, %124, %126, %128, %130, %132 in 1 : vector<64x32xf32>, vector<64x32xf32>, vector<64x32xf32>, vector<64x32xf32>, vector<64x32xf32>, vector<64x32xf32>, vector<64x32xf32>, vector<64x32xf32>, vector<64x32xf32> -> vector<64x288xf32>
    %c2_141 = arith.constant 2 : index
    %c0_142 = arith.constant 0 : index
    %c0_143 = arith.constant 0 : index
    %134 = vector.load %arg2[%c2_141, %c0_142, %c0_143] : memref<4x288x32xf32, #tpu.memory_space<vmem>>, vector<1x288x32xf32>
    %135 = vector.shape_cast %134 : vector<1x288x32xf32> to vector<288x32xf32>
    %cst_144 = arith.constant dense<0.000000e+00> : vector<64x32xf32>
    %136 = tpu.matmul %133, %135, %cst_144 {dimension_numbers = #tpu.dot_dimension_numbers<[1], [0], [0], [1], [0, 0, 1, 1], [], []>} : vector<64x288xf32>, vector<288x32xf32>, vector<64x32xf32> -> vector<64x32xf32>
    %c2_145 = arith.constant 2 : index
    %c0_146 = arith.constant 0 : index
    %c0_147 = arith.constant 0 : index
    %137 = vector.load %arg3[%c2_145, %c0_146, %c0_147] : memref<4x1x32xf32, #tpu.memory_space<vmem>>, vector<1x1x32xf32>
    %138 = vector.shape_cast %137 : vector<1x1x32xf32> to vector<1x32xf32>
    %139 = vector.broadcast %138 : vector<1x32xf32> to vector<64x32xf32>
    %140 = arith.addf %136, %139 : vector<64x32xf32>
    %c2_148 = arith.constant 2 : index
    %c0_149 = arith.constant 0 : index
    %c0_150 = arith.constant 0 : index
    %141 = vector.load %arg4[%c2_148, %c0_149, %c0_150] : memref<4x1x32xf32, #tpu.memory_space<vmem>>, vector<1x1x32xf32>
    %142 = vector.shape_cast %141 : vector<1x1x32xf32> to vector<1x32xf32>
    %c2_151 = arith.constant 2 : index
    %c0_152 = arith.constant 0 : index
    %c0_153 = arith.constant 0 : index
    %143 = vector.load %arg5[%c2_151, %c0_152, %c0_153] : memref<4x1x32xf32, #tpu.memory_space<vmem>>, vector<1x1x32xf32>
    %144 = vector.shape_cast %143 : vector<1x1x32xf32> to vector<1x32xf32>
    %cst_154 = arith.constant dense<0.000000e+00> : vector<32xf32>
    %145 = vector.multi_reduction <add>, %140, %cst_154 [0] : vector<64x32xf32> to vector<32xf32>
    %146 = vector.shape_cast %145 : vector<32xf32> to vector<1x32xf32>
    %c0_155 = arith.constant 0 : index
    %c0_156 = arith.constant 0 : index
    %147 = vector.load %arg10[%c0_155, %c0_156] : memref<32x32xf32, #tpu.memory_space<vmem>>, vector<32x32xf32>
    %cst_157 = arith.constant dense<0.000000e+00> : vector<1x32xf32>
    %148 = tpu.matmul %146, %147, %cst_157 {dimension_numbers = #tpu.dot_dimension_numbers<[1], [0], [0], [1], [0, 0, 1, 1], [], []>} : vector<1x32xf32>, vector<32x32xf32>, vector<1x32xf32> -> vector<1x32xf32>
    %149 = vector.broadcast %148 : vector<1x32xf32> to vector<64x32xf32>
    %150 = arith.subf %140, %149 : vector<64x32xf32>
    %151 = arith.mulf %150, %150 : vector<64x32xf32>
    %cst_158 = arith.constant dense<0.000000e+00> : vector<32xf32>
    %152 = vector.multi_reduction <add>, %151, %cst_158 [0] : vector<64x32xf32> to vector<32xf32>
    %153 = vector.shape_cast %152 : vector<32xf32> to vector<1x32xf32>
    %c0_159 = arith.constant 0 : index
    %c0_160 = arith.constant 0 : index
    %154 = vector.load %arg10[%c0_159, %c0_160] : memref<32x32xf32, #tpu.memory_space<vmem>>, vector<32x32xf32>
    %cst_161 = arith.constant dense<0.000000e+00> : vector<1x32xf32>
    %155 = tpu.matmul %153, %154, %cst_161 {dimension_numbers = #tpu.dot_dimension_numbers<[1], [0], [0], [1], [0, 0, 1, 1], [], []>} : vector<1x32xf32>, vector<32x32xf32>, vector<1x32xf32> -> vector<1x32xf32>
    %cst_162 = arith.constant 9.99999974E-6 : f32
    %156 = vector.broadcast %cst_162 : f32 to vector<1x32xf32>
    %157 = arith.addf %155, %156 : vector<1x32xf32>
    %158 = math.rsqrt %157 : vector<1x32xf32>
    %159 = vector.broadcast %158 : vector<1x32xf32> to vector<64x32xf32>
    %160 = arith.mulf %150, %159 : vector<64x32xf32>
    %161 = vector.broadcast %142 : vector<1x32xf32> to vector<64x32xf32>
    %162 = arith.mulf %160, %161 : vector<64x32xf32>
    %163 = vector.broadcast %144 : vector<1x32xf32> to vector<64x32xf32>
    %164 = arith.addf %162, %163 : vector<64x32xf32>
    %cst_163 = arith.constant 0.000000e+00 : f32
    %165 = vector.broadcast %cst_163 : f32 to vector<64x32xf32>
    %166 = arith.maximumf %164, %165 : vector<64x32xf32>
    %167 = vector.shape_cast %166 : vector<64x32xf32> to vector<8x8x32xf32>
    %c1_164 = arith.constant 1 : index
    %c1_165 = arith.constant 1 : index
    %c0_166 = arith.constant 0 : index
    %168 = vector.load %arg17[%c1_164, %c1_165, %c0_166] : memref<10x10x32xf32, #tpu.memory_space<vmem>>, vector<8x8x32xf32>
    tpu.vector_store %arg17[%c1_164, %c1_165, %c0_166], %167 {strides = array<i32>} : memref<10x10x32xf32, #tpu.memory_space<vmem>>, vector<8x8x32xf32>,
    %c0_167 = arith.constant 0 : index
    %c0_168 = arith.constant 0 : index
    %c0_169 = arith.constant 0 : index
    %169 = vector.load %arg17[%c0_167, %c0_168, %c0_169] : memref<10x10x32xf32, #tpu.memory_space<vmem>>, vector<8x8x32xf32>
    %170 = vector.shape_cast %169 : vector<8x8x32xf32> to vector<64x32xf32>
    %c0_170 = arith.constant 0 : index
    %c1_171 = arith.constant 1 : index
    %c0_172 = arith.constant 0 : index
    %171 = vector.load %arg17[%c0_170, %c1_171, %c0_172] : memref<10x10x32xf32, #tpu.memory_space<vmem>>, vector<8x8x32xf32>
    %172 = vector.shape_cast %171 : vector<8x8x32xf32> to vector<64x32xf32>
    %c0_173 = arith.constant 0 : index
    %c2_174 = arith.constant 2 : index
    %c0_175 = arith.constant 0 : index
    %173 = vector.load %arg17[%c0_173, %c2_174, %c0_175] : memref<10x10x32xf32, #tpu.memory_space<vmem>>, vector<8x8x32xf32>
    %174 = vector.shape_cast %173 : vector<8x8x32xf32> to vector<64x32xf32>
    %c1_176 = arith.constant 1 : index
    %c0_177 = arith.constant 0 : index
    %c0_178 = arith.constant 0 : index
    %175 = vector.load %arg17[%c1_176, %c0_177, %c0_178] : memref<10x10x32xf32, #tpu.memory_space<vmem>>, vector<8x8x32xf32>
    %176 = vector.shape_cast %175 : vector<8x8x32xf32> to vector<64x32xf32>
    %c1_179 = arith.constant 1 : index
    %c1_180 = arith.constant 1 : index
    %c0_181 = arith.constant 0 : index
    %177 = vector.load %arg17[%c1_179, %c1_180, %c0_181] : memref<10x10x32xf32, #tpu.memory_space<vmem>>, vector<8x8x32xf32>
    %178 = vector.shape_cast %177 : vector<8x8x32xf32> to vector<64x32xf32>
    %c1_182 = arith.constant 1 : index
    %c2_183 = arith.constant 2 : index
    %c0_184 = arith.constant 0 : index
    %179 = vector.load %arg17[%c1_182, %c2_183, %c0_184] : memref<10x10x32xf32, #tpu.memory_space<vmem>>, vector<8x8x32xf32>
    %180 = vector.shape_cast %179 : vector<8x8x32xf32> to vector<64x32xf32>
    %c2_185 = arith.constant 2 : index
    %c0_186 = arith.constant 0 : index
    %c0_187 = arith.constant 0 : index
    %181 = vector.load %arg17[%c2_185, %c0_186, %c0_187] : memref<10x10x32xf32, #tpu.memory_space<vmem>>, vector<8x8x32xf32>
    %182 = vector.shape_cast %181 : vector<8x8x32xf32> to vector<64x32xf32>
    %c2_188 = arith.constant 2 : index
    %c1_189 = arith.constant 1 : index
    %c0_190 = arith.constant 0 : index
    %183 = vector.load %arg17[%c2_188, %c1_189, %c0_190] : memref<10x10x32xf32, #tpu.memory_space<vmem>>, vector<8x8x32xf32>
    %184 = vector.shape_cast %183 : vector<8x8x32xf32> to vector<64x32xf32>
    %c2_191 = arith.constant 2 : index
    %c2_192 = arith.constant 2 : index
    %c0_193 = arith.constant 0 : index
    %185 = vector.load %arg17[%c2_191, %c2_192, %c0_193] : memref<10x10x32xf32, #tpu.memory_space<vmem>>, vector<8x8x32xf32>
    %186 = vector.shape_cast %185 : vector<8x8x32xf32> to vector<64x32xf32>
    %187 = tpu.concatenate %170, %172, %174, %176, %178, %180, %182, %184, %186 in 1 : vector<64x32xf32>, vector<64x32xf32>, vector<64x32xf32>, vector<64x32xf32>, vector<64x32xf32>, vector<64x32xf32>, vector<64x32xf32>, vector<64x32xf32>, vector<64x32xf32> -> vector<64x288xf32>
    %c3 = arith.constant 3 : index
    %c0_194 = arith.constant 0 : index
    %c0_195 = arith.constant 0 : index
    %188 = vector.load %arg2[%c3, %c0_194, %c0_195] : memref<4x288x32xf32, #tpu.memory_space<vmem>>, vector<1x288x32xf32>
    %189 = vector.shape_cast %188 : vector<1x288x32xf32> to vector<288x32xf32>
    %cst_196 = arith.constant dense<0.000000e+00> : vector<64x32xf32>
    %190 = tpu.matmul %187, %189, %cst_196 {dimension_numbers = #tpu.dot_dimension_numbers<[1], [0], [0], [1], [0, 0, 1, 1], [], []>} : vector<64x288xf32>, vector<288x32xf32>, vector<64x32xf32> -> vector<64x32xf32>
    %c3_197 = arith.constant 3 : index
    %c0_198 = arith.constant 0 : index
    %c0_199 = arith.constant 0 : index
    %191 = vector.load %arg3[%c3_197, %c0_198, %c0_199] : memref<4x1x32xf32, #tpu.memory_space<vmem>>, vector<1x1x32xf32>
    %192 = vector.shape_cast %191 : vector<1x1x32xf32> to vector<1x32xf32>
    %193 = vector.broadcast %192 : vector<1x32xf32> to vector<64x32xf32>
    %194 = arith.addf %190, %193 : vector<64x32xf32>
    %c3_200 = arith.constant 3 : index
    %c0_201 = arith.constant 0 : index
    %c0_202 = arith.constant 0 : index
    %195 = vector.load %arg4[%c3_200, %c0_201, %c0_202] : memref<4x1x32xf32, #tpu.memory_space<vmem>>, vector<1x1x32xf32>
    %196 = vector.shape_cast %195 : vector<1x1x32xf32> to vector<1x32xf32>
    %c3_203 = arith.constant 3 : index
    %c0_204 = arith.constant 0 : index
    %c0_205 = arith.constant 0 : index
    %197 = vector.load %arg5[%c3_203, %c0_204, %c0_205] : memref<4x1x32xf32, #tpu.memory_space<vmem>>, vector<1x1x32xf32>
    %198 = vector.shape_cast %197 : vector<1x1x32xf32> to vector<1x32xf32>
    %cst_206 = arith.constant dense<0.000000e+00> : vector<32xf32>
    %199 = vector.multi_reduction <add>, %194, %cst_206 [0] : vector<64x32xf32> to vector<32xf32>
    %200 = vector.shape_cast %199 : vector<32xf32> to vector<1x32xf32>
    %c0_207 = arith.constant 0 : index
    %c0_208 = arith.constant 0 : index
    %201 = vector.load %arg10[%c0_207, %c0_208] : memref<32x32xf32, #tpu.memory_space<vmem>>, vector<32x32xf32>
    %cst_209 = arith.constant dense<0.000000e+00> : vector<1x32xf32>
    %202 = tpu.matmul %200, %201, %cst_209 {dimension_numbers = #tpu.dot_dimension_numbers<[1], [0], [0], [1], [0, 0, 1, 1], [], []>} : vector<1x32xf32>, vector<32x32xf32>, vector<1x32xf32> -> vector<1x32xf32>
    %203 = vector.broadcast %202 : vector<1x32xf32> to vector<64x32xf32>
    %204 = arith.subf %194, %203 : vector<64x32xf32>
    %205 = arith.mulf %204, %204 : vector<64x32xf32>
    %cst_210 = arith.constant dense<0.000000e+00> : vector<32xf32>
    %206 = vector.multi_reduction <add>, %205, %cst_210 [0] : vector<64x32xf32> to vector<32xf32>
    %207 = vector.shape_cast %206 : vector<32xf32> to vector<1x32xf32>
    %c0_211 = arith.constant 0 : index
    %c0_212 = arith.constant 0 : index
    %208 = vector.load %arg10[%c0_211, %c0_212] : memref<32x32xf32, #tpu.memory_space<vmem>>, vector<32x32xf32>
    %cst_213 = arith.constant dense<0.000000e+00> : vector<1x32xf32>
    %209 = tpu.matmul %207, %208, %cst_213 {dimension_numbers = #tpu.dot_dimension_numbers<[1], [0], [0], [1], [0, 0, 1, 1], [], []>} : vector<1x32xf32>, vector<32x32xf32>, vector<1x32xf32> -> vector<1x32xf32>
    %cst_214 = arith.constant 9.99999974E-6 : f32
    %210 = vector.broadcast %cst_214 : f32 to vector<1x32xf32>
    %211 = arith.addf %209, %210 : vector<1x32xf32>
    %212 = math.rsqrt %211 : vector<1x32xf32>
    %213 = vector.broadcast %212 : vector<1x32xf32> to vector<64x32xf32>
    %214 = arith.mulf %204, %213 : vector<64x32xf32>
    %215 = vector.broadcast %196 : vector<1x32xf32> to vector<64x32xf32>
    %216 = arith.mulf %214, %215 : vector<64x32xf32>
    %217 = vector.broadcast %198 : vector<1x32xf32> to vector<64x32xf32>
    %218 = arith.addf %216, %217 : vector<64x32xf32>
    %cst_215 = arith.constant 0.000000e+00 : f32
    %219 = vector.broadcast %cst_215 : f32 to vector<64x32xf32>
    %220 = arith.maximumf %218, %219 : vector<64x32xf32>
    %221 = vector.shape_cast %220 : vector<64x32xf32> to vector<8x8x32xf32>
    %c1_216 = arith.constant 1 : index
    %c1_217 = arith.constant 1 : index
    %c0_218 = arith.constant 0 : index
    %222 = vector.load %arg17[%c1_216, %c1_217, %c0_218] : memref<10x10x32xf32, #tpu.memory_space<vmem>>, vector<8x8x32xf32>
    tpu.vector_store %arg17[%c1_216, %c1_217, %c0_218], %113 {strides = array<i32>} : memref<10x10x32xf32, #tpu.memory_space<vmem>>, vector<8x8x32xf32>,
    %c0_219 = arith.constant 0 : index
    %c0_220 = arith.constant 0 : index
    %c0_221 = arith.constant 0 : index
    %223 = vector.load %arg17[%c0_219, %c0_220, %c0_221] : memref<10x10x32xf32, #tpu.memory_space<vmem>>, vector<8x8x32xf32>
    %224 = vector.shape_cast %223 : vector<8x8x32xf32> to vector<64x32xf32>
    %c0_222 = arith.constant 0 : index
    %c1_223 = arith.constant 1 : index
    %c0_224 = arith.constant 0 : index
    %225 = vector.load %arg17[%c0_222, %c1_223, %c0_224] : memref<10x10x32xf32, #tpu.memory_space<vmem>>, vector<8x8x32xf32>
    %226 = vector.shape_cast %225 : vector<8x8x32xf32> to vector<64x32xf32>
    %c0_225 = arith.constant 0 : index
    %c2_226 = arith.constant 2 : index
    %c0_227 = arith.constant 0 : index
    %227 = vector.load %arg17[%c0_225, %c2_226, %c0_227] : memref<10x10x32xf32, #tpu.memory_space<vmem>>, vector<8x8x32xf32>
    %228 = vector.shape_cast %227 : vector<8x8x32xf32> to vector<64x32xf32>
    %c1_228 = arith.constant 1 : index
    %c0_229 = arith.constant 0 : index
    %c0_230 = arith.constant 0 : index
    %229 = vector.load %arg17[%c1_228, %c0_229, %c0_230] : memref<10x10x32xf32, #tpu.memory_space<vmem>>, vector<8x8x32xf32>
    %230 = vector.shape_cast %229 : vector<8x8x32xf32> to vector<64x32xf32>
    %c1_231 = arith.constant 1 : index
    %c1_232 = arith.constant 1 : index
    %c0_233 = arith.constant 0 : index
    %231 = vector.load %arg17[%c1_231, %c1_232, %c0_233] : memref<10x10x32xf32, #tpu.memory_space<vmem>>, vector<8x8x32xf32>
    %232 = vector.shape_cast %231 : vector<8x8x32xf32> to vector<64x32xf32>
    %c1_234 = arith.constant 1 : index
    %c2_235 = arith.constant 2 : index
    %c0_236 = arith.constant 0 : index
    %233 = vector.load %arg17[%c1_234, %c2_235, %c0_236] : memref<10x10x32xf32, #tpu.memory_space<vmem>>, vector<8x8x32xf32>
    %234 = vector.shape_cast %233 : vector<8x8x32xf32> to vector<64x32xf32>
    %c2_237 = arith.constant 2 : index
    %c0_238 = arith.constant 0 : index
    %c0_239 = arith.constant 0 : index
    %235 = vector.load %arg17[%c2_237, %c0_238, %c0_239] : memref<10x10x32xf32, #tpu.memory_space<vmem>>, vector<8x8x32xf32>
    %236 = vector.shape_cast %235 : vector<8x8x32xf32> to vector<64x32xf32>
    %c2_240 = arith.constant 2 : index
    %c1_241 = arith.constant 1 : index
    %c0_242 = arith.constant 0 : index
    %237 = vector.load %arg17[%c2_240, %c1_241, %c0_242] : memref<10x10x32xf32, #tpu.memory_space<vmem>>, vector<8x8x32xf32>
    %238 = vector.shape_cast %237 : vector<8x8x32xf32> to vector<64x32xf32>
    %c2_243 = arith.constant 2 : index
    %c2_244 = arith.constant 2 : index
    %c0_245 = arith.constant 0 : index
    %239 = vector.load %arg17[%c2_243, %c2_244, %c0_245] : memref<10x10x32xf32, #tpu.memory_space<vmem>>, vector<8x8x32xf32>
    %240 = vector.shape_cast %239 : vector<8x8x32xf32> to vector<64x32xf32>
    %241 = tpu.concatenate %224, %226, %228, %230, %232, %234, %236, %238, %240 in 1 : vector<64x32xf32>, vector<64x32xf32>, vector<64x32xf32>, vector<64x32xf32>, vector<64x32xf32>, vector<64x32xf32>, vector<64x32xf32>, vector<64x32xf32>, vector<64x32xf32> -> vector<64x288xf32>
    %c0_246 = arith.constant 0 : index
    %c0_247 = arith.constant 0 : index
    %242 = vector.load %arg6[%c0_246, %c0_247] : memref<288x16xf32, #tpu.memory_space<vmem>>, vector<288x16xf32>
    %cst_248 = arith.constant dense<0.000000e+00> : vector<64x16xf32>
    %243 = tpu.matmul %241, %242, %cst_248 {dimension_numbers = #tpu.dot_dimension_numbers<[1], [0], [0], [1], [0, 0, 1, 1], [], []>} : vector<64x288xf32>, vector<288x16xf32>, vector<64x16xf32> -> vector<64x16xf32>
    %c0_249 = arith.constant 0 : index
    %c0_250 = arith.constant 0 : index
    %244 = vector.load %arg7[%c0_249, %c0_250] : memref<1x16xf32, #tpu.memory_space<vmem>>, vector<1x16xf32>
    %245 = vector.broadcast %244 : vector<1x16xf32> to vector<64x16xf32>
    %246 = arith.addf %243, %245 : vector<64x16xf32>
    %c1_251 = arith.constant 1 : index
    %c1_252 = arith.constant 1 : index
    %c0_253 = arith.constant 0 : index
    %247 = vector.load %arg17[%c1_251, %c1_252, %c0_253] : memref<10x10x32xf32, #tpu.memory_space<vmem>>, vector<8x8x32xf32>
    tpu.vector_store %arg17[%c1_251, %c1_252, %c0_253], %221 {strides = array<i32>} : memref<10x10x32xf32, #tpu.memory_space<vmem>>, vector<8x8x32xf32>,
    %c0_254 = arith.constant 0 : index
    %c0_255 = arith.constant 0 : index
    %c0_256 = arith.constant 0 : index
    %248 = vector.load %arg17[%c0_254, %c0_255, %c0_256] : memref<10x10x32xf32, #tpu.memory_space<vmem>>, vector<8x8x32xf32>
    %249 = vector.shape_cast %248 : vector<8x8x32xf32> to vector<64x32xf32>
    %c0_257 = arith.constant 0 : index
    %c1_258 = arith.constant 1 : index
    %c0_259 = arith.constant 0 : index
    %250 = vector.load %arg17[%c0_257, %c1_258, %c0_259] : memref<10x10x32xf32, #tpu.memory_space<vmem>>, vector<8x8x32xf32>
    %251 = vector.shape_cast %250 : vector<8x8x32xf32> to vector<64x32xf32>
    %c0_260 = arith.constant 0 : index
    %c2_261 = arith.constant 2 : index
    %c0_262 = arith.constant 0 : index
    %252 = vector.load %arg17[%c0_260, %c2_261, %c0_262] : memref<10x10x32xf32, #tpu.memory_space<vmem>>, vector<8x8x32xf32>
    %253 = vector.shape_cast %252 : vector<8x8x32xf32> to vector<64x32xf32>
    %c1_263 = arith.constant 1 : index
    %c0_264 = arith.constant 0 : index
    %c0_265 = arith.constant 0 : index
    %254 = vector.load %arg17[%c1_263, %c0_264, %c0_265] : memref<10x10x32xf32, #tpu.memory_space<vmem>>, vector<8x8x32xf32>
    %255 = vector.shape_cast %254 : vector<8x8x32xf32> to vector<64x32xf32>
    %c1_266 = arith.constant 1 : index
    %c1_267 = arith.constant 1 : index
    %c0_268 = arith.constant 0 : index
    %256 = vector.load %arg17[%c1_266, %c1_267, %c0_268] : memref<10x10x32xf32, #tpu.memory_space<vmem>>, vector<8x8x32xf32>
    %257 = vector.shape_cast %256 : vector<8x8x32xf32> to vector<64x32xf32>
    %c1_269 = arith.constant 1 : index
    %c2_270 = arith.constant 2 : index
    %c0_271 = arith.constant 0 : index
    %258 = vector.load %arg17[%c1_269, %c2_270, %c0_271] : memref<10x10x32xf32, #tpu.memory_space<vmem>>, vector<8x8x32xf32>
    %259 = vector.shape_cast %258 : vector<8x8x32xf32> to vector<64x32xf32>
    %c2_272 = arith.constant 2 : index
    %c0_273 = arith.constant 0 : index
    %c0_274 = arith.constant 0 : index
    %260 = vector.load %arg17[%c2_272, %c0_273, %c0_274] : memref<10x10x32xf32, #tpu.memory_space<vmem>>, vector<8x8x32xf32>
    %261 = vector.shape_cast %260 : vector<8x8x32xf32> to vector<64x32xf32>
    %c2_275 = arith.constant 2 : index
    %c1_276 = arith.constant 1 : index
    %c0_277 = arith.constant 0 : index
    %262 = vector.load %arg17[%c2_275, %c1_276, %c0_277] : memref<10x10x32xf32, #tpu.memory_space<vmem>>, vector<8x8x32xf32>
    %263 = vector.shape_cast %262 : vector<8x8x32xf32> to vector<64x32xf32>
    %c2_278 = arith.constant 2 : index
    %c2_279 = arith.constant 2 : index
    %c0_280 = arith.constant 0 : index
    %264 = vector.load %arg17[%c2_278, %c2_279, %c0_280] : memref<10x10x32xf32, #tpu.memory_space<vmem>>, vector<8x8x32xf32>
    %265 = vector.shape_cast %264 : vector<8x8x32xf32> to vector<64x32xf32>
    %266 = tpu.concatenate %249, %251, %253, %255, %257, %259, %261, %263, %265 in 1 : vector<64x32xf32>, vector<64x32xf32>, vector<64x32xf32>, vector<64x32xf32>, vector<64x32xf32>, vector<64x32xf32>, vector<64x32xf32>, vector<64x32xf32>, vector<64x32xf32> -> vector<64x288xf32>
    %c0_281 = arith.constant 0 : index
    %c0_282 = arith.constant 0 : index
    %267 = vector.load %arg8[%c0_281, %c0_282] : memref<288x68xf32, #tpu.memory_space<vmem>>, vector<288x68xf32>
    %cst_283 = arith.constant dense<0.000000e+00> : vector<64x68xf32>
    %268 = tpu.matmul %266, %267, %cst_283 {dimension_numbers = #tpu.dot_dimension_numbers<[1], [0], [0], [1], [0, 0, 1, 1], [], []>} : vector<64x288xf32>, vector<288x68xf32>, vector<64x68xf32> -> vector<64x68xf32>
    %c0_284 = arith.constant 0 : index
    %c0_285 = arith.constant 0 : index
    %269 = vector.load %arg9[%c0_284, %c0_285] : memref<1x68xf32, #tpu.memory_space<vmem>>, vector<1x68xf32>
    %270 = vector.broadcast %269 : vector<1x68xf32> to vector<64x68xf32>
    %271 = arith.addf %268, %270 : vector<64x68xf32>
    %c0_286 = arith.constant 0 : index
    %c0_287 = arith.constant 0 : index
    %272 = vector.load %arg11[%c0_286, %c0_287] : memref<1x1xf32, #tpu.memory_space<vmem>>, vector<1x1xf32>
    %273 = vector.extract %272[0, 0] : f32 from vector<1x1xf32>
    %274 = vector.broadcast %273 : f32 to vector<64x68xf32>
    %275 = arith.mulf %271, %274 : vector<64x68xf32>
    %276 = vector.extract_strided_slice %275 {offsets = [0, 0], sizes = [64, 17], strides = [1, 1]} : vector<64x68xf32> to vector<64x17xf32>
    %277 = vector.extract_strided_slice %275 {offsets = [0, 17], sizes = [64, 17], strides = [1, 1]} : vector<64x68xf32> to vector<64x17xf32>
    %278 = vector.extract_strided_slice %275 {offsets = [0, 34], sizes = [64, 17], strides = [1, 1]} : vector<64x68xf32> to vector<64x17xf32>
    %279 = vector.extract_strided_slice %275 {offsets = [0, 51], sizes = [64, 17], strides = [1, 1]} : vector<64x68xf32> to vector<64x17xf32>
    %280 = tpu.concatenate %276, %277, %278, %279 in 0 : vector<64x17xf32>, vector<64x17xf32>, vector<64x17xf32>, vector<64x17xf32> -> vector<256x17xf32>
    %cst_288 = arith.constant dense<0xFF800000> : vector<256xf32>
    %281 = vector.multi_reduction <maximumf>, %280, %cst_288 [1] : vector<256x17xf32> to vector<256xf32>
    %282 = vector.shape_cast %281 : vector<256xf32> to vector<256x1xf32>
    %283 = vector.broadcast %282 : vector<256x1xf32> to vector<256x17xf32>
    %284 = arith.subf %280, %283 : vector<256x17xf32>
    %285 = math.exp %284 : vector<256x17xf32>
    %cst_289 = arith.constant dense<0.000000e+00> : vector<256xf32>
    %286 = vector.multi_reduction <add>, %285, %cst_289 [1] : vector<256x17xf32> to vector<256xf32>
    %287 = vector.shape_cast %286 : vector<256xf32> to vector<256x1xf32>
    %288 = tpu.reciprocal %287 {approx = true} : vector<256x1xf32> -> vector<256x1xf32>
    %289 = vector.broadcast %288 : vector<256x1xf32> to vector<256x17xf32>
    %290 = arith.mulf %285, %289 : vector<256x17xf32>
    %291 = tpu.iota {dimensions = array<i32: 1>} : vector<256x17xi32>
    %cst_290 = arith.constant dense<0xFF800000> : vector<256xf32>
    %292 = vector.multi_reduction <maximumf>, %290, %cst_290 [1] : vector<256x17xf32> to vector<256xf32>
    %293 = vector.shape_cast %292 : vector<256xf32> to vector<256x1xf32>
    %294 = vector.broadcast %293 : vector<256x1xf32> to vector<256x17xf32>
    %295 = arith.cmpf oeq, %290, %294 : vector<256x17xf32>
    %c17_i32 = arith.constant 17 : i32
    %296 = vector.broadcast %c17_i32 : i32 to vector<256x17xi32>
    %297 = arith.select %295, %291, %296 : vector<256x17xi1>, vector<256x17xi32>
    %cst_291 = arith.constant dense<2147483647> : vector<256xi32>
    %298 = vector.multi_reduction <minsi>, %297, %cst_291 [1] : vector<256x17xi32> to vector<256xi32>
    %299 = vector.shape_cast %298 : vector<256xi32> to vector<256x1xi32>
    %300 = vector.broadcast %299 : vector<256x1xi32> to vector<256x17xi32>
    %301 = arith.cmpi eq, %291, %300 : vector<256x17xi32>
    %cst_292 = arith.constant -1.000000e+00 : f32
    %302 = vector.broadcast %cst_292 : f32 to vector<256x17xf32>
    %303 = arith.select %301, %302, %290 : vector<256x17xi1>, vector<256x17xf32>
    %cst_293 = arith.constant dense<0xFF800000> : vector<256xf32>
    %304 = vector.multi_reduction <maximumf>, %303, %cst_293 [1] : vector<256x17xf32> to vector<256xf32>
    %305 = vector.shape_cast %304 : vector<256xf32> to vector<256x1xf32>
    %306 = vector.broadcast %305 : vector<256x1xf32> to vector<256x17xf32>
    %307 = arith.cmpf oeq, %303, %306 : vector<256x17xf32>
    %c17_i32_294 = arith.constant 17 : i32
    %308 = vector.broadcast %c17_i32_294 : i32 to vector<256x17xi32>
    %309 = arith.select %307, %291, %308 : vector<256x17xi1>, vector<256x17xi32>
    %cst_295 = arith.constant dense<2147483647> : vector<256xi32>
    %310 = vector.multi_reduction <minsi>, %309, %cst_295 [1] : vector<256x17xi32> to vector<256xi32>
    %311 = vector.shape_cast %310 : vector<256xi32> to vector<256x1xi32>
    %312 = vector.broadcast %311 : vector<256x1xi32> to vector<256x17xi32>
    %313 = arith.cmpi eq, %291, %312 : vector<256x17xi32>
    %cst_296 = arith.constant -1.000000e+00 : f32
    %314 = vector.broadcast %cst_296 : f32 to vector<256x17xf32>
    %315 = arith.select %313, %314, %303 : vector<256x17xi1>, vector<256x17xf32>
    %cst_297 = arith.constant dense<0xFF800000> : vector<256xf32>
    %316 = vector.multi_reduction <maximumf>, %315, %cst_297 [1] : vector<256x17xf32> to vector<256xf32>
    %317 = vector.shape_cast %316 : vector<256xf32> to vector<256x1xf32>
    %318 = vector.broadcast %317 : vector<256x1xf32> to vector<256x17xf32>
    %319 = arith.cmpf oeq, %315, %318 : vector<256x17xf32>
    %c17_i32_298 = arith.constant 17 : i32
    %320 = vector.broadcast %c17_i32_298 : i32 to vector<256x17xi32>
    %321 = arith.select %319, %291, %320 : vector<256x17xi1>, vector<256x17xi32>
    %cst_299 = arith.constant dense<2147483647> : vector<256xi32>
    %322 = vector.multi_reduction <minsi>, %321, %cst_299 [1] : vector<256x17xi32> to vector<256xi32>
    %323 = vector.shape_cast %322 : vector<256xi32> to vector<256x1xi32>
    %324 = vector.broadcast %323 : vector<256x1xi32> to vector<256x17xi32>
    %325 = arith.cmpi eq, %291, %324 : vector<256x17xi32>
    %cst_300 = arith.constant -1.000000e+00 : f32
    %326 = vector.broadcast %cst_300 : f32 to vector<256x17xf32>
    %327 = arith.select %325, %326, %315 : vector<256x17xi1>, vector<256x17xf32>
    %cst_301 = arith.constant dense<0xFF800000> : vector<256xf32>
    %328 = vector.multi_reduction <maximumf>, %327, %cst_301 [1] : vector<256x17xf32> to vector<256xf32>
    %329 = vector.shape_cast %328 : vector<256xf32> to vector<256x1xf32>
    %330 = tpu.concatenate %293, %305, %317, %329 in 1 : vector<256x1xf32>, vector<256x1xf32>, vector<256x1xf32>, vector<256x1xf32> -> vector<256x4xf32>
    %cst_302 = arith.constant dense<0.000000e+00> : vector<256xf32>
    %331 = vector.multi_reduction <add>, %330, %cst_302 [1] : vector<256x4xf32> to vector<256xf32>
    %332 = vector.shape_cast %331 : vector<256xf32> to vector<256x1xf32>
    %cst_303 = arith.constant 4.000000e+00 : f32
    %333 = vector.broadcast %cst_303 : f32 to vector<256x1xf32>
    %334 = arith.divf %332, %333 : vector<256x1xf32>
    %335 = tpu.concatenate %330, %334 in 1 : vector<256x4xf32>, vector<256x1xf32> -> vector<256x5xf32>
    %336 = vector.extract_strided_slice %335 {offsets = [0, 0], sizes = [64, 5], strides = [1, 1]} : vector<256x5xf32> to vector<64x5xf32>
    %337 = vector.extract_strided_slice %335 {offsets = [64, 0], sizes = [64, 5], strides = [1, 1]} : vector<256x5xf32> to vector<64x5xf32>
    %338 = vector.extract_strided_slice %335 {offsets = [128, 0], sizes = [64, 5], strides = [1, 1]} : vector<256x5xf32> to vector<64x5xf32>
    %339 = vector.extract_strided_slice %335 {offsets = [192, 0], sizes = [64, 5], strides = [1, 1]} : vector<256x5xf32> to vector<64x5xf32>
    %340 = tpu.concatenate %336, %337, %338, %339 in 1 : vector<64x5xf32>, vector<64x5xf32>, vector<64x5xf32>, vector<64x5xf32> -> vector<64x20xf32>
    %c0_304 = arith.constant 0 : index
    %c0_305 = arith.constant 0 : index
    %341 = vector.load %arg12[%c0_304, %c0_305] : memref<20x32xf32, #tpu.memory_space<vmem>>, vector<20x32xf32>
    %cst_306 = arith.constant dense<0.000000e+00> : vector<64x32xf32>
    %342 = tpu.matmul %340, %341, %cst_306 {dimension_numbers = #tpu.dot_dimension_numbers<[1], [0], [0], [1], [0, 0, 1, 1], [], []>} : vector<64x20xf32>, vector<20x32xf32>, vector<64x32xf32> -> vector<64x32xf32>
    %c0_307 = arith.constant 0 : index
    %c0_308 = arith.constant 0 : index
    %343 = vector.load %arg13[%c0_307, %c0_308] : memref<1x32xf32, #tpu.memory_space<vmem>>, vector<1x32xf32>
    %344 = vector.broadcast %343 : vector<1x32xf32> to vector<64x32xf32>
    %345 = arith.addf %342, %344 : vector<64x32xf32>
    %cst_309 = arith.constant 0.000000e+00 : f32
    %346 = vector.broadcast %cst_309 : f32 to vector<64x32xf32>
    %347 = arith.maximumf %345, %346 : vector<64x32xf32>
    %c0_310 = arith.constant 0 : index
    %c0_311 = arith.constant 0 : index
    %348 = vector.load %arg14[%c0_310, %c0_311] : memref<32x1xf32, #tpu.memory_space<vmem>>, vector<32x1xf32>
    %cst_312 = arith.constant dense<0.000000e+00> : vector<64x1xf32>
    %349 = tpu.matmul %347, %348, %cst_312 {dimension_numbers = #tpu.dot_dimension_numbers<[1], [0], [0], [1], [0, 0, 1, 1], [], []>} : vector<64x32xf32>, vector<32x1xf32>, vector<64x1xf32> -> vector<64x1xf32>
    %c0_313 = arith.constant 0 : index
    %c0_314 = arith.constant 0 : index
    %350 = vector.load %arg15[%c0_313, %c0_314] : memref<1x1xf32, #tpu.memory_space<vmem>>, vector<1x1xf32>
    %351 = vector.broadcast %350 : vector<1x1xf32> to vector<64x1xf32>
    %352 = arith.addf %349, %351 : vector<64x1xf32>
    %353 = arith.negf %246 : vector<64x16xf32>
    %354 = math.exp %353 : vector<64x16xf32>
    %cst_315 = arith.constant 1.000000e+00 : f32
    %355 = vector.broadcast %cst_315 : f32 to vector<64x16xf32>
    %356 = arith.addf %355, %354 : vector<64x16xf32>
    %357 = arith.divf %355, %356 : vector<64x16xf32>
    %358 = arith.negf %352 : vector<64x1xf32>
    %359 = math.exp %358 : vector<64x1xf32>
    %cst_316 = arith.constant 1.000000e+00 : f32
    %360 = vector.broadcast %cst_316 : f32 to vector<64x1xf32>
    %361 = arith.addf %360, %359 : vector<64x1xf32>
    %362 = arith.divf %360, %361 : vector<64x1xf32>
    %363 = vector.broadcast %362 : vector<64x1xf32> to vector<64x16xf32>
    %364 = arith.mulf %357, %363 : vector<64x16xf32>
    %cst_317 = arith.constant 0.000000e+00 : f32
    %365 = vector.broadcast %cst_317 : f32 to vector<64x44xf32>
    %366 = tpu.concatenate %364, %275, %365 in 1 : vector<64x16xf32>, vector<64x68xf32>, vector<64x44xf32> -> vector<64x128xf32>
    %c0_318 = arith.constant 0 : index
    %c0_319 = arith.constant 0 : index
    %c0_320 = arith.constant 0 : index
    %367 = vector.load %arg16[%c0_318, %c0_319, %c0_320] : memref<1x64x128xf32, #tpu.memory_space<vmem>>, vector<1x64x128xf32>
    %368 = vector.shape_cast %367 : vector<1x64x128xf32> to vector<64x128xf32>
    %369 = vector.shape_cast %366 : vector<64x128xf32> to vector<1x64x128xf32>
    tpu.vector_store %arg16[%c0_318, %c0_319, %c0_320], %369 {strides = array<i32>} : memref<1x64x128xf32, #tpu.memory_space<vmem>>, vector<1x64x128xf32>,
    return
  }
  func.func @transform_0(%arg0: i32) -> (i32, i32, i32, i32) {
    %c0_i32 = arith.constant 0 : i32
    %c0_i32_0 = arith.constant 0 : i32
    %c0_i32_1 = arith.constant 0 : i32
    %c0_i32_2 = arith.constant 0 : i32
    return %arg0, %c0_i32, %c0_i32_0, %c0_i32_1 : i32, i32, i32, i32
  }
  func.func @transform_1(%arg0: i32) -> (i32, i32, i32) {
    %c0_i32 = arith.constant 0 : i32
    %c0_i32_0 = arith.constant 0 : i32
    %c0_i32_1 = arith.constant 0 : i32
    %c0_i32_2 = arith.constant 0 : i32
    return %c0_i32, %c0_i32_0, %c0_i32_1 : i32, i32, i32
  }
  func.func @transform_2(%arg0: i32) -> (i32, i32, i32) {
    %c0_i32 = arith.constant 0 : i32
    %c0_i32_0 = arith.constant 0 : i32
    %c0_i32_1 = arith.constant 0 : i32
    %c0_i32_2 = arith.constant 0 : i32
    return %c0_i32, %c0_i32_0, %c0_i32_1 : i32, i32, i32
  }
  func.func @transform_3(%arg0: i32) -> (i32, i32, i32) {
    %c0_i32 = arith.constant 0 : i32
    %c0_i32_0 = arith.constant 0 : i32
    %c0_i32_1 = arith.constant 0 : i32
    %c0_i32_2 = arith.constant 0 : i32
    return %c0_i32, %c0_i32_0, %c0_i32_1 : i32, i32, i32
  }
  func.func @transform_4(%arg0: i32) -> (i32, i32, i32) {
    %c0_i32 = arith.constant 0 : i32
    %c0_i32_0 = arith.constant 0 : i32
    %c0_i32_1 = arith.constant 0 : i32
    %c0_i32_2 = arith.constant 0 : i32
    return %c0_i32, %c0_i32_0, %c0_i32_1 : i32, i32, i32
  }
  func.func @transform_5(%arg0: i32) -> (i32, i32) {
    %c0_i32 = arith.constant 0 : i32
    %c0_i32_0 = arith.constant 0 : i32
    %c0_i32_1 = arith.constant 0 : i32
    return %c0_i32, %c0_i32_0 : i32, i32
  }
  func.func @transform_6(%arg0: i32) -> (i32, i32) {
    %c0_i32 = arith.constant 0 : i32
    %c0_i32_0 = arith.constant 0 : i32
    %c0_i32_1 = arith.constant 0 : i32
    return %c0_i32, %c0_i32_0 : i32, i32
  }
  func.func @transform_7(%arg0: i32) -> (i32, i32) {
    %c0_i32 = arith.constant 0 : i32
    %c0_i32_0 = arith.constant 0 : i32
    %c0_i32_1 = arith.constant 0 : i32
    return %c0_i32, %c0_i32_0 : i32, i32
  }
  func.func @transform_8(%arg0: i32) -> (i32, i32) {
    %c0_i32 = arith.constant 0 : i32
    %c0_i32_0 = arith.constant 0 : i32
    %c0_i32_1 = arith.constant 0 : i32
    return %c0_i32, %c0_i32_0 : i32, i32
  }
  func.func @transform_9(%arg0: i32) -> (i32, i32) {
    %c0_i32 = arith.constant 0 : i32
    %c0_i32_0 = arith.constant 0 : i32
    %c0_i32_1 = arith.constant 0 : i32
    return %c0_i32, %c0_i32_0 : i32, i32
  }
  func.func @transform_10(%arg0: i32) -> (i32, i32) {
    %c0_i32 = arith.constant 0 : i32
    %c0_i32_0 = arith.constant 0 : i32
    %c0_i32_1 = arith.constant 0 : i32
    return %c0_i32, %c0_i32_0 : i32, i32
  }
  func.func @transform_11(%arg0: i32) -> (i32, i32) {
    %c0_i32 = arith.constant 0 : i32
    %c0_i32_0 = arith.constant 0 : i32
    %c0_i32_1 = arith.constant 0 : i32
    return %c0_i32, %c0_i32_0 : i32, i32
  }
  func.func @transform_12(%arg0: i32) -> (i32, i32) {
    %c0_i32 = arith.constant 0 : i32
    %c0_i32_0 = arith.constant 0 : i32
    %c0_i32_1 = arith.constant 0 : i32
    return %c0_i32, %c0_i32_0 : i32, i32
  }
  func.func @transform_13(%arg0: i32) -> (i32, i32) {
    %c0_i32 = arith.constant 0 : i32
    %c0_i32_0 = arith.constant 0 : i32
    %c0_i32_1 = arith.constant 0 : i32
    return %c0_i32, %c0_i32_0 : i32, i32
  }
  func.func @transform_14(%arg0: i32) -> (i32, i32) {
    %c0_i32 = arith.constant 0 : i32
    %c0_i32_0 = arith.constant 0 : i32
    %c0_i32_1 = arith.constant 0 : i32
    return %c0_i32, %c0_i32_0 : i32, i32
  }
  func.func @transform_15(%arg0: i32) -> (i32, i32, i32) {
    %c0_i32 = arith.constant 0 : i32
    %c0_i32_0 = arith.constant 0 : i32
    %c0_i32_1 = arith.constant 0 : i32
    return %arg0, %c0_i32, %c0_i32_0 : i32, i32, i32
  }
}

</mosaic_0001>

<llo_original>
// kernel: tpu_custom_call.1
$region0: #{tpu_custom_call.1}
  #allocation0 [shape = 'u32[]', space=smem, size = 0x4, offset = 0x4, fixed_abs, tag = 'smem constant byte address 0x4 - core index']
  #allocation1 [shape = 'u32[144,128]{1,0:T(1,128)}', space=vmem, size = 0x12000, scoped, tag = 'internal scratch']
  #allocation2 [shape = 'f32[10,10,32]{2,1,0:T(8,128)}', space=vmem, size = 0x14000, scoped, tag = 'scratch operand']
  #allocation3 [shape = 'f32[1,1]{1,0:T(1,128)S(1)}', space=vmem, size = 0x200, scoped, tag = 'scoped memory for tpu_custom_call.1']
  #allocation4 [shape = 'f32[1,1]{1,0:T(1,128)S(1)}', space=vmem, size = 0x200, scoped, tag = 'scoped memory for tpu_custom_call.1']
  %s0 = inlined_call_operand.vmem [shape: f32[2,8,8,16], index: 0, kind: input, shape index: {}]
  %s1 = inlined_call_operand.vmem [shape: f32[4,288,32], index: 1, kind: input, shape index: {}]
  %s2 = inlined_call_operand.vmem [shape: f32[4,1,32], index: 2, kind: input, shape index: {}]
  %s3 = inlined_call_operand.vmem [shape: f32[4,1,32], index: 3, kind: input, shape index: {}]
  %s4 = inlined_call_operand.vmem [shape: f32[4,1,32], index: 4, kind: input, shape index: {}]
  %s5 = inlined_call_operand.vmem [shape: f32[288,16], index: 5, kind: input, shape index: {}]
  %s6 = inlined_call_operand.vmem [shape: f32[1,16], index: 6, kind: input, shape index: {}]
  %s7 = inlined_call_operand.vmem [shape: f32[288,68], index: 7, kind: input, shape index: {}]
  %s8 = inlined_call_operand.vmem [shape: f32[1,68], index: 8, kind: input, shape index: {}]
  %s9 = inlined_call_operand.vmem [shape: f32[32,32], index: 9, kind: input, shape index: {}]
  %s10 = inlined_call_operand.<no memory space> [shape: f32[1,1], index: 10, kind: input, shape index: {}]
  %s11 = inlined_call_operand.vmem [shape: f32[20,32], index: 11, kind: input, shape index: {}]
  %s12 = inlined_call_operand.vmem [shape: f32[1,32], index: 12, kind: input, shape index: {}]
  %s13 = inlined_call_operand.vmem [shape: f32[32,1], index: 13, kind: input, shape index: {}]
  %s14 = inlined_call_operand.<no memory space> [shape: f32[1,1], index: 14, kind: input, shape index: {}]
  %s15 = inlined_call_operand.hbm [shape: f32[2,64,128], index: 15, kind: output, shape index: {}]
  %s16 = sld [smem:[#allocation0]]
  $region93: #{tpu_custom_call.1} parent=0
    _
  %s18 = ssub.s32 1, %s16
  %s19 = scalar_select 0, %s18, %s16
  %v20 = vstv %s10
  %21 = vst [vmem:[#allocation3] sm:$0x1] %v20
  %v22 = vstv %s14
  %23 = vst [vmem:[#allocation4] sm:$0x1] %v22
  $region1: #{tpu_custom_call.1} parent=0
    #allocation5 [shape = 'u8[65536]{0}', space=vmem, size = 0x10000, scoped, tag = 'output window, operand 0']
    #allocation6 [shape = 's32[2]{0}', space=sflag, size = 0x8, scoped, tag = 'scoped memory for tpu_custom_call.1']
    %24 = vsyncpa [#allocation6], 0
    %s25 = scalar_lea.sflag [#allocation6], 1
    %26 = vsyncpa %s25, 0
    loop: start=0, step=1, limit=4
    $region2: #{tpu_custom_call.1} parent=1 // loop_pre_header
      _
    $region3: #{tpu_custom_call.1} parent=1 // loop_header
      %s28 = sphi 0, %s32
      %p29 = scmp.ge.s32.totalorder %s28, 4
      %s38 = sphi 0, %s40
      %s41 = sphi 0, %s38
      %s42 = sphi 0, %s41
      %s58 = sphi 0, %s42
      %s62 = sphi 0, %s62
      %s64 = sphi 0, %s62
      %s65 = sphi 0, %s64
      %s79 = sphi 0, %s65
      %s83 = sphi 0, %s83
      %s85 = sphi 0, %s83
      %s86 = sphi 0, %s85
      %s100 = sphi 0, %s86
      %s104 = sphi 0, %s104
      %s106 = sphi 0, %s104
      %s107 = sphi 0, %s106
      %s121 = sphi 0, %s107
      %s125 = sphi 0, %s125
      %s127 = sphi 0, %s125
      %s128 = sphi 0, %s127
      %s142 = sphi 0, %s128
      %s146 = sphi 0, %s146
      %s148 = sphi 0, %s146
      %s149 = sphi 0, %s148
      %s163 = sphi 0, %s149
      %s167 = sphi 0, %s167
      %s169 = sphi 0, %s167
      %s170 = sphi 0, %s169
      %s184 = sphi 0, %s170
      %s188 = sphi 0, %s188
      %s190 = sphi 0, %s188
      %s191 = sphi 0, %s190
      %s205 = sphi 0, %s191
      %s209 = sphi 0, %s209
      %s211 = sphi 0, %s209
      %s212 = sphi 0, %s211
      %s226 = sphi 0, %s212
      %s230 = sphi 0, %s230
      %s232 = sphi 0, %s230
      %s233 = sphi 0, %s232
      %s247 = sphi 0, %s233
      %s251 = sphi 0, %s251
      %s253 = sphi 0, %s251
      %s254 = sphi 0, %s253
      %s268 = sphi 0, %s254
      %s272 = sphi 0, %s272
      %s274 = sphi 0, %s272
      %s275 = sphi 0, %s274
      %s289 = sphi 0, %s275
      %s293 = sphi 0, %s293
      %s295 = sphi 0, %s293
      %s296 = sphi 0, %s295
      %s310 = sphi 0, %s296
      %s314 = sphi 0, %s314
      %s316 = sphi 0, %s314
      %s317 = sphi 0, %s316
      %s331 = sphi 0, %s317
      %s335 = sphi 0, %s335
      %s337 = sphi 0, %s335
      %s338 = sphi 0, %s337
      %s352 = sphi 0, %s338
      %s358 = sphi 0, %s360
      %s361 = sphi 0, %s358
      %s362 = sphi 0, %s361
      %s378 = sphi 0, %s362
    $region4: #{tpu_custom_call.1} parent=1 // loop_header_branch
      %31 = sbr.rel (%p29) target = $region8
    $region5: #{tpu_custom_call.1} parent=1 // loop_body
      %s33 = ssub.s32 %s28, 1
      %s34 = ssub.s32 %s28, 2
      %s35 = sadd.s32 %s28, 1
      %s36 = ssub.s32 %s28, %s35
      %p37 = scmp.eq.s32.totalorder %s36, 0
      %s39 = sadd.s32 %s38, 1
      %s40 = scalar_select %p37, %s38, %s39
      %p43 = pneg %p37
      %p44 = scmp.eq.s32.totalorder %s28, 1
      %p45 = por %p43, %p44
      %p46 = scmp.ne.s32.totalorder %s38, %s41
      %p47 = scmp.eq.s32.totalorder %s28, 0
      %p48 = por %p46, %p47
      %p49 = scmp.ne.s32.totalorder %s38, %s41
      %p50 = scmp.eq.s32.totalorder %s33, 1
      %p51 = por %p49, %p50
      %p52 = scmp.ne.s32.totalorder %s41, %s42
      %p53 = scmp.eq.s32.totalorder %s33, 0
      %p54 = por %p52, %p53
      %p55 = scmp.ne.s32.totalorder %s41, %s42
      %p56 = scmp.eq.s32.totalorder %s34, 1
      %p57 = por %p55, %p56
      %p59 = scmp.ne.s32.totalorder %s42, %s58
      %p60 = scmp.eq.s32.totalorder %s34, 0
      %p61 = por %p59, %p60
      %s63 = sadd.s32 %s62, 1
      %p66 = scmp.eq.s32.totalorder %s28, 1
      %p67 = scmp.ne.s32.totalorder %s62, %s64
      %p68 = scmp.eq.s32.totalorder %s28, 0
      %p69 = por %p67, %p68
      %p70 = scmp.ne.s32.totalorder %s62, %s64
      %p71 = scmp.eq.s32.totalorder %s33, 1
      %p72 = por %p70, %p71
      %p73 = scmp.ne.s32.totalorder %s64, %s65
      %p74 = scmp.eq.s32.totalorder %s33, 0
      %p75 = por %p73, %p74
      %p76 = scmp.ne.s32.totalorder %s64, %s65
      %p77 = scmp.eq.s32.totalorder %s34, 1
      %p78 = por %p76, %p77
      %p80 = scmp.ne.s32.totalorder %s65, %s79
      %p81 = scmp.eq.s32.totalorder %s34, 0
      %p82 = por %p80, %p81
      %s84 = sadd.s32 %s83, 1
      %p87 = scmp.eq.s32.totalorder %s28, 1
      %p88 = scmp.ne.s32.totalorder %s83, %s85
      %p89 = scmp.eq.s32.totalorder %s28, 0
      %p90 = por %p88, %p89
      %p91 = scmp.ne.s32.totalorder %s83, %s85
      %p92 = scmp.eq.s32.totalorder %s33, 1
      %p93 = por %p91, %p92
      %p94 = scmp.ne.s32.totalorder %s85, %s86
      %p95 = scmp.eq.s32.totalorder %s33, 0
      %p96 = por %p94, %p95
      %p97 = scmp.ne.s32.totalorder %s85, %s86
      %p98 = scmp.eq.s32.totalorder %s34, 1
      %p99 = por %p97, %p98
      %p101 = scmp.ne.s32.totalorder %s86, %s100
      %p102 = scmp.eq.s32.totalorder %s34, 0
      %p103 = por %p101, %p102
      %s105 = sadd.s32 %s104, 1
      %p108 = scmp.eq.s32.totalorder %s28, 1
      %p109 = scmp.ne.s32.totalorder %s104, %s106
      %p110 = scmp.eq.s32.totalorder %s28, 0
      %p111 = por %p109, %p110
      %p112 = scmp.ne.s32.totalorder %s104, %s106
      %p113 = scmp.eq.s32.totalorder %s33, 1
      %p114 = por %p112, %p113
      %p115 = scmp.ne.s32.totalorder %s106, %s107
      %p116 = scmp.eq.s32.totalorder %s33, 0
      %p117 = por %p115, %p116
      %p118 = scmp.ne.s32.totalorder %s106, %s107
      %p119 = scmp.eq.s32.totalorder %s34, 1
      %p120 = por %p118, %p119
      %p122 = scmp.ne.s32.totalorder %s107, %s121
      %p123 = scmp.eq.s32.totalorder %s34, 0
      %p124 = por %p122, %p123
      %s126 = sadd.s32 %s125, 1
      %p129 = scmp.eq.s32.totalorder %s28, 1
      %p130 = scmp.ne.s32.totalorder %s125, %s127
      %p131 = scmp.eq.s32.totalorder %s28, 0
      %p132 = por %p130, %p131
      %p133 = scmp.ne.s32.totalorder %s125, %s127
      %p134 = scmp.eq.s32.totalorder %s33, 1
      %p135 = por %p133, %p134
      %p136 = scmp.ne.s32.totalorder %s127, %s128
      %p137 = scmp.eq.s32.totalorder %s33, 0
      %p138 = por %p136, %p137
      %p139 = scmp.ne.s32.totalorder %s127, %s128
      %p140 = scmp.eq.s32.totalorder %s34, 1
      %p141 = por %p139, %p140
      %p143 = scmp.ne.s32.totalorder %s128, %s142
      %p144 = scmp.eq.s32.totalorder %s34, 0
      %p145 = por %p143, %p144
      %s147 = sadd.s32 %s146, 1
      %p150 = scmp.eq.s32.totalorder %s28, 1
      %p151 = scmp.ne.s32.totalorder %s146, %s148
      %p152 = scmp.eq.s32.totalorder %s28, 0
      %p153 = por %p151, %p152
      %p154 = scmp.ne.s32.totalorder %s146, %s148
      %p155 = scmp.eq.s32.totalorder %s33, 1
      %p156 = por %p154, %p155
      %p157 = scmp.ne.s32.totalorder %s148, %s149
      %p158 = scmp.eq.s32.totalorder %s33, 0
      %p159 = por %p157, %p158
      %p160 = scmp.ne.s32.totalorder %s148, %s149
      %p161 = scmp.eq.s32.totalorder %s34, 1
      %p162 = por %p160, %p161
      %p164 = scmp.ne.s32.totalorder %s149, %s163
      %p165 = scmp.eq.s32.totalorder %s34, 0
      %p166 = por %p164, %p165
      %s168 = sadd.s32 %s167, 1
      %p171 = scmp.eq.s32.totalorder %s28, 1
      %p172 = scmp.ne.s32.totalorder %s167, %s169
      %p173 = scmp.eq.s32.totalorder %s28, 0
      %p174 = por %p172, %p173
      %p175 = scmp.ne.s32.totalorder %s167, %s169
      %p176 = scmp.eq.s32.totalorder %s33, 1
      %p177 = por %p175, %p176
      %p178 = scmp.ne.s32.totalorder %s169, %s170
      %p179 = scmp.eq.s32.totalorder %s33, 0
      %p180 = por %p178, %p179
      %p181 = scmp.ne.s32.totalorder %s169, %s170
      %p182 = scmp.eq.s32.totalorder %s34, 1
      %p183 = por %p181, %p182
      %p185 = scmp.ne.s32.totalorder %s170, %s184
      %p186 = scmp.eq.s32.totalorder %s34, 0
      %p187 = por %p185, %p186
      %s189 = sadd.s32 %s188, 1
      %p192 = scmp.eq.s32.totalorder %s28, 1
      %p193 = scmp.ne.s32.totalorder %s188, %s190
      %p194 = scmp.eq.s32.totalorder %s28, 0
      %p195 = por %p193, %p194
      %p196 = scmp.ne.s32.totalorder %s188, %s190
      %p197 = scmp.eq.s32.totalorder %s33, 1
      %p198 = por %p196, %p197
      %p199 = scmp.ne.s32.totalorder %s190, %s191
      %p200 = scmp.eq.s32.totalorder %s33, 0
      %p201 = por %p199, %p200
      %p202 = scmp.ne.s32.totalorder %s190, %s191
      %p203 = scmp.eq.s32.totalorder %s34, 1
      %p204 = por %p202, %p203
      %p206 = scmp.ne.s32.totalorder %s191, %s205
      %p207 = scmp.eq.s32.totalorder %s34, 0
      %p208 = por %p206, %p207
      %s210 = sadd.s32 %s209, 1
      %p213 = scmp.eq.s32.totalorder %s28, 1
      %p214 = scmp.ne.s32.totalorder %s209, %s211
      %p215 = scmp.eq.s32.totalorder %s28, 0
      %p216 = por %p214, %p215
      %p217 = scmp.ne.s32.totalorder %s209, %s211
      %p218 = scmp.eq.s32.totalorder %s33, 1
      %p219 = por %p217, %p218
      %p220 = scmp.ne.s32.totalorder %s211, %s212
      %p221 = scmp.eq.s32.totalorder %s33, 0
      %p222 = por %p220, %p221
      %p223 = scmp.ne.s32.totalorder %s211, %s212
      %p224 = scmp.eq.s32.totalorder %s34, 1
      %p225 = por %p223, %p224
      %p227 = scmp.ne.s32.totalorder %s212, %s226
      %p228 = scmp.eq.s32.totalorder %s34, 0
      %p229 = por %p227, %p228
      %s231 = sadd.s32 %s230, 1
      %p234 = scmp.eq.s32.totalorder %s28, 1
      %p235 = scmp.ne.s32.totalorder %s230, %s232
      %p236 = scmp.eq.s32.totalorder %s28, 0
      %p237 = por %p235, %p236
      %p238 = scmp.ne.s32.totalorder %s230, %s232
      %p239 = scmp.eq.s32.totalorder %s33, 1
      %p240 = por %p238, %p239
      %p241 = scmp.ne.s32.totalorder %s232, %s233
      %p242 = scmp.eq.s32.totalorder %s33, 0
      %p243 = por %p241, %p242
      %p244 = scmp.ne.s32.totalorder %s232, %s233
      %p245 = scmp.eq.s32.totalorder %s34, 1
      %p246 = por %p244, %p245
      %p248 = scmp.ne.s32.totalorder %s233, %s247
      %p249 = scmp.eq.s32.totalorder %s34, 0
      %p250 = por %p248, %p249
      %s252 = sadd.s32 %s251, 1
      %p255 = scmp.eq.s32.totalorder %s28, 1
      %p256 = scmp.ne.s32.totalorder %s251, %s253
      %p257 = scmp.eq.s32.totalorder %s28, 0
      %p258 = por %p256, %p257
      %p259 = scmp.ne.s32.totalorder %s251, %s253
      %p260 = scmp.eq.s32.totalorder %s33, 1
      %p261 = por %p259, %p260
      %p262 = scmp.ne.s32.totalorder %s253, %s254
      %p263 = scmp.eq.s32.totalorder %s33, 0
      %p264 = por %p262, %p263
      %p265 = scmp.ne.s32.totalorder %s253, %s254
      %p266 = scmp.eq.s32.totalorder %s34, 1
      %p267 = por %p265, %p266
      %p269 = scmp.ne.s32.totalorder %s254, %s268
      %p270 = scmp.eq.s32.totalorder %s34, 0
      %p271 = por %p269, %p270
      %s273 = sadd.s32 %s272, 1
      %p276 = scmp.eq.s32.totalorder %s28, 1
      %p277 = scmp.ne.s32.totalorder %s272, %s274
      %p278 = scmp.eq.s32.totalorder %s28, 0
      %p279 = por %p277, %p278
      %p280 = scmp.ne.s32.totalorder %s272, %s274
      %p281 = scmp.eq.s32.totalorder %s33, 1
      %p282 = por %p280, %p281
      %p283 = scmp.ne.s32.totalorder %s274, %s275
      %p284 = scmp.eq.s32.totalorder %s33, 0
      %p285 = por %p283, %p284
      %p286 = scmp.ne.s32.totalorder %s274, %s275
      %p287 = scmp.eq.s32.totalorder %s34, 1
      %p288 = por %p286, %p287
      %p290 = scmp.ne.s32.totalorder %s275, %s289
      %p291 = scmp.eq.s32.totalorder %s34, 0
      %p292 = por %p290, %p291
      %s294 = sadd.s32 %s293, 1
      %p297 = scmp.eq.s32.totalorder %s28, 1
      %p298 = scmp.ne.s32.totalorder %s293, %s295
      %p299 = scmp.eq.s32.totalorder %s28, 0
      %p300 = por %p298, %p299
      %p301 = scmp.ne.s32.totalorder %s293, %s295
      %p302 = scmp.eq.s32.totalorder %s33, 1
      %p303 = por %p301, %p302
      %p304 = scmp.ne.s32.totalorder %s295, %s296
      %p305 = scmp.eq.s32.totalorder %s33, 0
      %p306 = por %p304, %p305
      %p307 = scmp.ne.s32.totalorder %s295, %s296
      %p308 = scmp.eq.s32.totalorder %s34, 1
      %p309 = por %p307, %p308
      %p311 = scmp.ne.s32.totalorder %s296, %s310
      %p312 = scmp.eq.s32.totalorder %s34, 0
      %p313 = por %p311, %p312
      %s315 = sadd.s32 %s314, 1
      %p318 = scmp.eq.s32.totalorder %s28, 1
      %p319 = scmp.ne.s32.totalorder %s314, %s316
      %p320 = scmp.eq.s32.totalorder %s28, 0
      %p321 = por %p319, %p320
      %p322 = scmp.ne.s32.totalorder %s314, %s316
      %p323 = scmp.eq.s32.totalorder %s33, 1
      %p324 = por %p322, %p323
      %p325 = scmp.ne.s32.totalorder %s316, %s317
      %p326 = scmp.eq.s32.totalorder %s33, 0
      %p327 = por %p325, %p326
      %p328 = scmp.ne.s32.totalorder %s316, %s317
      %p329 = scmp.eq.s32.totalorder %s34, 1
      %p330 = por %p328, %p329
      %p332 = scmp.ne.s32.totalorder %s317, %s331
      %p333 = scmp.eq.s32.totalorder %s34, 0
      %p334 = por %p332, %p333
      %s336 = sadd.s32 %s335, 1
      %p339 = scmp.eq.s32.totalorder %s28, 1
      %p340 = scmp.ne.s32.totalorder %s335, %s337
      %p341 = scmp.eq.s32.totalorder %s28, 0
      %p342 = por %p340, %p341
      %p343 = scmp.ne.s32.totalorder %s335, %s337
      %p344 = scmp.eq.s32.totalorder %s33, 1
      %p345 = por %p343, %p344
      %p346 = scmp.ne.s32.totalorder %s337, %s338
      %p347 = scmp.eq.s32.totalorder %s33, 0
      %p348 = por %p346, %p347
      %p349 = scmp.ne.s32.totalorder %s337, %s338
      %p350 = scmp.eq.s32.totalorder %s34, 1
      %p351 = por %p349, %p350
      %p353 = scmp.ne.s32.totalorder %s338, %s352
      %p354 = scmp.eq.s32.totalorder %s34, 0
      %p355 = por %p353, %p354
      %s356 = ssub.s32 %s28, %s35
      %p357 = scmp.eq.s32.totalorder %s356, 0
      %s359 = sadd.s32 %s358, 1
      %s360 = scalar_select %p357, %s358, %s359
      %p363 = pneg %p357
      %p364 = scmp.eq.s32.totalorder %s28, 1
      %p365 = por %p363, %p364
      %p366 = scmp.ne.s32.totalorder %s358, %s361
      %p367 = scmp.eq.s32.totalorder %s28, 0
      %p368 = por %p366, %p367
      %p369 = scmp.ne.s32.totalorder %s358, %s361
      %p370 = scmp.eq.s32.totalorder %s33, 1
      %p371 = por %p369, %p370
      %p372 = scmp.ne.s32.totalorder %s361, %s362
      %p373 = scmp.eq.s32.totalorder %s33, 0
      %p374 = por %p372, %p373
      %p375 = scmp.ne.s32.totalorder %s361, %s362
      %p376 = scmp.eq.s32.totalorder %s34, 1
      %p377 = por %p375, %p376
      %p379 = scmp.ne.s32.totalorder %s362, %s378
      %p380 = scmp.eq.s32.totalorder %s34, 0
      %p381 = por %p379, %p380
      %p382 = scmp.le.s32.totalorder 1, %s28
      %p383 = scmp.lt.s32.totalorder %s28, 3
      %p384 = pnand %p382, %p383
      %p385 = pneg %p384
      // Predicated region
      $region9: #{tpu_custom_call.1} parent=5 // pred_check
        _
      $region10: #{tpu_custom_call.1} parent=5 // pred_check_branch
        %387 = sbr.rel (%p384) target = $region12
      $region11: #{tpu_custom_call.1} parent=5 // pred_region
        %s388 = ssub.s32 %s28, 1
        // Predicated region
        $region13: #{tpu_custom_call.1} parent=11 // pred_check
          %p389 = pneg %p75
        $region14: #{tpu_custom_call.1} parent=11 // pred_check_branch
          %391 = sbr.rel (%p389) target = $region16
        $region15: #{tpu_custom_call.1} parent=11 // pred_region
          _
        $region16: #{tpu_custom_call.1} parent=11 // pred_fallthru
          _
        // Predicated region
        $region17: #{tpu_custom_call.1} parent=11 // pred_check
          %p392 = pneg %p96
        $region18: #{tpu_custom_call.1} parent=11 // pred_check_branch
          %394 = sbr.rel (%p392) target = $region20
        $region19: #{tpu_custom_call.1} parent=11 // pred_region
          _
        $region20: #{tpu_custom_call.1} parent=11 // pred_fallthru
          _
        // Predicated region
        $region21: #{tpu_custom_call.1} parent=11 // pred_check
          %p395 = pneg %p117
        $region22: #{tpu_custom_call.1} parent=11 // pred_check_branch
          %397 = sbr.rel (%p395) target = $region24
        $region23: #{tpu_custom_call.1} parent=11 // pred_region
          _
        $region24: #{tpu_custom_call.1} parent=11 // pred_fallthru
          _
        // Predicated region
        $region25: #{tpu_custom_call.1} parent=11 // pred_check
          %p398 = pneg %p138
        $region26: #{tpu_custom_call.1} parent=11 // pred_check_branch
          %400 = sbr.rel (%p398) target = $region28
        $region27: #{tpu_custom_call.1} parent=11 // pred_region
          _
        $region28: #{tpu_custom_call.1} parent=11 // pred_fallthru
          _
        // Predicated region
        $region29: #{tpu_custom_call.1} parent=11 // pred_check
          %p401 = pneg %p159
        $region30: #{tpu_custom_call.1} parent=11 // pred_check_branch
          %403 = sbr.rel (%p401) target = $region32
        $region31: #{tpu_custom_call.1} parent=11 // pred_region
          _
        $region32: #{tpu_custom_call.1} parent=11 // pred_fallthru
          _
        // Predicated region
        $region33: #{tpu_custom_call.1} parent=11 // pred_check
          %p404 = pneg %p180
        $region34: #{tpu_custom_call.1} parent=11 // pred_check_branch
          %406 = sbr.rel (%p404) target = $region36
        $region35: #{tpu_custom_call.1} parent=11 // pred_region
          _
        $region36: #{tpu_custom_call.1} parent=11 // pred_fallthru
          _
        // Predicated region
        $region37: #{tpu_custom_call.1} parent=11 // pred_check
          %p407 = pneg %p201
        $region38: #{tpu_custom_call.1} parent=11 // pred_check_branch
          %409 = sbr.rel (%p407) target = $region40
        $region39: #{tpu_custom_call.1} parent=11 // pred_region
          _
        $region40: #{tpu_custom_call.1} parent=11 // pred_fallthru
          _
        // Predicated region
        $region41: #{tpu_custom_call.1} parent=11 // pred_check
          %p410 = pneg %p222
        $region42: #{tpu_custom_call.1} parent=11 // pred_check_branch
          %412 = sbr.rel (%p410) target = $region44
        $region43: #{tpu_custom_call.1} parent=11 // pred_region
          _
        $region44: #{tpu_custom_call.1} parent=11 // pred_fallthru
          _
        // Predicated region
        $region45: #{tpu_custom_call.1} parent=11 // pred_check
          %p413 = pneg %p243
        $region46: #{tpu_custom_call.1} parent=11 // pred_check_branch
          %415 = sbr.rel (%p413) target = $region48
        $region47: #{tpu_custom_call.1} parent=11 // pred_region
          _
        $region48: #{tpu_custom_call.1} parent=11 // pred_fallthru
          _
        // Predicated region
        $region49: #{tpu_custom_call.1} parent=11 // pred_check
          %p416 = pneg %p264
        $region50: #{tpu_custom_call.1} parent=11 // pred_check_branch
          %418 = sbr.rel (%p416) target = $region52
        $region51: #{tpu_custom_call.1} parent=11 // pred_region
          _
        $region52: #{tpu_custom_call.1} parent=11 // pred_fallthru
          _
        // Predicated region
        $region53: #{tpu_custom_call.1} parent=11 // pred_check
          %p419 = pneg %p285
        $region54: #{tpu_custom_call.1} parent=11 // pred_check_branch
          %421 = sbr.rel (%p419) target = $region56
        $region55: #{tpu_custom_call.1} parent=11 // pred_region
          _
        $region56: #{tpu_custom_call.1} parent=11 // pred_fallthru
          _
        // Predicated region
        $region57: #{tpu_custom_call.1} parent=11 // pred_check
          %p422 = pneg %p306
        $region58: #{tpu_custom_call.1} parent=11 // pred_check_branch
          %424 = sbr.rel (%p422) target = $region60
        $region59: #{tpu_custom_call.1} parent=11 // pred_region
          _
        $region60: #{tpu_custom_call.1} parent=11 // pred_fallthru
          _
        // Predicated region
        $region61: #{tpu_custom_call.1} parent=11 // pred_check
          %p425 = pneg %p327
        $region62: #{tpu_custom_call.1} parent=11 // pred_check_branch
          %427 = sbr.rel (%p425) target = $region64
        $region63: #{tpu_custom_call.1} parent=11 // pred_region
          _
        $region64: #{tpu_custom_call.1} parent=11 // pred_fallthru
          _
        // Predicated region
        $region65: #{tpu_custom_call.1} parent=11 // pred_check
          %p428 = pneg %p348
        $region66: #{tpu_custom_call.1} parent=11 // pred_check_branch
          %430 = sbr.rel (%p428) target = $region68
        $region67: #{tpu_custom_call.1} parent=11 // pred_region
          _
        $region68: #{tpu_custom_call.1} parent=11 // pred_fallthru
          _
      $region12: #{tpu_custom_call.1} parent=5 // pred_fallthru
        _
      %p431 = scmp.lt.s32.totalorder %s28, 2
      // Predicated region
      $region69: #{tpu_custom_call.1} parent=5 // pred_check
        %p432 = pneg %p431
      $region70: #{tpu_custom_call.1} parent=5 // pred_check_branch
        %434 = sbr.rel (%p432) target = $region72
      $region71: #{tpu_custom_call.1} parent=5 // pred_region
        // Predicated region
        $region73: #{tpu_custom_call.1} parent=71 // pred_check
          %p435 = pneg %p48
        $region74: #{tpu_custom_call.1} parent=71 // pred_check_branch
          %437 = sbr.rel (%p435) target = $region76
        $region75: #{tpu_custom_call.1} parent=71 // pred_region
          %p438 = scmp.lt.s32.totalorder %s28, 1
          %s439 = scalar_select %p438, %s28, 1
          %s440 = smul.addr %s439, 8
          %s441 = smul.addr %s440, 8
          %s442 = scalar_lea.vmem %s0, %s441
        $region76: #{tpu_custom_call.1} parent=71 // pred_fallthru
          _
      $region72: #{tpu_custom_call.1} parent=5 // pred_fallthru
        _
      %p443 = scmp.le.s32.totalorder 1, %s28
      %p444 = scmp.lt.s32.totalorder %s28, 3
      %p445 = pnand %p443, %p444
      %p446 = pneg %p445
      // Predicated region
      $region77: #{tpu_custom_call.1} parent=5 // pred_check
        _
      $region78: #{tpu_custom_call.1} parent=5 // pred_check_branch
        %448 = sbr.rel (%p445) target = $region80
      $region79: #{tpu_custom_call.1} parent=5 // pred_region
        %s449 = ssub.s32 %s28, 1
        %p450 = scmp.lt.s32.totalorder %s33, 1
        %s451 = scalar_select %p450, %s33, 1
        %s452 = smul.addr %s451, 8
        %s453 = smul.addr %s452, 8
        %s454 = scalar_lea.vmem %s0, %s453
        %p455 = pneg %p54
        %p456 = pneg %p51
        %p457 = pneg %p75
        %p458 = pneg %p72
        %p459 = pneg %p96
        %p460 = pneg %p93
        %p461 = pneg %p117
        %p462 = pneg %p114
        %p463 = pneg %p138
        %p464 = pneg %p135
        %p465 = pneg %p159
        %p466 = pneg %p156
        %p467 = pneg %p180
        %p468 = pneg %p177
        %p469 = pneg %p201
        %p470 = pneg %p198
        %p471 = pneg %p222
        %p472 = pneg %p219
        %p473 = pneg %p243
        %p474 = pneg %p240
        %p475 = pneg %p264
        %p476 = pneg %p261
        %p477 = pneg %p285
        %p478 = pneg %p282
        %p479 = pneg %p306
        %p480 = pneg %p303
        %p481 = pneg %p327
        %p482 = pneg %p324
        %p483 = pneg %p348
        %p484 = pneg %p345
        %p485 = pneg %p374
        %p486 = pneg %p371
        %s487 = sand.u32 %s361, 1
        %s488 = scalar_lea.sflag [#allocation6], %s487
        %s489 = sand.u32 %s361, 1
        %s490 = smul.addr %s489, 64
        %s491 = scalar_lea.vmem [#allocation5], %s490
        %p492 = scmp.lt.s32.totalorder %s33, 1
        %s493 = scalar_select %p492, %s33, 1
        %s494 = smul.addr %s493, 8
        %s495 = smul.addr %s494, 8
        %s496 = scalar_lea.vmem %s0, %s495
        %vm497 = vcmask 261120
        %498 = vst.msk [vmem:[#allocation2] sm:$0xff] %vm497, 0.0
        %vm499 = vcmask 254976
        %500 = vst.msk [vmem:[#allocation2 + $0x8] sm:$0x3] %vm499, 0.0
        %501 = vst.msk [vmem:[#allocation2 + $0x10] sm:$0xff] %vm497, 0.0
        %502 = vst.msk [vmem:[#allocation2 + $0x18] sm:$0x3] %vm499, 0.0
        %503 = vst.msk [vmem:[#allocation2 + $0x20] sm:$0xff] %vm497, 0.0
        %504 = vst.msk [vmem:[#allocation2 + $0x28] sm:$0x3] %vm499, 0.0
        %505 = vst.msk [vmem:[#allocation2 + $0x30] sm:$0xff] %vm497, 0.0
        %506 = vst.msk [vmem:[#allocation2 + $0x38] sm:$0x3] %vm499, 0.0
        %507 = vst.msk [vmem:[#allocation2 + $0x40] sm:$0xff] %vm497, 0.0
        %508 = vst.msk [vmem:[#allocation2 + $0x48] sm:$0x3] %vm499, 0.0
        %509 = vst.msk [vmem:[#allocation2 + $0x50] sm:$0xff] %vm497, 0.0
        %510 = vst.msk [vmem:[#allocation2 + $0x58] sm:$0x3] %vm499, 0.0
        %511 = vst.msk [vmem:[#allocation2 + $0x60] sm:$0xff] %vm497, 0.0
        %512 = vst.msk [vmem:[#allocation2 + $0x68] sm:$0x3] %vm499, 0.0
        %513 = vst.msk [vmem:[#allocation2 + $0x70] sm:$0xff] %vm497, 0.0
        %514 = vst.msk [vmem:[#allocation2 + $0x78] sm:$0x3] %vm499, 0.0
        %515 = vst.msk [vmem:[#allocation2 + $0x80] sm:$0xff] %vm497, 0.0
        %516 = vst.msk [vmem:[#allocation2 + $0x88] sm:$0x3] %vm499, 0.0
        %517 = vst.msk [vmem:[#allocation2 + $0x90] sm:$0xff] %vm497, 0.0
        %518 = vst.msk [vmem:[#allocation2 + $0x98] sm:$0x3] %vm499, 0.0
        %v519 = vld [vmem:[%s496] sm:$0xff]
        %v520 = vld [vmem:[%s496 + $0x8] sm:$0xff]
        %v521 = vld [vmem:[%s496 + $0x10] sm:$0xff]
        %v522 = vld [vmem:[%s496 + $0x18] sm:$0xff]
        %v523 = vld [vmem:[%s496 + $0x20] sm:$0xff]
        %v524 = vld [vmem:[%s496 + $0x28] sm:$0xff]
        %v525 = vld [vmem:[%s496 + $0x30] sm:$0xff]
        %v526 = vld [vmem:[%s496 + $0x38] sm:$0xff]
        %vm527 = vcmask 130048
        %v528 = vsel %vm527, %v519, 0.0
        %v529 = vsel %vm527, %v520, 0.0
        %v530 = vsel %vm527, %v521, 0.0
        %v531 = vsel %vm527, %v522, 0.0
        %v532 = vsel %vm527, %v523, 0.0
        %v533 = vsel %vm527, %v524, 0.0
        %v534 = vsel %vm527, %v525, 0.0
        %v535 = vsel %vm527, %v526, 0.0
        %s536 = scalar_lea.vmem [#allocation2], 16
        %537 = vst.msk [vmem:[%s536 + $0x1] sm:$0xff] %vm497, %v528
        %538 = vst.msk [vmem:[%s536 + $0x11] sm:$0xff] %vm497, %v529
        %539 = vst.msk [vmem:[%s536 + $0x21] sm:$0xff] %vm497, %v530
        %540 = vst.msk [vmem:[%s536 + $0x31] sm:$0xff] %vm497, %v531
        %541 = vst.msk [vmem:[%s536 + $0x41] sm:$0xff] %vm497, %v532
        %542 = vst.msk [vmem:[%s536 + $0x51] sm:$0xff] %vm497, %v533
        %543 = vst.msk [vmem:[%s536 + $0x61] sm:$0xff] %vm497, %v534
        %544 = vst.msk [vmem:[%s536 + $0x71] sm:$0xff] %vm497, %v535
        %v545 = vld [vmem:[#allocation2] sm:$0xff]
        %v546 = vld [vmem:[#allocation2 + $0x10] sm:$0xff]
        %v547 = vld [vmem:[#allocation2 + $0x20] sm:$0xff]
        %v548 = vld [vmem:[#allocation2 + $0x30] sm:$0xff]
        %v549 = vld [vmem:[#allocation2 + $0x40] sm:$0xff]
        %v550 = vld [vmem:[#allocation2 + $0x50] sm:$0xff]
        %v551 = vld [vmem:[#allocation2 + $0x60] sm:$0xff]
        %v552 = vld [vmem:[#allocation2 + $0x70] sm:$0xff]
        %v553 = vld [vmem:[#allocation2 + $0x1] sm:$0xff]
        %v554 = vld [vmem:[#allocation2 + $0x11] sm:$0xff]
        %v555 = vld [vmem:[#allocation2 + $0x21] sm:$0xff]
        %v556 = vld [vmem:[#allocation2 + $0x31] sm:$0xff]
        %v557 = vld [vmem:[#allocation2 + $0x41] sm:$0xff]
        %v558 = vld [vmem:[#allocation2 + $0x51] sm:$0xff]
        %v559 = vld [vmem:[#allocation2 + $0x61] sm:$0xff]
        %v560 = vld [vmem:[#allocation2 + $0x71] sm:$0xff]
        %v561 = vld [vmem:[#allocation2 + $0x2] sm:$0xff]
        %v562 = vld [vmem:[#allocation2 + $0x12] sm:$0xff]
        %v563 = vld [vmem:[#allocation2 + $0x22] sm:$0xff]
        %v564 = vld [vmem:[#allocation2 + $0x32] sm:$0xff]
        %v565 = vld [vmem:[#allocation2 + $0x42] sm:$0xff]
        %v566 = vld [vmem:[#allocation2 + $0x52] sm:$0xff]
        %v567 = vld [vmem:[#allocation2 + $0x62] sm:$0xff]
        %v568 = vld [vmem:[#allocation2 + $0x72] sm:$0xff]
        %v569 = vld [vmem:[%s536] sm:$0xff]
        %v570 = vld [vmem:[%s536 + $0x10] sm:$0xff]
        %v571 = vld [vmem:[%s536 + $0x20] sm:$0xff]
        %v572 = vld [vmem:[%s536 + $0x30] sm:$0xff]
        %v573 = vld [vmem:[%s536 + $0x40] sm:$0xff]
        %v574 = vld [vmem:[%s536 + $0x50] sm:$0xff]
        %v575 = vld [vmem:[%s536 + $0x60] sm:$0xff]
        %v576 = vld [vmem:[%s536 + $0x70] sm:$0xff]
        %v577 = vld [vmem:[%s536 + $0x1] sm:$0xff]
        %v578 = vld [vmem:[%s536 + $0x11] sm:$0xff]
        %v579 = vld [vmem:[%s536 + $0x21] sm:$0xff]
        %v580 = vld [vmem:[%s536 + $0x31] sm:$0xff]
        %v581 = vld [vmem:[%s536 + $0x41] sm:$0xff]
        %v582 = vld [vmem:[%s536 + $0x51] sm:$0xff]
        %v583 = vld [vmem:[%s536 + $0x61] sm:$0xff]
        %v584 = vld [vmem:[%s536 + $0x71] sm:$0xff]
        %v585 = vld [vmem:[%s536 + $0x2] sm:$0xff]
        %v586 = vld [vmem:[%s536 + $0x12] sm:$0xff]
        %v587 = vld [vmem:[%s536 + $0x22] sm:$0xff]
        %v588 = vld [vmem:[%s536 + $0x32] sm:$0xff]
        %v589 = vld [vmem:[%s536 + $0x42] sm:$0xff]
        %v590 = vld [vmem:[%s536 + $0x52] sm:$0xff]
        %v591 = vld [vmem:[%s536 + $0x62] sm:$0xff]
        %v592 = vld [vmem:[%s536 + $0x72] sm:$0xff]
        %s593 = scalar_lea.vmem [#allocation2], 32
        %v594 = vld [vmem:[%s593] sm:$0xff]
        %v595 = vld [vmem:[%s593 + $0x10] sm:$0xff]
        %v596 = vld [vmem:[%s593 + $0x20] sm:$0xff]
        %v597 = vld [vmem:[%s593 + $0x30] sm:$0xff]
        %v598 = vld [vmem:[%s593 + $0x40] sm:$0xff]
        %v599 = vld [vmem:[%s593 + $0x50] sm:$0xff]
        %v600 = vld [vmem:[%s593 + $0x60] sm:$0xff]
        %v601 = vld [vmem:[%s593 + $0x70] sm:$0xff]
        %v602 = vld [vmem:[%s593 + $0x1] sm:$0xff]
        %v603 = vld [vmem:[%s593 + $0x11] sm:$0xff]
        %v604 = vld [vmem:[%s593 + $0x21] sm:$0xff]
        %v605 = vld [vmem:[%s593 + $0x31] sm:$0xff]
        %v606 = vld [vmem:[%s593 + $0x41] sm:$0xff]
        %v607 = vld [vmem:[%s593 + $0x51] sm:$0xff]
        %v608 = vld [vmem:[%s593 + $0x61] sm:$0xff]
        %v609 = vld [vmem:[%s593 + $0x71] sm:$0xff]
        %v610 = vld [vmem:[%s593 + $0x2] sm:$0xff]
        %v611 = vld [vmem:[%s593 + $0x12] sm:$0xff]
        %v612 = vld [vmem:[%s593 + $0x22] sm:$0xff]
        %v613 = vld [vmem:[%s593 + $0x32] sm:$0xff]
        %v614 = vld [vmem:[%s593 + $0x42] sm:$0xff]
        %v615 = vld [vmem:[%s593 + $0x52] sm:$0xff]
        %v616 = vld [vmem:[%s593 + $0x62] sm:$0xff]
        %v617 = vld [vmem:[%s593 + $0x72] sm:$0xff]
        %626 = vrot.lane.b32.xlu0 %v553, 32
        %v627 = vpop.permute.xlu0 %626
        %628 = vrot.lane.b32.xlu0 %v554, 32
        %v629 = vpop.permute.xlu0 %628
        %630 = vrot.lane.b32.xlu0 %v555, 32
        %v631 = vpop.permute.xlu0 %630
        %632 = vrot.lane.b32.xlu0 %v556, 32
        %v633 = vpop.permute.xlu0 %632
        %634 = vrot.lane.b32.xlu0 %v557, 32
        %v635 = vpop.permute.xlu0 %634
        %636 = vrot.lane.b32.xlu0 %v558, 32
        %v637 = vpop.permute.xlu0 %636
        %638 = vrot.lane.b32.xlu0 %v559, 32
        %v639 = vpop.permute.xlu0 %638
        %640 = vrot.lane.b32.xlu0 %v560, 32
        %v641 = vpop.permute.xlu0 %640
        %658 = vrot.lane.b32.xlu0 %v561, 64
        %v659 = vpop.permute.xlu0 %658
        %660 = vrot.lane.b32.xlu0 %v562, 64
        %v661 = vpop.permute.xlu0 %660
        %662 = vrot.lane.b32.xlu0 %v563, 64
        %v663 = vpop.permute.xlu0 %662
        %664 = vrot.lane.b32.xlu0 %v564, 64
        %v665 = vpop.permute.xlu0 %664
        %666 = vrot.lane.b32.xlu0 %v565, 64
        %v667 = vpop.permute.xlu0 %666
        %668 = vrot.lane.b32.xlu0 %v566, 64
        %v669 = vpop.permute.xlu0 %668
        %670 = vrot.lane.b32.xlu0 %v567, 64
        %v671 = vpop.permute.xlu0 %670
        %672 = vrot.lane.b32.xlu0 %v568, 64
        %v673 = vpop.permute.xlu0 %672
        %690 = vrot.lane.b32.xlu0 %v569, 96
        %v691 = vpop.permute.xlu0 %690
        %692 = vrot.lane.b32.xlu0 %v570, 96
        %v693 = vpop.permute.xlu0 %692
        %694 = vrot.lane.b32.xlu0 %v571, 96
        %v695 = vpop.permute.xlu0 %694
        %696 = vrot.lane.b32.xlu0 %v572, 96
        %v697 = vpop.permute.xlu0 %696
        %698 = vrot.lane.b32.xlu0 %v573, 96
        %v699 = vpop.permute.xlu0 %698
        %700 = vrot.lane.b32.xlu0 %v574, 96
        %v701 = vpop.permute.xlu0 %700
        %702 = vrot.lane.b32.xlu0 %v575, 96
        %v703 = vpop.permute.xlu0 %702
        %704 = vrot.lane.b32.xlu0 %v576, 96
        %v705 = vpop.permute.xlu0 %704
        %722 = vrot.lane.b32.xlu0 %v585, 32
        %v723 = vpop.permute.xlu0 %722
        %724 = vrot.lane.b32.xlu0 %v586, 32
        %v725 = vpop.permute.xlu0 %724
        %726 = vrot.lane.b32.xlu0 %v587, 32
        %v727 = vpop.permute.xlu0 %726
        %728 = vrot.lane.b32.xlu0 %v588, 32
        %v729 = vpop.permute.xlu0 %728
        %730 = vrot.lane.b32.xlu0 %v589, 32
        %v731 = vpop.permute.xlu0 %730
        %732 = vrot.lane.b32.xlu0 %v590, 32
        %v733 = vpop.permute.xlu0 %732
        %734 = vrot.lane.b32.xlu0 %v591, 32
        %v735 = vpop.permute.xlu0 %734
        %736 = vrot.lane.b32.xlu0 %v592, 32
        %v737 = vpop.permute.xlu0 %736
        %754 = vrot.lane.b32.xlu0 %v594, 64
        %v755 = vpop.permute.xlu0 %754
        %756 = vrot.lane.b32.xlu0 %v595, 64
        %v757 = vpop.permute.xlu0 %756
        %758 = vrot.lane.b32.xlu0 %v596, 64
        %v759 = vpop.permute.xlu0 %758
        %760 = vrot.lane.b32.xlu0 %v597, 64
        %v761 = vpop.permute.xlu0 %760
        %762 = vrot.lane.b32.xlu0 %v598, 64
        %v763 = vpop.permute.xlu0 %762
        %764 = vrot.lane.b32.xlu0 %v599, 64
        %v765 = vpop.permute.xlu0 %764
        %766 = vrot.lane.b32.xlu0 %v600, 64
        %v767 = vpop.permute.xlu0 %766
        %768 = vrot.lane.b32.xlu0 %v601, 64
        %v769 = vpop.permute.xlu0 %768
        %786 = vrot.lane.b32.xlu0 %v602, 96
        %v787 = vpop.permute.xlu0 %786
        %788 = vrot.lane.b32.xlu0 %v603, 96
        %v789 = vpop.permute.xlu0 %788
        %790 = vrot.lane.b32.xlu0 %v604, 96
        %v791 = vpop.permute.xlu0 %790
        %792 = vrot.lane.b32.xlu0 %v605, 96
        %v793 = vpop.permute.xlu0 %792
        %794 = vrot.lane.b32.xlu0 %v606, 96
        %v795 = vpop.permute.xlu0 %794
        %796 = vrot.lane.b32.xlu0 %v607, 96
        %v797 = vpop.permute.xlu0 %796
        %798 = vrot.lane.b32.xlu0 %v608, 96
        %v799 = vpop.permute.xlu0 %798
        %800 = vrot.lane.b32.xlu0 %v609, 96
        %v801 = vpop.permute.xlu0 %800
        %v810 = vsel %vm497, %v545, %v627
        %v811 = vsel %vm497, %v546, %v629
        %v812 = vsel %vm497, %v547, %v631
        %v813 = vsel %vm497, %v548, %v633
        %v814 = vsel %vm497, %v549, %v635
        %v815 = vsel %vm497, %v550, %v637
        %v816 = vsel %vm497, %v551, %v639
        %v817 = vsel %vm497, %v552, %v641
        %vm818 = vcmask 523264
        %v819 = vsel %vm818, %v810, %v659
        %v820 = vsel %vm818, %v811, %v661
        %v821 = vsel %vm818, %v812, %v663
        %v822 = vsel %vm818, %v813, %v665
        %v823 = vsel %vm818, %v814, %v667
        %v824 = vsel %vm818, %v815, %v669
        %v825 = vsel %vm818, %v816, %v671
        %v826 = vsel %vm818, %v817, %v673
        %vm827 = vcmask 785408
        %v828 = vsel %vm827, %v819, %v691
        %v829 = vsel %vm827, %v820, %v693
        %v830 = vsel %vm827, %v821, %v695
        %v831 = vsel %vm827, %v822, %v697
        %v832 = vsel %vm827, %v823, %v699
        %v833 = vsel %vm827, %v824, %v701
        %v834 = vsel %vm827, %v825, %v703
        %v835 = vsel %vm827, %v826, %v705
        %v836 = vsel %vm497, %v577, %v723
        %v837 = vsel %vm497, %v578, %v725
        %v838 = vsel %vm497, %v579, %v727
        %v839 = vsel %vm497, %v580, %v729
        %v840 = vsel %vm497, %v581, %v731
        %v841 = vsel %vm497, %v582, %v733
        %v842 = vsel %vm497, %v583, %v735
        %v843 = vsel %vm497, %v584, %v737
        %v844 = vsel %vm818, %v836, %v755
        %v845 = vsel %vm818, %v837, %v757
        %v846 = vsel %vm818, %v838, %v759
        %v847 = vsel %vm818, %v839, %v761
        %v848 = vsel %vm818, %v840, %v763
        %v849 = vsel %vm818, %v841, %v765
        %v850 = vsel %vm818, %v842, %v767
        %v851 = vsel %vm818, %v843, %v769
        %v852 = vsel %vm827, %v844, %v787
        %v853 = vsel %vm827, %v845, %v789
        %v854 = vsel %vm827, %v846, %v791
        %v855 = vsel %vm827, %v847, %v793
        %v856 = vsel %vm827, %v848, %v795
        %v857 = vsel %vm827, %v849, %v797
        %v858 = vsel %vm827, %v850, %v799
        %v859 = vsel %vm827, %v851, %v801
        %v860 = vld [vmem:[%s1] sm:$0xff]
        %v861 = vld [vmem:[%s1 + $0x8] sm:$0xff]
        %v862 = vld [vmem:[%s1 + $0x10] sm:$0xff]
        %v863 = vld [vmem:[%s1 + $0x18] sm:$0xff]
        %v864 = vld [vmem:[%s1 + $0x20] sm:$0xff]
        %v865 = vld [vmem:[%s1 + $0x28] sm:$0xff]
        %v866 = vld [vmem:[%s1 + $0x30] sm:$0xff]
        %v867 = vld [vmem:[%s1 + $0x38] sm:$0xff]
        %v868 = vld [vmem:[%s1 + $0x40] sm:$0xff]
        %v869 = vld [vmem:[%s1 + $0x48] sm:$0xff]
        %v870 = vld [vmem:[%s1 + $0x50] sm:$0xff]
        %v871 = vld [vmem:[%s1 + $0x58] sm:$0xff]
        %v872 = vld [vmem:[%s1 + $0x60] sm:$0xff]
        %v873 = vld [vmem:[%s1 + $0x68] sm:$0xff]
        %v874 = vld [vmem:[%s1 + $0x70] sm:$0xff]
        %v875 = vld [vmem:[%s1 + $0x78] sm:$0xff]
        %v876 = vld [vmem:[%s1 + $0x80] sm:$0xff]
        %v877 = vld [vmem:[%s1 + $0x88] sm:$0xff]
        %v878 = vld [vmem:[%s1 + $0x90] sm:$0xff]
        %v879 = vld [vmem:[%s1 + $0x98] sm:$0xff]
        %v880 = vld [vmem:[%s1 + $0xa0] sm:$0xff]
        %v881 = vld [vmem:[%s1 + $0xa8] sm:$0xff]
        %v882 = vld [vmem:[%s1 + $0xb0] sm:$0xff]
        %v883 = vld [vmem:[%s1 + $0xb8] sm:$0xff]
        %v884 = vld [vmem:[%s1 + $0xc0] sm:$0xff]
        %v885 = vld [vmem:[%s1 + $0xc8] sm:$0xff]
        %v886 = vld [vmem:[%s1 + $0xd0] sm:$0xff]
        %v887 = vld [vmem:[%s1 + $0xd8] sm:$0xff]
        %v888 = vld [vmem:[%s1 + $0xe0] sm:$0xff]
        %v889 = vld [vmem:[%s1 + $0xe8] sm:$0xff]
        %v890 = vld [vmem:[%s1 + $0xf0] sm:$0xff]
        %v891 = vld [vmem:[%s1 + $0xf8] sm:$0xff]
        %v892 = vld [vmem:[%s1 + $0x100] sm:$0xff]
        %v893 = vld [vmem:[%s1 + $0x108] sm:$0xff]
        %v894 = vld [vmem:[%s1 + $0x110] sm:$0xff]
        %v895 = vld [vmem:[%s1 + $0x118] sm:$0xff]
        %v896 = vld [vmem:[%s2] sm:$0x1]
        %v898 = vlaneseq
        %v899 = vshrl.u32 %v898, 7
        %v900 = vsub.s32 0, %v899
        %v901 = vrot.slane %v896, %v900
        %v904 = vsel %vm497, %v610, 0
        %v907 = vsel %vm497, %v611, 0
        %v910 = vsel %vm497, %v612, 0
        %v913 = vsel %vm497, %v613, 0
        %v916 = vsel %vm497, %v614, 0
        %v919 = vsel %vm497, %v615, 0
        %v922 = vsel %vm497, %v616, 0
        %v925 = vsel %vm497, %v617, 0
        %927 = vmatprep.subr.mxu0 0.0
        %928 = vmatpush1.msra.mxu0 %v875
        %929 = vmatprep.subr.mxu0 0.0
        %930 = vmatpush1.msra.mxu0 %v874
        %931 = vmatprep.subr.mxu0 0.0
        %932 = vmatpush1.msra.mxu0 %v873
        %933 = vmatprep.subr.mxu0 0.0
        %934 = vmatpush1.msra.mxu0 %v872
        %935 = vmatprep.subr.mxu0 0.0
        %936 = vmatpush1.msra.mxu0 %v871
        %937 = vmatprep.subr.mxu0 0.0
        %938 = vmatpush1.msra.mxu0 %v870
        %939 = vmatprep.subr.mxu0 0.0
        %940 = vmatpush1.msra.mxu0 %v869
        %941 = vmatprep.subr.mxu0 0.0
        %942 = vmatpush1.msra.mxu0 %v868
        %943 = vmatprep.subr.mxu0 0.0
        %944 = vmatpush1.msra.mxu0 %v867
        %945 = vmatprep.subr.mxu0 0.0
        %946 = vmatpush1.msra.mxu0 %v866
        %947 = vmatprep.subr.mxu0 0.0
        %948 = vmatpush1.msra.mxu0 %v865
        %949 = vmatprep.subr.mxu0 0.0
        %950 = vmatpush1.msra.mxu0 %v864
        %951 = vmatprep.subr.mxu0 0.0
        %952 = vmatpush1.msra.mxu0 %v863
        %953 = vmatprep.subr.mxu0 0.0
        %954 = vmatpush1.msra.mxu0 %v862
        %955 = vmatprep.subr.mxu0 0.0
        %956 = vmatpush1.msra.mxu0 %v861
        %957 = vmatprep.subr.mxu0 0.0
        %958 = vmatpush1.msra.mxu0 %v860
        %959 = vmatprep.subr.mxu0 0.0
        %960 = vmatpush2.msra.mxu0 %v891
        %961 = vmatprep.subr.mxu0 0.0
        %962 = vmatpush2.msra.mxu0 %v890
        %963 = vmatprep.subr.mxu0 0.0
        %964 = vmatpush2.msra.mxu0 %v889
        %965 = vmatprep.subr.mxu0 0.0
        %966 = vmatpush2.msra.mxu0 %v888
        %967 = vmatprep.subr.mxu0 0.0
        %968 = vmatpush2.msra.mxu0 %v887
        %969 = vmatprep.subr.mxu0 0.0
        %970 = vmatpush2.msra.mxu0 %v886
        %971 = vmatprep.subr.mxu0 0.0
        %972 = vmatpush2.msra.mxu0 %v885
        %973 = vmatprep.subr.mxu0 0.0
        %974 = vmatpush2.msra.mxu0 %v884
        %975 = vmatprep.subr.mxu0 0.0
        %976 = vmatpush2.msra.mxu0 %v883
        %977 = vmatprep.subr.mxu0 0.0
        %978 = vmatpush2.msra.mxu0 %v882
        %979 = vmatprep.subr.mxu0 0.0
        %980 = vmatpush2.msra.mxu0 %v881
        %981 = vmatprep.subr.mxu0 0.0
        %982 = vmatpush2.msra.mxu0 %v880
        %983 = vmatprep.subr.mxu0 0.0
        %984 = vmatpush2.msra.mxu0 %v879
        %985 = vmatprep.subr.mxu0 0.0
        %986 = vmatpush2.msra.mxu0 %v878
        %987 = vmatprep.subr.mxu0 0.0
        %988 = vmatpush2.msra.mxu0 %v877
        %989 = vmatprep.subr.mxu0 0.0
        %990 = vmatpush2.msra.mxu0 %v876
        %991 = vmatprep.mubr.f32.mxu0 %v852
        %992 = vmatmul.mubr.f32.gmra.mxu0 %v828
        %v993 = vpop.f32.mrf.mxu0
        %v994 = vadd.f32 %v901, %v993
        %v995 = vpop.f32.mrf.mxu0
        %996 = vmatprep.mubr.f32.mxu0 %v853
        %997 = vmatmul.mubr.f32.gmra.mxu0 %v829
        %v998 = vpop.f32.mrf.mxu0
        %v999 = vadd.f32 %v901, %v998
        %v1000 = vpop.f32.mrf.mxu0
        %1001 = vmatprep.mubr.f32.mxu0 %v854
        %1002 = vmatmul.mubr.f32.gmra.mxu0 %v830
        %v1003 = vpop.f32.mrf.mxu0
        %v1004 = vadd.f32 %v901, %v1003
        %v1005 = vpop.f32.mrf.mxu0
        %1006 = vmatprep.mubr.f32.mxu0 %v855
        %1007 = vmatmul.mubr.f32.gmra.mxu0 %v831
        %v1008 = vpop.f32.mrf.mxu0
        %v1009 = vadd.f32 %v901, %v1008
        %v1010 = vpop.f32.mrf.mxu0
        %1011 = vmatprep.mubr.f32.mxu0 %v856
        %1012 = vmatmul.mubr.f32.gmra.mxu0 %v832
        %v1013 = vpop.f32.mrf.mxu0
        %v1014 = vadd.f32 %v901, %v1013
        %v1015 = vpop.f32.mrf.mxu0
        %1016 = vmatprep.mubr.f32.mxu0 %v857
        %1017 = vmatmul.mubr.f32.gmra.mxu0 %v833
        %v1018 = vpop.f32.mrf.mxu0
        %v1019 = vadd.f32 %v901, %v1018
        %v1020 = vpop.f32.mrf.mxu0
        %1021 = vmatprep.mubr.f32.mxu0 %v858
        %1022 = vmatmul.mubr.f32.gmra.mxu0 %v834
        %v1023 = vpop.f32.mrf.mxu0
        %v1024 = vadd.f32 %v901, %v1023
        %v1025 = vpop.f32.mrf.mxu0
        %1026 = vmatprep.mubr.f32.mxu0 %v859
        %1027 = vmatmul.mubr.f32.gmra.mxu0 %v835
        %v1028 = vpop.f32.mrf.mxu0
        %v1029 = vadd.f32 %v901, %v1028
        %v1030 = vpop.f32.mrf.mxu0
        %1031 = vdwg.mxu0
        %1032 = vmatprep.subr.mxu0 0.0
        %1033 = vmatpush1.msra.mxu0 0.0
        %1034 = vmatprep.subr.mxu0 0.0
        %1035 = vmatpush1.msra.mxu0 0.0
        %1036 = vmatprep.subr.mxu0 0.0
        %1037 = vmatpush1.msra.mxu0 0.0
        %1038 = vmatprep.subr.mxu0 0.0
        %1039 = vmatpush1.msra.mxu0 0.0
        %1040 = vmatprep.subr.mxu0 0.0
        %1041 = vmatpush1.msra.mxu0 0.0
        %1042 = vmatprep.subr.mxu0 0.0
        %1043 = vmatpush1.msra.mxu0 0.0
        %1044 = vmatprep.subr.mxu0 0.0
        %1045 = vmatpush1.msra.mxu0 0.0
        %1046 = vmatprep.subr.mxu0 0.0
        %1047 = vmatpush1.msra.mxu0 0.0
        %1048 = vmatprep.subr.mxu0 0.0
        %1049 = vmatpush1.msra.mxu0 0.0
        %1050 = vmatprep.subr.mxu0 0.0
        %1051 = vmatpush1.msra.mxu0 0.0
        %1052 = vmatprep.subr.mxu0 0.0
        %1053 = vmatpush1.msra.mxu0 0.0
        %1054 = vmatprep.subr.mxu0 0.0
        %1055 = vmatpush1.msra.mxu0 0.0
        %1056 = vmatprep.subr.mxu0 0.0
        %1057 = vmatpush1.msra.mxu0 %v895
        %1058 = vmatprep.subr.mxu0 0.0
        %1059 = vmatpush1.msra.mxu0 %v894
        %1060 = vmatprep.subr.mxu0 0.0
        %1061 = vmatpush1.msra.mxu0 %v893
        %1062 = vmatprep.subr.mxu0 0.0
        %1063 = vmatpush1.msra.mxu0 %v892
        %1064 = vmatprep.subr.mxu0 0.0
        %1065 = vmatpush2.msra.mxu0 0.0
        %1066 = vmatprep.subr.mxu0 0.0
        %1067 = vmatpush2.msra.mxu0 0.0
        %1068 = vmatprep.subr.mxu0 0.0
        %1069 = vmatpush2.msra.mxu0 0.0
        %1070 = vmatprep.subr.mxu0 0.0
        %1071 = vmatpush2.msra.mxu0 0.0
        %1072 = vmatprep.subr.mxu0 0.0
        %1073 = vmatpush2.msra.mxu0 0.0
        %1074 = vmatprep.subr.mxu0 0.0
        %1075 = vmatpush2.msra.mxu0 0.0
        %1076 = vmatprep.subr.mxu0 0.0
        %1077 = vmatpush2.msra.mxu0 0.0
        %1078 = vmatprep.subr.mxu0 0.0
        %1079 = vmatpush2.msra.mxu0 0.0
        %1080 = vmatprep.subr.mxu0 0.0
        %1081 = vmatpush2.msra.mxu0 0.0
        %1082 = vmatprep.subr.mxu0 0.0
        %1083 = vmatpush2.msra.mxu0 0.0
        %1084 = vmatprep.subr.mxu0 0.0
        %1085 = vmatpush2.msra.mxu0 0.0
        %1086 = vmatprep.subr.mxu0 0.0
        %1087 = vmatpush2.msra.mxu0 0.0
        %1088 = vmatprep.subr.mxu0 0.0
        %1089 = vmatpush2.msra.mxu0 0.0
        %1090 = vmatprep.subr.mxu0 0.0
        %1091 = vmatpush2.msra.mxu0 0.0
        %1092 = vmatprep.subr.mxu0 0.0
        %1093 = vmatpush2.msra.mxu0 0.0
        %1094 = vmatprep.subr.mxu0 0.0
        %1095 = vmatpush2.msra.mxu0 0.0
        %1096 = vmatprep.mubr.f32.mxu0 0.0
        %1097 = vmatmul.mubr.f32.gmra.mxu0 %v904
        %v1098 = vpop.f32.mrf.mxu0
        %v1099 = vadd.f32 %v994, %v1098
        %v1100 = vpop.f32.mrf.mxu0
        %1101 = vmatprep.mubr.f32.mxu0 0.0
        %1102 = vmatmul.mubr.f32.gmra.mxu0 %v907
        %v1103 = vpop.f32.mrf.mxu0
        %v1104 = vadd.f32 %v999, %v1103
        %v1105 = vpop.f32.mrf.mxu0
        %1106 = vmatprep.mubr.f32.mxu0 0.0
        %1107 = vmatmul.mubr.f32.gmra.mxu0 %v910
        %v1108 = vpop.f32.mrf.mxu0
        %v1109 = vadd.f32 %v1004, %v1108
        %v1110 = vpop.f32.mrf.mxu0
        %1111 = vmatprep.mubr.f32.mxu0 0.0
        %1112 = vmatmul.mubr.f32.gmra.mxu0 %v913
        %v1113 = vpop.f32.mrf.mxu0
        %v1114 = vadd.f32 %v1009, %v1113
        %v1115 = vpop.f32.mrf.mxu0
        %1116 = vmatprep.mubr.f32.mxu0 0.0
        %1117 = vmatmul.mubr.f32.gmra.mxu0 %v916
        %v1118 = vpop.f32.mrf.mxu0
        %v1119 = vadd.f32 %v1014, %v1118
        %v1120 = vpop.f32.mrf.mxu0
        %1121 = vmatprep.mubr.f32.mxu0 0.0
        %1122 = vmatmul.mubr.f32.gmra.mxu0 %v919
        %v1123 = vpop.f32.mrf.mxu0
        %v1124 = vadd.f32 %v1019, %v1123
        %v1125 = vpop.f32.mrf.mxu0
        %1126 = vmatprep.mubr.f32.mxu0 0.0
        %1127 = vmatmul.mubr.f32.gmra.mxu0 %v922
        %v1128 = vpop.f32.mrf.mxu0
        %v1129 = vadd.f32 %v1024, %v1128
        %v1130 = vpop.f32.mrf.mxu0
        %1131 = vmatprep.mubr.f32.mxu0 0.0
        %1132 = vmatmul.mubr.f32.gmra.mxu0 %v925
        %v1133 = vpop.f32.mrf.mxu0
        %v1134 = vadd.f32 %v1029, %v1133
        %v1135 = vpop.f32.mrf.mxu0
        %1136 = vdwg.mxu0
        %v1137 = vld [vmem:[%s3] sm:$0x1]
        %v1138 = vld [vmem:[%s4] sm:$0x1]
        %v1139 = vsel %vm497, %v1099, 0.0
        %v1140 = vsel %vm497, %v1104, 0.0
        %v1141 = vadd.f32 %v1139, %v1140
        %v1142 = vsel %vm497, %v1109, 0.0
        %v1143 = vadd.f32 %v1141, %v1142
        %v1144 = vsel %vm497, %v1114, 0.0
        %v1145 = vadd.f32 %v1143, %v1144
        %v1146 = vsel %vm497, %v1119, 0.0
        %v1147 = vadd.f32 %v1145, %v1146
        %v1148 = vsel %vm497, %v1124, 0.0
        %v1149 = vadd.f32 %v1147, %v1148
        %v1150 = vsel %vm497, %v1129, 0.0
        %v1151 = vadd.f32 %v1149, %v1150
        %v1152 = vsel %vm497, %v1134, 0.0
        %v1153 = vadd.f32 %v1151, %v1152
        %v1154 = vrot.slane %v1153, 4
        %v1155 = vadd.f32 %v1153, %v1154
        %v1156 = vrot.slane %v1155, 2
        %v1157 = vadd.f32 %v1155, %v1156
        %v1158 = vrot.slane %v1157, 1
        %v1159 = vadd.f32 %v1157, %v1158
        %v1160 = vld [vmem:[%s9] sm:$0xff]
        %v1161 = vld [vmem:[%s9 + $0x8] sm:$0xff]
        %v1162 = vld [vmem:[%s9 + $0x10] sm:$0xff]
        %v1163 = vld [vmem:[%s9 + $0x18] sm:$0xff]
        %v1165 = vsel %vm497, %v1159, 0
        %1167 = vmatprep.subr.mxu0 0.0
        %1168 = vmatpush1.msra.mxu0 0.0
        %1169 = vmatprep.subr.mxu0 0.0
        %1170 = vmatpush1.msra.mxu0 0.0
        %1171 = vmatprep.subr.mxu0 0.0
        %1172 = vmatpush1.msra.mxu0 0.0
        %1173 = vmatprep.subr.mxu0 0.0
        %1174 = vmatpush1.msra.mxu0 0.0
        %1175 = vmatprep.subr.mxu0 0.0
        %1176 = vmatpush1.msra.mxu0 0.0
        %1177 = vmatprep.subr.mxu0 0.0
        %1178 = vmatpush1.msra.mxu0 0.0
        %1179 = vmatprep.subr.mxu0 0.0
        %1180 = vmatpush1.msra.mxu0 0.0
        %1181 = vmatprep.subr.mxu0 0.0
        %1182 = vmatpush1.msra.mxu0 0.0
        %1183 = vmatprep.subr.mxu0 0.0
        %1184 = vmatpush1.msra.mxu0 0.0
        %1185 = vmatprep.subr.mxu0 0.0
        %1186 = vmatpush1.msra.mxu0 0.0
        %1187 = vmatprep.subr.mxu0 0.0
        %1188 = vmatpush1.msra.mxu0 0.0
        %1189 = vmatprep.subr.mxu0 0.0
        %1190 = vmatpush1.msra.mxu0 0.0
        %1191 = vmatprep.subr.mxu0 0.0
        %1192 = vmatpush1.msra.mxu0 %v1163
        %1193 = vmatprep.subr.mxu0 0.0
        %1194 = vmatpush1.msra.mxu0 %v1162
        %1195 = vmatprep.subr.mxu0 0.0
        %1196 = vmatpush1.msra.mxu0 %v1161
        %1197 = vmatprep.subr.mxu0 0.0
        %1198 = vmatpush1.msra.mxu0 %v1160
        %1199 = vmatprep.subr.mxu0 0.0
        %1200 = vmatpush2.msra.mxu0 0.0
        %1201 = vmatprep.subr.mxu0 0.0
        %1202 = vmatpush2.msra.mxu0 0.0
        %1203 = vmatprep.subr.mxu0 0.0
        %1204 = vmatpush2.msra.mxu0 0.0
        %1205 = vmatprep.subr.mxu0 0.0
        %1206 = vmatpush2.msra.mxu0 0.0
        %1207 = vmatprep.subr.mxu0 0.0
        %1208 = vmatpush2.msra.mxu0 0.0
        %1209 = vmatprep.subr.mxu0 0.0
        %1210 = vmatpush2.msra.mxu0 0.0
        %1211 = vmatprep.subr.mxu0 0.0
        %1212 = vmatpush2.msra.mxu0 0.0
        %1213 = vmatprep.subr.mxu0 0.0
        %1214 = vmatpush2.msra.mxu0 0.0
        %1215 = vmatprep.subr.mxu0 0.0
        %1216 = vmatpush2.msra.mxu0 0.0
        %1217 = vmatprep.subr.mxu0 0.0
        %1218 = vmatpush2.msra.mxu0 0.0
        %1219 = vmatprep.subr.mxu0 0.0
        %1220 = vmatpush2.msra.mxu0 0.0
        %1221 = vmatprep.subr.mxu0 0.0
        %1222 = vmatpush2.msra.mxu0 0.0
        %1223 = vmatprep.subr.mxu0 0.0
        %1224 = vmatpush2.msra.mxu0 0.0
        %1225 = vmatprep.subr.mxu0 0.0
        %1226 = vmatpush2.msra.mxu0 0.0
        %1227 = vmatprep.subr.mxu0 0.0
        %1228 = vmatpush2.msra.mxu0 0.0
        %1229 = vmatprep.subr.mxu0 0.0
        %1230 = vmatpush2.msra.mxu0 0.0
        %1231 = vmatprep.mubr.f32.mxu0 0.0
        %1232 = vmatmul.mubr.f32.gmra.mxu0 %v1165
        %v1233 = vpop.f32.mrf.mxu0
        %v1234 = vadd.f32 0.0, %v1233
        %v1235 = vpop.f32.mrf.mxu0
        %1236 = vdwg.mxu0
        %v1237 = vlaneseq
        %v1238 = vshrl.u32 %v1237, 7
        %v1239 = vsub.s32 0, %v1238
        %v1240 = vrot.slane %v1234, %v1239
        %v1241 = vsub.f32 %v1099, %v1240
        %v1242 = vsub.f32 %v1104, %v1240
        %v1243 = vsub.f32 %v1109, %v1240
        %v1244 = vsub.f32 %v1114, %v1240
        %v1245 = vsub.f32 %v1119, %v1240
        %v1246 = vsub.f32 %v1124, %v1240
        %v1247 = vsub.f32 %v1129, %v1240
        %v1248 = vsub.f32 %v1134, %v1240
        %v1249 = vmul.f32 %v1241, %v1241
        %v1250 = vmul.f32 %v1242, %v1242
        %v1251 = vmul.f32 %v1243, %v1243
        %v1252 = vmul.f32 %v1244, %v1244
        %v1253 = vmul.f32 %v1245, %v1245
        %v1254 = vmul.f32 %v1246, %v1246
        %v1255 = vmul.f32 %v1247, %v1247
        %v1256 = vmul.f32 %v1248, %v1248
        %v1257 = vsel %vm497, %v1249, 0.0
        %v1258 = vsel %vm497, %v1250, 0.0
        %v1259 = vadd.f32 %v1257, %v1258
        %v1260 = vsel %vm497, %v1251, 0.0
        %v1261 = vadd.f32 %v1259, %v1260
        %v1262 = vsel %vm497, %v1252, 0.0
        %v1263 = vadd.f32 %v1261, %v1262
        %v1264 = vsel %vm497, %v1253, 0.0
        %v1265 = vadd.f32 %v1263, %v1264
        %v1266 = vsel %vm497, %v1254, 0.0
        %v1267 = vadd.f32 %v1265, %v1266
        %v1268 = vsel %vm497, %v1255, 0.0
        %v1269 = vadd.f32 %v1267, %v1268
        %v1270 = vsel %vm497, %v1256, 0.0
        %v1271 = vadd.f32 %v1269, %v1270
        %v1272 = vrot.slane %v1271, 4
        %v1273 = vadd.f32 %v1271, %v1272
        %v1274 = vrot.slane %v1273, 2
        %v1275 = vadd.f32 %v1273, %v1274
        %v1276 = vrot.slane %v1275, 1
        %v1277 = vadd.f32 %v1275, %v1276
        %v1279 = vsel %vm497, %v1277, 0
        %1281 = vmatprep.subr.mxu0 0.0
        %1282 = vmatpush1.msra.mxu0 0.0
        %1283 = vmatprep.subr.mxu0 0.0
        %1284 = vmatpush1.msra.mxu0 0.0
        %1285 = vmatprep.subr.mxu0 0.0
        %1286 = vmatpush1.msra.mxu0 0.0
        %1287 = vmatprep.subr.mxu0 0.0
        %1288 = vmatpush1.msra.mxu0 0.0
        %1289 = vmatprep.subr.mxu0 0.0
        %1290 = vmatpush1.msra.mxu0 0.0
        %1291 = vmatprep.subr.mxu0 0.0
        %1292 = vmatpush1.msra.mxu0 0.0
        %1293 = vmatprep.subr.mxu0 0.0
        %1294 = vmatpush1.msra.mxu0 0.0
        %1295 = vmatprep.subr.mxu0 0.0
        %1296 = vmatpush1.msra.mxu0 0.0
        %1297 = vmatprep.subr.mxu0 0.0
        %1298 = vmatpush1.msra.mxu0 0.0
        %1299 = vmatprep.subr.mxu0 0.0
        %1300 = vmatpush1.msra.mxu0 0.0
        %1301 = vmatprep.subr.mxu0 0.0
        %1302 = vmatpush1.msra.mxu0 0.0
        %1303 = vmatprep.subr.mxu0 0.0
        %1304 = vmatpush1.msra.mxu0 0.0
        %1305 = vmatprep.subr.mxu0 0.0
        %1306 = vmatpush1.msra.mxu0 %v1163
        %1307 = vmatprep.subr.mxu0 0.0
        %1308 = vmatpush1.msra.mxu0 %v1162
        %1309 = vmatprep.subr.mxu0 0.0
        %1310 = vmatpush1.msra.mxu0 %v1161
        %1311 = vmatprep.subr.mxu0 0.0
        %1312 = vmatpush1.msra.mxu0 %v1160
        %1313 = vmatprep.subr.mxu0 0.0
        %1314 = vmatpush2.msra.mxu0 0.0
        %1315 = vmatprep.subr.mxu0 0.0
        %1316 = vmatpush2.msra.mxu0 0.0
        %1317 = vmatprep.subr.mxu0 0.0
        %1318 = vmatpush2.msra.mxu0 0.0
        %1319 = vmatprep.subr.mxu0 0.0
        %1320 = vmatpush2.msra.mxu0 0.0
        %1321 = vmatprep.subr.mxu0 0.0
        %1322 = vmatpush2.msra.mxu0 0.0
        %1323 = vmatprep.subr.mxu0 0.0
        %1324 = vmatpush2.msra.mxu0 0.0
        %1325 = vmatprep.subr.mxu0 0.0
        %1326 = vmatpush2.msra.mxu0 0.0
        %1327 = vmatprep.subr.mxu0 0.0
        %1328 = vmatpush2.msra.mxu0 0.0
        %1329 = vmatprep.subr.mxu0 0.0
        %1330 = vmatpush2.msra.mxu0 0.0
        %1331 = vmatprep.subr.mxu0 0.0
        %1332 = vmatpush2.msra.mxu0 0.0
        %1333 = vmatprep.subr.mxu0 0.0
        %1334 = vmatpush2.msra.mxu0 0.0
        %1335 = vmatprep.subr.mxu0 0.0
        %1336 = vmatpush2.msra.mxu0 0.0
        %1337 = vmatprep.subr.mxu0 0.0
        %1338 = vmatpush2.msra.mxu0 0.0
        %1339 = vmatprep.subr.mxu0 0.0
        %1340 = vmatpush2.msra.mxu0 0.0
        %1341 = vmatprep.subr.mxu0 0.0
        %1342 = vmatpush2.msra.mxu0 0.0
        %1343 = vmatprep.subr.mxu0 0.0
        %1344 = vmatpush2.msra.mxu0 0.0
        %1345 = vmatprep.mubr.f32.mxu0 0.0
        %1346 = vmatmul.mubr.f32.gmra.mxu0 %v1279
        %v1347 = vpop.f32.mrf.mxu0
        %v1348 = vadd.f32 1e-05, %v1347
        %v1349 = vpop.f32.mrf.mxu0
        %1350 = vdwg.mxu0
        %v1351 = vrsqrt.pop %v1348
        %v1352 = vlaneseq
        %v1353 = vshrl.u32 %v1352, 7
        %v1354 = vsub.s32 0, %v1353
        %v1355 = vrot.slane %v1351, %v1354
        %v1356 = vmul.f32 %v1241, %v1355
        %v1357 = vmul.f32 %v1242, %v1355
        %v1358 = vmul.f32 %v1243, %v1355
        %v1359 = vmul.f32 %v1244, %v1355
        %v1360 = vmul.f32 %v1245, %v1355
        %v1361 = vmul.f32 %v1246, %v1355
        %v1362 = vmul.f32 %v1247, %v1355
        %v1363 = vmul.f32 %v1248, %v1355
        %v1365 = vlaneseq
        %v1366 = vshrl.u32 %v1365, 7
        %v1367 = vsub.s32 0, %v1366
        %v1368 = vrot.slane %v1137, %v1367
        %v1370 = vmul.f32 %v1356, %v1368
        %v1371 = vmul.f32 %v1357, %v1368
        %v1372 = vmul.f32 %v1358, %v1368
        %v1373 = vmul.f32 %v1359, %v1368
        %v1374 = vmul.f32 %v1360, %v1368
        %v1375 = vmul.f32 %v1361, %v1368
        %v1376 = vmul.f32 %v1362, %v1368
        %v1377 = vmul.f32 %v1363, %v1368
        %v1379 = vlaneseq
        %v1380 = vshrl.u32 %v1379, 7
        %v1381 = vsub.s32 0, %v1380
        %v1382 = vrot.slane %v1138, %v1381
        %v1384 = vadd.f32 %v1370, %v1382
        %v1385 = vadd.f32 %v1371, %v1382
        %v1386 = vadd.f32 %v1372, %v1382
        %v1387 = vadd.f32 %v1373, %v1382
        %v1388 = vadd.f32 %v1374, %v1382
        %v1389 = vadd.f32 %v1375, %v1382
        %v1390 = vadd.f32 %v1376, %v1382
        %v1391 = vadd.f32 %v1377, %v1382
        %v1392 = vmax.f32 %v1384, 0.0
        %v1393 = vmax.f32 %v1385, 0.0
        %v1394 = vmax.f32 %v1386, 0.0
        %v1395 = vmax.f32 %v1387, 0.0
        %v1396 = vmax.f32 %v1388, 0.0
        %v1397 = vmax.f32 %v1389, 0.0
        %v1398 = vmax.f32 %v1390, 0.0
        %v1399 = vmax.f32 %v1391, 0.0
        %1400 = vst.msk [vmem:[%s536 + $0x1] sm:$0xff] %vm497, %v1392
        %1401 = vst.msk [vmem:[%s536 + $0x11] sm:$0xff] %vm497, %v1393
        %1402 = vst.msk [vmem:[%s536 + $0x21] sm:$0xff] %vm497, %v1394
        %1403 = vst.msk [vmem:[%s536 + $0x31] sm:$0xff] %vm497, %v1395
        %1404 = vst.msk [vmem:[%s536 + $0x41] sm:$0xff] %vm497, %v1396
        %1405 = vst.msk [vmem:[%s536 + $0x51] sm:$0xff] %vm497, %v1397
        %1406 = vst.msk [vmem:[%s536 + $0x61] sm:$0xff] %vm497, %v1398
        %1407 = vst.msk [vmem:[%s536 + $0x71] sm:$0xff] %vm497, %v1399
        %v1408 = vld [vmem:[#allocation2] sm:$0xff]
        %v1409 = vld [vmem:[#allocation2 + $0x10] sm:$0xff]
        %v1410 = vld [vmem:[#allocation2 + $0x20] sm:$0xff]
        %v1411 = vld [vmem:[#allocation2 + $0x30] sm:$0xff]
        %v1412 = vld [vmem:[#allocation2 + $0x40] sm:$0xff]
        %v1413 = vld [vmem:[#allocation2 + $0x50] sm:$0xff]
        %v1414 = vld [vmem:[#allocation2 + $0x60] sm:$0xff]
        %v1415 = vld [vmem:[#allocation2 + $0x70] sm:$0xff]
        %v1416 = vld [vmem:[#allocation2 + $0x1] sm:$0xff]
        %v1417 = vld [vmem:[#allocation2 + $0x11] sm:$0xff]
        %v1418 = vld [vmem:[#allocation2 + $0x21] sm:$0xff]
        %v1419 = vld [vmem:[#allocation2 + $0x31] sm:$0xff]
        %v1420 = vld [vmem:[#allocation2 + $0x41] sm:$0xff]
        %v1421 = vld [vmem:[#allocation2 + $0x51] sm:$0xff]
        %v1422 = vld [vmem:[#allocation2 + $0x61] sm:$0xff]
        %v1423 = vld [vmem:[#allocation2 + $0x71] sm:$0xff]
        %v1424 = vld [vmem:[#allocation2 + $0x2] sm:$0xff]
        %v1425 = vld [vmem:[#allocation2 + $0x12] sm:$0xff]
        %v1426 = vld [vmem:[#allocation2 + $0x22] sm:$0xff]
        %v1427 = vld [vmem:[#allocation2 + $0x32] sm:$0xff]
        %v1428 = vld [vmem:[#allocation2 + $0x42] sm:$0xff]
        %v1429 = vld [vmem:[#allocation2 + $0x52] sm:$0xff]
        %v1430 = vld [vmem:[#allocation2 + $0x62] sm:$0xff]
        %v1431 = vld [vmem:[#allocation2 + $0x72] sm:$0xff]
        %v1432 = vld [vmem:[%s536] sm:$0xff]
        %v1433 = vld [vmem:[%s536 + $0x10] sm:$0xff]
        %v1434 = vld [vmem:[%s536 + $0x20] sm:$0xff]
        %v1435 = vld [vmem:[%s536 + $0x30] sm:$0xff]
        %v1436 = vld [vmem:[%s536 + $0x40] sm:$0xff]
        %v1437 = vld [vmem:[%s536 + $0x50] sm:$0xff]
        %v1438 = vld [vmem:[%s536 + $0x60] sm:$0xff]
        %v1439 = vld [vmem:[%s536 + $0x70] sm:$0xff]
        %v1440 = vld [vmem:[%s536 + $0x1] sm:$0xff]
        %v1441 = vld [vmem:[%s536 + $0x11] sm:$0xff]
        %v1442 = vld [vmem:[%s536 + $0x21] sm:$0xff]
        %v1443 = vld [vmem:[%s536 + $0x31] sm:$0xff]
        %v1444 = vld [vmem:[%s536 + $0x41] sm:$0xff]
        %v1445 = vld [vmem:[%s536 + $0x51] sm:$0xff]
        %v1446 = vld [vmem:[%s536 + $0x61] sm:$0xff]
        %v1447 = vld [vmem:[%s536 + $0x71] sm:$0xff]
        %v1448 = vld [vmem:[%s536 + $0x2] sm:$0xff]
        %v1449 = vld [vmem:[%s536 + $0x12] sm:$0xff]
        %v1450 = vld [vmem:[%s536 + $0x22] sm:$0xff]
        %v1451 = vld [vmem:[%s536 + $0x32] sm:$0xff]
        %v1452 = vld [vmem:[%s536 + $0x42] sm:$0xff]
        %v1453 = vld [vmem:[%s536 + $0x52] sm:$0xff]
        %v1454 = vld [vmem:[%s536 + $0x62] sm:$0xff]
        %v1455 = vld [vmem:[%s536 + $0x72] sm:$0xff]
        %v1456 = vld [vmem:[%s593] sm:$0xff]
        %v1457 = vld [vmem:[%s593 + $0x10] sm:$0xff]
        %v1458 = vld [vmem:[%s593 + $0x20] sm:$0xff]
        %v1459 = vld [vmem:[%s593 + $0x30] sm:$0xff]
        %v1460 = vld [vmem:[%s593 + $0x40] sm:$0xff]
        %v1461 = vld [vmem:[%s593 + $0x50] sm:$0xff]
        %v1462 = vld [vmem:[%s593 + $0x60] sm:$0xff]
        %v1463 = vld [vmem:[%s593 + $0x70] sm:$0xff]
        %v1464 = vld [vmem:[%s593 + $0x1] sm:$0xff]
        %v1465 = vld [vmem:[%s593 + $0x11] sm:$0xff]
        %v1466 = vld [vmem:[%s593 + $0x21] sm:$0xff]
        %v1467 = vld [vmem:[%s593 + $0x31] sm:$0xff]
        %v1468 = vld [vmem:[%s593 + $0x41] sm:$0xff]
        %v1469 = vld [vmem:[%s593 + $0x51] sm:$0xff]
        %v1470 = vld [vmem:[%s593 + $0x61] sm:$0xff]
        %v1471 = vld [vmem:[%s593 + $0x71] sm:$0xff]
        %v1472 = vld [vmem:[%s593 + $0x2] sm:$0xff]
        %v1473 = vld [vmem:[%s593 + $0x12] sm:$0xff]
        %v1474 = vld [vmem:[%s593 + $0x22] sm:$0xff]
        %v1475 = vld [vmem:[%s593 + $0x32] sm:$0xff]
        %v1476 = vld [vmem:[%s593 + $0x42] sm:$0xff]
        %v1477 = vld [vmem:[%s593 + $0x52] sm:$0xff]
        %v1478 = vld [vmem:[%s593 + $0x62] sm:$0xff]
        %v1479 = vld [vmem:[%s593 + $0x72] sm:$0xff]
        %1488 = vrot.lane.b32.xlu0 %v1416, 32
        %v1489 = vpop.permute.xlu0 %1488
        %1490 = vrot.lane.b32.xlu0 %v1417, 32
        %v1491 = vpop.permute.xlu0 %1490
        %1492 = vrot.lane.b32.xlu0 %v1418, 32
        %v1493 = vpop.permute.xlu0 %1492
        %1494 = vrot.lane.b32.xlu0 %v1419, 32
        %v1495 = vpop.permute.xlu0 %1494
        %1496 = vrot.lane.b32.xlu0 %v1420, 32
        %v1497 = vpop.permute.xlu0 %1496
        %1498 = vrot.lane.b32.xlu0 %v1421, 32
        %v1499 = vpop.permute.xlu0 %1498
        %1500 = vrot.lane.b32.xlu0 %v1422, 32
        %v1501 = vpop.permute.xlu0 %1500
        %1502 = vrot.lane.b32.xlu0 %v1423, 32
        %v1503 = vpop.permute.xlu0 %1502
        %1520 = vrot.lane.b32.xlu0 %v1424, 64
        %v1521 = vpop.permute.xlu0 %1520
        %1522 = vrot.lane.b32.xlu0 %v1425, 64
        %v1523 = vpop.permute.xlu0 %1522
        %1524 = vrot.lane.b32.xlu0 %v1426, 64
        %v1525 = vpop.permute.xlu0 %1524
        %1526 = vrot.lane.b32.xlu0 %v1427, 64
        %v1527 = vpop.permute.xlu0 %1526
        %1528 = vrot.lane.b32.xlu0 %v1428, 64
        %v1529 = vpop.permute.xlu0 %1528
        %1530 = vrot.lane.b32.xlu0 %v1429, 64
        %v1531 = vpop.permute.xlu0 %1530
        %1532 = vrot.lane.b32.xlu0 %v1430, 64
        %v1533 = vpop.permute.xlu0 %1532
        %1534 = vrot.lane.b32.xlu0 %v1431, 64
        %v1535 = vpop.permute.xlu0 %1534
        %1552 = vrot.lane.b32.xlu0 %v1432, 96
        %v1553 = vpop.permute.xlu0 %1552
        %1554 = vrot.lane.b32.xlu0 %v1433, 96
        %v1555 = vpop.permute.xlu0 %1554
        %1556 = vrot.lane.b32.xlu0 %v1434, 96
        %v1557 = vpop.permute.xlu0 %1556
        %1558 = vrot.lane.b32.xlu0 %v1435, 96
        %v1559 = vpop.permute.xlu0 %1558
        %1560 = vrot.lane.b32.xlu0 %v1436, 96
        %v1561 = vpop.permute.xlu0 %1560
        %1562 = vrot.lane.b32.xlu0 %v1437, 96
        %v1563 = vpop.permute.xlu0 %1562
        %1564 = vrot.lane.b32.xlu0 %v1438, 96
        %v1565 = vpop.permute.xlu0 %1564
        %1566 = vrot.lane.b32.xlu0 %v1439, 96
        %v1567 = vpop.permute.xlu0 %1566
        %1584 = vrot.lane.b32.xlu0 %v1448, 32
        %v1585 = vpop.permute.xlu0 %1584
        %1586 = vrot.lane.b32.xlu0 %v1449, 32
        %v1587 = vpop.permute.xlu0 %1586
        %1588 = vrot.lane.b32.xlu0 %v1450, 32
        %v1589 = vpop.permute.xlu0 %1588
        %1590 = vrot.lane.b32.xlu0 %v1451, 32
        %v1591 = vpop.permute.xlu0 %1590
        %1592 = vrot.lane.b32.xlu0 %v1452, 32
        %v1593 = vpop.permute.xlu0 %1592
        %1594 = vrot.lane.b32.xlu0 %v1453, 32
        %v1595 = vpop.permute.xlu0 %1594
        %1596 = vrot.lane.b32.xlu0 %v1454, 32
        %v1597 = vpop.permute.xlu0 %1596
        %1598 = vrot.lane.b32.xlu0 %v1455, 32
        %v1599 = vpop.permute.xlu0 %1598
        %1616 = vrot.lane.b32.xlu0 %v1456, 64
        %v1617 = vpop.permute.xlu0 %1616
        %1618 = vrot.lane.b32.xlu0 %v1457, 64
        %v1619 = vpop.permute.xlu0 %1618
        %1620 = vrot.lane.b32.xlu0 %v1458, 64
        %v1621 = vpop.permute.xlu0 %1620
        %1622 = vrot.lane.b32.xlu0 %v1459, 64
        %v1623 = vpop.permute.xlu0 %1622
        %1624 = vrot.lane.b32.xlu0 %v1460, 64
        %v1625 = vpop.permute.xlu0 %1624
        %1626 = vrot.lane.b32.xlu0 %v1461, 64
        %v1627 = vpop.permute.xlu0 %1626
        %1628 = vrot.lane.b32.xlu0 %v1462, 64
        %v1629 = vpop.permute.xlu0 %1628
        %1630 = vrot.lane.b32.xlu0 %v1463, 64
        %v1631 = vpop.permute.xlu0 %1630
        %1648 = vrot.lane.b32.xlu0 %v1464, 96
        %v1649 = vpop.permute.xlu0 %1648
        %1650 = vrot.lane.b32.xlu0 %v1465, 96
        %v1651 = vpop.permute.xlu0 %1650
        %1652 = vrot.lane.b32.xlu0 %v1466, 96
        %v1653 = vpop.permute.xlu0 %1652
        %1654 = vrot.lane.b32.xlu0 %v1467, 96
        %v1655 = vpop.permute.xlu0 %1654
        %1656 = vrot.lane.b32.xlu0 %v1468, 96
        %v1657 = vpop.permute.xlu0 %1656
        %1658 = vrot.lane.b32.xlu0 %v1469, 96
        %v1659 = vpop.permute.xlu0 %1658
        %1660 = vrot.lane.b32.xlu0 %v1470, 96
        %v1661 = vpop.permute.xlu0 %1660
        %1662 = vrot.lane.b32.xlu0 %v1471, 96
        %v1663 = vpop.permute.xlu0 %1662
        %v1672 = vsel %vm497, %v1408, %v1489
        %v1673 = vsel %vm497, %v1409, %v1491
        %v1674 = vsel %vm497, %v1410, %v1493
        %v1675 = vsel %vm497, %v1411, %v1495
        %v1676 = vsel %vm497, %v1412, %v1497
        %v1677 = vsel %vm497, %v1413, %v1499
        %v1678 = vsel %vm497, %v1414, %v1501
        %v1679 = vsel %vm497, %v1415, %v1503
        %v1680 = vsel %vm818, %v1672, %v1521
        %v1681 = vsel %vm818, %v1673, %v1523
        %v1682 = vsel %vm818, %v1674, %v1525
        %v1683 = vsel %vm818, %v1675, %v1527
        %v1684 = vsel %vm818, %v1676, %v1529
        %v1685 = vsel %vm818, %v1677, %v1531
        %v1686 = vsel %vm818, %v1678, %v1533
        %v1687 = vsel %vm818, %v1679, %v1535
        %v1688 = vsel %vm827, %v1680, %v1553
        %v1689 = vsel %vm827, %v1681, %v1555
        %v1690 = vsel %vm827, %v1682, %v1557
        %v1691 = vsel %vm827, %v1683, %v1559
        %v1692 = vsel %vm827, %v1684, %v1561
        %v1693 = vsel %vm827, %v1685, %v1563
        %v1694 = vsel %vm827, %v1686, %v1565
        %v1695 = vsel %vm827, %v1687, %v1567
        %v1696 = vsel %vm497, %v1440, %v1585
        %v1697 = vsel %vm497, %v1441, %v1587
        %v1698 = vsel %vm497, %v1442, %v1589
        %v1699 = vsel %vm497, %v1443, %v1591
        %v1700 = vsel %vm497, %v1444, %v1593
        %v1701 = vsel %vm497, %v1445, %v1595
        %v1702 = vsel %vm497, %v1446, %v1597
        %v1703 = vsel %vm497, %v1447, %v1599
        %v1704 = vsel %vm818, %v1696, %v1617
        %v1705 = vsel %vm818, %v1697, %v1619
        %v1706 = vsel %vm818, %v1698, %v1621
        %v1707 = vsel %vm818, %v1699, %v1623
        %v1708 = vsel %vm818, %v1700, %v1625
        %v1709 = vsel %vm818, %v1701, %v1627
        %v1710 = vsel %vm818, %v1702, %v1629
        %v1711 = vsel %vm818, %v1703, %v1631
        %v1712 = vsel %vm827, %v1704, %v1649
        %v1713 = vsel %vm827, %v1705, %v1651
        %v1714 = vsel %vm827, %v1706, %v1653
        %v1715 = vsel %vm827, %v1707, %v1655
        %v1716 = vsel %vm827, %v1708, %v1657
        %v1717 = vsel %vm827, %v1709, %v1659
        %v1718 = vsel %vm827, %v1710, %v1661
        %v1719 = vsel %vm827, %v1711, %v1663
        %s1720 = scalar_lea.vmem %s1, 288
        %v1721 = vld [vmem:[%s1720] sm:$0xff]
        %v1722 = vld [vmem:[%s1720 + $0x8] sm:$0xff]
        %v1723 = vld [vmem:[%s1720 + $0x10] sm:$0xff]
        %v1724 = vld [vmem:[%s1720 + $0x18] sm:$0xff]
        %v1725 = vld [vmem:[%s1720 + $0x20] sm:$0xff]
        %v1726 = vld [vmem:[%s1720 + $0x28] sm:$0xff]
        %v1727 = vld [vmem:[%s1720 + $0x30] sm:$0xff]
        %v1728 = vld [vmem:[%s1720 + $0x38] sm:$0xff]
        %v1729 = vld [vmem:[%s1720 + $0x40] sm:$0xff]
        %v1730 = vld [vmem:[%s1720 + $0x48] sm:$0xff]
        %v1731 = vld [vmem:[%s1720 + $0x50] sm:$0xff]
        %v1732 = vld [vmem:[%s1720 + $0x58] sm:$0xff]
        %v1733 = vld [vmem:[%s1720 + $0x60] sm:$0xff]
        %v1734 = vld [vmem:[%s1720 + $0x68] sm:$0xff]
        %v1735 = vld [vmem:[%s1720 + $0x70] sm:$0xff]
        %v1736 = vld [vmem:[%s1720 + $0x78] sm:$0xff]
        %v1737 = vld [vmem:[%s1720 + $0x80] sm:$0xff]
        %v1738 = vld [vmem:[%s1720 + $0x88] sm:$0xff]
        %v1739 = vld [vmem:[%s1720 + $0x90] sm:$0xff]
        %v1740 = vld [vmem:[%s1720 + $0x98] sm:$0xff]
        %v1741 = vld [vmem:[%s1720 + $0xa0] sm:$0xff]
        %v1742 = vld [vmem:[%s1720 + $0xa8] sm:$0xff]
        %v1743 = vld [vmem:[%s1720 + $0xb0] sm:$0xff]
        %v1744 = vld [vmem:[%s1720 + $0xb8] sm:$0xff]
        %v1745 = vld [vmem:[%s1720 + $0xc0] sm:$0xff]
        %v1746 = vld [vmem:[%s1720 + $0xc8] sm:$0xff]
        %v1747 = vld [vmem:[%s1720 + $0xd0] sm:$0xff]
        %v1748 = vld [vmem:[%s1720 + $0xd8] sm:$0xff]
        %v1749 = vld [vmem:[%s1720 + $0xe0] sm:$0xff]
        %v1750 = vld [vmem:[%s1720 + $0xe8] sm:$0xff]
        %v1751 = vld [vmem:[%s1720 + $0xf0] sm:$0xff]
        %v1752 = vld [vmem:[%s1720 + $0xf8] sm:$0xff]
        %v1753 = vld [vmem:[%s1720 + $0x100] sm:$0xff]
        %v1754 = vld [vmem:[%s1720 + $0x108] sm:$0xff]
        %v1755 = vld [vmem:[%s1720 + $0x110] sm:$0xff]
        %v1756 = vld [vmem:[%s1720 + $0x118] sm:$0xff]
        %s1757 = scalar_lea.vmem %s2, 1
        %v1758 = vld [vmem:[%s1757] sm:$0x1]
        %v1760 = vlaneseq
        %v1761 = vshrl.u32 %v1760, 7
        %v1762 = vsub.s32 0, %v1761
        %v1763 = vrot.slane %v1758, %v1762
        %v1766 = vsel %vm497, %v1472, 0
        %v1769 = vsel %vm497, %v1473, 0
        %v1772 = vsel %vm497, %v1474, 0
        %v1775 = vsel %vm497, %v1475, 0
        %v1778 = vsel %vm497, %v1476, 0
        %v1781 = vsel %vm497, %v1477, 0
        %v1784 = vsel %vm497, %v1478, 0
        %v1787 = vsel %vm497, %v1479, 0
        %1789 = vmatprep.subr.mxu0 0.0
        %1790 = vmatpush1.msra.mxu0 %v1736
        %1791 = vmatprep.subr.mxu0 0.0
        %1792 = vmatpush1.msra.mxu0 %v1735
        %1793 = vmatprep.subr.mxu0 0.0
        %1794 = vmatpush1.msra.mxu0 %v1734
        %1795 = vmatprep.subr.mxu0 0.0
        %1796 = vmatpush1.msra.mxu0 %v1733
        %1797 = vmatprep.subr.mxu0 0.0
        %1798 = vmatpush1.msra.mxu0 %v1732
        %1799 = vmatprep.subr.mxu0 0.0
        %1800 = vmatpush1.msra.mxu0 %v1731
        %1801 = vmatprep.subr.mxu0 0.0
        %1802 = vmatpush1.msra.mxu0 %v1730
        %1803 = vmatprep.subr.mxu0 0.0
        %1804 = vmatpush1.msra.mxu0 %v1729
        %1805 = vmatprep.subr.mxu0 0.0
        %1806 = vmatpush1.msra.mxu0 %v1728
        %1807 = vmatprep.subr.mxu0 0.0
        %1808 = vmatpush1.msra.mxu0 %v1727
        %1809 = vmatprep.subr.mxu0 0.0
        %1810 = vmatpush1.msra.mxu0 %v1726
        %1811 = vmatprep.subr.mxu0 0.0
        %1812 = vmatpush1.msra.mxu0 %v1725
        %1813 = vmatprep.subr.mxu0 0.0
        %1814 = vmatpush1.msra.mxu0 %v1724
        %1815 = vmatprep.subr.mxu0 0.0
        %1816 = vmatpush1.msra.mxu0 %v1723
        %1817 = vmatprep.subr.mxu0 0.0
        %1818 = vmatpush1.msra.mxu0 %v1722
        %1819 = vmatprep.subr.mxu0 0.0
        %1820 = vmatpush1.msra.mxu0 %v1721
        %1821 = vmatprep.subr.mxu0 0.0
        %1822 = vmatpush2.msra.mxu0 %v1752
        %1823 = vmatprep.subr.mxu0 0.0
        %1824 = vmatpush2.msra.mxu0 %v1751
        %1825 = vmatprep.subr.mxu0 0.0
        %1826 = vmatpush2.msra.mxu0 %v1750
        %1827 = vmatprep.subr.mxu0 0.0
        %1828 = vmatpush2.msra.mxu0 %v1749
        %1829 = vmatprep.subr.mxu0 0.0
        %1830 = vmatpush2.msra.mxu0 %v1748
        %1831 = vmatprep.subr.mxu0 0.0
        %1832 = vmatpush2.msra.mxu0 %v1747
        %1833 = vmatprep.subr.mxu0 0.0
        %1834 = vmatpush2.msra.mxu0 %v1746
        %1835 = vmatprep.subr.mxu0 0.0
        %1836 = vmatpush2.msra.mxu0 %v1745
        %1837 = vmatprep.subr.mxu0 0.0
        %1838 = vmatpush2.msra.mxu0 %v1744
        %1839 = vmatprep.subr.mxu0 0.0
        %1840 = vmatpush2.msra.mxu0 %v1743
        %1841 = vmatprep.subr.mxu0 0.0
        %1842 = vmatpush2.msra.mxu0 %v1742
        %1843 = vmatprep.subr.mxu0 0.0
        %1844 = vmatpush2.msra.mxu0 %v1741
        %1845 = vmatprep.subr.mxu0 0.0
        %1846 = vmatpush2.msra.mxu0 %v1740
        %1847 = vmatprep.subr.mxu0 0.0
        %1848 = vmatpush2.msra.mxu0 %v1739
        %1849 = vmatprep.subr.mxu0 0.0
        %1850 = vmatpush2.msra.mxu0 %v1738
        %1851 = vmatprep.subr.mxu0 0.0
        %1852 = vmatpush2.msra.mxu0 %v1737
        %1853 = vmatprep.mubr.f32.mxu0 %v1712
        %1854 = vmatmul.mubr.f32.gmra.mxu0 %v1688
        %v1855 = vpop.f32.mrf.mxu0
        %v1856 = vadd.f32 %v1763, %v1855
        %v1857 = vpop.f32.mrf.mxu0
        %1858 = vmatprep.mubr.f32.mxu0 %v1713
        %1859 = vmatmul.mubr.f32.gmra.mxu0 %v1689
        %v1860 = vpop.f32.mrf.mxu0
        %v1861 = vadd.f32 %v1763, %v1860
        %v1862 = vpop.f32.mrf.mxu0
        %1863 = vmatprep.mubr.f32.mxu0 %v1714
        %1864 = vmatmul.mubr.f32.gmra.mxu0 %v1690
        %v1865 = vpop.f32.mrf.mxu0
        %v1866 = vadd.f32 %v1763, %v1865
        %v1867 = vpop.f32.mrf.mxu0
        %1868 = vmatprep.mubr.f32.mxu0 %v1715
        %1869 = vmatmul.mubr.f32.gmra.mxu0 %v1691
        %v1870 = vpop.f32.mrf.mxu0
        %v1871 = vadd.f32 %v1763, %v1870
        %v1872 = vpop.f32.mrf.mxu0
        %1873 = vmatprep.mubr.f32.mxu0 %v1716
        %1874 = vmatmul.mubr.f32.gmra.mxu0 %v1692
        %v1875 = vpop.f32.mrf.mxu0
        %v1876 = vadd.f32 %v1763, %v1875
        %v1877 = vpop.f32.mrf.mxu0
        %1878 = vmatprep.mubr.f32.mxu0 %v1717
        %1879 = vmatmul.mubr.f32.gmra.mxu0 %v1693
        %v1880 = vpop.f32.mrf.mxu0
        %v1881 = vadd.f32 %v1763, %v1880
        %v1882 = vpop.f32.mrf.mxu0
        %1883 = vmatprep.mubr.f32.mxu0 %v1718
        %1884 = vmatmul.mubr.f32.gmra.mxu0 %v1694
        %v1885 = vpop.f32.mrf.mxu0
        %v1886 = vadd.f32 %v1763, %v1885
        %v1887 = vpop.f32.mrf.mxu0
        %1888 = vmatprep.mubr.f32.mxu0 %v1719
        %1889 = vmatmul.mubr.f32.gmra.mxu0 %v1695
        %v1890 = vpop.f32.mrf.mxu0
        %v1891 = vadd.f32 %v1763, %v1890
        %v1892 = vpop.f32.mrf.mxu0
        %1893 = vdwg.mxu0
        %1894 = vmatprep.subr.mxu0 0.0
        %1895 = vmatpush1.msra.mxu0 0.0
        %1896 = vmatprep.subr.mxu0 0.0
        %1897 = vmatpush1.msra.mxu0 0.0
        %1898 = vmatprep.subr.mxu0 0.0
        %1899 = vmatpush1.msra.mxu0 0.0
        %1900 = vmatprep.subr.mxu0 0.0
        %1901 = vmatpush1.msra.mxu0 0.0
        %1902 = vmatprep.subr.mxu0 0.0
        %1903 = vmatpush1.msra.mxu0 0.0
        %1904 = vmatprep.subr.mxu0 0.0
        %1905 = vmatpush1.msra.mxu0 0.0
        %1906 = vmatprep.subr.mxu0 0.0
        %1907 = vmatpush1.msra.mxu0 0.0
        %1908 = vmatprep.subr.mxu0 0.0
        %1909 = vmatpush1.msra.mxu0 0.0
        %1910 = vmatprep.subr.mxu0 0.0
        %1911 = vmatpush1.msra.mxu0 0.0
        %1912 = vmatprep.subr.mxu0 0.0
        %1913 = vmatpush1.msra.mxu0 0.0
        %1914 = vmatprep.subr.mxu0 0.0
        %1915 = vmatpush1.msra.mxu0 0.0
        %1916 = vmatprep.subr.mxu0 0.0
        %1917 = vmatpush1.msra.mxu0 0.0
        %1918 = vmatprep.subr.mxu0 0.0
        %1919 = vmatpush1.msra.mxu0 %v1756
        %1920 = vmatprep.subr.mxu0 0.0
        %1921 = vmatpush1.msra.mxu0 %v1755
        %1922 = vmatprep.subr.mxu0 0.0
        %1923 = vmatpush1.msra.mxu0 %v1754
        %1924 = vmatprep.subr.mxu0 0.0
        %1925 = vmatpush1.msra.mxu0 %v1753
        %1926 = vmatprep.subr.mxu0 0.0
        %1927 = vmatpush2.msra.mxu0 0.0
        %1928 = vmatprep.subr.mxu0 0.0
        %1929 = vmatpush2.msra.mxu0 0.0
        %1930 = vmatprep.subr.mxu0 0.0
        %1931 = vmatpush2.msra.mxu0 0.0
        %1932 = vmatprep.subr.mxu0 0.0
        %1933 = vmatpush2.msra.mxu0 0.0
        %1934 = vmatprep.subr.mxu0 0.0
        %1935 = vmatpush2.msra.mxu0 0.0
        %1936 = vmatprep.subr.mxu0 0.0
        %1937 = vmatpush2.msra.mxu0 0.0
        %1938 = vmatprep.subr.mxu0 0.0
        %1939 = vmatpush2.msra.mxu0 0.0
        %1940 = vmatprep.subr.mxu0 0.0
        %1941 = vmatpush2.msra.mxu0 0.0
        %1942 = vmatprep.subr.mxu0 0.0
        %1943 = vmatpush2.msra.mxu0 0.0
        %1944 = vmatprep.subr.mxu0 0.0
        %1945 = vmatpush2.msra.mxu0 0.0
        %1946 = vmatprep.subr.mxu0 0.0
        %1947 = vmatpush2.msra.mxu0 0.0
        %1948 = vmatprep.subr.mxu0 0.0
        %1949 = vmatpush2.msra.mxu0 0.0
        %1950 = vmatprep.subr.mxu0 0.0
        %1951 = vmatpush2.msra.mxu0 0.0
        %1952 = vmatprep.subr.mxu0 0.0
        %1953 = vmatpush2.msra.mxu0 0.0
        %1954 = vmatprep.subr.mxu0 0.0
        %1955 = vmatpush2.msra.mxu0 0.0
        %1956 = vmatprep.subr.mxu0 0.0
        %1957 = vmatpush2.msra.mxu0 0.0
        %1958 = vmatprep.mubr.f32.mxu0 0.0
        %1959 = vmatmul.mubr.f32.gmra.mxu0 %v1766
        %v1960 = vpop.f32.mrf.mxu0
        %v1961 = vadd.f32 %v1856, %v1960
        %v1962 = vpop.f32.mrf.mxu0
        %1963 = vmatprep.mubr.f32.mxu0 0.0
        %1964 = vmatmul.mubr.f32.gmra.mxu0 %v1769
        %v1965 = vpop.f32.mrf.mxu0
        %v1966 = vadd.f32 %v1861, %v1965
        %v1967 = vpop.f32.mrf.mxu0
        %1968 = vmatprep.mubr.f32.mxu0 0.0
        %1969 = vmatmul.mubr.f32.gmra.mxu0 %v1772
        %v1970 = vpop.f32.mrf.mxu0
        %v1971 = vadd.f32 %v1866, %v1970
        %v1972 = vpop.f32.mrf.mxu0
        %1973 = vmatprep.mubr.f32.mxu0 0.0
        %1974 = vmatmul.mubr.f32.gmra.mxu0 %v1775
        %v1975 = vpop.f32.mrf.mxu0
        %v1976 = vadd.f32 %v1871, %v1975
        %v1977 = vpop.f32.mrf.mxu0
        %1978 = vmatprep.mubr.f32.mxu0 0.0
        %1979 = vmatmul.mubr.f32.gmra.mxu0 %v1778
        %v1980 = vpop.f32.mrf.mxu0
        %v1981 = vadd.f32 %v1876, %v1980
        %v1982 = vpop.f32.mrf.mxu0
        %1983 = vmatprep.mubr.f32.mxu0 0.0
        %1984 = vmatmul.mubr.f32.gmra.mxu0 %v1781
        %v1985 = vpop.f32.mrf.mxu0
        %v1986 = vadd.f32 %v1881, %v1985
        %v1987 = vpop.f32.mrf.mxu0
        %1988 = vmatprep.mubr.f32.mxu0 0.0
        %1989 = vmatmul.mubr.f32.gmra.mxu0 %v1784
        %v1990 = vpop.f32.mrf.mxu0
        %v1991 = vadd.f32 %v1886, %v1990
        %v1992 = vpop.f32.mrf.mxu0
        %1993 = vmatprep.mubr.f32.mxu0 0.0
        %1994 = vmatmul.mubr.f32.gmra.mxu0 %v1787
        %v1995 = vpop.f32.mrf.mxu0
        %v1996 = vadd.f32 %v1891, %v1995
        %v1997 = vpop.f32.mrf.mxu0
        %1998 = vdwg.mxu0
        %s1999 = scalar_lea.vmem %s3, 1
        %v2000 = vld [vmem:[%s1999] sm:$0x1]
        %s2001 = scalar_lea.vmem %s4, 1
        %v2002 = vld [vmem:[%s2001] sm:$0x1]
        %v2003 = vsel %vm497, %v1961, 0.0
        %v2004 = vsel %vm497, %v1966, 0.0
        %v2005 = vadd.f32 %v2003, %v2004
        %v2006 = vsel %vm497, %v1971, 0.0
        %v2007 = vadd.f32 %v2005, %v2006
        %v2008 = vsel %vm497, %v1976, 0.0
        %v2009 = vadd.f32 %v2007, %v2008
        %v2010 = vsel %vm497, %v1981, 0.0
        %v2011 = vadd.f32 %v2009, %v2010
        %v2012 = vsel %vm497, %v1986, 0.0
        %v2013 = vadd.f32 %v2011, %v2012
        %v2014 = vsel %vm497, %v1991, 0.0
        %v2015 = vadd.f32 %v2013, %v2014
        %v2016 = vsel %vm497, %v1996, 0.0
        %v2017 = vadd.f32 %v2015, %v2016
        %v2018 = vrot.slane %v2017, 4
        %v2019 = vadd.f32 %v2017, %v2018
        %v2020 = vrot.slane %v2019, 2
        %v2021 = vadd.f32 %v2019, %v2020
        %v2022 = vrot.slane %v2021, 1
        %v2023 = vadd.f32 %v2021, %v2022
        %v2024 = vld [vmem:[%s9] sm:$0xff]
        %v2025 = vld [vmem:[%s9 + $0x8] sm:$0xff]
        %v2026 = vld [vmem:[%s9 + $0x10] sm:$0xff]
        %v2027 = vld [vmem:[%s9 + $0x18] sm:$0xff]
        %v2029 = vsel %vm497, %v2023, 0
        %2031 = vmatprep.subr.mxu0 0.0
        %2032 = vmatpush1.msra.mxu0 0.0
        %2033 = vmatprep.subr.mxu0 0.0
        %2034 = vmatpush1.msra.mxu0 0.0
        %2035 = vmatprep.subr.mxu0 0.0
        %2036 = vmatpush1.msra.mxu0 0.0
        %2037 = vmatprep.subr.mxu0 0.0
        %2038 = vmatpush1.msra.mxu0 0.0
        %2039 = vmatprep.subr.mxu0 0.0
        %2040 = vmatpush1.msra.mxu0 0.0
        %2041 = vmatprep.subr.mxu0 0.0
        %2042 = vmatpush1.msra.mxu0 0.0
        %2043 = vmatprep.subr.mxu0 0.0
        %2044 = vmatpush1.msra.mxu0 0.0
        %2045 = vmatprep.subr.mxu0 0.0
        %2046 = vmatpush1.msra.mxu0 0.0
        %2047 = vmatprep.subr.mxu0 0.0
        %2048 = vmatpush1.msra.mxu0 0.0
        %2049 = vmatprep.subr.mxu0 0.0
        %2050 = vmatpush1.msra.mxu0 0.0
        %2051 = vmatprep.subr.mxu0 0.0
        %2052 = vmatpush1.msra.mxu0 0.0
        %2053 = vmatprep.subr.mxu0 0.0
        %2054 = vmatpush1.msra.mxu0 0.0
        %2055 = vmatprep.subr.mxu0 0.0
        %2056 = vmatpush1.msra.mxu0 %v2027
        %2057 = vmatprep.subr.mxu0 0.0
        %2058 = vmatpush1.msra.mxu0 %v2026
        %2059 = vmatprep.subr.mxu0 0.0
        %2060 = vmatpush1.msra.mxu0 %v2025
        %2061 = vmatprep.subr.mxu0 0.0
        %2062 = vmatpush1.msra.mxu0 %v2024
        %2063 = vmatprep.subr.mxu0 0.0
        %2064 = vmatpush2.msra.mxu0 0.0
        %2065 = vmatprep.subr.mxu0 0.0
        %2066 = vmatpush2.msra.mxu0 0.0
        %2067 = vmatprep.subr.mxu0 0.0
        %2068 = vmatpush2.msra.mxu0 0.0
        %2069 = vmatprep.subr.mxu0 0.0
        %2070 = vmatpush2.msra.mxu0 0.0
        %2071 = vmatprep.subr.mxu0 0.0
        %2072 = vmatpush2.msra.mxu0 0.0
        %2073 = vmatprep.subr.mxu0 0.0
        %2074 = vmatpush2.msra.mxu0 0.0
        %2075 = vmatprep.subr.mxu0 0.0
        %2076 = vmatpush2.msra.mxu0 0.0
        %2077 = vmatprep.subr.mxu0 0.0
        %2078 = vmatpush2.msra.mxu0 0.0
        %2079 = vmatprep.subr.mxu0 0.0
        %2080 = vmatpush2.msra.mxu0 0.0
        %2081 = vmatprep.subr.mxu0 0.0
        %2082 = vmatpush2.msra.mxu0 0.0
        %2083 = vmatprep.subr.mxu0 0.0
        %2084 = vmatpush2.msra.mxu0 0.0
        %2085 = vmatprep.subr.mxu0 0.0
        %2086 = vmatpush2.msra.mxu0 0.0
        %2087 = vmatprep.subr.mxu0 0.0
        %2088 = vmatpush2.msra.mxu0 0.0
        %2089 = vmatprep.subr.mxu0 0.0
        %2090 = vmatpush2.msra.mxu0 0.0
        %2091 = vmatprep.subr.mxu0 0.0
        %2092 = vmatpush2.msra.mxu0 0.0
        %2093 = vmatprep.subr.mxu0 0.0
        %2094 = vmatpush2.msra.mxu0 0.0
        %2095 = vmatprep.mubr.f32.mxu0 0.0
        %2096 = vmatmul.mubr.f32.gmra.mxu0 %v2029
        %v2097 = vpop.f32.mrf.mxu0
        %v2098 = vadd.f32 0.0, %v2097
        %v2099 = vpop.f32.mrf.mxu0
        %2100 = vdwg.mxu0
        %v2101 = vlaneseq
        %v2102 = vshrl.u32 %v2101, 7
        %v2103 = vsub.s32 0, %v2102
        %v2104 = vrot.slane %v2098, %v2103
        %v2105 = vsub.f32 %v1961, %v2104
        %v2106 = vsub.f32 %v1966, %v2104
        %v2107 = vsub.f32 %v1971, %v2104
        %v2108 = vsub.f32 %v1976, %v2104
        %v2109 = vsub.f32 %v1981, %v2104
        %v2110 = vsub.f32 %v1986, %v2104
        %v2111 = vsub.f32 %v1991, %v2104
        %v2112 = vsub.f32 %v1996, %v2104
        %v2113 = vmul.f32 %v2105, %v2105
        %v2114 = vmul.f32 %v2106, %v2106
        %v2115 = vmul.f32 %v2107, %v2107
        %v2116 = vmul.f32 %v2108, %v2108
        %v2117 = vmul.f32 %v2109, %v2109
        %v2118 = vmul.f32 %v2110, %v2110
        %v2119 = vmul.f32 %v2111, %v2111
        %v2120 = vmul.f32 %v2112, %v2112
        %v2121 = vsel %vm497, %v2113, 0.0
        %v2122 = vsel %vm497, %v2114, 0.0
        %v2123 = vadd.f32 %v2121, %v2122
        %v2124 = vsel %vm497, %v2115, 0.0
        %v2125 = vadd.f32 %v2123, %v2124
        %v2126 = vsel %vm497, %v2116, 0.0
        %v2127 = vadd.f32 %v2125, %v2126
        %v2128 = vsel %vm497, %v2117, 0.0
        %v2129 = vadd.f32 %v2127, %v2128
        %v2130 = vsel %vm497, %v2118, 0.0
        %v2131 = vadd.f32 %v2129, %v2130
        %v2132 = vsel %vm497, %v2119, 0.0
        %v2133 = vadd.f32 %v2131, %v2132
        %v2134 = vsel %vm497, %v2120, 0.0
        %v2135 = vadd.f32 %v2133, %v2134
        %v2136 = vrot.slane %v2135, 4
        %v2137 = vadd.f32 %v2135, %v2136
        %v2138 = vrot.slane %v2137, 2
        %v2139 = vadd.f32 %v2137, %v2138
        %v2140 = vrot.slane %v2139, 1
        %v2141 = vadd.f32 %v2139, %v2140
        %v2143 = vsel %vm497, %v2141, 0
        %2145 = vmatprep.subr.mxu0 0.0
        %2146 = vmatpush1.msra.mxu0 0.0
        %2147 = vmatprep.subr.mxu0 0.0
        %2148 = vmatpush1.msra.mxu0 0.0
        %2149 = vmatprep.subr.mxu0 0.0
        %2150 = vmatpush1.msra.mxu0 0.0
        %2151 = vmatprep.subr.mxu0 0.0
        %2152 = vmatpush1.msra.mxu0 0.0
        %2153 = vmatprep.subr.mxu0 0.0
        %2154 = vmatpush1.msra.mxu0 0.0
        %2155 = vmatprep.subr.mxu0 0.0
        %2156 = vmatpush1.msra.mxu0 0.0
        %2157 = vmatprep.subr.mxu0 0.0
        %2158 = vmatpush1.msra.mxu0 0.0
        %2159 = vmatprep.subr.mxu0 0.0
        %2160 = vmatpush1.msra.mxu0 0.0
        %2161 = vmatprep.subr.mxu0 0.0
        %2162 = vmatpush1.msra.mxu0 0.0
        %2163 = vmatprep.subr.mxu0 0.0
        %2164 = vmatpush1.msra.mxu0 0.0
        %2165 = vmatprep.subr.mxu0 0.0
        %2166 = vmatpush1.msra.mxu0 0.0
        %2167 = vmatprep.subr.mxu0 0.0
        %2168 = vmatpush1.msra.mxu0 0.0
        %2169 = vmatprep.subr.mxu0 0.0
        %2170 = vmatpush1.msra.mxu0 %v2027
        %2171 = vmatprep.subr.mxu0 0.0
        %2172 = vmatpush1.msra.mxu0 %v2026
        %2173 = vmatprep.subr.mxu0 0.0
        %2174 = vmatpush1.msra.mxu0 %v2025
        %2175 = vmatprep.subr.mxu0 0.0
        %2176 = vmatpush1.msra.mxu0 %v2024
        %2177 = vmatprep.subr.mxu0 0.0
        %2178 = vmatpush2.msra.mxu0 0.0
        %2179 = vmatprep.subr.mxu0 0.0
        %2180 = vmatpush2.msra.mxu0 0.0
        %2181 = vmatprep.subr.mxu0 0.0
        %2182 = vmatpush2.msra.mxu0 0.0
        %2183 = vmatprep.subr.mxu0 0.0
        %2184 = vmatpush2.msra.mxu0 0.0
        %2185 = vmatprep.subr.mxu0 0.0
        %2186 = vmatpush2.msra.mxu0 0.0
        %2187 = vmatprep.subr.mxu0 0.0
        %2188 = vmatpush2.msra.mxu0 0.0
        %2189 = vmatprep.subr.mxu0 0.0
        %2190 = vmatpush2.msra.mxu0 0.0
        %2191 = vmatprep.subr.mxu0 0.0
        %2192 = vmatpush2.msra.mxu0 0.0
        %2193 = vmatprep.subr.mxu0 0.0
        %2194 = vmatpush2.msra.mxu0 0.0
        %2195 = vmatprep.subr.mxu0 0.0
        %2196 = vmatpush2.msra.mxu0 0.0
        %2197 = vmatprep.subr.mxu0 0.0
        %2198 = vmatpush2.msra.mxu0 0.0
        %2199 = vmatprep.subr.mxu0 0.0
        %2200 = vmatpush2.msra.mxu0 0.0
        %2201 = vmatprep.subr.mxu0 0.0
        %2202 = vmatpush2.msra.mxu0 0.0
        %2203 = vmatprep.subr.mxu0 0.0
        %2204 = vmatpush2.msra.mxu0 0.0
        %2205 = vmatprep.subr.mxu0 0.0
        %2206 = vmatpush2.msra.mxu0 0.0
        %2207 = vmatprep.subr.mxu0 0.0
        %2208 = vmatpush2.msra.mxu0 0.0
        %2209 = vmatprep.mubr.f32.mxu0 0.0
        %2210 = vmatmul.mubr.f32.gmra.mxu0 %v2143
        %v2211 = vpop.f32.mrf.mxu0
        %v2212 = vadd.f32 1e-05, %v2211
        %v2213 = vpop.f32.mrf.mxu0
        %2214 = vdwg.mxu0
        %v2215 = vrsqrt.pop %v2212
        %v2216 = vlaneseq
        %v2217 = vshrl.u32 %v2216, 7
        %v2218 = vsub.s32 0, %v2217
        %v2219 = vrot.slane %v2215, %v2218
        %v2220 = vmul.f32 %v2105, %v2219
        %v2221 = vmul.f32 %v2106, %v2219
        %v2222 = vmul.f32 %v2107, %v2219
        %v2223 = vmul.f32 %v2108, %v2219
        %v2224 = vmul.f32 %v2109, %v2219
        %v2225 = vmul.f32 %v2110, %v2219
        %v2226 = vmul.f32 %v2111, %v2219
        %v2227 = vmul.f32 %v2112, %v2219
        %v2229 = vlaneseq
        %v2230 = vshrl.u32 %v2229, 7
        %v2231 = vsub.s32 0, %v2230
        %v2232 = vrot.slane %v2000, %v2231
        %v2234 = vmul.f32 %v2220, %v2232
        %v2235 = vmul.f32 %v2221, %v2232
        %v2236 = vmul.f32 %v2222, %v2232
        %v2237 = vmul.f32 %v2223, %v2232
        %v2238 = vmul.f32 %v2224, %v2232
        %v2239 = vmul.f32 %v2225, %v2232
        %v2240 = vmul.f32 %v2226, %v2232
        %v2241 = vmul.f32 %v2227, %v2232
        %v2243 = vlaneseq
        %v2244 = vshrl.u32 %v2243, 7
        %v2245 = vsub.s32 0, %v2244
        %v2246 = vrot.slane %v2002, %v2245
        %v2248 = vadd.f32 %v2234, %v2246
        %v2249 = vadd.f32 %v2235, %v2246
        %v2250 = vadd.f32 %v2236, %v2246
        %v2251 = vadd.f32 %v2237, %v2246
        %v2252 = vadd.f32 %v2238, %v2246
        %v2253 = vadd.f32 %v2239, %v2246
        %v2254 = vadd.f32 %v2240, %v2246
        %v2255 = vadd.f32 %v2241, %v2246
        %v2256 = vmax.f32 %v2248, 0.0
        %v2257 = vmax.f32 %v2249, 0.0
        %v2258 = vmax.f32 %v2250, 0.0
        %v2259 = vmax.f32 %v2251, 0.0
        %v2260 = vmax.f32 %v2252, 0.0
        %v2261 = vmax.f32 %v2253, 0.0
        %v2262 = vmax.f32 %v2254, 0.0
        %v2263 = vmax.f32 %v2255, 0.0
        %2264 = vst.msk [vmem:[%s536 + $0x1] sm:$0xff] %vm497, %v528
        %2265 = vst.msk [vmem:[%s536 + $0x11] sm:$0xff] %vm497, %v529
        %2266 = vst.msk [vmem:[%s536 + $0x21] sm:$0xff] %vm497, %v530
        %2267 = vst.msk [vmem:[%s536 + $0x31] sm:$0xff] %vm497, %v531
        %2268 = vst.msk [vmem:[%s536 + $0x41] sm:$0xff] %vm497, %v532
        %2269 = vst.msk [vmem:[%s536 + $0x51] sm:$0xff] %vm497, %v533
        %2270 = vst.msk [vmem:[%s536 + $0x61] sm:$0xff] %vm497, %v534
        %2271 = vst.msk [vmem:[%s536 + $0x71] sm:$0xff] %vm497, %v535
        %v2272 = vld [vmem:[#allocation2] sm:$0xff]
        %v2273 = vld [vmem:[#allocation2 + $0x10] sm:$0xff]
        %v2274 = vld [vmem:[#allocation2 + $0x20] sm:$0xff]
        %v2275 = vld [vmem:[#allocation2 + $0x30] sm:$0xff]
        %v2276 = vld [vmem:[#allocation2 + $0x40] sm:$0xff]
        %v2277 = vld [vmem:[#allocation2 + $0x50] sm:$0xff]
        %v2278 = vld [vmem:[#allocation2 + $0x60] sm:$0xff]
        %v2279 = vld [vmem:[#allocation2 + $0x70] sm:$0xff]
        %v2280 = vld [vmem:[#allocation2 + $0x1] sm:$0xff]
        %v2281 = vld [vmem:[#allocation2 + $0x11] sm:$0xff]
        %v2282 = vld [vmem:[#allocation2 + $0x21] sm:$0xff]
        %v2283 = vld [vmem:[#allocation2 + $0x31] sm:$0xff]
        %v2284 = vld [vmem:[#allocation2 + $0x41] sm:$0xff]
        %v2285 = vld [vmem:[#allocation2 + $0x51] sm:$0xff]
        %v2286 = vld [vmem:[#allocation2 + $0x61] sm:$0xff]
        %v2287 = vld [vmem:[#allocation2 + $0x71] sm:$0xff]
        %v2288 = vld [vmem:[#allocation2 + $0x2] sm:$0xff]
        %v2289 = vld [vmem:[#allocation2 + $0x12] sm:$0xff]
        %v2290 = vld [vmem:[#allocation2 + $0x22] sm:$0xff]
        %v2291 = vld [vmem:[#allocation2 + $0x32] sm:$0xff]
        %v2292 = vld [vmem:[#allocation2 + $0x42] sm:$0xff]
        %v2293 = vld [vmem:[#allocation2 + $0x52] sm:$0xff]
        %v2294 = vld [vmem:[#allocation2 + $0x62] sm:$0xff]
        %v2295 = vld [vmem:[#allocation2 + $0x72] sm:$0xff]
        %v2296 = vld [vmem:[%s536] sm:$0xff]
        %v2297 = vld [vmem:[%s536 + $0x10] sm:$0xff]
        %v2298 = vld [vmem:[%s536 + $0x20] sm:$0xff]
        %v2299 = vld [vmem:[%s536 + $0x30] sm:$0xff]
        %v2300 = vld [vmem:[%s536 + $0x40] sm:$0xff]
        %v2301 = vld [vmem:[%s536 + $0x50] sm:$0xff]
        %v2302 = vld [vmem:[%s536 + $0x60] sm:$0xff]
        %v2303 = vld [vmem:[%s536 + $0x70] sm:$0xff]
        %v2304 = vld [vmem:[%s536 + $0x1] sm:$0xff]
        %v2305 = vld [vmem:[%s536 + $0x11] sm:$0xff]
        %v2306 = vld [vmem:[%s536 + $0x21] sm:$0xff]
        %v2307 = vld [vmem:[%s536 + $0x31] sm:$0xff]
        %v2308 = vld [vmem:[%s536 + $0x41] sm:$0xff]
        %v2309 = vld [vmem:[%s536 + $0x51] sm:$0xff]
        %v2310 = vld [vmem:[%s536 + $0x61] sm:$0xff]
        %v2311 = vld [vmem:[%s536 + $0x71] sm:$0xff]
        %v2312 = vld [vmem:[%s536 + $0x2] sm:$0xff]
        %v2313 = vld [vmem:[%s536 + $0x12] sm:$0xff]
        %v2314 = vld [vmem:[%s536 + $0x22] sm:$0xff]
        %v2315 = vld [vmem:[%s536 + $0x32] sm:$0xff]
        %v2316 = vld [vmem:[%s536 + $0x42] sm:$0xff]
        %v2317 = vld [vmem:[%s536 + $0x52] sm:$0xff]
        %v2318 = vld [vmem:[%s536 + $0x62] sm:$0xff]
        %v2319 = vld [vmem:[%s536 + $0x72] sm:$0xff]
        %v2320 = vld [vmem:[%s593] sm:$0xff]
        %v2321 = vld [vmem:[%s593 + $0x10] sm:$0xff]
        %v2322 = vld [vmem:[%s593 + $0x20] sm:$0xff]
        %v2323 = vld [vmem:[%s593 + $0x30] sm:$0xff]
        %v2324 = vld [vmem:[%s593 + $0x40] sm:$0xff]
        %v2325 = vld [vmem:[%s593 + $0x50] sm:$0xff]
        %v2326 = vld [vmem:[%s593 + $0x60] sm:$0xff]
        %v2327 = vld [vmem:[%s593 + $0x70] sm:$0xff]
        %v2328 = vld [vmem:[%s593 + $0x1] sm:$0xff]
        %v2329 = vld [vmem:[%s593 + $0x11] sm:$0xff]
        %v2330 = vld [vmem:[%s593 + $0x21] sm:$0xff]
        %v2331 = vld [vmem:[%s593 + $0x31] sm:$0xff]
        %v2332 = vld [vmem:[%s593 + $0x41] sm:$0xff]
        %v2333 = vld [vmem:[%s593 + $0x51] sm:$0xff]
        %v2334 = vld [vmem:[%s593 + $0x61] sm:$0xff]
        %v2335 = vld [vmem:[%s593 + $0x71] sm:$0xff]
        %v2336 = vld [vmem:[%s593 + $0x2] sm:$0xff]
        %v2337 = vld [vmem:[%s593 + $0x12] sm:$0xff]
        %v2338 = vld [vmem:[%s593 + $0x22] sm:$0xff]
        %v2339 = vld [vmem:[%s593 + $0x32] sm:$0xff]
        %v2340 = vld [vmem:[%s593 + $0x42] sm:$0xff]
        %v2341 = vld [vmem:[%s593 + $0x52] sm:$0xff]
        %v2342 = vld [vmem:[%s593 + $0x62] sm:$0xff]
        %v2343 = vld [vmem:[%s593 + $0x72] sm:$0xff]
        %2352 = vrot.lane.b32.xlu0 %v2280, 32
        %v2353 = vpop.permute.xlu0 %2352
        %2354 = vrot.lane.b32.xlu0 %v2281, 32
        %v2355 = vpop.permute.xlu0 %2354
        %2356 = vrot.lane.b32.xlu0 %v2282, 32
        %v2357 = vpop.permute.xlu0 %2356
        %2358 = vrot.lane.b32.xlu0 %v2283, 32
        %v2359 = vpop.permute.xlu0 %2358
        %2360 = vrot.lane.b32.xlu0 %v2284, 32
        %v2361 = vpop.permute.xlu0 %2360
        %2362 = vrot.lane.b32.xlu0 %v2285, 32
        %v2363 = vpop.permute.xlu0 %2362
        %2364 = vrot.lane.b32.xlu0 %v2286, 32
        %v2365 = vpop.permute.xlu0 %2364
        %2366 = vrot.lane.b32.xlu0 %v2287, 32
        %v2367 = vpop.permute.xlu0 %2366
        %2384 = vrot.lane.b32.xlu0 %v2288, 64
        %v2385 = vpop.permute.xlu0 %2384
        %2386 = vrot.lane.b32.xlu0 %v2289, 64
        %v2387 = vpop.permute.xlu0 %2386
        %2388 = vrot.lane.b32.xlu0 %v2290, 64
        %v2389 = vpop.permute.xlu0 %2388
        %2390 = vrot.lane.b32.xlu0 %v2291, 64
        %v2391 = vpop.permute.xlu0 %2390
        %2392 = vrot.lane.b32.xlu0 %v2292, 64
        %v2393 = vpop.permute.xlu0 %2392
        %2394 = vrot.lane.b32.xlu0 %v2293, 64
        %v2395 = vpop.permute.xlu0 %2394
        %2396 = vrot.lane.b32.xlu0 %v2294, 64
        %v2397 = vpop.permute.xlu0 %2396
        %2398 = vrot.lane.b32.xlu0 %v2295, 64
        %v2399 = vpop.permute.xlu0 %2398
        %2416 = vrot.lane.b32.xlu0 %v2296, 96
        %v2417 = vpop.permute.xlu0 %2416
        %2418 = vrot.lane.b32.xlu0 %v2297, 96
        %v2419 = vpop.permute.xlu0 %2418
        %2420 = vrot.lane.b32.xlu0 %v2298, 96
        %v2421 = vpop.permute.xlu0 %2420
        %2422 = vrot.lane.b32.xlu0 %v2299, 96
        %v2423 = vpop.permute.xlu0 %2422
        %2424 = vrot.lane.b32.xlu0 %v2300, 96
        %v2425 = vpop.permute.xlu0 %2424
        %2426 = vrot.lane.b32.xlu0 %v2301, 96
        %v2427 = vpop.permute.xlu0 %2426
        %2428 = vrot.lane.b32.xlu0 %v2302, 96
        %v2429 = vpop.permute.xlu0 %2428
        %2430 = vrot.lane.b32.xlu0 %v2303, 96
        %v2431 = vpop.permute.xlu0 %2430
        %2448 = vrot.lane.b32.xlu0 %v2312, 32
        %v2449 = vpop.permute.xlu0 %2448
        %2450 = vrot.lane.b32.xlu0 %v2313, 32
        %v2451 = vpop.permute.xlu0 %2450
        %2452 = vrot.lane.b32.xlu0 %v2314, 32
        %v2453 = vpop.permute.xlu0 %2452
        %2454 = vrot.lane.b32.xlu0 %v2315, 32
        %v2455 = vpop.permute.xlu0 %2454
        %2456 = vrot.lane.b32.xlu0 %v2316, 32
        %v2457 = vpop.permute.xlu0 %2456
        %2458 = vrot.lane.b32.xlu0 %v2317, 32
        %v2459 = vpop.permute.xlu0 %2458
        %2460 = vrot.lane.b32.xlu0 %v2318, 32
        %v2461 = vpop.permute.xlu0 %2460
        %2462 = vrot.lane.b32.xlu0 %v2319, 32
        %v2463 = vpop.permute.xlu0 %2462
        %2480 = vrot.lane.b32.xlu0 %v2320, 64
        %v2481 = vpop.permute.xlu0 %2480
        %2482 = vrot.lane.b32.xlu0 %v2321, 64
        %v2483 = vpop.permute.xlu0 %2482
        %2484 = vrot.lane.b32.xlu0 %v2322, 64
        %v2485 = vpop.permute.xlu0 %2484
        %2486 = vrot.lane.b32.xlu0 %v2323, 64
        %v2487 = vpop.permute.xlu0 %2486
        %2488 = vrot.lane.b32.xlu0 %v2324, 64
        %v2489 = vpop.permute.xlu0 %2488
        %2490 = vrot.lane.b32.xlu0 %v2325, 64
        %v2491 = vpop.permute.xlu0 %2490
        %2492 = vrot.lane.b32.xlu0 %v2326, 64
        %v2493 = vpop.permute.xlu0 %2492
        %2494 = vrot.lane.b32.xlu0 %v2327, 64
        %v2495 = vpop.permute.xlu0 %2494
        %2512 = vrot.lane.b32.xlu0 %v2328, 96
        %v2513 = vpop.permute.xlu0 %2512
        %2514 = vrot.lane.b32.xlu0 %v2329, 96
        %v2515 = vpop.permute.xlu0 %2514
        %2516 = vrot.lane.b32.xlu0 %v2330, 96
        %v2517 = vpop.permute.xlu0 %2516
        %2518 = vrot.lane.b32.xlu0 %v2331, 96
        %v2519 = vpop.permute.xlu0 %2518
        %2520 = vrot.lane.b32.xlu0 %v2332, 96
        %v2521 = vpop.permute.xlu0 %2520
        %2522 = vrot.lane.b32.xlu0 %v2333, 96
        %v2523 = vpop.permute.xlu0 %2522
        %2524 = vrot.lane.b32.xlu0 %v2334, 96
        %v2525 = vpop.permute.xlu0 %2524
        %2526 = vrot.lane.b32.xlu0 %v2335, 96
        %v2527 = vpop.permute.xlu0 %2526
        %v2536 = vsel %vm497, %v2272, %v2353
        %v2537 = vsel %vm497, %v2273, %v2355
        %v2538 = vsel %vm497, %v2274, %v2357
        %v2539 = vsel %vm497, %v2275, %v2359
        %v2540 = vsel %vm497, %v2276, %v2361
        %v2541 = vsel %vm497, %v2277, %v2363
        %v2542 = vsel %vm497, %v2278, %v2365
        %v2543 = vsel %vm497, %v2279, %v2367
        %v2544 = vsel %vm818, %v2536, %v2385
        %v2545 = vsel %vm818, %v2537, %v2387
        %v2546 = vsel %vm818, %v2538, %v2389
        %v2547 = vsel %vm818, %v2539, %v2391
        %v2548 = vsel %vm818, %v2540, %v2393
        %v2549 = vsel %vm818, %v2541, %v2395
        %v2550 = vsel %vm818, %v2542, %v2397
        %v2551 = vsel %vm818, %v2543, %v2399
        %v2552 = vsel %vm827, %v2544, %v2417
        %v2553 = vsel %vm827, %v2545, %v2419
        %v2554 = vsel %vm827, %v2546, %v2421
        %v2555 = vsel %vm827, %v2547, %v2423
        %v2556 = vsel %vm827, %v2548, %v2425
        %v2557 = vsel %vm827, %v2549, %v2427
        %v2558 = vsel %vm827, %v2550, %v2429
        %v2559 = vsel %vm827, %v2551, %v2431
        %v2560 = vsel %vm497, %v2304, %v2449
        %v2561 = vsel %vm497, %v2305, %v2451
        %v2562 = vsel %vm497, %v2306, %v2453
        %v2563 = vsel %vm497, %v2307, %v2455
        %v2564 = vsel %vm497, %v2308, %v2457
        %v2565 = vsel %vm497, %v2309, %v2459
        %v2566 = vsel %vm497, %v2310, %v2461
        %v2567 = vsel %vm497, %v2311, %v2463
        %v2568 = vsel %vm818, %v2560, %v2481
        %v2569 = vsel %vm818, %v2561, %v2483
        %v2570 = vsel %vm818, %v2562, %v2485
        %v2571 = vsel %vm818, %v2563, %v2487
        %v2572 = vsel %vm818, %v2564, %v2489
        %v2573 = vsel %vm818, %v2565, %v2491
        %v2574 = vsel %vm818, %v2566, %v2493
        %v2575 = vsel %vm818, %v2567, %v2495
        %v2576 = vsel %vm827, %v2568, %v2513
        %v2577 = vsel %vm827, %v2569, %v2515
        %v2578 = vsel %vm827, %v2570, %v2517
        %v2579 = vsel %vm827, %v2571, %v2519
        %v2580 = vsel %vm827, %v2572, %v2521
        %v2581 = vsel %vm827, %v2573, %v2523
        %v2582 = vsel %vm827, %v2574, %v2525
        %v2583 = vsel %vm827, %v2575, %v2527
        %s2584 = scalar_lea.vmem %s1, 576
        %v2585 = vld [vmem:[%s2584] sm:$0xff]
        %v2586 = vld [vmem:[%s2584 + $0x8] sm:$0xff]
        %v2587 = vld [vmem:[%s2584 + $0x10] sm:$0xff]
        %v2588 = vld [vmem:[%s2584 + $0x18] sm:$0xff]
        %v2589 = vld [vmem:[%s2584 + $0x20] sm:$0xff]
        %v2590 = vld [vmem:[%s2584 + $0x28] sm:$0xff]
        %v2591 = vld [vmem:[%s2584 + $0x30] sm:$0xff]
        %v2592 = vld [vmem:[%s2584 + $0x38] sm:$0xff]
        %v2593 = vld [vmem:[%s2584 + $0x40] sm:$0xff]
        %v2594 = vld [vmem:[%s2584 + $0x48] sm:$0xff]
        %v2595 = vld [vmem:[%s2584 + $0x50] sm:$0xff]
        %v2596 = vld [vmem:[%s2584 + $0x58] sm:$0xff]
        %v2597 = vld [vmem:[%s2584 + $0x60] sm:$0xff]
        %v2598 = vld [vmem:[%s2584 + $0x68] sm:$0xff]
        %v2599 = vld [vmem:[%s2584 + $0x70] sm:$0xff]
        %v2600 = vld [vmem:[%s2584 + $0x78] sm:$0xff]
        %v2601 = vld [vmem:[%s2584 + $0x80] sm:$0xff]
        %v2602 = vld [vmem:[%s2584 + $0x88] sm:$0xff]
        %v2603 = vld [vmem:[%s2584 + $0x90] sm:$0xff]
        %v2604 = vld [vmem:[%s2584 + $0x98] sm:$0xff]
        %v2605 = vld [vmem:[%s2584 + $0xa0] sm:$0xff]
        %v2606 = vld [vmem:[%s2584 + $0xa8] sm:$0xff]
        %v2607 = vld [vmem:[%s2584 + $0xb0] sm:$0xff]
        %v2608 = vld [vmem:[%s2584 + $0xb8] sm:$0xff]
        %v2609 = vld [vmem:[%s2584 + $0xc0] sm:$0xff]
        %v2610 = vld [vmem:[%s2584 + $0xc8] sm:$0xff]
        %v2611 = vld [vmem:[%s2584 + $0xd0] sm:$0xff]
        %v2612 = vld [vmem:[%s2584 + $0xd8] sm:$0xff]
        %v2613 = vld [vmem:[%s2584 + $0xe0] sm:$0xff]
        %v2614 = vld [vmem:[%s2584 + $0xe8] sm:$0xff]
        %v2615 = vld [vmem:[%s2584 + $0xf0] sm:$0xff]
        %v2616 = vld [vmem:[%s2584 + $0xf8] sm:$0xff]
        %v2617 = vld [vmem:[%s2584 + $0x100] sm:$0xff]
        %v2618 = vld [vmem:[%s2584 + $0x108] sm:$0xff]
        %v2619 = vld [vmem:[%s2584 + $0x110] sm:$0xff]
        %v2620 = vld [vmem:[%s2584 + $0x118] sm:$0xff]
        %s2621 = scalar_lea.vmem %s2, 2
        %v2622 = vld [vmem:[%s2621] sm:$0x1]
        %v2624 = vlaneseq
        %v2625 = vshrl.u32 %v2624, 7
        %v2626 = vsub.s32 0, %v2625
        %v2627 = vrot.slane %v2622, %v2626
        %v2630 = vsel %vm497, %v2336, 0
        %v2633 = vsel %vm497, %v2337, 0
        %v2636 = vsel %vm497, %v2338, 0
        %v2639 = vsel %vm497, %v2339, 0
        %v2642 = vsel %vm497, %v2340, 0
        %v2645 = vsel %vm497, %v2341, 0
        %v2648 = vsel %vm497, %v2342, 0
        %v2651 = vsel %vm497, %v2343, 0
        %2653 = vmatprep.subr.mxu0 0.0
        %2654 = vmatpush1.msra.mxu0 %v2600
        %2655 = vmatprep.subr.mxu0 0.0
        %2656 = vmatpush1.msra.mxu0 %v2599
        %2657 = vmatprep.subr.mxu0 0.0
        %2658 = vmatpush1.msra.mxu0 %v2598
        %2659 = vmatprep.subr.mxu0 0.0
        %2660 = vmatpush1.msra.mxu0 %v2597
        %2661 = vmatprep.subr.mxu0 0.0
        %2662 = vmatpush1.msra.mxu0 %v2596
        %2663 = vmatprep.subr.mxu0 0.0
        %2664 = vmatpush1.msra.mxu0 %v2595
        %2665 = vmatprep.subr.mxu0 0.0
        %2666 = vmatpush1.msra.mxu0 %v2594
        %2667 = vmatprep.subr.mxu0 0.0
        %2668 = vmatpush1.msra.mxu0 %v2593
        %2669 = vmatprep.subr.mxu0 0.0
        %2670 = vmatpush1.msra.mxu0 %v2592
        %2671 = vmatprep.subr.mxu0 0.0
        %2672 = vmatpush1.msra.mxu0 %v2591
        %2673 = vmatprep.subr.mxu0 0.0
        %2674 = vmatpush1.msra.mxu0 %v2590
        %2675 = vmatprep.subr.mxu0 0.0
        %2676 = vmatpush1.msra.mxu0 %v2589
        %2677 = vmatprep.subr.mxu0 0.0
        %2678 = vmatpush1.msra.mxu0 %v2588
        %2679 = vmatprep.subr.mxu0 0.0
        %2680 = vmatpush1.msra.mxu0 %v2587
        %2681 = vmatprep.subr.mxu0 0.0
        %2682 = vmatpush1.msra.mxu0 %v2586
        %2683 = vmatprep.subr.mxu0 0.0
        %2684 = vmatpush1.msra.mxu0 %v2585
        %2685 = vmatprep.subr.mxu0 0.0
        %2686 = vmatpush2.msra.mxu0 %v2616
        %2687 = vmatprep.subr.mxu0 0.0
        %2688 = vmatpush2.msra.mxu0 %v2615
        %2689 = vmatprep.subr.mxu0 0.0
        %2690 = vmatpush2.msra.mxu0 %v2614
        %2691 = vmatprep.subr.mxu0 0.0
        %2692 = vmatpush2.msra.mxu0 %v2613
        %2693 = vmatprep.subr.mxu0 0.0
        %2694 = vmatpush2.msra.mxu0 %v2612
        %2695 = vmatprep.subr.mxu0 0.0
        %2696 = vmatpush2.msra.mxu0 %v2611
        %2697 = vmatprep.subr.mxu0 0.0
        %2698 = vmatpush2.msra.mxu0 %v2610
        %2699 = vmatprep.subr.mxu0 0.0
        %2700 = vmatpush2.msra.mxu0 %v2609
        %2701 = vmatprep.subr.mxu0 0.0
        %2702 = vmatpush2.msra.mxu0 %v2608
        %2703 = vmatprep.subr.mxu0 0.0
        %2704 = vmatpush2.msra.mxu0 %v2607
        %2705 = vmatprep.subr.mxu0 0.0
        %2706 = vmatpush2.msra.mxu0 %v2606
        %2707 = vmatprep.subr.mxu0 0.0
        %2708 = vmatpush2.msra.mxu0 %v2605
        %2709 = vmatprep.subr.mxu0 0.0
        %2710 = vmatpush2.msra.mxu0 %v2604
        %2711 = vmatprep.subr.mxu0 0.0
        %2712 = vmatpush2.msra.mxu0 %v2603
        %2713 = vmatprep.subr.mxu0 0.0
        %2714 = vmatpush2.msra.mxu0 %v2602
        %2715 = vmatprep.subr.mxu0 0.0
        %2716 = vmatpush2.msra.mxu0 %v2601
        %2717 = vmatprep.mubr.f32.mxu0 %v2576
        %2718 = vmatmul.mubr.f32.gmra.mxu0 %v2552
        %v2719 = vpop.f32.mrf.mxu0
        %v2720 = vadd.f32 %v2627, %v2719
        %v2721 = vpop.f32.mrf.mxu0
        %2722 = vmatprep.mubr.f32.mxu0 %v2577
        %2723 = vmatmul.mubr.f32.gmra.mxu0 %v2553
        %v2724 = vpop.f32.mrf.mxu0
        %v2725 = vadd.f32 %v2627, %v2724
        %v2726 = vpop.f32.mrf.mxu0
        %2727 = vmatprep.mubr.f32.mxu0 %v2578
        %2728 = vmatmul.mubr.f32.gmra.mxu0 %v2554
        %v2729 = vpop.f32.mrf.mxu0
        %v2730 = vadd.f32 %v2627, %v2729
        %v2731 = vpop.f32.mrf.mxu0
        %2732 = vmatprep.mubr.f32.mxu0 %v2579
        %2733 = vmatmul.mubr.f32.gmra.mxu0 %v2555
        %v2734 = vpop.f32.mrf.mxu0
        %v2735 = vadd.f32 %v2627, %v2734
        %v2736 = vpop.f32.mrf.mxu0
        %2737 = vmatprep.mubr.f32.mxu0 %v2580
        %2738 = vmatmul.mubr.f32.gmra.mxu0 %v2556
        %v2739 = vpop.f32.mrf.mxu0
        %v2740 = vadd.f32 %v2627, %v2739
        %v2741 = vpop.f32.mrf.mxu0
        %2742 = vmatprep.mubr.f32.mxu0 %v2581
        %2743 = vmatmul.mubr.f32.gmra.mxu0 %v2557
        %v2744 = vpop.f32.mrf.mxu0
        %v2745 = vadd.f32 %v2627, %v2744
        %v2746 = vpop.f32.mrf.mxu0
        %2747 = vmatprep.mubr.f32.mxu0 %v2582
        %2748 = vmatmul.mubr.f32.gmra.mxu0 %v2558
        %v2749 = vpop.f32.mrf.mxu0
        %v2750 = vadd.f32 %v2627, %v2749
        %v2751 = vpop.f32.mrf.mxu0
        %2752 = vmatprep.mubr.f32.mxu0 %v2583
        %2753 = vmatmul.mubr.f32.gmra.mxu0 %v2559
        %v2754 = vpop.f32.mrf.mxu0
        %v2755 = vadd.f32 %v2627, %v2754
        %v2756 = vpop.f32.mrf.mxu0
        %2757 = vdwg.mxu0
        %2758 = vmatprep.subr.mxu0 0.0
        %2759 = vmatpush1.msra.mxu0 0.0
        %2760 = vmatprep.subr.mxu0 0.0
        %2761 = vmatpush1.msra.mxu0 0.0
        %2762 = vmatprep.subr.mxu0 0.0
        %2763 = vmatpush1.msra.mxu0 0.0
        %2764 = vmatprep.subr.mxu0 0.0
        %2765 = vmatpush1.msra.mxu0 0.0
        %2766 = vmatprep.subr.mxu0 0.0
        %2767 = vmatpush1.msra.mxu0 0.0
        %2768 = vmatprep.subr.mxu0 0.0
        %2769 = vmatpush1.msra.mxu0 0.0
        %2770 = vmatprep.subr.mxu0 0.0
        %2771 = vmatpush1.msra.mxu0 0.0
        %2772 = vmatprep.subr.mxu0 0.0
        %2773 = vmatpush1.msra.mxu0 0.0
        %2774 = vmatprep.subr.mxu0 0.0
        %2775 = vmatpush1.msra.mxu0 0.0
        %2776 = vmatprep.subr.mxu0 0.0
        %2777 = vmatpush1.msra.mxu0 0.0
        %2778 = vmatprep.subr.mxu0 0.0
        %2779 = vmatpush1.msra.mxu0 0.0
        %2780 = vmatprep.subr.mxu0 0.0
        %2781 = vmatpush1.msra.mxu0 0.0
        %2782 = vmatprep.subr.mxu0 0.0
        %2783 = vmatpush1.msra.mxu0 %v2620
        %2784 = vmatprep.subr.mxu0 0.0
        %2785 = vmatpush1.msra.mxu0 %v2619
        %2786 = vmatprep.subr.mxu0 0.0
        %2787 = vmatpush1.msra.mxu0 %v2618
        %2788 = vmatprep.subr.mxu0 0.0
        %2789 = vmatpush1.msra.mxu0 %v2617
        %2790 = vmatprep.subr.mxu0 0.0
        %2791 = vmatpush2.msra.mxu0 0.0
        %2792 = vmatprep.subr.mxu0 0.0
        %2793 = vmatpush2.msra.mxu0 0.0
        %2794 = vmatprep.subr.mxu0 0.0
        %2795 = vmatpush2.msra.mxu0 0.0
        %2796 = vmatprep.subr.mxu0 0.0
        %2797 = vmatpush2.msra.mxu0 0.0
        %2798 = vmatprep.subr.mxu0 0.0
        %2799 = vmatpush2.msra.mxu0 0.0
        %2800 = vmatprep.subr.mxu0 0.0
        %2801 = vmatpush2.msra.mxu0 0.0
        %2802 = vmatprep.subr.mxu0 0.0
        %2803 = vmatpush2.msra.mxu0 0.0
        %2804 = vmatprep.subr.mxu0 0.0
        %2805 = vmatpush2.msra.mxu0 0.0
        %2806 = vmatprep.subr.mxu0 0.0
        %2807 = vmatpush2.msra.mxu0 0.0
        %2808 = vmatprep.subr.mxu0 0.0
        %2809 = vmatpush2.msra.mxu0 0.0
        %2810 = vmatprep.subr.mxu0 0.0
        %2811 = vmatpush2.msra.mxu0 0.0
        %2812 = vmatprep.subr.mxu0 0.0
        %2813 = vmatpush2.msra.mxu0 0.0
        %2814 = vmatprep.subr.mxu0 0.0
        %2815 = vmatpush2.msra.mxu0 0.0
        %2816 = vmatprep.subr.mxu0 0.0
        %2817 = vmatpush2.msra.mxu0 0.0
        %2818 = vmatprep.subr.mxu0 0.0
        %2819 = vmatpush2.msra.mxu0 0.0
        %2820 = vmatprep.subr.mxu0 0.0
        %2821 = vmatpush2.msra.mxu0 0.0
        %2822 = vmatprep.mubr.f32.mxu0 0.0
        %2823 = vmatmul.mubr.f32.gmra.mxu0 %v2630
        %v2824 = vpop.f32.mrf.mxu0
        %v2825 = vadd.f32 %v2720, %v2824
        %v2826 = vpop.f32.mrf.mxu0
        %2827 = vmatprep.mubr.f32.mxu0 0.0
        %2828 = vmatmul.mubr.f32.gmra.mxu0 %v2633
        %v2829 = vpop.f32.mrf.mxu0
        %v2830 = vadd.f32 %v2725, %v2829
        %v2831 = vpop.f32.mrf.mxu0
        %2832 = vmatprep.mubr.f32.mxu0 0.0
        %2833 = vmatmul.mubr.f32.gmra.mxu0 %v2636
        %v2834 = vpop.f32.mrf.mxu0
        %v2835 = vadd.f32 %v2730, %v2834
        %v2836 = vpop.f32.mrf.mxu0
        %2837 = vmatprep.mubr.f32.mxu0 0.0
        %2838 = vmatmul.mubr.f32.gmra.mxu0 %v2639
        %v2839 = vpop.f32.mrf.mxu0
        %v2840 = vadd.f32 %v2735, %v2839
        %v2841 = vpop.f32.mrf.mxu0
        %2842 = vmatprep.mubr.f32.mxu0 0.0
        %2843 = vmatmul.mubr.f32.gmra.mxu0 %v2642
        %v2844 = vpop.f32.mrf.mxu0
        %v2845 = vadd.f32 %v2740, %v2844
        %v2846 = vpop.f32.mrf.mxu0
        %2847 = vmatprep.mubr.f32.mxu0 0.0
        %2848 = vmatmul.mubr.f32.gmra.mxu0 %v2645
        %v2849 = vpop.f32.mrf.mxu0
        %v2850 = vadd.f32 %v2745, %v2849
        %v2851 = vpop.f32.mrf.mxu0
        %2852 = vmatprep.mubr.f32.mxu0 0.0
        %2853 = vmatmul.mubr.f32.gmra.mxu0 %v2648
        %v2854 = vpop.f32.mrf.mxu0
        %v2855 = vadd.f32 %v2750, %v2854
        %v2856 = vpop.f32.mrf.mxu0
        %2857 = vmatprep.mubr.f32.mxu0 0.0
        %2858 = vmatmul.mubr.f32.gmra.mxu0 %v2651
        %v2859 = vpop.f32.mrf.mxu0
        %v2860 = vadd.f32 %v2755, %v2859
        %v2861 = vpop.f32.mrf.mxu0
        %2862 = vdwg.mxu0
        %s2863 = scalar_lea.vmem %s3, 2
        %v2864 = vld [vmem:[%s2863] sm:$0x1]
        %s2865 = scalar_lea.vmem %s4, 2
        %v2866 = vld [vmem:[%s2865] sm:$0x1]
        %v2867 = vsel %vm497, %v2825, 0.0
        %v2868 = vsel %vm497, %v2830, 0.0
        %v2869 = vadd.f32 %v2867, %v2868
        %v2870 = vsel %vm497, %v2835, 0.0
        %v2871 = vadd.f32 %v2869, %v2870
        %v2872 = vsel %vm497, %v2840, 0.0
        %v2873 = vadd.f32 %v2871, %v2872
        %v2874 = vsel %vm497, %v2845, 0.0
        %v2875 = vadd.f32 %v2873, %v2874
        %v2876 = vsel %vm497, %v2850, 0.0
        %v2877 = vadd.f32 %v2875, %v2876
        %v2878 = vsel %vm497, %v2855, 0.0
        %v2879 = vadd.f32 %v2877, %v2878
        %v2880 = vsel %vm497, %v2860, 0.0
        %v2881 = vadd.f32 %v2879, %v2880
        %v2882 = vrot.slane %v2881, 4
        %v2883 = vadd.f32 %v2881, %v2882
        %v2884 = vrot.slane %v2883, 2
        %v2885 = vadd.f32 %v2883, %v2884
        %v2886 = vrot.slane %v2885, 1
        %v2887 = vadd.f32 %v2885, %v2886
        %v2888 = vld [vmem:[%s9] sm:$0xff]
        %v2889 = vld [vmem:[%s9 + $0x8] sm:$0xff]
        %v2890 = vld [vmem:[%s9 + $0x10] sm:$0xff]
        %v2891 = vld [vmem:[%s9 + $0x18] sm:$0xff]
        %v2893 = vsel %vm497, %v2887, 0
        %2895 = vmatprep.subr.mxu0 0.0
        %2896 = vmatpush1.msra.mxu0 0.0
        %2897 = vmatprep.subr.mxu0 0.0
        %2898 = vmatpush1.msra.mxu0 0.0
        %2899 = vmatprep.subr.mxu0 0.0
        %2900 = vmatpush1.msra.mxu0 0.0
        %2901 = vmatprep.subr.mxu0 0.0
        %2902 = vmatpush1.msra.mxu0 0.0
        %2903 = vmatprep.subr.mxu0 0.0
        %2904 = vmatpush1.msra.mxu0 0.0
        %2905 = vmatprep.subr.mxu0 0.0
        %2906 = vmatpush1.msra.mxu0 0.0
        %2907 = vmatprep.subr.mxu0 0.0
        %2908 = vmatpush1.msra.mxu0 0.0
        %2909 = vmatprep.subr.mxu0 0.0
        %2910 = vmatpush1.msra.mxu0 0.0
        %2911 = vmatprep.subr.mxu0 0.0
        %2912 = vmatpush1.msra.mxu0 0.0
        %2913 = vmatprep.subr.mxu0 0.0
        %2914 = vmatpush1.msra.mxu0 0.0
        %2915 = vmatprep.subr.mxu0 0.0
        %2916 = vmatpush1.msra.mxu0 0.0
        %2917 = vmatprep.subr.mxu0 0.0
        %2918 = vmatpush1.msra.mxu0 0.0
        %2919 = vmatprep.subr.mxu0 0.0
        %2920 = vmatpush1.msra.mxu0 %v2891
        %2921 = vmatprep.subr.mxu0 0.0
        %2922 = vmatpush1.msra.mxu0 %v2890
        %2923 = vmatprep.subr.mxu0 0.0
        %2924 = vmatpush1.msra.mxu0 %v2889
        %2925 = vmatprep.subr.mxu0 0.0
        %2926 = vmatpush1.msra.mxu0 %v2888
        %2927 = vmatprep.subr.mxu0 0.0
        %2928 = vmatpush2.msra.mxu0 0.0
        %2929 = vmatprep.subr.mxu0 0.0
        %2930 = vmatpush2.msra.mxu0 0.0
        %2931 = vmatprep.subr.mxu0 0.0
        %2932 = vmatpush2.msra.mxu0 0.0
        %2933 = vmatprep.subr.mxu0 0.0
        %2934 = vmatpush2.msra.mxu0 0.0
        %2935 = vmatprep.subr.mxu0 0.0
        %2936 = vmatpush2.msra.mxu0 0.0
        %2937 = vmatprep.subr.mxu0 0.0
        %2938 = vmatpush2.msra.mxu0 0.0
        %2939 = vmatprep.subr.mxu0 0.0
        %2940 = vmatpush2.msra.mxu0 0.0
        %2941 = vmatprep.subr.mxu0 0.0
        %2942 = vmatpush2.msra.mxu0 0.0
        %2943 = vmatprep.subr.mxu0 0.0
        %2944 = vmatpush2.msra.mxu0 0.0
        %2945 = vmatprep.subr.mxu0 0.0
        %2946 = vmatpush2.msra.mxu0 0.0
        %2947 = vmatprep.subr.mxu0 0.0
        %2948 = vmatpush2.msra.mxu0 0.0
        %2949 = vmatprep.subr.mxu0 0.0
        %2950 = vmatpush2.msra.mxu0 0.0
        %2951 = vmatprep.subr.mxu0 0.0
        %2952 = vmatpush2.msra.mxu0 0.0
        %2953 = vmatprep.subr.mxu0 0.0
        %2954 = vmatpush2.msra.mxu0 0.0
        %2955 = vmatprep.subr.mxu0 0.0
        %2956 = vmatpush2.msra.mxu0 0.0
        %2957 = vmatprep.subr.mxu0 0.0
        %2958 = vmatpush2.msra.mxu0 0.0
        %2959 = vmatprep.mubr.f32.mxu0 0.0
        %2960 = vmatmul.mubr.f32.gmra.mxu0 %v2893
        %v2961 = vpop.f32.mrf.mxu0
        %v2962 = vadd.f32 0.0, %v2961
        %v2963 = vpop.f32.mrf.mxu0
        %2964 = vdwg.mxu0
        %v2965 = vlaneseq
        %v2966 = vshrl.u32 %v2965, 7
        %v2967 = vsub.s32 0, %v2966
        %v2968 = vrot.slane %v2962, %v2967
        %v2969 = vsub.f32 %v2825, %v2968
        %v2970 = vsub.f32 %v2830, %v2968
        %v2971 = vsub.f32 %v2835, %v2968
        %v2972 = vsub.f32 %v2840, %v2968
        %v2973 = vsub.f32 %v2845, %v2968
        %v2974 = vsub.f32 %v2850, %v2968
        %v2975 = vsub.f32 %v2855, %v2968
        %v2976 = vsub.f32 %v2860, %v2968
        %v2977 = vmul.f32 %v2969, %v2969
        %v2978 = vmul.f32 %v2970, %v2970
        %v2979 = vmul.f32 %v2971, %v2971
        %v2980 = vmul.f32 %v2972, %v2972
        %v2981 = vmul.f32 %v2973, %v2973
        %v2982 = vmul.f32 %v2974, %v2974
        %v2983 = vmul.f32 %v2975, %v2975
        %v2984 = vmul.f32 %v2976, %v2976
        %v2985 = vsel %vm497, %v2977, 0.0
        %v2986 = vsel %vm497, %v2978, 0.0
        %v2987 = vadd.f32 %v2985, %v2986
        %v2988 = vsel %vm497, %v2979, 0.0
        %v2989 = vadd.f32 %v2987, %v2988
        %v2990 = vsel %vm497, %v2980, 0.0
        %v2991 = vadd.f32 %v2989, %v2990
        %v2992 = vsel %vm497, %v2981, 0.0
        %v2993 = vadd.f32 %v2991, %v2992
        %v2994 = vsel %vm497, %v2982, 0.0
        %v2995 = vadd.f32 %v2993, %v2994
        %v2996 = vsel %vm497, %v2983, 0.0
        %v2997 = vadd.f32 %v2995, %v2996
        %v2998 = vsel %vm497, %v2984, 0.0
        %v2999 = vadd.f32 %v2997, %v2998
        %v3000 = vrot.slane %v2999, 4
        %v3001 = vadd.f32 %v2999, %v3000
        %v3002 = vrot.slane %v3001, 2
        %v3003 = vadd.f32 %v3001, %v3002
        %v3004 = vrot.slane %v3003, 1
        %v3005 = vadd.f32 %v3003, %v3004
        %v3007 = vsel %vm497, %v3005, 0
        %3009 = vmatprep.subr.mxu0 0.0
        %3010 = vmatpush1.msra.mxu0 0.0
        %3011 = vmatprep.subr.mxu0 0.0
        %3012 = vmatpush1.msra.mxu0 0.0
        %3013 = vmatprep.subr.mxu0 0.0
        %3014 = vmatpush1.msra.mxu0 0.0
        %3015 = vmatprep.subr.mxu0 0.0
        %3016 = vmatpush1.msra.mxu0 0.0
        %3017 = vmatprep.subr.mxu0 0.0
        %3018 = vmatpush1.msra.mxu0 0.0
        %3019 = vmatprep.subr.mxu0 0.0
        %3020 = vmatpush1.msra.mxu0 0.0
        %3021 = vmatprep.subr.mxu0 0.0
        %3022 = vmatpush1.msra.mxu0 0.0
        %3023 = vmatprep.subr.mxu0 0.0
        %3024 = vmatpush1.msra.mxu0 0.0
        %3025 = vmatprep.subr.mxu0 0.0
        %3026 = vmatpush1.msra.mxu0 0.0
        %3027 = vmatprep.subr.mxu0 0.0
        %3028 = vmatpush1.msra.mxu0 0.0
        %3029 = vmatprep.subr.mxu0 0.0
        %3030 = vmatpush1.msra.mxu0 0.0
        %3031 = vmatprep.subr.mxu0 0.0
        %3032 = vmatpush1.msra.mxu0 0.0
        %3033 = vmatprep.subr.mxu0 0.0
        %3034 = vmatpush1.msra.mxu0 %v2891
        %3035 = vmatprep.subr.mxu0 0.0
        %3036 = vmatpush1.msra.mxu0 %v2890
        %3037 = vmatprep.subr.mxu0 0.0
        %3038 = vmatpush1.msra.mxu0 %v2889
        %3039 = vmatprep.subr.mxu0 0.0
        %3040 = vmatpush1.msra.mxu0 %v2888
        %3041 = vmatprep.subr.mxu0 0.0
        %3042 = vmatpush2.msra.mxu0 0.0
        %3043 = vmatprep.subr.mxu0 0.0
        %3044 = vmatpush2.msra.mxu0 0.0
        %3045 = vmatprep.subr.mxu0 0.0
        %3046 = vmatpush2.msra.mxu0 0.0
        %3047 = vmatprep.subr.mxu0 0.0
        %3048 = vmatpush2.msra.mxu0 0.0
        %3049 = vmatprep.subr.mxu0 0.0
        %3050 = vmatpush2.msra.mxu0 0.0
        %3051 = vmatprep.subr.mxu0 0.0
        %3052 = vmatpush2.msra.mxu0 0.0
        %3053 = vmatprep.subr.mxu0 0.0
        %3054 = vmatpush2.msra.mxu0 0.0
        %3055 = vmatprep.subr.mxu0 0.0
        %3056 = vmatpush2.msra.mxu0 0.0
        %3057 = vmatprep.subr.mxu0 0.0
        %3058 = vmatpush2.msra.mxu0 0.0
        %3059 = vmatprep.subr.mxu0 0.0
        %3060 = vmatpush2.msra.mxu0 0.0
        %3061 = vmatprep.subr.mxu0 0.0
        %3062 = vmatpush2.msra.mxu0 0.0
        %3063 = vmatprep.subr.mxu0 0.0
        %3064 = vmatpush2.msra.mxu0 0.0
        %3065 = vmatprep.subr.mxu0 0.0
        %3066 = vmatpush2.msra.mxu0 0.0
        %3067 = vmatprep.subr.mxu0 0.0
        %3068 = vmatpush2.msra.mxu0 0.0
        %3069 = vmatprep.subr.mxu0 0.0
        %3070 = vmatpush2.msra.mxu0 0.0
        %3071 = vmatprep.subr.mxu0 0.0
        %3072 = vmatpush2.msra.mxu0 0.0
        %3073 = vmatprep.mubr.f32.mxu0 0.0
        %3074 = vmatmul.mubr.f32.gmra.mxu0 %v3007
        %v3075 = vpop.f32.mrf.mxu0
        %v3076 = vadd.f32 1e-05, %v3075
        %v3077 = vpop.f32.mrf.mxu0
        %3078 = vdwg.mxu0
        %v3079 = vrsqrt.pop %v3076
        %v3080 = vlaneseq
        %v3081 = vshrl.u32 %v3080, 7
        %v3082 = vsub.s32 0, %v3081
        %v3083 = vrot.slane %v3079, %v3082
        %v3084 = vmul.f32 %v2969, %v3083
        %v3085 = vmul.f32 %v2970, %v3083
        %v3086 = vmul.f32 %v2971, %v3083
        %v3087 = vmul.f32 %v2972, %v3083
        %v3088 = vmul.f32 %v2973, %v3083
        %v3089 = vmul.f32 %v2974, %v3083
        %v3090 = vmul.f32 %v2975, %v3083
        %v3091 = vmul.f32 %v2976, %v3083
        %v3093 = vlaneseq
        %v3094 = vshrl.u32 %v3093, 7
        %v3095 = vsub.s32 0, %v3094
        %v3096 = vrot.slane %v2864, %v3095
        %v3098 = vmul.f32 %v3084, %v3096
        %v3099 = vmul.f32 %v3085, %v3096
        %v3100 = vmul.f32 %v3086, %v3096
        %v3101 = vmul.f32 %v3087, %v3096
        %v3102 = vmul.f32 %v3088, %v3096
        %v3103 = vmul.f32 %v3089, %v3096
        %v3104 = vmul.f32 %v3090, %v3096
        %v3105 = vmul.f32 %v3091, %v3096
        %v3107 = vlaneseq
        %v3108 = vshrl.u32 %v3107, 7
        %v3109 = vsub.s32 0, %v3108
        %v3110 = vrot.slane %v2866, %v3109
        %v3112 = vadd.f32 %v3098, %v3110
        %v3113 = vadd.f32 %v3099, %v3110
        %v3114 = vadd.f32 %v3100, %v3110
        %v3115 = vadd.f32 %v3101, %v3110
        %v3116 = vadd.f32 %v3102, %v3110
        %v3117 = vadd.f32 %v3103, %v3110
        %v3118 = vadd.f32 %v3104, %v3110
        %v3119 = vadd.f32 %v3105, %v3110
        %v3120 = vmax.f32 %v3112, 0.0
        %v3121 = vmax.f32 %v3113, 0.0
        %v3122 = vmax.f32 %v3114, 0.0
        %v3123 = vmax.f32 %v3115, 0.0
        %v3124 = vmax.f32 %v3116, 0.0
        %v3125 = vmax.f32 %v3117, 0.0
        %v3126 = vmax.f32 %v3118, 0.0
        %v3127 = vmax.f32 %v3119, 0.0
        %3128 = vst.msk [vmem:[%s536 + $0x1] sm:$0xff] %vm497, %v3120
        %3129 = vst.msk [vmem:[%s536 + $0x11] sm:$0xff] %vm497, %v3121
        %3130 = vst.msk [vmem:[%s536 + $0x21] sm:$0xff] %vm497, %v3122
        %3131 = vst.msk [vmem:[%s536 + $0x31] sm:$0xff] %vm497, %v3123
        %3132 = vst.msk [vmem:[%s536 + $0x41] sm:$0xff] %vm497, %v3124
        %3133 = vst.msk [vmem:[%s536 + $0x51] sm:$0xff] %vm497, %v3125
        %3134 = vst.msk [vmem:[%s536 + $0x61] sm:$0xff] %vm497, %v3126
        %3135 = vst.msk [vmem:[%s536 + $0x71] sm:$0xff] %vm497, %v3127
        %v3136 = vld [vmem:[#allocation2] sm:$0xff]
        %v3137 = vld [vmem:[#allocation2 + $0x10] sm:$0xff]
        %v3138 = vld [vmem:[#allocation2 + $0x20] sm:$0xff]
        %v3139 = vld [vmem:[#allocation2 + $0x30] sm:$0xff]
        %v3140 = vld [vmem:[#allocation2 + $0x40] sm:$0xff]
        %v3141 = vld [vmem:[#allocation2 + $0x50] sm:$0xff]
        %v3142 = vld [vmem:[#allocation2 + $0x60] sm:$0xff]
        %v3143 = vld [vmem:[#allocation2 + $0x70] sm:$0xff]
        %v3144 = vld [vmem:[#allocation2 + $0x1] sm:$0xff]
        %v3145 = vld [vmem:[#allocation2 + $0x11] sm:$0xff]
        %v3146 = vld [vmem:[#allocation2 + $0x21] sm:$0xff]
        %v3147 = vld [vmem:[#allocation2 + $0x31] sm:$0xff]
        %v3148 = vld [vmem:[#allocation2 + $0x41] sm:$0xff]
        %v3149 = vld [vmem:[#allocation2 + $0x51] sm:$0xff]
        %v3150 = vld [vmem:[#allocation2 + $0x61] sm:$0xff]
        %v3151 = vld [vmem:[#allocation2 + $0x71] sm:$0xff]
        %v3152 = vld [vmem:[#allocation2 + $0x2] sm:$0xff]
        %v3153 = vld [vmem:[#allocation2 + $0x12] sm:$0xff]
        %v3154 = vld [vmem:[#allocation2 + $0x22] sm:$0xff]
        %v3155 = vld [vmem:[#allocation2 + $0x32] sm:$0xff]
        %v3156 = vld [vmem:[#allocation2 + $0x42] sm:$0xff]
        %v3157 = vld [vmem:[#allocation2 + $0x52] sm:$0xff]
        %v3158 = vld [vmem:[#allocation2 + $0x62] sm:$0xff]
        %v3159 = vld [vmem:[#allocation2 + $0x72] sm:$0xff]
        %v3160 = vld [vmem:[%s536] sm:$0xff]
        %v3161 = vld [vmem:[%s536 + $0x10] sm:$0xff]
        %v3162 = vld [vmem:[%s536 + $0x20] sm:$0xff]
        %v3163 = vld [vmem:[%s536 + $0x30] sm:$0xff]
        %v3164 = vld [vmem:[%s536 + $0x40] sm:$0xff]
        %v3165 = vld [vmem:[%s536 + $0x50] sm:$0xff]
        %v3166 = vld [vmem:[%s536 + $0x60] sm:$0xff]
        %v3167 = vld [vmem:[%s536 + $0x70] sm:$0xff]
        %v3168 = vld [vmem:[%s536 + $0x1] sm:$0xff]
        %v3169 = vld [vmem:[%s536 + $0x11] sm:$0xff]
        %v3170 = vld [vmem:[%s536 + $0x21] sm:$0xff]
        %v3171 = vld [vmem:[%s536 + $0x31] sm:$0xff]
        %v3172 = vld [vmem:[%s536 + $0x41] sm:$0xff]
        %v3173 = vld [vmem:[%s536 + $0x51] sm:$0xff]
        %v3174 = vld [vmem:[%s536 + $0x61] sm:$0xff]
        %v3175 = vld [vmem:[%s536 + $0x71] sm:$0xff]
        %v3176 = vld [vmem:[%s536 + $0x2] sm:$0xff]
        %v3177 = vld [vmem:[%s536 + $0x12] sm:$0xff]
        %v3178 = vld [vmem:[%s536 + $0x22] sm:$0xff]
        %v3179 = vld [vmem:[%s536 + $0x32] sm:$0xff]
        %v3180 = vld [vmem:[%s536 + $0x42] sm:$0xff]
        %v3181 = vld [vmem:[%s536 + $0x52] sm:$0xff]
        %v3182 = vld [vmem:[%s536 + $0x62] sm:$0xff]
        %v3183 = vld [vmem:[%s536 + $0x72] sm:$0xff]
        %v3184 = vld [vmem:[%s593] sm:$0xff]
        %v3185 = vld [vmem:[%s593 + $0x10] sm:$0xff]
        %v3186 = vld [vmem:[%s593 + $0x20] sm:$0xff]
        %v3187 = vld [vmem:[%s593 + $0x30] sm:$0xff]
        %v3188 = vld [vmem:[%s593 + $0x40] sm:$0xff]
        %v3189 = vld [vmem:[%s593 + $0x50] sm:$0xff]
        %v3190 = vld [vmem:[%s593 + $0x60] sm:$0xff]
        %v3191 = vld [vmem:[%s593 + $0x70] sm:$0xff]
        %v3192 = vld [vmem:[%s593 + $0x1] sm:$0xff]
        %v3193 = vld [vmem:[%s593 + $0x11] sm:$0xff]
        %v3194 = vld [vmem:[%s593 + $0x21] sm:$0xff]
        %v3195 = vld [vmem:[%s593 + $0x31] sm:$0xff]
        %v3196 = vld [vmem:[%s593 + $0x41] sm:$0xff]
        %v3197 = vld [vmem:[%s593 + $0x51] sm:$0xff]
        %v3198 = vld [vmem:[%s593 + $0x61] sm:$0xff]
        %v3199 = vld [vmem:[%s593 + $0x71] sm:$0xff]
        %v3200 = vld [vmem:[%s593 + $0x2] sm:$0xff]
        %v3201 = vld [vmem:[%s593 + $0x12] sm:$0xff]
        %v3202 = vld [vmem:[%s593 + $0x22] sm:$0xff]
        %v3203 = vld [vmem:[%s593 + $0x32] sm:$0xff]
        %v3204 = vld [vmem:[%s593 + $0x42] sm:$0xff]
        %v3205 = vld [vmem:[%s593 + $0x52] sm:$0xff]
        %v3206 = vld [vmem:[%s593 + $0x62] sm:$0xff]
        %v3207 = vld [vmem:[%s593 + $0x72] sm:$0xff]
        %3216 = vrot.lane.b32.xlu0 %v3144, 32
        %v3217 = vpop.permute.xlu0 %3216
        %3218 = vrot.lane.b32.xlu0 %v3145, 32
        %v3219 = vpop.permute.xlu0 %3218
        %3220 = vrot.lane.b32.xlu0 %v3146, 32
        %v3221 = vpop.permute.xlu0 %3220
        %3222 = vrot.lane.b32.xlu0 %v3147, 32
        %v3223 = vpop.permute.xlu0 %3222
        %3224 = vrot.lane.b32.xlu0 %v3148, 32
        %v3225 = vpop.permute.xlu0 %3224
        %3226 = vrot.lane.b32.xlu0 %v3149, 32
        %v3227 = vpop.permute.xlu0 %3226
        %3228 = vrot.lane.b32.xlu0 %v3150, 32
        %v3229 = vpop.permute.xlu0 %3228
        %3230 = vrot.lane.b32.xlu0 %v3151, 32
        %v3231 = vpop.permute.xlu0 %3230
        %3248 = vrot.lane.b32.xlu0 %v3152, 64
        %v3249 = vpop.permute.xlu0 %3248
        %3250 = vrot.lane.b32.xlu0 %v3153, 64
        %v3251 = vpop.permute.xlu0 %3250
        %3252 = vrot.lane.b32.xlu0 %v3154, 64
        %v3253 = vpop.permute.xlu0 %3252
        %3254 = vrot.lane.b32.xlu0 %v3155, 64
        %v3255 = vpop.permute.xlu0 %3254
        %3256 = vrot.lane.b32.xlu0 %v3156, 64
        %v3257 = vpop.permute.xlu0 %3256
        %3258 = vrot.lane.b32.xlu0 %v3157, 64
        %v3259 = vpop.permute.xlu0 %3258
        %3260 = vrot.lane.b32.xlu0 %v3158, 64
        %v3261 = vpop.permute.xlu0 %3260
        %3262 = vrot.lane.b32.xlu0 %v3159, 64
        %v3263 = vpop.permute.xlu0 %3262
        %3280 = vrot.lane.b32.xlu0 %v3160, 96
        %v3281 = vpop.permute.xlu0 %3280
        %3282 = vrot.lane.b32.xlu0 %v3161, 96
        %v3283 = vpop.permute.xlu0 %3282
        %3284 = vrot.lane.b32.xlu0 %v3162, 96
        %v3285 = vpop.permute.xlu0 %3284
        %3286 = vrot.lane.b32.xlu0 %v3163, 96
        %v3287 = vpop.permute.xlu0 %3286
        %3288 = vrot.lane.b32.xlu0 %v3164, 96
        %v3289 = vpop.permute.xlu0 %3288
        %3290 = vrot.lane.b32.xlu0 %v3165, 96
        %v3291 = vpop.permute.xlu0 %3290
        %3292 = vrot.lane.b32.xlu0 %v3166, 96
        %v3293 = vpop.permute.xlu0 %3292
        %3294 = vrot.lane.b32.xlu0 %v3167, 96
        %v3295 = vpop.permute.xlu0 %3294
        %3312 = vrot.lane.b32.xlu0 %v3176, 32
        %v3313 = vpop.permute.xlu0 %3312
        %3314 = vrot.lane.b32.xlu0 %v3177, 32
        %v3315 = vpop.permute.xlu0 %3314
        %3316 = vrot.lane.b32.xlu0 %v3178, 32
        %v3317 = vpop.permute.xlu0 %3316
        %3318 = vrot.lane.b32.xlu0 %v3179, 32
        %v3319 = vpop.permute.xlu0 %3318
        %3320 = vrot.lane.b32.xlu0 %v3180, 32
        %v3321 = vpop.permute.xlu0 %3320
        %3322 = vrot.lane.b32.xlu0 %v3181, 32
        %v3323 = vpop.permute.xlu0 %3322
        %3324 = vrot.lane.b32.xlu0 %v3182, 32
        %v3325 = vpop.permute.xlu0 %3324
        %3326 = vrot.lane.b32.xlu0 %v3183, 32
        %v3327 = vpop.permute.xlu0 %3326
        %3344 = vrot.lane.b32.xlu0 %v3184, 64
        %v3345 = vpop.permute.xlu0 %3344
        %3346 = vrot.lane.b32.xlu0 %v3185, 64
        %v3347 = vpop.permute.xlu0 %3346
        %3348 = vrot.lane.b32.xlu0 %v3186, 64
        %v3349 = vpop.permute.xlu0 %3348
        %3350 = vrot.lane.b32.xlu0 %v3187, 64
        %v3351 = vpop.permute.xlu0 %3350
        %3352 = vrot.lane.b32.xlu0 %v3188, 64
        %v3353 = vpop.permute.xlu0 %3352
        %3354 = vrot.lane.b32.xlu0 %v3189, 64
        %v3355 = vpop.permute.xlu0 %3354
        %3356 = vrot.lane.b32.xlu0 %v3190, 64
        %v3357 = vpop.permute.xlu0 %3356
        %3358 = vrot.lane.b32.xlu0 %v3191, 64
        %v3359 = vpop.permute.xlu0 %3358
        %3376 = vrot.lane.b32.xlu0 %v3192, 96
        %v3377 = vpop.permute.xlu0 %3376
        %3378 = vrot.lane.b32.xlu0 %v3193, 96
        %v3379 = vpop.permute.xlu0 %3378
        %3380 = vrot.lane.b32.xlu0 %v3194, 96
        %v3381 = vpop.permute.xlu0 %3380
        %3382 = vrot.lane.b32.xlu0 %v3195, 96
        %v3383 = vpop.permute.xlu0 %3382
        %3384 = vrot.lane.b32.xlu0 %v3196, 96
        %v3385 = vpop.permute.xlu0 %3384
        %3386 = vrot.lane.b32.xlu0 %v3197, 96
        %v3387 = vpop.permute.xlu0 %3386
        %3388 = vrot.lane.b32.xlu0 %v3198, 96
        %v3389 = vpop.permute.xlu0 %3388
        %3390 = vrot.lane.b32.xlu0 %v3199, 96
        %v3391 = vpop.permute.xlu0 %3390
        %v3400 = vsel %vm497, %v3136, %v3217
        %v3401 = vsel %vm497, %v3137, %v3219
        %v3402 = vsel %vm497, %v3138, %v3221
        %v3403 = vsel %vm497, %v3139, %v3223
        %v3404 = vsel %vm497, %v3140, %v3225
        %v3405 = vsel %vm497, %v3141, %v3227
        %v3406 = vsel %vm497, %v3142, %v3229
        %v3407 = vsel %vm497, %v3143, %v3231
        %v3408 = vsel %vm818, %v3400, %v3249
        %v3409 = vsel %vm818, %v3401, %v3251
        %v3410 = vsel %vm818, %v3402, %v3253
        %v3411 = vsel %vm818, %v3403, %v3255
        %v3412 = vsel %vm818, %v3404, %v3257
        %v3413 = vsel %vm818, %v3405, %v3259
        %v3414 = vsel %vm818, %v3406, %v3261
        %v3415 = vsel %vm818, %v3407, %v3263
        %v3416 = vsel %vm827, %v3408, %v3281
        %v3417 = vsel %vm827, %v3409, %v3283
        %v3418 = vsel %vm827, %v3410, %v3285
        %v3419 = vsel %vm827, %v3411, %v3287
        %v3420 = vsel %vm827, %v3412, %v3289
        %v3421 = vsel %vm827, %v3413, %v3291
        %v3422 = vsel %vm827, %v3414, %v3293
        %v3423 = vsel %vm827, %v3415, %v3295
        %v3424 = vsel %vm497, %v3168, %v3313
        %v3425 = vsel %vm497, %v3169, %v3315
        %v3426 = vsel %vm497, %v3170, %v3317
        %v3427 = vsel %vm497, %v3171, %v3319
        %v3428 = vsel %vm497, %v3172, %v3321
        %v3429 = vsel %vm497, %v3173, %v3323
        %v3430 = vsel %vm497, %v3174, %v3325
        %v3431 = vsel %vm497, %v3175, %v3327
        %v3432 = vsel %vm818, %v3424, %v3345
        %v3433 = vsel %vm818, %v3425, %v3347
        %v3434 = vsel %vm818, %v3426, %v3349
        %v3435 = vsel %vm818, %v3427, %v3351
        %v3436 = vsel %vm818, %v3428, %v3353
        %v3437 = vsel %vm818, %v3429, %v3355
        %v3438 = vsel %vm818, %v3430, %v3357
        %v3439 = vsel %vm818, %v3431, %v3359
        %v3440 = vsel %vm827, %v3432, %v3377
        %v3441 = vsel %vm827, %v3433, %v3379
        %v3442 = vsel %vm827, %v3434, %v3381
        %v3443 = vsel %vm827, %v3435, %v3383
        %v3444 = vsel %vm827, %v3436, %v3385
        %v3445 = vsel %vm827, %v3437, %v3387
        %v3446 = vsel %vm827, %v3438, %v3389
        %v3447 = vsel %vm827, %v3439, %v3391
        %s3448 = scalar_lea.vmem %s1, 864
        %v3449 = vld [vmem:[%s3448] sm:$0xff]
        %v3450 = vld [vmem:[%s3448 + $0x8] sm:$0xff]
        %v3451 = vld [vmem:[%s3448 + $0x10] sm:$0xff]
        %v3452 = vld [vmem:[%s3448 + $0x18] sm:$0xff]
        %v3453 = vld [vmem:[%s3448 + $0x20] sm:$0xff]
        %v3454 = vld [vmem:[%s3448 + $0x28] sm:$0xff]
        %v3455 = vld [vmem:[%s3448 + $0x30] sm:$0xff]
        %v3456 = vld [vmem:[%s3448 + $0x38] sm:$0xff]
        %v3457 = vld [vmem:[%s3448 + $0x40] sm:$0xff]
        %v3458 = vld [vmem:[%s3448 + $0x48] sm:$0xff]
        %v3459 = vld [vmem:[%s3448 + $0x50] sm:$0xff]
        %v3460 = vld [vmem:[%s3448 + $0x58] sm:$0xff]
        %v3461 = vld [vmem:[%s3448 + $0x60] sm:$0xff]
        %v3462 = vld [vmem:[%s3448 + $0x68] sm:$0xff]
        %v3463 = vld [vmem:[%s3448 + $0x70] sm:$0xff]
        %v3464 = vld [vmem:[%s3448 + $0x78] sm:$0xff]
        %v3465 = vld [vmem:[%s3448 + $0x80] sm:$0xff]
        %v3466 = vld [vmem:[%s3448 + $0x88] sm:$0xff]
        %v3467 = vld [vmem:[%s3448 + $0x90] sm:$0xff]
        %v3468 = vld [vmem:[%s3448 + $0x98] sm:$0xff]
        %v3469 = vld [vmem:[%s3448 + $0xa0] sm:$0xff]
        %v3470 = vld [vmem:[%s3448 + $0xa8] sm:$0xff]
        %v3471 = vld [vmem:[%s3448 + $0xb0] sm:$0xff]
        %v3472 = vld [vmem:[%s3448 + $0xb8] sm:$0xff]
        %v3473 = vld [vmem:[%s3448 + $0xc0] sm:$0xff]
        %v3474 = vld [vmem:[%s3448 + $0xc8] sm:$0xff]
        %v3475 = vld [vmem:[%s3448 + $0xd0] sm:$0xff]
        %v3476 = vld [vmem:[%s3448 + $0xd8] sm:$0xff]
        %v3477 = vld [vmem:[%s3448 + $0xe0] sm:$0xff]
        %v3478 = vld [vmem:[%s3448 + $0xe8] sm:$0xff]
        %v3479 = vld [vmem:[%s3448 + $0xf0] sm:$0xff]
        %v3480 = vld [vmem:[%s3448 + $0xf8] sm:$0xff]
        %v3481 = vld [vmem:[%s3448 + $0x100] sm:$0xff]
        %v3482 = vld [vmem:[%s3448 + $0x108] sm:$0xff]
        %v3483 = vld [vmem:[%s3448 + $0x110] sm:$0xff]
        %v3484 = vld [vmem:[%s3448 + $0x118] sm:$0xff]
        %s3485 = scalar_lea.vmem %s2, 3
        %v3486 = vld [vmem:[%s3485] sm:$0x1]
        %v3488 = vlaneseq
        %v3489 = vshrl.u32 %v3488, 7
        %v3490 = vsub.s32 0, %v3489
        %v3491 = vrot.slane %v3486, %v3490
        %v3494 = vsel %vm497, %v3200, 0
        %v3497 = vsel %vm497, %v3201, 0
        %v3500 = vsel %vm497, %v3202, 0
        %v3503 = vsel %vm497, %v3203, 0
        %v3506 = vsel %vm497, %v3204, 0
        %v3509 = vsel %vm497, %v3205, 0
        %v3512 = vsel %vm497, %v3206, 0
        %v3515 = vsel %vm497, %v3207, 0
        %3517 = vmatprep.subr.mxu0 0.0
        %3518 = vmatpush1.msra.mxu0 %v3464
        %3519 = vmatprep.subr.mxu0 0.0
        %3520 = vmatpush1.msra.mxu0 %v3463
        %3521 = vmatprep.subr.mxu0 0.0
        %3522 = vmatpush1.msra.mxu0 %v3462
        %3523 = vmatprep.subr.mxu0 0.0
        %3524 = vmatpush1.msra.mxu0 %v3461
        %3525 = vmatprep.subr.mxu0 0.0
        %3526 = vmatpush1.msra.mxu0 %v3460
        %3527 = vmatprep.subr.mxu0 0.0
        %3528 = vmatpush1.msra.mxu0 %v3459
        %3529 = vmatprep.subr.mxu0 0.0
        %3530 = vmatpush1.msra.mxu0 %v3458
        %3531 = vmatprep.subr.mxu0 0.0
        %3532 = vmatpush1.msra.mxu0 %v3457
        %3533 = vmatprep.subr.mxu0 0.0
        %3534 = vmatpush1.msra.mxu0 %v3456
        %3535 = vmatprep.subr.mxu0 0.0
        %3536 = vmatpush1.msra.mxu0 %v3455
        %3537 = vmatprep.subr.mxu0 0.0
        %3538 = vmatpush1.msra.mxu0 %v3454
        %3539 = vmatprep.subr.mxu0 0.0
        %3540 = vmatpush1.msra.mxu0 %v3453
        %3541 = vmatprep.subr.mxu0 0.0
        %3542 = vmatpush1.msra.mxu0 %v3452
        %3543 = vmatprep.subr.mxu0 0.0
        %3544 = vmatpush1.msra.mxu0 %v3451
        %3545 = vmatprep.subr.mxu0 0.0
        %3546 = vmatpush1.msra.mxu0 %v3450
        %3547 = vmatprep.subr.mxu0 0.0
        %3548 = vmatpush1.msra.mxu0 %v3449
        %3549 = vmatprep.subr.mxu0 0.0
        %3550 = vmatpush2.msra.mxu0 %v3480
        %3551 = vmatprep.subr.mxu0 0.0
        %3552 = vmatpush2.msra.mxu0 %v3479
        %3553 = vmatprep.subr.mxu0 0.0
        %3554 = vmatpush2.msra.mxu0 %v3478
        %3555 = vmatprep.subr.mxu0 0.0
        %3556 = vmatpush2.msra.mxu0 %v3477
        %3557 = vmatprep.subr.mxu0 0.0
        %3558 = vmatpush2.msra.mxu0 %v3476
        %3559 = vmatprep.subr.mxu0 0.0
        %3560 = vmatpush2.msra.mxu0 %v3475
        %3561 = vmatprep.subr.mxu0 0.0
        %3562 = vmatpush2.msra.mxu0 %v3474
        %3563 = vmatprep.subr.mxu0 0.0
        %3564 = vmatpush2.msra.mxu0 %v3473
        %3565 = vmatprep.subr.mxu0 0.0
        %3566 = vmatpush2.msra.mxu0 %v3472
        %3567 = vmatprep.subr.mxu0 0.0
        %3568 = vmatpush2.msra.mxu0 %v3471
        %3569 = vmatprep.subr.mxu0 0.0
        %3570 = vmatpush2.msra.mxu0 %v3470
        %3571 = vmatprep.subr.mxu0 0.0
        %3572 = vmatpush2.msra.mxu0 %v3469
        %3573 = vmatprep.subr.mxu0 0.0
        %3574 = vmatpush2.msra.mxu0 %v3468
        %3575 = vmatprep.subr.mxu0 0.0
        %3576 = vmatpush2.msra.mxu0 %v3467
        %3577 = vmatprep.subr.mxu0 0.0
        %3578 = vmatpush2.msra.mxu0 %v3466
        %3579 = vmatprep.subr.mxu0 0.0
        %3580 = vmatpush2.msra.mxu0 %v3465
        %3581 = vmatprep.mubr.f32.mxu0 %v3440
        %3582 = vmatmul.mubr.f32.gmra.mxu0 %v3416
        %v3583 = vpop.f32.mrf.mxu0
        %v3584 = vadd.f32 %v3491, %v3583
        %v3585 = vpop.f32.mrf.mxu0
        %3586 = vmatprep.mubr.f32.mxu0 %v3441
        %3587 = vmatmul.mubr.f32.gmra.mxu0 %v3417
        %v3588 = vpop.f32.mrf.mxu0
        %v3589 = vadd.f32 %v3491, %v3588
        %v3590 = vpop.f32.mrf.mxu0
        %3591 = vmatprep.mubr.f32.mxu0 %v3442
        %3592 = vmatmul.mubr.f32.gmra.mxu0 %v3418
        %v3593 = vpop.f32.mrf.mxu0
        %v3594 = vadd.f32 %v3491, %v3593
        %v3595 = vpop.f32.mrf.mxu0
        %3596 = vmatprep.mubr.f32.mxu0 %v3443
        %3597 = vmatmul.mubr.f32.gmra.mxu0 %v3419
        %v3598 = vpop.f32.mrf.mxu0
        %v3599 = vadd.f32 %v3491, %v3598
        %v3600 = vpop.f32.mrf.mxu0
        %3601 = vmatprep.mubr.f32.mxu0 %v3444
        %3602 = vmatmul.mubr.f32.gmra.mxu0 %v3420
        %v3603 = vpop.f32.mrf.mxu0
        %v3604 = vadd.f32 %v3491, %v3603
        %v3605 = vpop.f32.mrf.mxu0
        %3606 = vmatprep.mubr.f32.mxu0 %v3445
        %3607 = vmatmul.mubr.f32.gmra.mxu0 %v3421
        %v3608 = vpop.f32.mrf.mxu0
        %v3609 = vadd.f32 %v3491, %v3608
        %v3610 = vpop.f32.mrf.mxu0
        %3611 = vmatprep.mubr.f32.mxu0 %v3446
        %3612 = vmatmul.mubr.f32.gmra.mxu0 %v3422
        %v3613 = vpop.f32.mrf.mxu0
        %v3614 = vadd.f32 %v3491, %v3613
        %v3615 = vpop.f32.mrf.mxu0
        %3616 = vmatprep.mubr.f32.mxu0 %v3447
        %3617 = vmatmul.mubr.f32.gmra.mxu0 %v3423
        %v3618 = vpop.f32.mrf.mxu0
        %v3619 = vadd.f32 %v3491, %v3618
        %v3620 = vpop.f32.mrf.mxu0
        %3621 = vdwg.mxu0
        %3622 = vmatprep.subr.mxu0 0.0
        %3623 = vmatpush1.msra.mxu0 0.0
        %3624 = vmatprep.subr.mxu0 0.0
        %3625 = vmatpush1.msra.mxu0 0.0
        %3626 = vmatprep.subr.mxu0 0.0
        %3627 = vmatpush1.msra.mxu0 0.0
        %3628 = vmatprep.subr.mxu0 0.0
        %3629 = vmatpush1.msra.mxu0 0.0
        %3630 = vmatprep.subr.mxu0 0.0
        %3631 = vmatpush1.msra.mxu0 0.0
        %3632 = vmatprep.subr.mxu0 0.0
        %3633 = vmatpush1.msra.mxu0 0.0
        %3634 = vmatprep.subr.mxu0 0.0
        %3635 = vmatpush1.msra.mxu0 0.0
        %3636 = vmatprep.subr.mxu0 0.0
        %3637 = vmatpush1.msra.mxu0 0.0
        %3638 = vmatprep.subr.mxu0 0.0
        %3639 = vmatpush1.msra.mxu0 0.0
        %3640 = vmatprep.subr.mxu0 0.0
        %3641 = vmatpush1.msra.mxu0 0.0
        %3642 = vmatprep.subr.mxu0 0.0
        %3643 = vmatpush1.msra.mxu0 0.0
        %3644 = vmatprep.subr.mxu0 0.0
        %3645 = vmatpush1.msra.mxu0 0.0
        %3646 = vmatprep.subr.mxu0 0.0
        %3647 = vmatpush1.msra.mxu0 %v3484
        %3648 = vmatprep.subr.mxu0 0.0
        %3649 = vmatpush1.msra.mxu0 %v3483
        %3650 = vmatprep.subr.mxu0 0.0
        %3651 = vmatpush1.msra.mxu0 %v3482
        %3652 = vmatprep.subr.mxu0 0.0
        %3653 = vmatpush1.msra.mxu0 %v3481
        %3654 = vmatprep.subr.mxu0 0.0
        %3655 = vmatpush2.msra.mxu0 0.0
        %3656 = vmatprep.subr.mxu0 0.0
        %3657 = vmatpush2.msra.mxu0 0.0
        %3658 = vmatprep.subr.mxu0 0.0
        %3659 = vmatpush2.msra.mxu0 0.0
        %3660 = vmatprep.subr.mxu0 0.0
        %3661 = vmatpush2.msra.mxu0 0.0
        %3662 = vmatprep.subr.mxu0 0.0
        %3663 = vmatpush2.msra.mxu0 0.0
        %3664 = vmatprep.subr.mxu0 0.0
        %3665 = vmatpush2.msra.mxu0 0.0
        %3666 = vmatprep.subr.mxu0 0.0
        %3667 = vmatpush2.msra.mxu0 0.0
        %3668 = vmatprep.subr.mxu0 0.0
        %3669 = vmatpush2.msra.mxu0 0.0
        %3670 = vmatprep.subr.mxu0 0.0
        %3671 = vmatpush2.msra.mxu0 0.0
        %3672 = vmatprep.subr.mxu0 0.0
        %3673 = vmatpush2.msra.mxu0 0.0
        %3674 = vmatprep.subr.mxu0 0.0
        %3675 = vmatpush2.msra.mxu0 0.0
        %3676 = vmatprep.subr.mxu0 0.0
        %3677 = vmatpush2.msra.mxu0 0.0
        %3678 = vmatprep.subr.mxu0 0.0
        %3679 = vmatpush2.msra.mxu0 0.0
        %3680 = vmatprep.subr.mxu0 0.0
        %3681 = vmatpush2.msra.mxu0 0.0
        %3682 = vmatprep.subr.mxu0 0.0
        %3683 = vmatpush2.msra.mxu0 0.0
        %3684 = vmatprep.subr.mxu0 0.0
        %3685 = vmatpush2.msra.mxu0 0.0
        %3686 = vmatprep.mubr.f32.mxu0 0.0
        %3687 = vmatmul.mubr.f32.gmra.mxu0 %v3494
        %v3688 = vpop.f32.mrf.mxu0
        %v3689 = vadd.f32 %v3584, %v3688
        %v3690 = vpop.f32.mrf.mxu0
        %3691 = vmatprep.mubr.f32.mxu0 0.0
        %3692 = vmatmul.mubr.f32.gmra.mxu0 %v3497
        %v3693 = vpop.f32.mrf.mxu0
        %v3694 = vadd.f32 %v3589, %v3693
        %v3695 = vpop.f32.mrf.mxu0
        %3696 = vmatprep.mubr.f32.mxu0 0.0
        %3697 = vmatmul.mubr.f32.gmra.mxu0 %v3500
        %v3698 = vpop.f32.mrf.mxu0
        %v3699 = vadd.f32 %v3594, %v3698
        %v3700 = vpop.f32.mrf.mxu0
        %3701 = vmatprep.mubr.f32.mxu0 0.0
        %3702 = vmatmul.mubr.f32.gmra.mxu0 %v3503
        %v3703 = vpop.f32.mrf.mxu0
        %v3704 = vadd.f32 %v3599, %v3703
        %v3705 = vpop.f32.mrf.mxu0
        %3706 = vmatprep.mubr.f32.mxu0 0.0
        %3707 = vmatmul.mubr.f32.gmra.mxu0 %v3506
        %v3708 = vpop.f32.mrf.mxu0
        %v3709 = vadd.f32 %v3604, %v3708
        %v3710 = vpop.f32.mrf.mxu0
        %3711 = vmatprep.mubr.f32.mxu0 0.0
        %3712 = vmatmul.mubr.f32.gmra.mxu0 %v3509
        %v3713 = vpop.f32.mrf.mxu0
        %v3714 = vadd.f32 %v3609, %v3713
        %v3715 = vpop.f32.mrf.mxu0
        %3716 = vmatprep.mubr.f32.mxu0 0.0
        %3717 = vmatmul.mubr.f32.gmra.mxu0 %v3512
        %v3718 = vpop.f32.mrf.mxu0
        %v3719 = vadd.f32 %v3614, %v3718
        %v3720 = vpop.f32.mrf.mxu0
        %3721 = vmatprep.mubr.f32.mxu0 0.0
        %3722 = vmatmul.mubr.f32.gmra.mxu0 %v3515
        %v3723 = vpop.f32.mrf.mxu0
        %v3724 = vadd.f32 %v3619, %v3723
        %v3725 = vpop.f32.mrf.mxu0
        %3726 = vdwg.mxu0
        %s3727 = scalar_lea.vmem %s3, 3
        %v3728 = vld [vmem:[%s3727] sm:$0x1]
        %s3729 = scalar_lea.vmem %s4, 3
        %v3730 = vld [vmem:[%s3729] sm:$0x1]
        %v3731 = vsel %vm497, %v3689, 0.0
        %v3732 = vsel %vm497, %v3694, 0.0
        %v3733 = vadd.f32 %v3731, %v3732
        %v3734 = vsel %vm497, %v3699, 0.0
        %v3735 = vadd.f32 %v3733, %v3734
        %v3736 = vsel %vm497, %v3704, 0.0
        %v3737 = vadd.f32 %v3735, %v3736
        %v3738 = vsel %vm497, %v3709, 0.0
        %v3739 = vadd.f32 %v3737, %v3738
        %v3740 = vsel %vm497, %v3714, 0.0
        %v3741 = vadd.f32 %v3739, %v3740
        %v3742 = vsel %vm497, %v3719, 0.0
        %v3743 = vadd.f32 %v3741, %v3742
        %v3744 = vsel %vm497, %v3724, 0.0
        %v3745 = vadd.f32 %v3743, %v3744
        %v3746 = vrot.slane %v3745, 4
        %v3747 = vadd.f32 %v3745, %v3746
        %v3748 = vrot.slane %v3747, 2
        %v3749 = vadd.f32 %v3747, %v3748
        %v3750 = vrot.slane %v3749, 1
        %v3751 = vadd.f32 %v3749, %v3750
        %v3752 = vld [vmem:[%s9] sm:$0xff]
        %v3753 = vld [vmem:[%s9 + $0x8] sm:$0xff]
        %v3754 = vld [vmem:[%s9 + $0x10] sm:$0xff]
        %v3755 = vld [vmem:[%s9 + $0x18] sm:$0xff]
        %v3757 = vsel %vm497, %v3751, 0
        %3759 = vmatprep.subr.mxu0 0.0
        %3760 = vmatpush1.msra.mxu0 0.0
        %3761 = vmatprep.subr.mxu0 0.0
        %3762 = vmatpush1.msra.mxu0 0.0
        %3763 = vmatprep.subr.mxu0 0.0
        %3764 = vmatpush1.msra.mxu0 0.0
        %3765 = vmatprep.subr.mxu0 0.0
        %3766 = vmatpush1.msra.mxu0 0.0
        %3767 = vmatprep.subr.mxu0 0.0
        %3768 = vmatpush1.msra.mxu0 0.0
        %3769 = vmatprep.subr.mxu0 0.0
        %3770 = vmatpush1.msra.mxu0 0.0
        %3771 = vmatprep.subr.mxu0 0.0
        %3772 = vmatpush1.msra.mxu0 0.0
        %3773 = vmatprep.subr.mxu0 0.0
        %3774 = vmatpush1.msra.mxu0 0.0
        %3775 = vmatprep.subr.mxu0 0.0
        %3776 = vmatpush1.msra.mxu0 0.0
        %3777 = vmatprep.subr.mxu0 0.0
        %3778 = vmatpush1.msra.mxu0 0.0
        %3779 = vmatprep.subr.mxu0 0.0
        %3780 = vmatpush1.msra.mxu0 0.0
        %3781 = vmatprep.subr.mxu0 0.0
        %3782 = vmatpush1.msra.mxu0 0.0
        %3783 = vmatprep.subr.mxu0 0.0
        %3784 = vmatpush1.msra.mxu0 %v3755
        %3785 = vmatprep.subr.mxu0 0.0
        %3786 = vmatpush1.msra.mxu0 %v3754
        %3787 = vmatprep.subr.mxu0 0.0
        %3788 = vmatpush1.msra.mxu0 %v3753
        %3789 = vmatprep.subr.mxu0 0.0
        %3790 = vmatpush1.msra.mxu0 %v3752
        %3791 = vmatprep.subr.mxu0 0.0
        %3792 = vmatpush2.msra.mxu0 0.0
        %3793 = vmatprep.subr.mxu0 0.0
        %3794 = vmatpush2.msra.mxu0 0.0
        %3795 = vmatprep.subr.mxu0 0.0
        %3796 = vmatpush2.msra.mxu0 0.0
        %3797 = vmatprep.subr.mxu0 0.0
        %3798 = vmatpush2.msra.mxu0 0.0
        %3799 = vmatprep.subr.mxu0 0.0
        %3800 = vmatpush2.msra.mxu0 0.0
        %3801 = vmatprep.subr.mxu0 0.0
        %3802 = vmatpush2.msra.mxu0 0.0
        %3803 = vmatprep.subr.mxu0 0.0
        %3804 = vmatpush2.msra.mxu0 0.0
        %3805 = vmatprep.subr.mxu0 0.0
        %3806 = vmatpush2.msra.mxu0 0.0
        %3807 = vmatprep.subr.mxu0 0.0
        %3808 = vmatpush2.msra.mxu0 0.0
        %3809 = vmatprep.subr.mxu0 0.0
        %3810 = vmatpush2.msra.mxu0 0.0
        %3811 = vmatprep.subr.mxu0 0.0
        %3812 = vmatpush2.msra.mxu0 0.0
        %3813 = vmatprep.subr.mxu0 0.0
        %3814 = vmatpush2.msra.mxu0 0.0
        %3815 = vmatprep.subr.mxu0 0.0
        %3816 = vmatpush2.msra.mxu0 0.0
        %3817 = vmatprep.subr.mxu0 0.0
        %3818 = vmatpush2.msra.mxu0 0.0
        %3819 = vmatprep.subr.mxu0 0.0
        %3820 = vmatpush2.msra.mxu0 0.0
        %3821 = vmatprep.subr.mxu0 0.0
        %3822 = vmatpush2.msra.mxu0 0.0
        %3823 = vmatprep.mubr.f32.mxu0 0.0
        %3824 = vmatmul.mubr.f32.gmra.mxu0 %v3757
        %v3825 = vpop.f32.mrf.mxu0
        %v3826 = vadd.f32 0.0, %v3825
        %v3827 = vpop.f32.mrf.mxu0
        %3828 = vdwg.mxu0
        %v3829 = vlaneseq
        %v3830 = vshrl.u32 %v3829, 7
        %v3831 = vsub.s32 0, %v3830
        %v3832 = vrot.slane %v3826, %v3831
        %v3833 = vsub.f32 %v3689, %v3832
        %v3834 = vsub.f32 %v3694, %v3832
        %v3835 = vsub.f32 %v3699, %v3832
        %v3836 = vsub.f32 %v3704, %v3832
        %v3837 = vsub.f32 %v3709, %v3832
        %v3838 = vsub.f32 %v3714, %v3832
        %v3839 = vsub.f32 %v3719, %v3832
        %v3840 = vsub.f32 %v3724, %v3832
        %v3841 = vmul.f32 %v3833, %v3833
        %v3842 = vmul.f32 %v3834, %v3834
        %v3843 = vmul.f32 %v3835, %v3835
        %v3844 = vmul.f32 %v3836, %v3836
        %v3845 = vmul.f32 %v3837, %v3837
        %v3846 = vmul.f32 %v3838, %v3838
        %v3847 = vmul.f32 %v3839, %v3839
        %v3848 = vmul.f32 %v3840, %v3840
        %v3849 = vsel %vm497, %v3841, 0.0
        %v3850 = vsel %vm497, %v3842, 0.0
        %v3851 = vadd.f32 %v3849, %v3850
        %v3852 = vsel %vm497, %v3843, 0.0
        %v3853 = vadd.f32 %v3851, %v3852
        %v3854 = vsel %vm497, %v3844, 0.0
        %v3855 = vadd.f32 %v3853, %v3854
        %v3856 = vsel %vm497, %v3845, 0.0
        %v3857 = vadd.f32 %v3855, %v3856
        %v3858 = vsel %vm497, %v3846, 0.0
        %v3859 = vadd.f32 %v3857, %v3858
        %v3860 = vsel %vm497, %v3847, 0.0
        %v3861 = vadd.f32 %v3859, %v3860
        %v3862 = vsel %vm497, %v3848, 0.0
        %v3863 = vadd.f32 %v3861, %v3862
        %v3864 = vrot.slane %v3863, 4
        %v3865 = vadd.f32 %v3863, %v3864
        %v3866 = vrot.slane %v3865, 2
        %v3867 = vadd.f32 %v3865, %v3866
        %v3868 = vrot.slane %v3867, 1
        %v3869 = vadd.f32 %v3867, %v3868
        %v3871 = vsel %vm497, %v3869, 0
        %3873 = vmatprep.subr.mxu0 0.0
        %3874 = vmatpush1.msra.mxu0 0.0
        %3875 = vmatprep.subr.mxu0 0.0
        %3876 = vmatpush1.msra.mxu0 0.0
        %3877 = vmatprep.subr.mxu0 0.0
        %3878 = vmatpush1.msra.mxu0 0.0
        %3879 = vmatprep.subr.mxu0 0.0
        %3880 = vmatpush1.msra.mxu0 0.0
        %3881 = vmatprep.subr.mxu0 0.0
        %3882 = vmatpush1.msra.mxu0 0.0
        %3883 = vmatprep.subr.mxu0 0.0
        %3884 = vmatpush1.msra.mxu0 0.0
        %3885 = vmatprep.subr.mxu0 0.0
        %3886 = vmatpush1.msra.mxu0 0.0
        %3887 = vmatprep.subr.mxu0 0.0
        %3888 = vmatpush1.msra.mxu0 0.0
        %3889 = vmatprep.subr.mxu0 0.0
        %3890 = vmatpush1.msra.mxu0 0.0
        %3891 = vmatprep.subr.mxu0 0.0
        %3892 = vmatpush1.msra.mxu0 0.0
        %3893 = vmatprep.subr.mxu0 0.0
        %3894 = vmatpush1.msra.mxu0 0.0
        %3895 = vmatprep.subr.mxu0 0.0
        %3896 = vmatpush1.msra.mxu0 0.0
        %3897 = vmatprep.subr.mxu0 0.0
        %3898 = vmatpush1.msra.mxu0 %v3755
        %3899 = vmatprep.subr.mxu0 0.0
        %3900 = vmatpush1.msra.mxu0 %v3754
        %3901 = vmatprep.subr.mxu0 0.0
        %3902 = vmatpush1.msra.mxu0 %v3753
        %3903 = vmatprep.subr.mxu0 0.0
        %3904 = vmatpush1.msra.mxu0 %v3752
        %3905 = vmatprep.subr.mxu0 0.0
        %3906 = vmatpush2.msra.mxu0 0.0
        %3907 = vmatprep.subr.mxu0 0.0
        %3908 = vmatpush2.msra.mxu0 0.0
        %3909 = vmatprep.subr.mxu0 0.0
        %3910 = vmatpush2.msra.mxu0 0.0
        %3911 = vmatprep.subr.mxu0 0.0
        %3912 = vmatpush2.msra.mxu0 0.0
        %3913 = vmatprep.subr.mxu0 0.0
        %3914 = vmatpush2.msra.mxu0 0.0
        %3915 = vmatprep.subr.mxu0 0.0
        %3916 = vmatpush2.msra.mxu0 0.0
        %3917 = vmatprep.subr.mxu0 0.0
        %3918 = vmatpush2.msra.mxu0 0.0
        %3919 = vmatprep.subr.mxu0 0.0
        %3920 = vmatpush2.msra.mxu0 0.0
        %3921 = vmatprep.subr.mxu0 0.0
        %3922 = vmatpush2.msra.mxu0 0.0
        %3923 = vmatprep.subr.mxu0 0.0
        %3924 = vmatpush2.msra.mxu0 0.0
        %3925 = vmatprep.subr.mxu0 0.0
        %3926 = vmatpush2.msra.mxu0 0.0
        %3927 = vmatprep.subr.mxu0 0.0
        %3928 = vmatpush2.msra.mxu0 0.0
        %3929 = vmatprep.subr.mxu0 0.0
        %3930 = vmatpush2.msra.mxu0 0.0
        %3931 = vmatprep.subr.mxu0 0.0
        %3932 = vmatpush2.msra.mxu0 0.0
        %3933 = vmatprep.subr.mxu0 0.0
        %3934 = vmatpush2.msra.mxu0 0.0
        %3935 = vmatprep.subr.mxu0 0.0
        %3936 = vmatpush2.msra.mxu0 0.0
        %3937 = vmatprep.mubr.f32.mxu0 0.0
        %3938 = vmatmul.mubr.f32.gmra.mxu0 %v3871
        %v3939 = vpop.f32.mrf.mxu0
        %v3940 = vadd.f32 1e-05, %v3939
        %v3941 = vpop.f32.mrf.mxu0
        %3942 = vdwg.mxu0
        %v3943 = vrsqrt.pop %v3940
        %v3944 = vlaneseq
        %v3945 = vshrl.u32 %v3944, 7
        %v3946 = vsub.s32 0, %v3945
        %v3947 = vrot.slane %v3943, %v3946
        %v3948 = vmul.f32 %v3833, %v3947
        %v3949 = vmul.f32 %v3834, %v3947
        %v3950 = vmul.f32 %v3835, %v3947
        %v3951 = vmul.f32 %v3836, %v3947
        %v3952 = vmul.f32 %v3837, %v3947
        %v3953 = vmul.f32 %v3838, %v3947
        %v3954 = vmul.f32 %v3839, %v3947
        %v3955 = vmul.f32 %v3840, %v3947
        %v3957 = vlaneseq
        %v3958 = vshrl.u32 %v3957, 7
        %v3959 = vsub.s32 0, %v3958
        %v3960 = vrot.slane %v3728, %v3959
        %v3962 = vmul.f32 %v3948, %v3960
        %v3963 = vmul.f32 %v3949, %v3960
        %v3964 = vmul.f32 %v3950, %v3960
        %v3965 = vmul.f32 %v3951, %v3960
        %v3966 = vmul.f32 %v3952, %v3960
        %v3967 = vmul.f32 %v3953, %v3960
        %v3968 = vmul.f32 %v3954, %v3960
        %v3969 = vmul.f32 %v3955, %v3960
        %v3971 = vlaneseq
        %v3972 = vshrl.u32 %v3971, 7
        %v3973 = vsub.s32 0, %v3972
        %v3974 = vrot.slane %v3730, %v3973
        %v3976 = vadd.f32 %v3962, %v3974
        %v3977 = vadd.f32 %v3963, %v3974
        %v3978 = vadd.f32 %v3964, %v3974
        %v3979 = vadd.f32 %v3965, %v3974
        %v3980 = vadd.f32 %v3966, %v3974
        %v3981 = vadd.f32 %v3967, %v3974
        %v3982 = vadd.f32 %v3968, %v3974
        %v3983 = vadd.f32 %v3969, %v3974
        %v3984 = vmax.f32 %v3976, 0.0
        %v3985 = vmax.f32 %v3977, 0.0
        %v3986 = vmax.f32 %v3978, 0.0
        %v3987 = vmax.f32 %v3979, 0.0
        %v3988 = vmax.f32 %v3980, 0.0
        %v3989 = vmax.f32 %v3981, 0.0
        %v3990 = vmax.f32 %v3982, 0.0
        %v3991 = vmax.f32 %v3983, 0.0
        %3992 = vst.msk [vmem:[%s536 + $0x1] sm:$0xff] %vm497, %v2256
        %3993 = vst.msk [vmem:[%s536 + $0x11] sm:$0xff] %vm497, %v2257
        %3994 = vst.msk [vmem:[%s536 + $0x21] sm:$0xff] %vm497, %v2258
        %3995 = vst.msk [vmem:[%s536 + $0x31] sm:$0xff] %vm497, %v2259
        %3996 = vst.msk [vmem:[%s536 + $0x41] sm:$0xff] %vm497, %v2260
        %3997 = vst.msk [vmem:[%s536 + $0x51] sm:$0xff] %vm497, %v2261
        %3998 = vst.msk [vmem:[%s536 + $0x61] sm:$0xff] %vm497, %v2262
        %3999 = vst.msk [vmem:[%s536 + $0x71] sm:$0xff] %vm497, %v2263
        %v4000 = vld [vmem:[#allocation2] sm:$0xff]
        %v4001 = vld [vmem:[#allocation2 + $0x10] sm:$0xff]
        %v4002 = vld [vmem:[#allocation2 + $0x20] sm:$0xff]
        %v4003 = vld [vmem:[#allocation2 + $0x30] sm:$0xff]
        %v4004 = vld [vmem:[#allocation2 + $0x40] sm:$0xff]
        %v4005 = vld [vmem:[#allocation2 + $0x50] sm:$0xff]
        %v4006 = vld [vmem:[#allocation2 + $0x60] sm:$0xff]
        %v4007 = vld [vmem:[#allocation2 + $0x70] sm:$0xff]
        %v4008 = vld [vmem:[#allocation2 + $0x1] sm:$0xff]
        %v4009 = vld [vmem:[#allocation2 + $0x11] sm:$0xff]
        %v4010 = vld [vmem:[#allocation2 + $0x21] sm:$0xff]
        %v4011 = vld [vmem:[#allocation2 + $0x31] sm:$0xff]
        %v4012 = vld [vmem:[#allocation2 + $0x41] sm:$0xff]
        %v4013 = vld [vmem:[#allocation2 + $0x51] sm:$0xff]
        %v4014 = vld [vmem:[#allocation2 + $0x61] sm:$0xff]
        %v4015 = vld [vmem:[#allocation2 + $0x71] sm:$0xff]
        %v4016 = vld [vmem:[#allocation2 + $0x2] sm:$0xff]
        %v4017 = vld [vmem:[#allocation2 + $0x12] sm:$0xff]
        %v4018 = vld [vmem:[#allocation2 + $0x22] sm:$0xff]
        %v4019 = vld [vmem:[#allocation2 + $0x32] sm:$0xff]
        %v4020 = vld [vmem:[#allocation2 + $0x42] sm:$0xff]
        %v4021 = vld [vmem:[#allocation2 + $0x52] sm:$0xff]
        %v4022 = vld [vmem:[#allocation2 + $0x62] sm:$0xff]
        %v4023 = vld [vmem:[#allocation2 + $0x72] sm:$0xff]
        %v4024 = vld [vmem:[%s536] sm:$0xff]
        %v4025 = vld [vmem:[%s536 + $0x10] sm:$0xff]
        %v4026 = vld [vmem:[%s536 + $0x20] sm:$0xff]
        %v4027 = vld [vmem:[%s536 + $0x30] sm:$0xff]
        %v4028 = vld [vmem:[%s536 + $0x40] sm:$0xff]
        %v4029 = vld [vmem:[%s536 + $0x50] sm:$0xff]
        %v4030 = vld [vmem:[%s536 + $0x60] sm:$0xff]
        %v4031 = vld [vmem:[%s536 + $0x70] sm:$0xff]
        %v4032 = vld [vmem:[%s536 + $0x1] sm:$0xff]
        %v4033 = vld [vmem:[%s536 + $0x11] sm:$0xff]
        %v4034 = vld [vmem:[%s536 + $0x21] sm:$0xff]
        %v4035 = vld [vmem:[%s536 + $0x31] sm:$0xff]
        %v4036 = vld [vmem:[%s536 + $0x41] sm:$0xff]
        %v4037 = vld [vmem:[%s536 + $0x51] sm:$0xff]
        %v4038 = vld [vmem:[%s536 + $0x61] sm:$0xff]
        %v4039 = vld [vmem:[%s536 + $0x71] sm:$0xff]
        %v4040 = vld [vmem:[%s536 + $0x2] sm:$0xff]
        %v4041 = vld [vmem:[%s536 + $0x12] sm:$0xff]
        %v4042 = vld [vmem:[%s536 + $0x22] sm:$0xff]
        %v4043 = vld [vmem:[%s536 + $0x32] sm:$0xff]
        %v4044 = vld [vmem:[%s536 + $0x42] sm:$0xff]
        %v4045 = vld [vmem:[%s536 + $0x52] sm:$0xff]
        %v4046 = vld [vmem:[%s536 + $0x62] sm:$0xff]
        %v4047 = vld [vmem:[%s536 + $0x72] sm:$0xff]
        %v4048 = vld [vmem:[%s593] sm:$0xff]
        %v4049 = vld [vmem:[%s593 + $0x10] sm:$0xff]
        %v4050 = vld [vmem:[%s593 + $0x20] sm:$0xff]
        %v4051 = vld [vmem:[%s593 + $0x30] sm:$0xff]
        %v4052 = vld [vmem:[%s593 + $0x40] sm:$0xff]
        %v4053 = vld [vmem:[%s593 + $0x50] sm:$0xff]
        %v4054 = vld [vmem:[%s593 + $0x60] sm:$0xff]
        %v4055 = vld [vmem:[%s593 + $0x70] sm:$0xff]
        %v4056 = vld [vmem:[%s593 + $0x1] sm:$0xff]
        %v4057 = vld [vmem:[%s593 + $0x11] sm:$0xff]
        %v4058 = vld [vmem:[%s593 + $0x21] sm:$0xff]
        %v4059 = vld [vmem:[%s593 + $0x31] sm:$0xff]
        %v4060 = vld [vmem:[%s593 + $0x41] sm:$0xff]
        %v4061 = vld [vmem:[%s593 + $0x51] sm:$0xff]
        %v4062 = vld [vmem:[%s593 + $0x61] sm:$0xff]
        %v4063 = vld [vmem:[%s593 + $0x71] sm:$0xff]
        %v4064 = vld [vmem:[%s593 + $0x2] sm:$0xff]
        %v4065 = vld [vmem:[%s593 + $0x12] sm:$0xff]
        %v4066 = vld [vmem:[%s593 + $0x22] sm:$0xff]
        %v4067 = vld [vmem:[%s593 + $0x32] sm:$0xff]
        %v4068 = vld [vmem:[%s593 + $0x42] sm:$0xff]
        %v4069 = vld [vmem:[%s593 + $0x52] sm:$0xff]
        %v4070 = vld [vmem:[%s593 + $0x62] sm:$0xff]
        %v4071 = vld [vmem:[%s593 + $0x72] sm:$0xff]
        %4080 = vrot.lane.b32.xlu0 %v4008, 32
        %v4081 = vpop.permute.xlu0 %4080
        %4082 = vrot.lane.b32.xlu0 %v4009, 32
        %v4083 = vpop.permute.xlu0 %4082
        %4084 = vrot.lane.b32.xlu0 %v4010, 32
        %v4085 = vpop.permute.xlu0 %4084
        %4086 = vrot.lane.b32.xlu0 %v4011, 32
        %v4087 = vpop.permute.xlu0 %4086
        %4088 = vrot.lane.b32.xlu0 %v4012, 32
        %v4089 = vpop.permute.xlu0 %4088
        %4090 = vrot.lane.b32.xlu0 %v4013, 32
        %v4091 = vpop.permute.xlu0 %4090
        %4092 = vrot.lane.b32.xlu0 %v4014, 32
        %v4093 = vpop.permute.xlu0 %4092
        %4094 = vrot.lane.b32.xlu0 %v4015, 32
        %v4095 = vpop.permute.xlu0 %4094
        %4112 = vrot.lane.b32.xlu0 %v4016, 64
        %v4113 = vpop.permute.xlu0 %4112
        %4114 = vrot.lane.b32.xlu0 %v4017, 64
        %v4115 = vpop.permute.xlu0 %4114
        %4116 = vrot.lane.b32.xlu0 %v4018, 64
        %v4117 = vpop.permute.xlu0 %4116
        %4118 = vrot.lane.b32.xlu0 %v4019, 64
        %v4119 = vpop.permute.xlu0 %4118
        %4120 = vrot.lane.b32.xlu0 %v4020, 64
        %v4121 = vpop.permute.xlu0 %4120
        %4122 = vrot.lane.b32.xlu0 %v4021, 64
        %v4123 = vpop.permute.xlu0 %4122
        %4124 = vrot.lane.b32.xlu0 %v4022, 64
        %v4125 = vpop.permute.xlu0 %4124
        %4126 = vrot.lane.b32.xlu0 %v4023, 64
        %v4127 = vpop.permute.xlu0 %4126
        %4144 = vrot.lane.b32.xlu0 %v4024, 96
        %v4145 = vpop.permute.xlu0 %4144
        %4146 = vrot.lane.b32.xlu0 %v4025, 96
        %v4147 = vpop.permute.xlu0 %4146
        %4148 = vrot.lane.b32.xlu0 %v4026, 96
        %v4149 = vpop.permute.xlu0 %4148
        %4150 = vrot.lane.b32.xlu0 %v4027, 96
        %v4151 = vpop.permute.xlu0 %4150
        %4152 = vrot.lane.b32.xlu0 %v4028, 96
        %v4153 = vpop.permute.xlu0 %4152
        %4154 = vrot.lane.b32.xlu0 %v4029, 96
        %v4155 = vpop.permute.xlu0 %4154
        %4156 = vrot.lane.b32.xlu0 %v4030, 96
        %v4157 = vpop.permute.xlu0 %4156
        %4158 = vrot.lane.b32.xlu0 %v4031, 96
        %v4159 = vpop.permute.xlu0 %4158
        %4176 = vrot.lane.b32.xlu0 %v4040, 32
        %v4177 = vpop.permute.xlu0 %4176
        %4178 = vrot.lane.b32.xlu0 %v4041, 32
        %v4179 = vpop.permute.xlu0 %4178
        %4180 = vrot.lane.b32.xlu0 %v4042, 32
        %v4181 = vpop.permute.xlu0 %4180
        %4182 = vrot.lane.b32.xlu0 %v4043, 32
        %v4183 = vpop.permute.xlu0 %4182
        %4184 = vrot.lane.b32.xlu0 %v4044, 32
        %v4185 = vpop.permute.xlu0 %4184
        %4186 = vrot.lane.b32.xlu0 %v4045, 32
        %v4187 = vpop.permute.xlu0 %4186
        %4188 = vrot.lane.b32.xlu0 %v4046, 32
        %v4189 = vpop.permute.xlu0 %4188
        %4190 = vrot.lane.b32.xlu0 %v4047, 32
        %v4191 = vpop.permute.xlu0 %4190
        %4208 = vrot.lane.b32.xlu0 %v4048, 64
        %v4209 = vpop.permute.xlu0 %4208
        %4210 = vrot.lane.b32.xlu0 %v4049, 64
        %v4211 = vpop.permute.xlu0 %4210
        %4212 = vrot.lane.b32.xlu0 %v4050, 64
        %v4213 = vpop.permute.xlu0 %4212
        %4214 = vrot.lane.b32.xlu0 %v4051, 64
        %v4215 = vpop.permute.xlu0 %4214
        %4216 = vrot.lane.b32.xlu0 %v4052, 64
        %v4217 = vpop.permute.xlu0 %4216
        %4218 = vrot.lane.b32.xlu0 %v4053, 64
        %v4219 = vpop.permute.xlu0 %4218
        %4220 = vrot.lane.b32.xlu0 %v4054, 64
        %v4221 = vpop.permute.xlu0 %4220
        %4222 = vrot.lane.b32.xlu0 %v4055, 64
        %v4223 = vpop.permute.xlu0 %4222
        %4240 = vrot.lane.b32.xlu0 %v4056, 96
        %v4241 = vpop.permute.xlu0 %4240
        %4242 = vrot.lane.b32.xlu0 %v4057, 96
        %v4243 = vpop.permute.xlu0 %4242
        %4244 = vrot.lane.b32.xlu0 %v4058, 96
        %v4245 = vpop.permute.xlu0 %4244
        %4246 = vrot.lane.b32.xlu0 %v4059, 96
        %v4247 = vpop.permute.xlu0 %4246
        %4248 = vrot.lane.b32.xlu0 %v4060, 96
        %v4249 = vpop.permute.xlu0 %4248
        %4250 = vrot.lane.b32.xlu0 %v4061, 96
        %v4251 = vpop.permute.xlu0 %4250
        %4252 = vrot.lane.b32.xlu0 %v4062, 96
        %v4253 = vpop.permute.xlu0 %4252
        %4254 = vrot.lane.b32.xlu0 %v4063, 96
        %v4255 = vpop.permute.xlu0 %4254
        %v4264 = vsel %vm497, %v4000, %v4081
        %v4265 = vsel %vm497, %v4001, %v4083
        %v4266 = vsel %vm497, %v4002, %v4085
        %v4267 = vsel %vm497, %v4003, %v4087
        %v4268 = vsel %vm497, %v4004, %v4089
        %v4269 = vsel %vm497, %v4005, %v4091
        %v4270 = vsel %vm497, %v4006, %v4093
        %v4271 = vsel %vm497, %v4007, %v4095
        %v4272 = vsel %vm818, %v4264, %v4113
        %v4273 = vsel %vm818, %v4265, %v4115
        %v4274 = vsel %vm818, %v4266, %v4117
        %v4275 = vsel %vm818, %v4267, %v4119
        %v4276 = vsel %vm818, %v4268, %v4121
        %v4277 = vsel %vm818, %v4269, %v4123
        %v4278 = vsel %vm818, %v4270, %v4125
        %v4279 = vsel %vm818, %v4271, %v4127
        %v4280 = vsel %vm827, %v4272, %v4145
        %v4281 = vsel %vm827, %v4273, %v4147
        %v4282 = vsel %vm827, %v4274, %v4149
        %v4283 = vsel %vm827, %v4275, %v4151
        %v4284 = vsel %vm827, %v4276, %v4153
        %v4285 = vsel %vm827, %v4277, %v4155
        %v4286 = vsel %vm827, %v4278, %v4157
        %v4287 = vsel %vm827, %v4279, %v4159
        %v4288 = vsel %vm497, %v4032, %v4177
        %v4289 = vsel %vm497, %v4033, %v4179
        %v4290 = vsel %vm497, %v4034, %v4181
        %v4291 = vsel %vm497, %v4035, %v4183
        %v4292 = vsel %vm497, %v4036, %v4185
        %v4293 = vsel %vm497, %v4037, %v4187
        %v4294 = vsel %vm497, %v4038, %v4189
        %v4295 = vsel %vm497, %v4039, %v4191
        %v4296 = vsel %vm818, %v4288, %v4209
        %v4297 = vsel %vm818, %v4289, %v4211
        %v4298 = vsel %vm818, %v4290, %v4213
        %v4299 = vsel %vm818, %v4291, %v4215
        %v4300 = vsel %vm818, %v4292, %v4217
        %v4301 = vsel %vm818, %v4293, %v4219
        %v4302 = vsel %vm818, %v4294, %v4221
        %v4303 = vsel %vm818, %v4295, %v4223
        %v4304 = vsel %vm827, %v4296, %v4241
        %v4305 = vsel %vm827, %v4297, %v4243
        %v4306 = vsel %vm827, %v4298, %v4245
        %v4307 = vsel %vm827, %v4299, %v4247
        %v4308 = vsel %vm827, %v4300, %v4249
        %v4309 = vsel %vm827, %v4301, %v4251
        %v4310 = vsel %vm827, %v4302, %v4253
        %v4311 = vsel %vm827, %v4303, %v4255
        %v4312 = vld [vmem:[%s5] sm:$0xff]
        %v4313 = vld [vmem:[%s5 + $0x8] sm:$0xff]
        %v4314 = vld [vmem:[%s5 + $0x10] sm:$0xff]
        %v4315 = vld [vmem:[%s5 + $0x18] sm:$0xff]
        %v4316 = vld [vmem:[%s5 + $0x20] sm:$0xff]
        %v4317 = vld [vmem:[%s5 + $0x28] sm:$0xff]
        %v4318 = vld [vmem:[%s5 + $0x30] sm:$0xff]
        %v4319 = vld [vmem:[%s5 + $0x38] sm:$0xff]
        %v4320 = vld [vmem:[%s5 + $0x40] sm:$0xff]
        %v4321 = vld [vmem:[%s5 + $0x48] sm:$0xff]
        %v4322 = vld [vmem:[%s5 + $0x50] sm:$0xff]
        %v4323 = vld [vmem:[%s5 + $0x58] sm:$0xff]
        %v4324 = vld [vmem:[%s5 + $0x60] sm:$0xff]
        %v4325 = vld [vmem:[%s5 + $0x68] sm:$0xff]
        %v4326 = vld [vmem:[%s5 + $0x70] sm:$0xff]
        %v4327 = vld [vmem:[%s5 + $0x78] sm:$0xff]
        %v4328 = vld [vmem:[%s5 + $0x80] sm:$0xff]
        %v4329 = vld [vmem:[%s5 + $0x88] sm:$0xff]
        %v4330 = vld [vmem:[%s5 + $0x90] sm:$0xff]
        %v4331 = vld [vmem:[%s5 + $0x98] sm:$0xff]
        %v4332 = vld [vmem:[%s5 + $0xa0] sm:$0xff]
        %v4333 = vld [vmem:[%s5 + $0xa8] sm:$0xff]
        %v4334 = vld [vmem:[%s5 + $0xb0] sm:$0xff]
        %v4335 = vld [vmem:[%s5 + $0xb8] sm:$0xff]
        %v4336 = vld [vmem:[%s5 + $0xc0] sm:$0xff]
        %v4337 = vld [vmem:[%s5 + $0xc8] sm:$0xff]
        %v4338 = vld [vmem:[%s5 + $0xd0] sm:$0xff]
        %v4339 = vld [vmem:[%s5 + $0xd8] sm:$0xff]
        %v4340 = vld [vmem:[%s5 + $0xe0] sm:$0xff]
        %v4341 = vld [vmem:[%s5 + $0xe8] sm:$0xff]
        %v4342 = vld [vmem:[%s5 + $0xf0] sm:$0xff]
        %v4343 = vld [vmem:[%s5 + $0xf8] sm:$0xff]
        %v4344 = vld [vmem:[%s5 + $0x100] sm:$0xff]
        %v4345 = vld [vmem:[%s5 + $0x108] sm:$0xff]
        %v4346 = vld [vmem:[%s5 + $0x110] sm:$0xff]
        %v4347 = vld [vmem:[%s5 + $0x118] sm:$0xff]
        %v4348 = vld [vmem:[%s6] sm:$0x1]
        %v4350 = vlaneseq
        %v4351 = vshrl.u32 %v4350, 7
        %v4352 = vsub.s32 0, %v4351
        %v4353 = vrot.slane %v4348, %v4352
        %v4356 = vsel %vm497, %v4064, 0
        %v4359 = vsel %vm497, %v4065, 0
        %v4362 = vsel %vm497, %v4066, 0
        %v4365 = vsel %vm497, %v4067, 0
        %v4368 = vsel %vm497, %v4068, 0
        %v4371 = vsel %vm497, %v4069, 0
        %v4374 = vsel %vm497, %v4070, 0
        %v4377 = vsel %vm497, %v4071, 0
        %4379 = vmatprep.subr.mxu0 0.0
        %4380 = vmatpush1.msra.mxu0 %v4327
        %4381 = vmatprep.subr.mxu0 0.0
        %4382 = vmatpush1.msra.mxu0 %v4326
        %4383 = vmatprep.subr.mxu0 0.0
        %4384 = vmatpush1.msra.mxu0 %v4325
        %4385 = vmatprep.subr.mxu0 0.0
        %4386 = vmatpush1.msra.mxu0 %v4324
        %4387 = vmatprep.subr.mxu0 0.0
        %4388 = vmatpush1.msra.mxu0 %v4323
        %4389 = vmatprep.subr.mxu0 0.0
        %4390 = vmatpush1.msra.mxu0 %v4322
        %4391 = vmatprep.subr.mxu0 0.0
        %4392 = vmatpush1.msra.mxu0 %v4321
        %4393 = vmatprep.subr.mxu0 0.0
        %4394 = vmatpush1.msra.mxu0 %v4320
        %4395 = vmatprep.subr.mxu0 0.0
        %4396 = vmatpush1.msra.mxu0 %v4319
        %4397 = vmatprep.subr.mxu0 0.0
        %4398 = vmatpush1.msra.mxu0 %v4318
        %4399 = vmatprep.subr.mxu0 0.0
        %4400 = vmatpush1.msra.mxu0 %v4317
        %4401 = vmatprep.subr.mxu0 0.0
        %4402 = vmatpush1.msra.mxu0 %v4316
        %4403 = vmatprep.subr.mxu0 0.0
        %4404 = vmatpush1.msra.mxu0 %v4315
        %4405 = vmatprep.subr.mxu0 0.0
        %4406 = vmatpush1.msra.mxu0 %v4314
        %4407 = vmatprep.subr.mxu0 0.0
        %4408 = vmatpush1.msra.mxu0 %v4313
        %4409 = vmatprep.subr.mxu0 0.0
        %4410 = vmatpush1.msra.mxu0 %v4312
        %4411 = vmatprep.subr.mxu0 0.0
        %4412 = vmatpush2.msra.mxu0 %v4343
        %4413 = vmatprep.subr.mxu0 0.0
        %4414 = vmatpush2.msra.mxu0 %v4342
        %4415 = vmatprep.subr.mxu0 0.0
        %4416 = vmatpush2.msra.mxu0 %v4341
        %4417 = vmatprep.subr.mxu0 0.0
        %4418 = vmatpush2.msra.mxu0 %v4340
        %4419 = vmatprep.subr.mxu0 0.0
        %4420 = vmatpush2.msra.mxu0 %v4339
        %4421 = vmatprep.subr.mxu0 0.0
        %4422 = vmatpush2.msra.mxu0 %v4338
        %4423 = vmatprep.subr.mxu0 0.0
        %4424 = vmatpush2.msra.mxu0 %v4337
        %4425 = vmatprep.subr.mxu0 0.0
        %4426 = vmatpush2.msra.mxu0 %v4336
        %4427 = vmatprep.subr.mxu0 0.0
        %4428 = vmatpush2.msra.mxu0 %v4335
        %4429 = vmatprep.subr.mxu0 0.0
        %4430 = vmatpush2.msra.mxu0 %v4334
        %4431 = vmatprep.subr.mxu0 0.0
        %4432 = vmatpush2.msra.mxu0 %v4333
        %4433 = vmatprep.subr.mxu0 0.0
        %4434 = vmatpush2.msra.mxu0 %v4332
        %4435 = vmatprep.subr.mxu0 0.0
        %4436 = vmatpush2.msra.mxu0 %v4331
        %4437 = vmatprep.subr.mxu0 0.0
        %4438 = vmatpush2.msra.mxu0 %v4330
        %4439 = vmatprep.subr.mxu0 0.0
        %4440 = vmatpush2.msra.mxu0 %v4329
        %4441 = vmatprep.subr.mxu0 0.0
        %4442 = vmatpush2.msra.mxu0 %v4328
        %4443 = vmatprep.mubr.f32.mxu0 %v4304
        %4444 = vmatmul.mubr.f32.gmra.mxu0 %v4280
        %v4445 = vpop.f32.mrf.mxu0
        %v4446 = vadd.f32 %v4353, %v4445
        %v4447 = vpop.f32.mrf.mxu0
        %4448 = vmatprep.mubr.f32.mxu0 %v4305
        %4449 = vmatmul.mubr.f32.gmra.mxu0 %v4281
        %v4450 = vpop.f32.mrf.mxu0
        %v4451 = vadd.f32 %v4353, %v4450
        %v4452 = vpop.f32.mrf.mxu0
        %4453 = vmatprep.mubr.f32.mxu0 %v4306
        %4454 = vmatmul.mubr.f32.gmra.mxu0 %v4282
        %v4455 = vpop.f32.mrf.mxu0
        %v4456 = vadd.f32 %v4353, %v4455
        %v4457 = vpop.f32.mrf.mxu0
        %4458 = vmatprep.mubr.f32.mxu0 %v4307
        %4459 = vmatmul.mubr.f32.gmra.mxu0 %v4283
        %v4460 = vpop.f32.mrf.mxu0
        %v4461 = vadd.f32 %v4353, %v4460
        %v4462 = vpop.f32.mrf.mxu0
        %4463 = vmatprep.mubr.f32.mxu0 %v4308
        %4464 = vmatmul.mubr.f32.gmra.mxu0 %v4284
        %v4465 = vpop.f32.mrf.mxu0
        %v4466 = vadd.f32 %v4353, %v4465
        %v4467 = vpop.f32.mrf.mxu0
        %4468 = vmatprep.mubr.f32.mxu0 %v4309
        %4469 = vmatmul.mubr.f32.gmra.mxu0 %v4285
        %v4470 = vpop.f32.mrf.mxu0
        %v4471 = vadd.f32 %v4353, %v4470
        %v4472 = vpop.f32.mrf.mxu0
        %4473 = vmatprep.mubr.f32.mxu0 %v4310
        %4474 = vmatmul.mubr.f32.gmra.mxu0 %v4286
        %v4475 = vpop.f32.mrf.mxu0
        %v4476 = vadd.f32 %v4353, %v4475
        %v4477 = vpop.f32.mrf.mxu0
        %4478 = vmatprep.mubr.f32.mxu0 %v4311
        %4479 = vmatmul.mubr.f32.gmra.mxu0 %v4287
        %v4480 = vpop.f32.mrf.mxu0
        %v4481 = vadd.f32 %v4353, %v4480
        %v4482 = vpop.f32.mrf.mxu0
        %4483 = vdwg.mxu0
        %4484 = vmatprep.subr.mxu0 0.0
        %4485 = vmatpush1.msra.mxu0 0.0
        %4486 = vmatprep.subr.mxu0 0.0
        %4487 = vmatpush1.msra.mxu0 0.0
        %4488 = vmatprep.subr.mxu0 0.0
        %4489 = vmatpush1.msra.mxu0 0.0
        %4490 = vmatprep.subr.mxu0 0.0
        %4491 = vmatpush1.msra.mxu0 0.0
        %4492 = vmatprep.subr.mxu0 0.0
        %4493 = vmatpush1.msra.mxu0 0.0
        %4494 = vmatprep.subr.mxu0 0.0
        %4495 = vmatpush1.msra.mxu0 0.0
        %4496 = vmatprep.subr.mxu0 0.0
        %4497 = vmatpush1.msra.mxu0 0.0
        %4498 = vmatprep.subr.mxu0 0.0
        %4499 = vmatpush1.msra.mxu0 0.0
        %4500 = vmatprep.subr.mxu0 0.0
        %4501 = vmatpush1.msra.mxu0 0.0
        %4502 = vmatprep.subr.mxu0 0.0
        %4503 = vmatpush1.msra.mxu0 0.0
        %4504 = vmatprep.subr.mxu0 0.0
        %4505 = vmatpush1.msra.mxu0 0.0
        %4506 = vmatprep.subr.mxu0 0.0
        %4507 = vmatpush1.msra.mxu0 0.0
        %4508 = vmatprep.subr.mxu0 0.0
        %4509 = vmatpush1.msra.mxu0 %v4347
        %4510 = vmatprep.subr.mxu0 0.0
        %4511 = vmatpush1.msra.mxu0 %v4346
        %4512 = vmatprep.subr.mxu0 0.0
        %4513 = vmatpush1.msra.mxu0 %v4345
        %4514 = vmatprep.subr.mxu0 0.0
        %4515 = vmatpush1.msra.mxu0 %v4344
        %4516 = vmatprep.subr.mxu0 0.0
        %4517 = vmatpush2.msra.mxu0 0.0
        %4518 = vmatprep.subr.mxu0 0.0
        %4519 = vmatpush2.msra.mxu0 0.0
        %4520 = vmatprep.subr.mxu0 0.0
        %4521 = vmatpush2.msra.mxu0 0.0
        %4522 = vmatprep.subr.mxu0 0.0
        %4523 = vmatpush2.msra.mxu0 0.0
        %4524 = vmatprep.subr.mxu0 0.0
        %4525 = vmatpush2.msra.mxu0 0.0
        %4526 = vmatprep.subr.mxu0 0.0
        %4527 = vmatpush2.msra.mxu0 0.0
        %4528 = vmatprep.subr.mxu0 0.0
        %4529 = vmatpush2.msra.mxu0 0.0
        %4530 = vmatprep.subr.mxu0 0.0
        %4531 = vmatpush2.msra.mxu0 0.0
        %4532 = vmatprep.subr.mxu0 0.0
        %4533 = vmatpush2.msra.mxu0 0.0
        %4534 = vmatprep.subr.mxu0 0.0
        %4535 = vmatpush2.msra.mxu0 0.0
        %4536 = vmatprep.subr.mxu0 0.0
        %4537 = vmatpush2.msra.mxu0 0.0
        %4538 = vmatprep.subr.mxu0 0.0
        %4539 = vmatpush2.msra.mxu0 0.0
        %4540 = vmatprep.subr.mxu0 0.0
        %4541 = vmatpush2.msra.mxu0 0.0
        %4542 = vmatprep.subr.mxu0 0.0
        %4543 = vmatpush2.msra.mxu0 0.0
        %4544 = vmatprep.subr.mxu0 0.0
        %4545 = vmatpush2.msra.mxu0 0.0
        %4546 = vmatprep.subr.mxu0 0.0
        %4547 = vmatpush2.msra.mxu0 0.0
        %4548 = vmatprep.mubr.f32.mxu0 0.0
        %4549 = vmatmul.mubr.f32.gmra.mxu0 %v4356
        %v4550 = vpop.f32.mrf.mxu0
        %v4551 = vadd.f32 %v4446, %v4550
        %v4552 = vpop.f32.mrf.mxu0
        %4553 = vmatprep.mubr.f32.mxu0 0.0
        %4554 = vmatmul.mubr.f32.gmra.mxu0 %v4359
        %v4555 = vpop.f32.mrf.mxu0
        %v4556 = vadd.f32 %v4451, %v4555
        %v4557 = vpop.f32.mrf.mxu0
        %4558 = vmatprep.mubr.f32.mxu0 0.0
        %4559 = vmatmul.mubr.f32.gmra.mxu0 %v4362
        %v4560 = vpop.f32.mrf.mxu0
        %v4561 = vadd.f32 %v4456, %v4560
        %v4562 = vpop.f32.mrf.mxu0
        %4563 = vmatprep.mubr.f32.mxu0 0.0
        %4564 = vmatmul.mubr.f32.gmra.mxu0 %v4365
        %v4565 = vpop.f32.mrf.mxu0
        %v4566 = vadd.f32 %v4461, %v4565
        %v4567 = vpop.f32.mrf.mxu0
        %4568 = vmatprep.mubr.f32.mxu0 0.0
        %4569 = vmatmul.mubr.f32.gmra.mxu0 %v4368
        %v4570 = vpop.f32.mrf.mxu0
        %v4571 = vadd.f32 %v4466, %v4570
        %v4572 = vpop.f32.mrf.mxu0
        %4573 = vmatprep.mubr.f32.mxu0 0.0
        %4574 = vmatmul.mubr.f32.gmra.mxu0 %v4371
        %v4575 = vpop.f32.mrf.mxu0
        %v4576 = vadd.f32 %v4471, %v4575
        %v4577 = vpop.f32.mrf.mxu0
        %4578 = vmatprep.mubr.f32.mxu0 0.0
        %4579 = vmatmul.mubr.f32.gmra.mxu0 %v4374
        %v4580 = vpop.f32.mrf.mxu0
        %v4581 = vadd.f32 %v4476, %v4580
        %v4582 = vpop.f32.mrf.mxu0
        %4583 = vmatprep.mubr.f32.mxu0 0.0
        %4584 = vmatmul.mubr.f32.gmra.mxu0 %v4377
        %v4585 = vpop.f32.mrf.mxu0
        %v4586 = vadd.f32 %v4481, %v4585
        %v4587 = vpop.f32.mrf.mxu0
        %4588 = vdwg.mxu0
        %4589 = vst.msk [vmem:[%s536 + $0x1] sm:$0xff] %vm497, %v3984
        %4590 = vst.msk [vmem:[%s536 + $0x11] sm:$0xff] %vm497, %v3985
        %4591 = vst.msk [vmem:[%s536 + $0x21] sm:$0xff] %vm497, %v3986
        %4592 = vst.msk [vmem:[%s536 + $0x31] sm:$0xff] %vm497, %v3987
        %4593 = vst.msk [vmem:[%s536 + $0x41] sm:$0xff] %vm497, %v3988
        %4594 = vst.msk [vmem:[%s536 + $0x51] sm:$0xff] %vm497, %v3989
        %4595 = vst.msk [vmem:[%s536 + $0x61] sm:$0xff] %vm497, %v3990
        %4596 = vst.msk [vmem:[%s536 + $0x71] sm:$0xff] %vm497, %v3991
        %v4597 = vld [vmem:[#allocation2] sm:$0xff]
        %v4598 = vld [vmem:[#allocation2 + $0x10] sm:$0xff]
        %v4599 = vld [vmem:[#allocation2 + $0x20] sm:$0xff]
        %v4600 = vld [vmem:[#allocation2 + $0x30] sm:$0xff]
        %v4601 = vld [vmem:[#allocation2 + $0x40] sm:$0xff]
        %v4602 = vld [vmem:[#allocation2 + $0x50] sm:$0xff]
        %v4603 = vld [vmem:[#allocation2 + $0x60] sm:$0xff]
        %v4604 = vld [vmem:[#allocation2 + $0x70] sm:$0xff]
        %v4605 = vld [vmem:[#allocation2 + $0x1] sm:$0xff]
        %v4606 = vld [vmem:[#allocation2 + $0x11] sm:$0xff]
        %v4607 = vld [vmem:[#allocation2 + $0x21] sm:$0xff]
        %v4608 = vld [vmem:[#allocation2 + $0x31] sm:$0xff]
        %v4609 = vld [vmem:[#allocation2 + $0x41] sm:$0xff]
        %v4610 = vld [vmem:[#allocation2 + $0x51] sm:$0xff]
        %v4611 = vld [vmem:[#allocation2 + $0x61] sm:$0xff]
        %v4612 = vld [vmem:[#allocation2 + $0x71] sm:$0xff]
        %v4613 = vld [vmem:[#allocation2 + $0x2] sm:$0xff]
        %v4614 = vld [vmem:[#allocation2 + $0x12] sm:$0xff]
        %v4615 = vld [vmem:[#allocation2 + $0x22] sm:$0xff]
        %v4616 = vld [vmem:[#allocation2 + $0x32] sm:$0xff]
        %v4617 = vld [vmem:[#allocation2 + $0x42] sm:$0xff]
        %v4618 = vld [vmem:[#allocation2 + $0x52] sm:$0xff]
        %v4619 = vld [vmem:[#allocation2 + $0x62] sm:$0xff]
        %v4620 = vld [vmem:[#allocation2 + $0x72] sm:$0xff]
        %v4621 = vld [vmem:[%s536] sm:$0xff]
        %v4622 = vld [vmem:[%s536 + $0x10] sm:$0xff]
        %v4623 = vld [vmem:[%s536 + $0x20] sm:$0xff]
        %v4624 = vld [vmem:[%s536 + $0x30] sm:$0xff]
        %v4625 = vld [vmem:[%s536 + $0x40] sm:$0xff]
        %v4626 = vld [vmem:[%s536 + $0x50] sm:$0xff]
        %v4627 = vld [vmem:[%s536 + $0x60] sm:$0xff]
        %v4628 = vld [vmem:[%s536 + $0x70] sm:$0xff]
        %v4629 = vld [vmem:[%s536 + $0x1] sm:$0xff]
        %v4630 = vld [vmem:[%s536 + $0x11] sm:$0xff]
        %v4631 = vld [vmem:[%s536 + $0x21] sm:$0xff]
        %v4632 = vld [vmem:[%s536 + $0x31] sm:$0xff]
        %v4633 = vld [vmem:[%s536 + $0x41] sm:$0xff]
        %v4634 = vld [vmem:[%s536 + $0x51] sm:$0xff]
        %v4635 = vld [vmem:[%s536 + $0x61] sm:$0xff]
        %v4636 = vld [vmem:[%s536 + $0x71] sm:$0xff]
        %v4637 = vld [vmem:[%s536 + $0x2] sm:$0xff]
        %v4638 = vld [vmem:[%s536 + $0x12] sm:$0xff]
        %v4639 = vld [vmem:[%s536 + $0x22] sm:$0xff]
        %v4640 = vld [vmem:[%s536 + $0x32] sm:$0xff]
        %v4641 = vld [vmem:[%s536 + $0x42] sm:$0xff]
        %v4642 = vld [vmem:[%s536 + $0x52] sm:$0xff]
        %v4643 = vld [vmem:[%s536 + $0x62] sm:$0xff]
        %v4644 = vld [vmem:[%s536 + $0x72] sm:$0xff]
        %v4645 = vld [vmem:[%s593] sm:$0xff]
        %v4646 = vld [vmem:[%s593 + $0x10] sm:$0xff]
        %v4647 = vld [vmem:[%s593 + $0x20] sm:$0xff]
        %v4648 = vld [vmem:[%s593 + $0x30] sm:$0xff]
        %v4649 = vld [vmem:[%s593 + $0x40] sm:$0xff]
        %v4650 = vld [vmem:[%s593 + $0x50] sm:$0xff]
        %v4651 = vld [vmem:[%s593 + $0x60] sm:$0xff]
        %v4652 = vld [vmem:[%s593 + $0x70] sm:$0xff]
        %v4653 = vld [vmem:[%s593 + $0x1] sm:$0xff]
        %v4654 = vld [vmem:[%s593 + $0x11] sm:$0xff]
        %v4655 = vld [vmem:[%s593 + $0x21] sm:$0xff]
        %v4656 = vld [vmem:[%s593 + $0x31] sm:$0xff]
        %v4657 = vld [vmem:[%s593 + $0x41] sm:$0xff]
        %v4658 = vld [vmem:[%s593 + $0x51] sm:$0xff]
        %v4659 = vld [vmem:[%s593 + $0x61] sm:$0xff]
        %v4660 = vld [vmem:[%s593 + $0x71] sm:$0xff]
        %v4661 = vld [vmem:[%s593 + $0x2] sm:$0xff]
        %v4662 = vld [vmem:[%s593 + $0x12] sm:$0xff]
        %v4663 = vld [vmem:[%s593 + $0x22] sm:$0xff]
        %v4664 = vld [vmem:[%s593 + $0x32] sm:$0xff]
        %v4665 = vld [vmem:[%s593 + $0x42] sm:$0xff]
        %v4666 = vld [vmem:[%s593 + $0x52] sm:$0xff]
        %v4667 = vld [vmem:[%s593 + $0x62] sm:$0xff]
        %v4668 = vld [vmem:[%s593 + $0x72] sm:$0xff]
        %4677 = vrot.lane.b32.xlu0 %v4605, 32
        %v4678 = vpop.permute.xlu0 %4677
        %4679 = vrot.lane.b32.xlu0 %v4606, 32
        %v4680 = vpop.permute.xlu0 %4679
        %4681 = vrot.lane.b32.xlu0 %v4607, 32
        %v4682 = vpop.permute.xlu0 %4681
        %4683 = vrot.lane.b32.xlu0 %v4608, 32
        %v4684 = vpop.permute.xlu0 %4683
        %4685 = vrot.lane.b32.xlu0 %v4609, 32
        %v4686 = vpop.permute.xlu0 %4685
        %4687 = vrot.lane.b32.xlu0 %v4610, 32
        %v4688 = vpop.permute.xlu0 %4687
        %4689 = vrot.lane.b32.xlu0 %v4611, 32
        %v4690 = vpop.permute.xlu0 %4689
        %4691 = vrot.lane.b32.xlu0 %v4612, 32
        %v4692 = vpop.permute.xlu0 %4691
        %4709 = vrot.lane.b32.xlu0 %v4613, 64
        %v4710 = vpop.permute.xlu0 %4709
        %4711 = vrot.lane.b32.xlu0 %v4614, 64
        %v4712 = vpop.permute.xlu0 %4711
        %4713 = vrot.lane.b32.xlu0 %v4615, 64
        %v4714 = vpop.permute.xlu0 %4713
        %4715 = vrot.lane.b32.xlu0 %v4616, 64
        %v4716 = vpop.permute.xlu0 %4715
        %4717 = vrot.lane.b32.xlu0 %v4617, 64
        %v4718 = vpop.permute.xlu0 %4717
        %4719 = vrot.lane.b32.xlu0 %v4618, 64
        %v4720 = vpop.permute.xlu0 %4719
        %4721 = vrot.lane.b32.xlu0 %v4619, 64
        %v4722 = vpop.permute.xlu0 %4721
        %4723 = vrot.lane.b32.xlu0 %v4620, 64
        %v4724 = vpop.permute.xlu0 %4723
        %4741 = vrot.lane.b32.xlu0 %v4621, 96
        %v4742 = vpop.permute.xlu0 %4741
        %4743 = vrot.lane.b32.xlu0 %v4622, 96
        %v4744 = vpop.permute.xlu0 %4743
        %4745 = vrot.lane.b32.xlu0 %v4623, 96
        %v4746 = vpop.permute.xlu0 %4745
        %4747 = vrot.lane.b32.xlu0 %v4624, 96
        %v4748 = vpop.permute.xlu0 %4747
        %4749 = vrot.lane.b32.xlu0 %v4625, 96
        %v4750 = vpop.permute.xlu0 %4749
        %4751 = vrot.lane.b32.xlu0 %v4626, 96
        %v4752 = vpop.permute.xlu0 %4751
        %4753 = vrot.lane.b32.xlu0 %v4627, 96
        %v4754 = vpop.permute.xlu0 %4753
        %4755 = vrot.lane.b32.xlu0 %v4628, 96
        %v4756 = vpop.permute.xlu0 %4755
        %4773 = vrot.lane.b32.xlu0 %v4637, 32
        %v4774 = vpop.permute.xlu0 %4773
        %4775 = vrot.lane.b32.xlu0 %v4638, 32
        %v4776 = vpop.permute.xlu0 %4775
        %4777 = vrot.lane.b32.xlu0 %v4639, 32
        %v4778 = vpop.permute.xlu0 %4777
        %4779 = vrot.lane.b32.xlu0 %v4640, 32
        %v4780 = vpop.permute.xlu0 %4779
        %4781 = vrot.lane.b32.xlu0 %v4641, 32
        %v4782 = vpop.permute.xlu0 %4781
        %4783 = vrot.lane.b32.xlu0 %v4642, 32
        %v4784 = vpop.permute.xlu0 %4783
        %4785 = vrot.lane.b32.xlu0 %v4643, 32
        %v4786 = vpop.permute.xlu0 %4785
        %4787 = vrot.lane.b32.xlu0 %v4644, 32
        %v4788 = vpop.permute.xlu0 %4787
        %4805 = vrot.lane.b32.xlu0 %v4645, 64
        %v4806 = vpop.permute.xlu0 %4805
        %4807 = vrot.lane.b32.xlu0 %v4646, 64
        %v4808 = vpop.permute.xlu0 %4807
        %4809 = vrot.lane.b32.xlu0 %v4647, 64
        %v4810 = vpop.permute.xlu0 %4809
        %4811 = vrot.lane.b32.xlu0 %v4648, 64
        %v4812 = vpop.permute.xlu0 %4811
        %4813 = vrot.lane.b32.xlu0 %v4649, 64
        %v4814 = vpop.permute.xlu0 %4813
        %4815 = vrot.lane.b32.xlu0 %v4650, 64
        %v4816 = vpop.permute.xlu0 %4815
        %4817 = vrot.lane.b32.xlu0 %v4651, 64
        %v4818 = vpop.permute.xlu0 %4817
        %4819 = vrot.lane.b32.xlu0 %v4652, 64
        %v4820 = vpop.permute.xlu0 %4819
        %4837 = vrot.lane.b32.xlu0 %v4653, 96
        %v4838 = vpop.permute.xlu0 %4837
        %4839 = vrot.lane.b32.xlu0 %v4654, 96
        %v4840 = vpop.permute.xlu0 %4839
        %4841 = vrot.lane.b32.xlu0 %v4655, 96
        %v4842 = vpop.permute.xlu0 %4841
        %4843 = vrot.lane.b32.xlu0 %v4656, 96
        %v4844 = vpop.permute.xlu0 %4843
        %4845 = vrot.lane.b32.xlu0 %v4657, 96
        %v4846 = vpop.permute.xlu0 %4845
        %4847 = vrot.lane.b32.xlu0 %v4658, 96
        %v4848 = vpop.permute.xlu0 %4847
        %4849 = vrot.lane.b32.xlu0 %v4659, 96
        %v4850 = vpop.permute.xlu0 %4849
        %4851 = vrot.lane.b32.xlu0 %v4660, 96
        %v4852 = vpop.permute.xlu0 %4851
        %v4861 = vsel %vm497, %v4597, %v4678
        %v4862 = vsel %vm497, %v4598, %v4680
        %v4863 = vsel %vm497, %v4599, %v4682
        %v4864 = vsel %vm497, %v4600, %v4684
        %v4865 = vsel %vm497, %v4601, %v4686
        %v4866 = vsel %vm497, %v4602, %v4688
        %v4867 = vsel %vm497, %v4603, %v4690
        %v4868 = vsel %vm497, %v4604, %v4692
        %v4869 = vsel %vm818, %v4861, %v4710
        %v4870 = vsel %vm818, %v4862, %v4712
        %v4871 = vsel %vm818, %v4863, %v4714
        %v4872 = vsel %vm818, %v4864, %v4716
        %v4873 = vsel %vm818, %v4865, %v4718
        %v4874 = vsel %vm818, %v4866, %v4720
        %v4875 = vsel %vm818, %v4867, %v4722
        %v4876 = vsel %vm818, %v4868, %v4724
        %v4877 = vsel %vm827, %v4869, %v4742
        %v4878 = vsel %vm827, %v4870, %v4744
        %v4879 = vsel %vm827, %v4871, %v4746
        %v4880 = vsel %vm827, %v4872, %v4748
        %v4881 = vsel %vm827, %v4873, %v4750
        %v4882 = vsel %vm827, %v4874, %v4752
        %v4883 = vsel %vm827, %v4875, %v4754
        %v4884 = vsel %vm827, %v4876, %v4756
        %v4885 = vsel %vm497, %v4629, %v4774
        %v4886 = vsel %vm497, %v4630, %v4776
        %v4887 = vsel %vm497, %v4631, %v4778
        %v4888 = vsel %vm497, %v4632, %v4780
        %v4889 = vsel %vm497, %v4633, %v4782
        %v4890 = vsel %vm497, %v4634, %v4784
        %v4891 = vsel %vm497, %v4635, %v4786
        %v4892 = vsel %vm497, %v4636, %v4788
        %v4893 = vsel %vm818, %v4885, %v4806
        %v4894 = vsel %vm818, %v4886, %v4808
        %v4895 = vsel %vm818, %v4887, %v4810
        %v4896 = vsel %vm818, %v4888, %v4812
        %v4897 = vsel %vm818, %v4889, %v4814
        %v4898 = vsel %vm818, %v4890, %v4816
        %v4899 = vsel %vm818, %v4891, %v4818
        %v4900 = vsel %vm818, %v4892, %v4820
        %v4901 = vsel %vm827, %v4893, %v4838
        %v4902 = vsel %vm827, %v4894, %v4840
        %v4903 = vsel %vm827, %v4895, %v4842
        %v4904 = vsel %vm827, %v4896, %v4844
        %v4905 = vsel %vm827, %v4897, %v4846
        %v4906 = vsel %vm827, %v4898, %v4848
        %v4907 = vsel %vm827, %v4899, %v4850
        %v4908 = vsel %vm827, %v4900, %v4852
        %v4909 = vld [vmem:[%s7] sm:$0xff]
        %v4910 = vld [vmem:[%s7 + $0x8] sm:$0xff]
        %v4911 = vld [vmem:[%s7 + $0x10] sm:$0xff]
        %v4912 = vld [vmem:[%s7 + $0x18] sm:$0xff]
        %v4913 = vld [vmem:[%s7 + $0x20] sm:$0xff]
        %v4914 = vld [vmem:[%s7 + $0x28] sm:$0xff]
        %v4915 = vld [vmem:[%s7 + $0x30] sm:$0xff]
        %v4916 = vld [vmem:[%s7 + $0x38] sm:$0xff]
        %v4917 = vld [vmem:[%s7 + $0x40] sm:$0xff]
        %v4918 = vld [vmem:[%s7 + $0x48] sm:$0xff]
        %v4919 = vld [vmem:[%s7 + $0x50] sm:$0xff]
        %v4920 = vld [vmem:[%s7 + $0x58] sm:$0xff]
        %v4921 = vld [vmem:[%s7 + $0x60] sm:$0xff]
        %v4922 = vld [vmem:[%s7 + $0x68] sm:$0xff]
        %v4923 = vld [vmem:[%s7 + $0x70] sm:$0xff]
        %v4924 = vld [vmem:[%s7 + $0x78] sm:$0xff]
        %v4925 = vld [vmem:[%s7 + $0x80] sm:$0xff]
        %v4926 = vld [vmem:[%s7 + $0x88] sm:$0xff]
        %v4927 = vld [vmem:[%s7 + $0x90] sm:$0xff]
        %v4928 = vld [vmem:[%s7 + $0x98] sm:$0xff]
        %v4929 = vld [vmem:[%s7 + $0xa0] sm:$0xff]
        %v4930 = vld [vmem:[%s7 + $0xa8] sm:$0xff]
        %v4931 = vld [vmem:[%s7 + $0xb0] sm:$0xff]
        %v4932 = vld [vmem:[%s7 + $0xb8] sm:$0xff]
        %v4933 = vld [vmem:[%s7 + $0xc0] sm:$0xff]
        %v4934 = vld [vmem:[%s7 + $0xc8] sm:$0xff]
        %v4935 = vld [vmem:[%s7 + $0xd0] sm:$0xff]
        %v4936 = vld [vmem:[%s7 + $0xd8] sm:$0xff]
        %v4937 = vld [vmem:[%s7 + $0xe0] sm:$0xff]
        %v4938 = vld [vmem:[%s7 + $0xe8] sm:$0xff]
        %v4939 = vld [vmem:[%s7 + $0xf0] sm:$0xff]
        %v4940 = vld [vmem:[%s7 + $0xf8] sm:$0xff]
        %v4941 = vld [vmem:[%s7 + $0x100] sm:$0xff]
        %v4942 = vld [vmem:[%s7 + $0x108] sm:$0xff]
        %v4943 = vld [vmem:[%s7 + $0x110] sm:$0xff]
        %v4944 = vld [vmem:[%s7 + $0x118] sm:$0xff]
        %v4945 = vld [vmem:[%s8] sm:$0x1]
        %v4947 = vlaneseq
        %v4948 = vshrl.u32 %v4947, 7
        %v4949 = vsub.s32 0, %v4948
        %v4950 = vrot.slane %v4945, %v4949
        %v4953 = vsel %vm497, %v4661, 0
        %v4956 = vsel %vm497, %v4662, 0
        %v4959 = vsel %vm497, %v4663, 0
        %v4962 = vsel %vm497, %v4664, 0
        %v4965 = vsel %vm497, %v4665, 0
        %v4968 = vsel %vm497, %v4666, 0
        %v4971 = vsel %vm497, %v4667, 0
        %v4974 = vsel %vm497, %v4668, 0
        %4976 = vmatprep.subr.mxu0 0.0
        %4977 = vmatpush1.msra.mxu0 %v4924
        %4978 = vmatprep.subr.mxu0 0.0
        %4979 = vmatpush1.msra.mxu0 %v4923
        %4980 = vmatprep.subr.mxu0 0.0
        %4981 = vmatpush1.msra.mxu0 %v4922
        %4982 = vmatprep.subr.mxu0 0.0
        %4983 = vmatpush1.msra.mxu0 %v4921
        %4984 = vmatprep.subr.mxu0 0.0
        %4985 = vmatpush1.msra.mxu0 %v4920
        %4986 = vmatprep.subr.mxu0 0.0
        %4987 = vmatpush1.msra.mxu0 %v4919
        %4988 = vmatprep.subr.mxu0 0.0
        %4989 = vmatpush1.msra.mxu0 %v4918
        %4990 = vmatprep.subr.mxu0 0.0
        %4991 = vmatpush1.msra.mxu0 %v4917
        %4992 = vmatprep.subr.mxu0 0.0
        %4993 = vmatpush1.msra.mxu0 %v4916
        %4994 = vmatprep.subr.mxu0 0.0
        %4995 = vmatpush1.msra.mxu0 %v4915
        %4996 = vmatprep.subr.mxu0 0.0
        %4997 = vmatpush1.msra.mxu0 %v4914
        %4998 = vmatprep.subr.mxu0 0.0
        %4999 = vmatpush1.msra.mxu0 %v4913
        %5000 = vmatprep.subr.mxu0 0.0
        %5001 = vmatpush1.msra.mxu0 %v4912
        %5002 = vmatprep.subr.mxu0 0.0
        %5003 = vmatpush1.msra.mxu0 %v4911
        %5004 = vmatprep.subr.mxu0 0.0
        %5005 = vmatpush1.msra.mxu0 %v4910
        %5006 = vmatprep.subr.mxu0 0.0
        %5007 = vmatpush1.msra.mxu0 %v4909
        %5008 = vmatprep.subr.mxu0 0.0
        %5009 = vmatpush2.msra.mxu0 %v4940
        %5010 = vmatprep.subr.mxu0 0.0
        %5011 = vmatpush2.msra.mxu0 %v4939
        %5012 = vmatprep.subr.mxu0 0.0
        %5013 = vmatpush2.msra.mxu0 %v4938
        %5014 = vmatprep.subr.mxu0 0.0
        %5015 = vmatpush2.msra.mxu0 %v4937
        %5016 = vmatprep.subr.mxu0 0.0
        %5017 = vmatpush2.msra.mxu0 %v4936
        %5018 = vmatprep.subr.mxu0 0.0
        %5019 = vmatpush2.msra.mxu0 %v4935
        %5020 = vmatprep.subr.mxu0 0.0
        %5021 = vmatpush2.msra.mxu0 %v4934
        %5022 = vmatprep.subr.mxu0 0.0
        %5023 = vmatpush2.msra.mxu0 %v4933
        %5024 = vmatprep.subr.mxu0 0.0
        %5025 = vmatpush2.msra.mxu0 %v4932
        %5026 = vmatprep.subr.mxu0 0.0
        %5027 = vmatpush2.msra.mxu0 %v4931
        %5028 = vmatprep.subr.mxu0 0.0
        %5029 = vmatpush2.msra.mxu0 %v4930
        %5030 = vmatprep.subr.mxu0 0.0
        %5031 = vmatpush2.msra.mxu0 %v4929
        %5032 = vmatprep.subr.mxu0 0.0
        %5033 = vmatpush2.msra.mxu0 %v4928
        %5034 = vmatprep.subr.mxu0 0.0
        %5035 = vmatpush2.msra.mxu0 %v4927
        %5036 = vmatprep.subr.mxu0 0.0
        %5037 = vmatpush2.msra.mxu0 %v4926
        %5038 = vmatprep.subr.mxu0 0.0
        %5039 = vmatpush2.msra.mxu0 %v4925
        %5040 = vmatprep.mubr.f32.mxu0 %v4901
        %5041 = vmatmul.mubr.f32.gmra.mxu0 %v4877
        %v5042 = vpop.f32.mrf.mxu0
        %v5043 = vadd.f32 %v4950, %v5042
        %v5044 = vpop.f32.mrf.mxu0
        %5045 = vmatprep.mubr.f32.mxu0 %v4902
        %5046 = vmatmul.mubr.f32.gmra.mxu0 %v4878
        %v5047 = vpop.f32.mrf.mxu0
        %v5048 = vadd.f32 %v4950, %v5047
        %v5049 = vpop.f32.mrf.mxu0
        %5050 = vmatprep.mubr.f32.mxu0 %v4903
        %5051 = vmatmul.mubr.f32.gmra.mxu0 %v4879
        %v5052 = vpop.f32.mrf.mxu0
        %v5053 = vadd.f32 %v4950, %v5052
        %v5054 = vpop.f32.mrf.mxu0
        %5055 = vmatprep.mubr.f32.mxu0 %v4904
        %5056 = vmatmul.mubr.f32.gmra.mxu0 %v4880
        %v5057 = vpop.f32.mrf.mxu0
        %v5058 = vadd.f32 %v4950, %v5057
        %v5059 = vpop.f32.mrf.mxu0
        %5060 = vmatprep.mubr.f32.mxu0 %v4905
        %5061 = vmatmul.mubr.f32.gmra.mxu0 %v4881
        %v5062 = vpop.f32.mrf.mxu0
        %v5063 = vadd.f32 %v4950, %v5062
        %v5064 = vpop.f32.mrf.mxu0
        %5065 = vmatprep.mubr.f32.mxu0 %v4906
        %5066 = vmatmul.mubr.f32.gmra.mxu0 %v4882
        %v5067 = vpop.f32.mrf.mxu0
        %v5068 = vadd.f32 %v4950, %v5067
        %v5069 = vpop.f32.mrf.mxu0
        %5070 = vmatprep.mubr.f32.mxu0 %v4907
        %5071 = vmatmul.mubr.f32.gmra.mxu0 %v4883
        %v5072 = vpop.f32.mrf.mxu0
        %v5073 = vadd.f32 %v4950, %v5072
        %v5074 = vpop.f32.mrf.mxu0
        %5075 = vmatprep.mubr.f32.mxu0 %v4908
        %5076 = vmatmul.mubr.f32.gmra.mxu0 %v4884
        %v5077 = vpop.f32.mrf.mxu0
        %v5078 = vadd.f32 %v4950, %v5077
        %v5079 = vpop.f32.mrf.mxu0
        %5080 = vdwg.mxu0
        %5081 = vmatprep.subr.mxu0 0.0
        %5082 = vmatpush1.msra.mxu0 0.0
        %5083 = vmatprep.subr.mxu0 0.0
        %5084 = vmatpush1.msra.mxu0 0.0
        %5085 = vmatprep.subr.mxu0 0.0
        %5086 = vmatpush1.msra.mxu0 0.0
        %5087 = vmatprep.subr.mxu0 0.0
        %5088 = vmatpush1.msra.mxu0 0.0
        %5089 = vmatprep.subr.mxu0 0.0
        %5090 = vmatpush1.msra.mxu0 0.0
        %5091 = vmatprep.subr.mxu0 0.0
        %5092 = vmatpush1.msra.mxu0 0.0
        %5093 = vmatprep.subr.mxu0 0.0
        %5094 = vmatpush1.msra.mxu0 0.0
        %5095 = vmatprep.subr.mxu0 0.0
        %5096 = vmatpush1.msra.mxu0 0.0
        %5097 = vmatprep.subr.mxu0 0.0
        %5098 = vmatpush1.msra.mxu0 0.0
        %5099 = vmatprep.subr.mxu0 0.0
        %5100 = vmatpush1.msra.mxu0 0.0
        %5101 = vmatprep.subr.mxu0 0.0
        %5102 = vmatpush1.msra.mxu0 0.0
        %5103 = vmatprep.subr.mxu0 0.0
        %5104 = vmatpush1.msra.mxu0 0.0
        %5105 = vmatprep.subr.mxu0 0.0
        %5106 = vmatpush1.msra.mxu0 %v4944
        %5107 = vmatprep.subr.mxu0 0.0
        %5108 = vmatpush1.msra.mxu0 %v4943
        %5109 = vmatprep.subr.mxu0 0.0
        %5110 = vmatpush1.msra.mxu0 %v4942
        %5111 = vmatprep.subr.mxu0 0.0
        %5112 = vmatpush1.msra.mxu0 %v4941
        %5113 = vmatprep.subr.mxu0 0.0
        %5114 = vmatpush2.msra.mxu0 0.0
        %5115 = vmatprep.subr.mxu0 0.0
        %5116 = vmatpush2.msra.mxu0 0.0
        %5117 = vmatprep.subr.mxu0 0.0
        %5118 = vmatpush2.msra.mxu0 0.0
        %5119 = vmatprep.subr.mxu0 0.0
        %5120 = vmatpush2.msra.mxu0 0.0
        %5121 = vmatprep.subr.mxu0 0.0
        %5122 = vmatpush2.msra.mxu0 0.0
        %5123 = vmatprep.subr.mxu0 0.0
        %5124 = vmatpush2.msra.mxu0 0.0
        %5125 = vmatprep.subr.mxu0 0.0
        %5126 = vmatpush2.msra.mxu0 0.0
        %5127 = vmatprep.subr.mxu0 0.0
        %5128 = vmatpush2.msra.mxu0 0.0
        %5129 = vmatprep.subr.mxu0 0.0
        %5130 = vmatpush2.msra.mxu0 0.0
        %5131 = vmatprep.subr.mxu0 0.0
        %5132 = vmatpush2.msra.mxu0 0.0
        %5133 = vmatprep.subr.mxu0 0.0
        %5134 = vmatpush2.msra.mxu0 0.0
        %5135 = vmatprep.subr.mxu0 0.0
        %5136 = vmatpush2.msra.mxu0 0.0
        %5137 = vmatprep.subr.mxu0 0.0
        %5138 = vmatpush2.msra.mxu0 0.0
        %5139 = vmatprep.subr.mxu0 0.0
        %5140 = vmatpush2.msra.mxu0 0.0
        %5141 = vmatprep.subr.mxu0 0.0
        %5142 = vmatpush2.msra.mxu0 0.0
        %5143 = vmatprep.subr.mxu0 0.0
        %5144 = vmatpush2.msra.mxu0 0.0
        %5145 = vmatprep.mubr.f32.mxu0 0.0
        %5146 = vmatmul.mubr.f32.gmra.mxu0 %v4953
        %v5147 = vpop.f32.mrf.mxu0
        %v5148 = vadd.f32 %v5043, %v5147
        %v5149 = vpop.f32.mrf.mxu0
        %5150 = vmatprep.mubr.f32.mxu0 0.0
        %5151 = vmatmul.mubr.f32.gmra.mxu0 %v4956
        %v5152 = vpop.f32.mrf.mxu0
        %v5153 = vadd.f32 %v5048, %v5152
        %v5154 = vpop.f32.mrf.mxu0
        %5155 = vmatprep.mubr.f32.mxu0 0.0
        %5156 = vmatmul.mubr.f32.gmra.mxu0 %v4959
        %v5157 = vpop.f32.mrf.mxu0
        %v5158 = vadd.f32 %v5053, %v5157
        %v5159 = vpop.f32.mrf.mxu0
        %5160 = vmatprep.mubr.f32.mxu0 0.0
        %5161 = vmatmul.mubr.f32.gmra.mxu0 %v4962
        %v5162 = vpop.f32.mrf.mxu0
        %v5163 = vadd.f32 %v5058, %v5162
        %v5164 = vpop.f32.mrf.mxu0
        %5165 = vmatprep.mubr.f32.mxu0 0.0
        %5166 = vmatmul.mubr.f32.gmra.mxu0 %v4965
        %v5167 = vpop.f32.mrf.mxu0
        %v5168 = vadd.f32 %v5063, %v5167
        %v5169 = vpop.f32.mrf.mxu0
        %5170 = vmatprep.mubr.f32.mxu0 0.0
        %5171 = vmatmul.mubr.f32.gmra.mxu0 %v4968
        %v5172 = vpop.f32.mrf.mxu0
        %v5173 = vadd.f32 %v5068, %v5172
        %v5174 = vpop.f32.mrf.mxu0
        %5175 = vmatprep.mubr.f32.mxu0 0.0
        %5176 = vmatmul.mubr.f32.gmra.mxu0 %v4971
        %v5177 = vpop.f32.mrf.mxu0
        %v5178 = vadd.f32 %v5073, %v5177
        %v5179 = vpop.f32.mrf.mxu0
        %5180 = vmatprep.mubr.f32.mxu0 0.0
        %5181 = vmatmul.mubr.f32.gmra.mxu0 %v4974
        %v5182 = vpop.f32.mrf.mxu0
        %v5183 = vadd.f32 %v5078, %v5182
        %v5184 = vpop.f32.mrf.mxu0
        %5185 = vdwg.mxu0
        %v5186 = vld [vmem:[#allocation3] sm:$0x1]
        %s5187 = vtos %v5186
        %v5188 = vstv %s5187
        %v5189 = vmul.f32 %v5148, %v5188
        %v5190 = vmul.f32 %v5153, %v5188
        %v5191 = vmul.f32 %v5158, %v5188
        %v5192 = vmul.f32 %v5163, %v5188
        %v5193 = vmul.f32 %v5168, %v5188
        %v5194 = vmul.f32 %v5173, %v5188
        %v5195 = vmul.f32 %v5178, %v5188
        %v5196 = vmul.f32 %v5183, %v5188
        %5205 = vrot.lane.b32.xlu0 %v5189, 111
        %v5206 = vpop.permute.xlu0 %5205
        %5207 = vrot.lane.b32.xlu0 %v5190, 111
        %v5208 = vpop.permute.xlu0 %5207
        %5209 = vrot.lane.b32.xlu0 %v5191, 111
        %v5210 = vpop.permute.xlu0 %5209
        %5211 = vrot.lane.b32.xlu0 %v5192, 111
        %v5212 = vpop.permute.xlu0 %5211
        %5213 = vrot.lane.b32.xlu0 %v5193, 111
        %v5214 = vpop.permute.xlu0 %5213
        %5215 = vrot.lane.b32.xlu0 %v5194, 111
        %v5216 = vpop.permute.xlu0 %5215
        %5217 = vrot.lane.b32.xlu0 %v5195, 111
        %v5218 = vpop.permute.xlu0 %5217
        %5219 = vrot.lane.b32.xlu0 %v5196, 111
        %v5220 = vpop.permute.xlu0 %5219
        %5229 = vrot.lane.b32.xlu0 %v5189, 94
        %v5230 = vpop.permute.xlu0 %5229
        %5231 = vrot.lane.b32.xlu0 %v5190, 94
        %v5232 = vpop.permute.xlu0 %5231
        %5233 = vrot.lane.b32.xlu0 %v5191, 94
        %v5234 = vpop.permute.xlu0 %5233
        %5235 = vrot.lane.b32.xlu0 %v5192, 94
        %v5236 = vpop.permute.xlu0 %5235
        %5237 = vrot.lane.b32.xlu0 %v5193, 94
        %v5238 = vpop.permute.xlu0 %5237
        %5239 = vrot.lane.b32.xlu0 %v5194, 94
        %v5240 = vpop.permute.xlu0 %5239
        %5241 = vrot.lane.b32.xlu0 %v5195, 94
        %v5242 = vpop.permute.xlu0 %5241
        %5243 = vrot.lane.b32.xlu0 %v5196, 94
        %v5244 = vpop.permute.xlu0 %5243
        %5253 = vrot.lane.b32.xlu0 %v5189, 77
        %v5254 = vpop.permute.xlu0 %5253
        %5255 = vrot.lane.b32.xlu0 %v5190, 77
        %v5256 = vpop.permute.xlu0 %5255
        %5257 = vrot.lane.b32.xlu0 %v5191, 77
        %v5258 = vpop.permute.xlu0 %5257
        %5259 = vrot.lane.b32.xlu0 %v5192, 77
        %v5260 = vpop.permute.xlu0 %5259
        %5261 = vrot.lane.b32.xlu0 %v5193, 77
        %v5262 = vpop.permute.xlu0 %5261
        %5263 = vrot.lane.b32.xlu0 %v5194, 77
        %v5264 = vpop.permute.xlu0 %5263
        %5265 = vrot.lane.b32.xlu0 %v5195, 77
        %v5266 = vpop.permute.xlu0 %5265
        %5267 = vrot.lane.b32.xlu0 %v5196, 77
        %v5268 = vpop.permute.xlu0 %5267
        %vm5277 = vcmask 138240
        %v5278 = vsel %vm5277, %v5189, -inf
        %5279 = vmax.xlane.f32.xlu0 %v5278
        %v5280 = vpop.xlane.xlu0 %5279
        %v5281 = vsel %vm5277, %v5190, -inf
        %5282 = vmax.xlane.f32.xlu0 %v5281
        %v5283 = vpop.xlane.xlu0 %5282
        %v5284 = vsel %vm5277, %v5191, -inf
        %5285 = vmax.xlane.f32.xlu0 %v5284
        %v5286 = vpop.xlane.xlu0 %5285
        %v5287 = vsel %vm5277, %v5192, -inf
        %5288 = vmax.xlane.f32.xlu0 %v5287
        %v5289 = vpop.xlane.xlu0 %5288
        %v5290 = vsel %vm5277, %v5193, -inf
        %5291 = vmax.xlane.f32.xlu0 %v5290
        %v5292 = vpop.xlane.xlu0 %5291
        %v5293 = vsel %vm5277, %v5194, -inf
        %5294 = vmax.xlane.f32.xlu0 %v5293
        %v5295 = vpop.xlane.xlu0 %5294
        %v5296 = vsel %vm5277, %v5195, -inf
        %5297 = vmax.xlane.f32.xlu0 %v5296
        %v5298 = vpop.xlane.xlu0 %5297
        %v5299 = vsel %vm5277, %v5196, -inf
        %5300 = vmax.xlane.f32.xlu0 %v5299
        %v5301 = vpop.xlane.xlu0 %5300
        %v5302 = vsel %vm5277, %v5206, -inf
        %5303 = vmax.xlane.f32.xlu0 %v5302
        %v5304 = vpop.xlane.xlu0 %5303
        %v5305 = vsel %vm5277, %v5208, -inf
        %5306 = vmax.xlane.f32.xlu0 %v5305
        %v5307 = vpop.xlane.xlu0 %5306
        %v5308 = vsel %vm5277, %v5210, -inf
        %5309 = vmax.xlane.f32.xlu0 %v5308
        %v5310 = vpop.xlane.xlu0 %5309
        %v5311 = vsel %vm5277, %v5212, -inf
        %5312 = vmax.xlane.f32.xlu0 %v5311
        %v5313 = vpop.xlane.xlu0 %5312
        %v5314 = vsel %vm5277, %v5214, -inf
        %5315 = vmax.xlane.f32.xlu0 %v5314
        %v5316 = vpop.xlane.xlu0 %5315
        %v5317 = vsel %vm5277, %v5216, -inf
        %5318 = vmax.xlane.f32.xlu0 %v5317
        %v5319 = vpop.xlane.xlu0 %5318
        %v5320 = vsel %vm5277, %v5218, -inf
        %5321 = vmax.xlane.f32.xlu0 %v5320
        %v5322 = vpop.xlane.xlu0 %5321
        %v5323 = vsel %vm5277, %v5220, -inf
        %5324 = vmax.xlane.f32.xlu0 %v5323
        %v5325 = vpop.xlane.xlu0 %5324
        %v5326 = vsel %vm5277, %v5230, -inf
        %5327 = vmax.xlane.f32.xlu0 %v5326
        %v5328 = vpop.xlane.xlu0 %5327
        %v5329 = vsel %vm5277, %v5232, -inf
        %5330 = vmax.xlane.f32.xlu0 %v5329
        %v5331 = vpop.xlane.xlu0 %5330
        %v5332 = vsel %vm5277, %v5234, -inf
        %5333 = vmax.xlane.f32.xlu0 %v5332
        %v5334 = vpop.xlane.xlu0 %5333
        %v5335 = vsel %vm5277, %v5236, -inf
        %5336 = vmax.xlane.f32.xlu0 %v5335
        %v5337 = vpop.xlane.xlu0 %5336
        %v5338 = vsel %vm5277, %v5238, -inf
        %5339 = vmax.xlane.f32.xlu0 %v5338
        %v5340 = vpop.xlane.xlu0 %5339
        %v5341 = vsel %vm5277, %v5240, -inf
        %5342 = vmax.xlane.f32.xlu0 %v5341
        %v5343 = vpop.xlane.xlu0 %5342
        %v5344 = vsel %vm5277, %v5242, -inf
        %5345 = vmax.xlane.f32.xlu0 %v5344
        %v5346 = vpop.xlane.xlu0 %5345
        %v5347 = vsel %vm5277, %v5244, -inf
        %5348 = vmax.xlane.f32.xlu0 %v5347
        %v5349 = vpop.xlane.xlu0 %5348
        %v5350 = vsel %vm5277, %v5254, -inf
        %5351 = vmax.xlane.f32.xlu0 %v5350
        %v5352 = vpop.xlane.xlu0 %5351
        %v5353 = vsel %vm5277, %v5256, -inf
        %5354 = vmax.xlane.f32.xlu0 %v5353
        %v5355 = vpop.xlane.xlu0 %5354
        %v5356 = vsel %vm5277, %v5258, -inf
        %5357 = vmax.xlane.f32.xlu0 %v5356
        %v5358 = vpop.xlane.xlu0 %5357
        %v5359 = vsel %vm5277, %v5260, -inf
        %5360 = vmax.xlane.f32.xlu0 %v5359
        %v5361 = vpop.xlane.xlu0 %5360
        %v5362 = vsel %vm5277, %v5262, -inf
        %5363 = vmax.xlane.f32.xlu0 %v5362
        %v5364 = vpop.xlane.xlu0 %5363
        %v5365 = vsel %vm5277, %v5264, -inf
        %5366 = vmax.xlane.f32.xlu0 %v5365
        %v5367 = vpop.xlane.xlu0 %5366
        %v5368 = vsel %vm5277, %v5266, -inf
        %5369 = vmax.xlane.f32.xlu0 %v5368
        %v5370 = vpop.xlane.xlu0 %5369
        %v5371 = vsel %vm5277, %v5268, -inf
        %5372 = vmax.xlane.f32.xlu0 %v5371
        %v5373 = vpop.xlane.xlu0 %5372
        %v5374 = vsub.f32 %v5189, %v5280
        %v5375 = vsub.f32 %v5190, %v5283
        %v5376 = vsub.f32 %v5191, %v5286
        %v5377 = vsub.f32 %v5192, %v5289
        %v5378 = vsub.f32 %v5193, %v5292
        %v5379 = vsub.f32 %v5194, %v5295
        %v5380 = vsub.f32 %v5195, %v5298
        %v5381 = vsub.f32 %v5196, %v5301
        %v5382 = vsub.f32 %v5206, %v5304
        %v5383 = vsub.f32 %v5208, %v5307
        %v5384 = vsub.f32 %v5210, %v5310
        %v5385 = vsub.f32 %v5212, %v5313
        %v5386 = vsub.f32 %v5214, %v5316
        %v5387 = vsub.f32 %v5216, %v5319
        %v5388 = vsub.f32 %v5218, %v5322
        %v5389 = vsub.f32 %v5220, %v5325
        %v5390 = vsub.f32 %v5230, %v5328
        %v5391 = vsub.f32 %v5232, %v5331
        %v5392 = vsub.f32 %v5234, %v5334
        %v5393 = vsub.f32 %v5236, %v5337
        %v5394 = vsub.f32 %v5238, %v5340
        %v5395 = vsub.f32 %v5240, %v5343
        %v5396 = vsub.f32 %v5242, %v5346
        %v5397 = vsub.f32 %v5244, %v5349
        %v5398 = vsub.f32 %v5254, %v5352
        %v5399 = vsub.f32 %v5256, %v5355
        %v5400 = vsub.f32 %v5258, %v5358
        %v5401 = vsub.f32 %v5260, %v5361
        %v5402 = vsub.f32 %v5262, %v5364
        %v5403 = vsub.f32 %v5264, %v5367
        %v5404 = vsub.f32 %v5266, %v5370
        %v5405 = vsub.f32 %v5268, %v5373
        %v5406 = vmul.f32 %v5374, 1.442695
        %v5407 = vpow.pop %v5406
        %v5408 = vmul.f32 %v5375, 1.442695
        %v5409 = vpow.pop %v5408
        %v5410 = vmul.f32 %v5376, 1.442695
        %v5411 = vpow.pop %v5410
        %v5412 = vmul.f32 %v5377, 1.442695
        %v5413 = vpow.pop %v5412
        %v5414 = vmul.f32 %v5378, 1.442695
        %v5415 = vpow.pop %v5414
        %v5416 = vmul.f32 %v5379, 1.442695
        %v5417 = vpow.pop %v5416
        %v5418 = vmul.f32 %v5380, 1.442695
        %v5419 = vpow.pop %v5418
        %v5420 = vmul.f32 %v5381, 1.442695
        %v5421 = vpow.pop %v5420
        %v5422 = vmul.f32 %v5382, 1.442695
        %v5423 = vpow.pop %v5422
        %v5424 = vmul.f32 %v5383, 1.442695
        %v5425 = vpow.pop %v5424
        %v5426 = vmul.f32 %v5384, 1.442695
        %v5427 = vpow.pop %v5426
        %v5428 = vmul.f32 %v5385, 1.442695
        %v5429 = vpow.pop %v5428
        %v5430 = vmul.f32 %v5386, 1.442695
        %v5431 = vpow.pop %v5430
        %v5432 = vmul.f32 %v5387, 1.442695
        %v5433 = vpow.pop %v5432
        %v5434 = vmul.f32 %v5388, 1.442695
        %v5435 = vpow.pop %v5434
        %v5436 = vmul.f32 %v5389, 1.442695
        %v5437 = vpow.pop %v5436
        %v5438 = vmul.f32 %v5390, 1.442695
        %v5439 = vpow.pop %v5438
        %v5440 = vmul.f32 %v5391, 1.442695
        %v5441 = vpow.pop %v5440
        %v5442 = vmul.f32 %v5392, 1.442695
        %v5443 = vpow.pop %v5442
        %v5444 = vmul.f32 %v5393, 1.442695
        %v5445 = vpow.pop %v5444
        %v5446 = vmul.f32 %v5394, 1.442695
        %v5447 = vpow.pop %v5446
        %v5448 = vmul.f32 %v5395, 1.442695
        %v5449 = vpow.pop %v5448
        %v5450 = vmul.f32 %v5396, 1.442695
        %v5451 = vpow.pop %v5450
        %v5452 = vmul.f32 %v5397, 1.442695
        %v5453 = vpow.pop %v5452
        %v5454 = vmul.f32 %v5398, 1.442695
        %v5455 = vpow.pop %v5454
        %v5456 = vmul.f32 %v5399, 1.442695
        %v5457 = vpow.pop %v5456
        %v5458 = vmul.f32 %v5400, 1.442695
        %v5459 = vpow.pop %v5458
        %v5460 = vmul.f32 %v5401, 1.442695
        %v5461 = vpow.pop %v5460
        %v5462 = vmul.f32 %v5402, 1.442695
        %v5463 = vpow.pop %v5462
        %v5464 = vmul.f32 %v5403, 1.442695
        %v5465 = vpow.pop %v5464
        %v5466 = vmul.f32 %v5404, 1.442695
        %v5467 = vpow.pop %v5466
        %v5468 = vmul.f32 %v5405, 1.442695
        %v5469 = vpow.pop %v5468
        %v5470 = vsel %vm5277, %v5407, 0.0
        %5471 = vadd.xlane.f32.xlu0 %v5470
        %v5472 = vpop.xlane.xlu0 %5471
        %v5473 = vsel %vm5277, %v5409, 0.0
        %5474 = vadd.xlane.f32.xlu0 %v5473
        %v5475 = vpop.xlane.xlu0 %5474
        %v5476 = vsel %vm5277, %v5411, 0.0
        %5477 = vadd.xlane.f32.xlu0 %v5476
        %v5478 = vpop.xlane.xlu0 %5477
        %v5479 = vsel %vm5277, %v5413, 0.0
        %5480 = vadd.xlane.f32.xlu0 %v5479
        %v5481 = vpop.xlane.xlu0 %5480
        %v5482 = vsel %vm5277, %v5415, 0.0
        %5483 = vadd.xlane.f32.xlu0 %v5482
        %v5484 = vpop.xlane.xlu0 %5483
        %v5485 = vsel %vm5277, %v5417, 0.0
        %5486 = vadd.xlane.f32.xlu0 %v5485
        %v5487 = vpop.xlane.xlu0 %5486
        %v5488 = vsel %vm5277, %v5419, 0.0
        %5489 = vadd.xlane.f32.xlu0 %v5488
        %v5490 = vpop.xlane.xlu0 %5489
        %v5491 = vsel %vm5277, %v5421, 0.0
        %5492 = vadd.xlane.f32.xlu0 %v5491
        %v5493 = vpop.xlane.xlu0 %5492
        %v5494 = vsel %vm5277, %v5423, 0.0
        %5495 = vadd.xlane.f32.xlu0 %v5494
        %v5496 = vpop.xlane.xlu0 %5495
        %v5497 = vsel %vm5277, %v5425, 0.0
        %5498 = vadd.xlane.f32.xlu0 %v5497
        %v5499 = vpop.xlane.xlu0 %5498
        %v5500 = vsel %vm5277, %v5427, 0.0
        %5501 = vadd.xlane.f32.xlu0 %v5500
        %v5502 = vpop.xlane.xlu0 %5501
        %v5503 = vsel %vm5277, %v5429, 0.0
        %5504 = vadd.xlane.f32.xlu0 %v5503
        %v5505 = vpop.xlane.xlu0 %5504
        %v5506 = vsel %vm5277, %v5431, 0.0
        %5507 = vadd.xlane.f32.xlu0 %v5506
        %v5508 = vpop.xlane.xlu0 %5507
        %v5509 = vsel %vm5277, %v5433, 0.0
        %5510 = vadd.xlane.f32.xlu0 %v5509
        %v5511 = vpop.xlane.xlu0 %5510
        %v5512 = vsel %vm5277, %v5435, 0.0
        %5513 = vadd.xlane.f32.xlu0 %v5512
        %v5514 = vpop.xlane.xlu0 %5513
        %v5515 = vsel %vm5277, %v5437, 0.0
        %5516 = vadd.xlane.f32.xlu0 %v5515
        %v5517 = vpop.xlane.xlu0 %5516
        %v5518 = vsel %vm5277, %v5439, 0.0
        %5519 = vadd.xlane.f32.xlu0 %v5518
        %v5520 = vpop.xlane.xlu0 %5519
        %v5521 = vsel %vm5277, %v5441, 0.0
        %5522 = vadd.xlane.f32.xlu0 %v5521
        %v5523 = vpop.xlane.xlu0 %5522
        %v5524 = vsel %vm5277, %v5443, 0.0
        %5525 = vadd.xlane.f32.xlu0 %v5524
        %v5526 = vpop.xlane.xlu0 %5525
        %v5527 = vsel %vm5277, %v5445, 0.0
        %5528 = vadd.xlane.f32.xlu0 %v5527
        %v5529 = vpop.xlane.xlu0 %5528
        %v5530 = vsel %vm5277, %v5447, 0.0
        %5531 = vadd.xlane.f32.xlu0 %v5530
        %v5532 = vpop.xlane.xlu0 %5531
        %v5533 = vsel %vm5277, %v5449, 0.0
        %5534 = vadd.xlane.f32.xlu0 %v5533
        %v5535 = vpop.xlane.xlu0 %5534
        %v5536 = vsel %vm5277, %v5451, 0.0
        %5537 = vadd.xlane.f32.xlu0 %v5536
        %v5538 = vpop.xlane.xlu0 %5537
        %v5539 = vsel %vm5277, %v5453, 0.0
        %5540 = vadd.xlane.f32.xlu0 %v5539
        %v5541 = vpop.xlane.xlu0 %5540
        %v5542 = vsel %vm5277, %v5455, 0.0
        %5543 = vadd.xlane.f32.xlu0 %v5542
        %v5544 = vpop.xlane.xlu0 %5543
        %v5545 = vsel %vm5277, %v5457, 0.0
        %5546 = vadd.xlane.f32.xlu0 %v5545
        %v5547 = vpop.xlane.xlu0 %5546
        %v5548 = vsel %vm5277, %v5459, 0.0
        %5549 = vadd.xlane.f32.xlu0 %v5548
        %v5550 = vpop.xlane.xlu0 %5549
        %v5551 = vsel %vm5277, %v5461, 0.0
        %5552 = vadd.xlane.f32.xlu0 %v5551
        %v5553 = vpop.xlane.xlu0 %5552
        %v5554 = vsel %vm5277, %v5463, 0.0
        %5555 = vadd.xlane.f32.xlu0 %v5554
        %v5556 = vpop.xlane.xlu0 %5555
        %v5557 = vsel %vm5277, %v5465, 0.0
        %5558 = vadd.xlane.f32.xlu0 %v5557
        %v5559 = vpop.xlane.xlu0 %5558
        %v5560 = vsel %vm5277, %v5467, 0.0
        %5561 = vadd.xlane.f32.xlu0 %v5560
        %v5562 = vpop.xlane.xlu0 %5561
        %v5563 = vsel %vm5277, %v5469, 0.0
        %5564 = vadd.xlane.f32.xlu0 %v5563
        %v5565 = vpop.xlane.xlu0 %5564
        %v5566 = vrcp.pop %v5472
        %v5567 = vrcp.pop %v5475
        %v5568 = vrcp.pop %v5478
        %v5569 = vrcp.pop %v5481
        %v5570 = vrcp.pop %v5484
        %v5571 = vrcp.pop %v5487
        %v5572 = vrcp.pop %v5490
        %v5573 = vrcp.pop %v5493
        %v5574 = vrcp.pop %v5496
        %v5575 = vrcp.pop %v5499
        %v5576 = vrcp.pop %v5502
        %v5577 = vrcp.pop %v5505
        %v5578 = vrcp.pop %v5508
        %v5579 = vrcp.pop %v5511
        %v5580 = vrcp.pop %v5514
        %v5581 = vrcp.pop %v5517
        %v5582 = vrcp.pop %v5520
        %v5583 = vrcp.pop %v5523
        %v5584 = vrcp.pop %v5526
        %v5585 = vrcp.pop %v5529
        %v5586 = vrcp.pop %v5532
        %v5587 = vrcp.pop %v5535
        %v5588 = vrcp.pop %v5538
        %v5589 = vrcp.pop %v5541
        %v5590 = vrcp.pop %v5544
        %v5591 = vrcp.pop %v5547
        %v5592 = vrcp.pop %v5550
        %v5593 = vrcp.pop %v5553
        %v5594 = vrcp.pop %v5556
        %v5595 = vrcp.pop %v5559
        %v5596 = vrcp.pop %v5562
        %v5597 = vrcp.pop %v5565
        %v5598 = vmul.f32 %v5407, %v5566
        %v5599 = vmul.f32 %v5409, %v5567
        %v5600 = vmul.f32 %v5411, %v5568
        %v5601 = vmul.f32 %v5413, %v5569
        %v5602 = vmul.f32 %v5415, %v5570
        %v5603 = vmul.f32 %v5417, %v5571
        %v5604 = vmul.f32 %v5419, %v5572
        %v5605 = vmul.f32 %v5421, %v5573
        %v5606 = vmul.f32 %v5423, %v5574
        %v5607 = vmul.f32 %v5425, %v5575
        %v5608 = vmul.f32 %v5427, %v5576
        %v5609 = vmul.f32 %v5429, %v5577
        %v5610 = vmul.f32 %v5431, %v5578
        %v5611 = vmul.f32 %v5433, %v5579
        %v5612 = vmul.f32 %v5435, %v5580
        %v5613 = vmul.f32 %v5437, %v5581
        %v5614 = vmul.f32 %v5439, %v5582
        %v5615 = vmul.f32 %v5441, %v5583
        %v5616 = vmul.f32 %v5443, %v5584
        %v5617 = vmul.f32 %v5445, %v5585
        %v5618 = vmul.f32 %v5447, %v5586
        %v5619 = vmul.f32 %v5449, %v5587
        %v5620 = vmul.f32 %v5451, %v5588
        %v5621 = vmul.f32 %v5453, %v5589
        %v5622 = vmul.f32 %v5455, %v5590
        %v5623 = vmul.f32 %v5457, %v5591
        %v5624 = vmul.f32 %v5459, %v5592
        %v5625 = vmul.f32 %v5461, %v5593
        %v5626 = vmul.f32 %v5463, %v5594
        %v5627 = vmul.f32 %v5465, %v5595
        %v5628 = vmul.f32 %v5467, %v5596
        %v5629 = vmul.f32 %v5469, %v5597
        %v5630 = vlaneseq
        %v5631 = vand.u32 %v5630, 127
        %v5632 = vsel %vm5277, %v5598, -inf
        %5633 = vmax.xlane.f32.xlu0 %v5632
        %v5634 = vpop.xlane.xlu0 %5633
        %v5635 = vsel %vm5277, %v5599, -inf
        %5636 = vmax.xlane.f32.xlu0 %v5635
        %v5637 = vpop.xlane.xlu0 %5636
        %v5638 = vsel %vm5277, %v5600, -inf
        %5639 = vmax.xlane.f32.xlu0 %v5638
        %v5640 = vpop.xlane.xlu0 %5639
        %v5641 = vsel %vm5277, %v5601, -inf
        %5642 = vmax.xlane.f32.xlu0 %v5641
        %v5643 = vpop.xlane.xlu0 %5642
        %v5644 = vsel %vm5277, %v5602, -inf
        %5645 = vmax.xlane.f32.xlu0 %v5644
        %v5646 = vpop.xlane.xlu0 %5645
        %v5647 = vsel %vm5277, %v5603, -inf
        %5648 = vmax.xlane.f32.xlu0 %v5647
        %v5649 = vpop.xlane.xlu0 %5648
        %v5650 = vsel %vm5277, %v5604, -inf
        %5651 = vmax.xlane.f32.xlu0 %v5650
        %v5652 = vpop.xlane.xlu0 %5651
        %v5653 = vsel %vm5277, %v5605, -inf
        %5654 = vmax.xlane.f32.xlu0 %v5653
        %v5655 = vpop.xlane.xlu0 %5654
        %v5656 = vsel %vm5277, %v5606, -inf
        %5657 = vmax.xlane.f32.xlu0 %v5656
        %v5658 = vpop.xlane.xlu0 %5657
        %v5659 = vsel %vm5277, %v5607, -inf
        %5660 = vmax.xlane.f32.xlu0 %v5659
        %v5661 = vpop.xlane.xlu0 %5660
        %v5662 = vsel %vm5277, %v5608, -inf
        %5663 = vmax.xlane.f32.xlu0 %v5662
        %v5664 = vpop.xlane.xlu0 %5663
        %v5665 = vsel %vm5277, %v5609, -inf
        %5666 = vmax.xlane.f32.xlu0 %v5665
        %v5667 = vpop.xlane.xlu0 %5666
        %v5668 = vsel %vm5277, %v5610, -inf
        %5669 = vmax.xlane.f32.xlu0 %v5668
        %v5670 = vpop.xlane.xlu0 %5669
        %v5671 = vsel %vm5277, %v5611, -inf
        %5672 = vmax.xlane.f32.xlu0 %v5671
        %v5673 = vpop.xlane.xlu0 %5672
        %v5674 = vsel %vm5277, %v5612, -inf
        %5675 = vmax.xlane.f32.xlu0 %v5674
        %v5676 = vpop.xlane.xlu0 %5675
        %v5677 = vsel %vm5277, %v5613, -inf
        %5678 = vmax.xlane.f32.xlu0 %v5677
        %v5679 = vpop.xlane.xlu0 %5678
        %v5680 = vsel %vm5277, %v5614, -inf
        %5681 = vmax.xlane.f32.xlu0 %v5680
        %v5682 = vpop.xlane.xlu0 %5681
        %v5683 = vsel %vm5277, %v5615, -inf
        %5684 = vmax.xlane.f32.xlu0 %v5683
        %v5685 = vpop.xlane.xlu0 %5684
        %v5686 = vsel %vm5277, %v5616, -inf
        %5687 = vmax.xlane.f32.xlu0 %v5686
        %v5688 = vpop.xlane.xlu0 %5687
        %v5689 = vsel %vm5277, %v5617, -inf
        %5690 = vmax.xlane.f32.xlu0 %v5689
        %v5691 = vpop.xlane.xlu0 %5690
        %v5692 = vsel %vm5277, %v5618, -inf
        %5693 = vmax.xlane.f32.xlu0 %v5692
        %v5694 = vpop.xlane.xlu0 %5693
        %v5695 = vsel %vm5277, %v5619, -inf
        %5696 = vmax.xlane.f32.xlu0 %v5695
        %v5697 = vpop.xlane.xlu0 %5696
        %v5698 = vsel %vm5277, %v5620, -inf
        %5699 = vmax.xlane.f32.xlu0 %v5698
        %v5700 = vpop.xlane.xlu0 %5699
        %v5701 = vsel %vm5277, %v5621, -inf
        %5702 = vmax.xlane.f32.xlu0 %v5701
        %v5703 = vpop.xlane.xlu0 %5702
        %v5704 = vsel %vm5277, %v5622, -inf
        %5705 = vmax.xlane.f32.xlu0 %v5704
        %v5706 = vpop.xlane.xlu0 %5705
        %v5707 = vsel %vm5277, %v5623, -inf
        %5708 = vmax.xlane.f32.xlu0 %v5707
        %v5709 = vpop.xlane.xlu0 %5708
        %v5710 = vsel %vm5277, %v5624, -inf
        %5711 = vmax.xlane.f32.xlu0 %v5710
        %v5712 = vpop.xlane.xlu0 %5711
        %v5713 = vsel %vm5277, %v5625, -inf
        %5714 = vmax.xlane.f32.xlu0 %v5713
        %v5715 = vpop.xlane.xlu0 %5714
        %v5716 = vsel %vm5277, %v5626, -inf
        %5717 = vmax.xlane.f32.xlu0 %v5716
        %v5718 = vpop.xlane.xlu0 %5717
        %v5719 = vsel %vm5277, %v5627, -inf
        %5720 = vmax.xlane.f32.xlu0 %v5719
        %v5721 = vpop.xlane.xlu0 %5720
        %v5722 = vsel %vm5277, %v5628, -inf
        %5723 = vmax.xlane.f32.xlu0 %v5722
        %v5724 = vpop.xlane.xlu0 %5723
        %v5725 = vsel %vm5277, %v5629, -inf
        %5726 = vmax.xlane.f32.xlu0 %v5725
        %v5727 = vpop.xlane.xlu0 %5726
        %vm5728 = vcmp.eq.f32.partialorder %v5598, %v5634
        %vm5729 = vcmp.eq.f32.partialorder %v5599, %v5637
        %vm5730 = vcmp.eq.f32.partialorder %v5600, %v5640
        %vm5731 = vcmp.eq.f32.partialorder %v5601, %v5643
        %vm5732 = vcmp.eq.f32.partialorder %v5602, %v5646
        %vm5733 = vcmp.eq.f32.partialorder %v5603, %v5649
        %vm5734 = vcmp.eq.f32.partialorder %v5604, %v5652
        %vm5735 = vcmp.eq.f32.partialorder %v5605, %v5655
        %vm5736 = vcmp.eq.f32.partialorder %v5606, %v5658
        %vm5737 = vcmp.eq.f32.partialorder %v5607, %v5661
        %vm5738 = vcmp.eq.f32.partialorder %v5608, %v5664
        %vm5739 = vcmp.eq.f32.partialorder %v5609, %v5667
        %vm5740 = vcmp.eq.f32.partialorder %v5610, %v5670
        %vm5741 = vcmp.eq.f32.partialorder %v5611, %v5673
        %vm5742 = vcmp.eq.f32.partialorder %v5612, %v5676
        %vm5743 = vcmp.eq.f32.partialorder %v5613, %v5679
        %vm5744 = vcmp.eq.f32.partialorder %v5614, %v5682
        %vm5745 = vcmp.eq.f32.partialorder %v5615, %v5685
        %vm5746 = vcmp.eq.f32.partialorder %v5616, %v5688
        %vm5747 = vcmp.eq.f32.partialorder %v5617, %v5691
        %vm5748 = vcmp.eq.f32.partialorder %v5618, %v5694
        %vm5749 = vcmp.eq.f32.partialorder %v5619, %v5697
        %vm5750 = vcmp.eq.f32.partialorder %v5620, %v5700
        %vm5751 = vcmp.eq.f32.partialorder %v5621, %v5703
        %vm5752 = vcmp.eq.f32.partialorder %v5622, %v5706
        %vm5753 = vcmp.eq.f32.partialorder %v5623, %v5709
        %vm5754 = vcmp.eq.f32.partialorder %v5624, %v5712
        %vm5755 = vcmp.eq.f32.partialorder %v5625, %v5715
        %vm5756 = vcmp.eq.f32.partialorder %v5626, %v5718
        %vm5757 = vcmp.eq.f32.partialorder %v5627, %v5721
        %vm5758 = vcmp.eq.f32.partialorder %v5628, %v5724
        %vm5759 = vcmp.eq.f32.partialorder %v5629, %v5727
        %v5760 = vsel %vm5728, %v5631, 17
        %v5761 = vsel %vm5729, %v5631, 17
        %v5762 = vsel %vm5730, %v5631, 17
        %v5763 = vsel %vm5731, %v5631, 17
        %v5764 = vsel %vm5732, %v5631, 17
        %v5765 = vsel %vm5733, %v5631, 17
        %v5766 = vsel %vm5734, %v5631, 17
        %v5767 = vsel %vm5735, %v5631, 17
        %v5768 = vsel %vm5736, %v5631, 17
        %v5769 = vsel %vm5737, %v5631, 17
        %v5770 = vsel %vm5738, %v5631, 17
        %v5771 = vsel %vm5739, %v5631, 17
        %v5772 = vsel %vm5740, %v5631, 17
        %v5773 = vsel %vm5741, %v5631, 17
        %v5774 = vsel %vm5742, %v5631, 17
        %v5775 = vsel %vm5743, %v5631, 17
        %v5776 = vsel %vm5744, %v5631, 17
        %v5777 = vsel %vm5745, %v5631, 17
        %v5778 = vsel %vm5746, %v5631, 17
        %v5779 = vsel %vm5747, %v5631, 17
        %v5780 = vsel %vm5748, %v5631, 17
        %v5781 = vsel %vm5749, %v5631, 17
        %v5782 = vsel %vm5750, %v5631, 17
        %v5783 = vsel %vm5751, %v5631, 17
        %v5784 = vsel %vm5752, %v5631, 17
        %v5785 = vsel %vm5753, %v5631, 17
        %v5786 = vsel %vm5754, %v5631, 17
        %v5787 = vsel %vm5755, %v5631, 17
        %v5788 = vsel %vm5756, %v5631, 17
        %v5789 = vsel %vm5757, %v5631, 17
        %v5790 = vsel %vm5758, %v5631, 17
        %v5791 = vsel %vm5759, %v5631, 17
        %v5792 = vsel %vm5277, %v5760, 2147483647
        %v5793 = vand.u32 %v5792, 65535
        %v5794 = vshra.s32 %v5792, 16
        %v5795 = vcvt.s32.f32 %v5793
        %v5796 = vcvt.s32.f32 %v5794
        %5797 = vmin.xlane.f32.xlu0 %v5796
        %v5798 = vpop.xlane.xlu0 %5797
        %vm5799 = vcmp.eq.f32.partialorder %v5796, %v5798
        %v5800 = vsel %vm5799, %v5795, inf
        %5801 = vmin.xlane.f32.xlu0 %v5800
        %v5802 = vpop.xlane.xlu0 %5801
        %v5803 = vcvt.f32.s32 %v5802
        %v5804 = vcvt.f32.s32 %v5798
        %v5805 = vshll.u32 %v5804, 16
        %v5806 = vadd.s32 %v5805, %v5803
        %v5807 = vsel %vm5277, %v5761, 2147483647
        %v5808 = vand.u32 %v5807, 65535
        %v5809 = vshra.s32 %v5807, 16
        %v5810 = vcvt.s32.f32 %v5808
        %v5811 = vcvt.s32.f32 %v5809
        %5812 = vmin.xlane.f32.xlu0 %v5811
        %v5813 = vpop.xlane.xlu0 %5812
        %vm5814 = vcmp.eq.f32.partialorder %v5811, %v5813
        %v5815 = vsel %vm5814, %v5810, inf
        %5816 = vmin.xlane.f32.xlu0 %v5815
        %v5817 = vpop.xlane.xlu0 %5816
        %v5818 = vcvt.f32.s32 %v5817
        %v5819 = vcvt.f32.s32 %v5813
        %v5820 = vshll.u32 %v5819, 16
        %v5821 = vadd.s32 %v5820, %v5818
        %v5822 = vsel %vm5277, %v5762, 2147483647
        %v5823 = vand.u32 %v5822, 65535
        %v5824 = vshra.s32 %v5822, 16
        %v5825 = vcvt.s32.f32 %v5823
        %v5826 = vcvt.s32.f32 %v5824
        %5827 = vmin.xlane.f32.xlu0 %v5826
        %v5828 = vpop.xlane.xlu0 %5827
        %vm5829 = vcmp.eq.f32.partialorder %v5826, %v5828
        %v5830 = vsel %vm5829, %v5825, inf
        %5831 = vmin.xlane.f32.xlu0 %v5830
        %v5832 = vpop.xlane.xlu0 %5831
        %v5833 = vcvt.f32.s32 %v5832
        %v5834 = vcvt.f32.s32 %v5828
        %v5835 = vshll.u32 %v5834, 16
        %v5836 = vadd.s32 %v5835, %v5833
        %v5837 = vsel %vm5277, %v5763, 2147483647
        %v5838 = vand.u32 %v5837, 65535
        %v5839 = vshra.s32 %v5837, 16
        %v5840 = vcvt.s32.f32 %v5838
        %v5841 = vcvt.s32.f32 %v5839
        %5842 = vmin.xlane.f32.xlu0 %v5841
        %v5843 = vpop.xlane.xlu0 %5842
        %vm5844 = vcmp.eq.f32.partialorder %v5841, %v5843
        %v5845 = vsel %vm5844, %v5840, inf
        %5846 = vmin.xlane.f32.xlu0 %v5845
        %v5847 = vpop.xlane.xlu0 %5846
        %v5848 = vcvt.f32.s32 %v5847
        %v5849 = vcvt.f32.s32 %v5843
        %v5850 = vshll.u32 %v5849, 16
        %v5851 = vadd.s32 %v5850, %v5848
        %v5852 = vsel %vm5277, %v5764, 2147483647
        %v5853 = vand.u32 %v5852, 65535
        %v5854 = vshra.s32 %v5852, 16
        %v5855 = vcvt.s32.f32 %v5853
        %v5856 = vcvt.s32.f32 %v5854
        %5857 = vmin.xlane.f32.xlu0 %v5856
        %v5858 = vpop.xlane.xlu0 %5857
        %vm5859 = vcmp.eq.f32.partialorder %v5856, %v5858
        %v5860 = vsel %vm5859, %v5855, inf
        %5861 = vmin.xlane.f32.xlu0 %v5860
        %v5862 = vpop.xlane.xlu0 %5861
        %v5863 = vcvt.f32.s32 %v5862
        %v5864 = vcvt.f32.s32 %v5858
        %v5865 = vshll.u32 %v5864, 16
        %v5866 = vadd.s32 %v5865, %v5863
        %v5867 = vsel %vm5277, %v5765, 2147483647
        %v5868 = vand.u32 %v5867, 65535
        %v5869 = vshra.s32 %v5867, 16
        %v5870 = vcvt.s32.f32 %v5868
        %v5871 = vcvt.s32.f32 %v5869
        %5872 = vmin.xlane.f32.xlu0 %v5871
        %v5873 = vpop.xlane.xlu0 %5872
        %vm5874 = vcmp.eq.f32.partialorder %v5871, %v5873
        %v5875 = vsel %vm5874, %v5870, inf
        %5876 = vmin.xlane.f32.xlu0 %v5875
        %v5877 = vpop.xlane.xlu0 %5876
        %v5878 = vcvt.f32.s32 %v5877
        %v5879 = vcvt.f32.s32 %v5873
        %v5880 = vshll.u32 %v5879, 16
        %v5881 = vadd.s32 %v5880, %v5878
        %v5882 = vsel %vm5277, %v5766, 2147483647
        %v5883 = vand.u32 %v5882, 65535
        %v5884 = vshra.s32 %v5882, 16
        %v5885 = vcvt.s32.f32 %v5883
        %v5886 = vcvt.s32.f32 %v5884
        %5887 = vmin.xlane.f32.xlu0 %v5886
        %v5888 = vpop.xlane.xlu0 %5887
        %vm5889 = vcmp.eq.f32.partialorder %v5886, %v5888
        %v5890 = vsel %vm5889, %v5885, inf
        %5891 = vmin.xlane.f32.xlu0 %v5890
        %v5892 = vpop.xlane.xlu0 %5891
        %v5893 = vcvt.f32.s32 %v5892
        %v5894 = vcvt.f32.s32 %v5888
        %v5895 = vshll.u32 %v5894, 16
        %v5896 = vadd.s32 %v5895, %v5893
        %v5897 = vsel %vm5277, %v5767, 2147483647
        %v5898 = vand.u32 %v5897, 65535
        %v5899 = vshra.s32 %v5897, 16
        %v5900 = vcvt.s32.f32 %v5898
        %v5901 = vcvt.s32.f32 %v5899
        %5902 = vmin.xlane.f32.xlu0 %v5901
        %v5903 = vpop.xlane.xlu0 %5902
        %vm5904 = vcmp.eq.f32.partialorder %v5901, %v5903
        %v5905 = vsel %vm5904, %v5900, inf
        %5906 = vmin.xlane.f32.xlu0 %v5905
        %v5907 = vpop.xlane.xlu0 %5906
        %v5908 = vcvt.f32.s32 %v5907
        %v5909 = vcvt.f32.s32 %v5903
        %v5910 = vshll.u32 %v5909, 16
        %v5911 = vadd.s32 %v5910, %v5908
        %v5912 = vsel %vm5277, %v5768, 2147483647
        %v5913 = vand.u32 %v5912, 65535
        %v5914 = vshra.s32 %v5912, 16
        %v5915 = vcvt.s32.f32 %v5913
        %v5916 = vcvt.s32.f32 %v5914
        %5917 = vmin.xlane.f32.xlu0 %v5916
        %v5918 = vpop.xlane.xlu0 %5917
        %vm5919 = vcmp.eq.f32.partialorder %v5916, %v5918
        %v5920 = vsel %vm5919, %v5915, inf
        %5921 = vmin.xlane.f32.xlu0 %v5920
        %v5922 = vpop.xlane.xlu0 %5921
        %v5923 = vcvt.f32.s32 %v5922
        %v5924 = vcvt.f32.s32 %v5918
        %v5925 = vshll.u32 %v5924, 16
        %v5926 = vadd.s32 %v5925, %v5923
        %v5927 = vsel %vm5277, %v5769, 2147483647
        %v5928 = vand.u32 %v5927, 65535
        %v5929 = vshra.s32 %v5927, 16
        %v5930 = vcvt.s32.f32 %v5928
        %v5931 = vcvt.s32.f32 %v5929
        %5932 = vmin.xlane.f32.xlu0 %v5931
        %v5933 = vpop.xlane.xlu0 %5932
        %vm5934 = vcmp.eq.f32.partialorder %v5931, %v5933
        %v5935 = vsel %vm5934, %v5930, inf
        %5936 = vmin.xlane.f32.xlu0 %v5935
        %v5937 = vpop.xlane.xlu0 %5936
        %v5938 = vcvt.f32.s32 %v5937
        %v5939 = vcvt.f32.s32 %v5933
        %v5940 = vshll.u32 %v5939, 16
        %v5941 = vadd.s32 %v5940, %v5938
        %v5942 = vsel %vm5277, %v5770, 2147483647
        %v5943 = vand.u32 %v5942, 65535
        %v5944 = vshra.s32 %v5942, 16
        %v5945 = vcvt.s32.f32 %v5943
        %v5946 = vcvt.s32.f32 %v5944
        %5947 = vmin.xlane.f32.xlu0 %v5946
        %v5948 = vpop.xlane.xlu0 %5947
        %vm5949 = vcmp.eq.f32.partialorder %v5946, %v5948
        %v5950 = vsel %vm5949, %v5945, inf
        %5951 = vmin.xlane.f32.xlu0 %v5950
        %v5952 = vpop.xlane.xlu0 %5951
        %v5953 = vcvt.f32.s32 %v5952
        %v5954 = vcvt.f32.s32 %v5948
        %v5955 = vshll.u32 %v5954, 16
        %v5956 = vadd.s32 %v5955, %v5953
        %v5957 = vsel %vm5277, %v5771, 2147483647
        %v5958 = vand.u32 %v5957, 65535
        %v5959 = vshra.s32 %v5957, 16
        %v5960 = vcvt.s32.f32 %v5958
        %v5961 = vcvt.s32.f32 %v5959
        %5962 = vmin.xlane.f32.xlu0 %v5961
        %v5963 = vpop.xlane.xlu0 %5962
        %vm5964 = vcmp.eq.f32.partialorder %v5961, %v5963
        %v5965 = vsel %vm5964, %v5960, inf
        %5966 = vmin.xlane.f32.xlu0 %v5965
        %v5967 = vpop.xlane.xlu0 %5966
        %v5968 = vcvt.f32.s32 %v5967
        %v5969 = vcvt.f32.s32 %v5963
        %v5970 = vshll.u32 %v5969, 16
        %v5971 = vadd.s32 %v5970, %v5968
        %v5972 = vsel %vm5277, %v5772, 2147483647
        %v5973 = vand.u32 %v5972, 65535
        %v5974 = vshra.s32 %v5972, 16
        %v5975 = vcvt.s32.f32 %v5973
        %v5976 = vcvt.s32.f32 %v5974
        %5977 = vmin.xlane.f32.xlu0 %v5976
        %v5978 = vpop.xlane.xlu0 %5977
        %vm5979 = vcmp.eq.f32.partialorder %v5976, %v5978
        %v5980 = vsel %vm5979, %v5975, inf
        %5981 = vmin.xlane.f32.xlu0 %v5980
        %v5982 = vpop.xlane.xlu0 %5981
        %v5983 = vcvt.f32.s32 %v5982
        %v5984 = vcvt.f32.s32 %v5978
        %v5985 = vshll.u32 %v5984, 16
        %v5986 = vadd.s32 %v5985, %v5983
        %v5987 = vsel %vm5277, %v5773, 2147483647
        %v5988 = vand.u32 %v5987, 65535
        %v5989 = vshra.s32 %v5987, 16
        %v5990 = vcvt.s32.f32 %v5988
        %v5991 = vcvt.s32.f32 %v5989
        %5992 = vmin.xlane.f32.xlu0 %v5991
        %v5993 = vpop.xlane.xlu0 %5992
        %vm5994 = vcmp.eq.f32.partialorder %v5991, %v5993
        %v5995 = vsel %vm5994, %v5990, inf
        %5996 = vmin.xlane.f32.xlu0 %v5995
        %v5997 = vpop.xlane.xlu0 %5996
        %v5998 = vcvt.f32.s32 %v5997
        %v5999 = vcvt.f32.s32 %v5993
        %v6000 = vshll.u32 %v5999, 16
        %v6001 = vadd.s32 %v6000, %v5998
        %v6002 = vsel %vm5277, %v5774, 2147483647
        %v6003 = vand.u32 %v6002, 65535
        %v6004 = vshra.s32 %v6002, 16
        %v6005 = vcvt.s32.f32 %v6003
        %v6006 = vcvt.s32.f32 %v6004
        %6007 = vmin.xlane.f32.xlu0 %v6006
        %v6008 = vpop.xlane.xlu0 %6007
        %vm6009 = vcmp.eq.f32.partialorder %v6006, %v6008
        %v6010 = vsel %vm6009, %v6005, inf
        %6011 = vmin.xlane.f32.xlu0 %v6010
        %v6012 = vpop.xlane.xlu0 %6011
        %v6013 = vcvt.f32.s32 %v6012
        %v6014 = vcvt.f32.s32 %v6008
        %v6015 = vshll.u32 %v6014, 16
        %v6016 = vadd.s32 %v6015, %v6013
        %v6017 = vsel %vm5277, %v5775, 2147483647
        %v6018 = vand.u32 %v6017, 65535
        %v6019 = vshra.s32 %v6017, 16
        %v6020 = vcvt.s32.f32 %v6018
        %v6021 = vcvt.s32.f32 %v6019
        %6022 = vmin.xlane.f32.xlu0 %v6021
        %v6023 = vpop.xlane.xlu0 %6022
        %vm6024 = vcmp.eq.f32.partialorder %v6021, %v6023
        %v6025 = vsel %vm6024, %v6020, inf
        %6026 = vmin.xlane.f32.xlu0 %v6025
        %v6027 = vpop.xlane.xlu0 %6026
        %v6028 = vcvt.f32.s32 %v6027
        %v6029 = vcvt.f32.s32 %v6023
        %v6030 = vshll.u32 %v6029, 16
        %v6031 = vadd.s32 %v6030, %v6028
        %v6032 = vsel %vm5277, %v5776, 2147483647
        %v6033 = vand.u32 %v6032, 65535
        %v6034 = vshra.s32 %v6032, 16
        %v6035 = vcvt.s32.f32 %v6033
        %v6036 = vcvt.s32.f32 %v6034
        %6037 = vmin.xlane.f32.xlu0 %v6036
        %v6038 = vpop.xlane.xlu0 %6037
        %vm6039 = vcmp.eq.f32.partialorder %v6036, %v6038
        %v6040 = vsel %vm6039, %v6035, inf
        %6041 = vmin.xlane.f32.xlu0 %v6040
        %v6042 = vpop.xlane.xlu0 %6041
        %v6043 = vcvt.f32.s32 %v6042
        %v6044 = vcvt.f32.s32 %v6038
        %v6045 = vshll.u32 %v6044, 16
        %v6046 = vadd.s32 %v6045, %v6043
        %v6047 = vsel %vm5277, %v5777, 2147483647
        %v6048 = vand.u32 %v6047, 65535
        %v6049 = vshra.s32 %v6047, 16
        %v6050 = vcvt.s32.f32 %v6048
        %v6051 = vcvt.s32.f32 %v6049
        %6052 = vmin.xlane.f32.xlu0 %v6051
        %v6053 = vpop.xlane.xlu0 %6052
        %vm6054 = vcmp.eq.f32.partialorder %v6051, %v6053
        %v6055 = vsel %vm6054, %v6050, inf
        %6056 = vmin.xlane.f32.xlu0 %v6055
        %v6057 = vpop.xlane.xlu0 %6056
        %v6058 = vcvt.f32.s32 %v6057
        %v6059 = vcvt.f32.s32 %v6053
        %v6060 = vshll.u32 %v6059, 16
        %v6061 = vadd.s32 %v6060, %v6058
        %v6062 = vsel %vm5277, %v5778, 2147483647
        %v6063 = vand.u32 %v6062, 65535
        %v6064 = vshra.s32 %v6062, 16
        %v6065 = vcvt.s32.f32 %v6063
        %v6066 = vcvt.s32.f32 %v6064
        %6067 = vmin.xlane.f32.xlu0 %v6066
        %v6068 = vpop.xlane.xlu0 %6067
        %vm6069 = vcmp.eq.f32.partialorder %v6066, %v6068
        %v6070 = vsel %vm6069, %v6065, inf
        %6071 = vmin.xlane.f32.xlu0 %v6070
        %v6072 = vpop.xlane.xlu0 %6071
        %v6073 = vcvt.f32.s32 %v6072
        %v6074 = vcvt.f32.s32 %v6068
        %v6075 = vshll.u32 %v6074, 16
        %v6076 = vadd.s32 %v6075, %v6073
        %v6077 = vsel %vm5277, %v5779, 2147483647
        %v6078 = vand.u32 %v6077, 65535
        %v6079 = vshra.s32 %v6077, 16
        %v6080 = vcvt.s32.f32 %v6078
        %v6081 = vcvt.s32.f32 %v6079
        %6082 = vmin.xlane.f32.xlu0 %v6081
        %v6083 = vpop.xlane.xlu0 %6082
        %vm6084 = vcmp.eq.f32.partialorder %v6081, %v6083
        %v6085 = vsel %vm6084, %v6080, inf
        %6086 = vmin.xlane.f32.xlu0 %v6085
        %v6087 = vpop.xlane.xlu0 %6086
        %v6088 = vcvt.f32.s32 %v6087
        %v6089 = vcvt.f32.s32 %v6083
        %v6090 = vshll.u32 %v6089, 16
        %v6091 = vadd.s32 %v6090, %v6088
        %v6092 = vsel %vm5277, %v5780, 2147483647
        %v6093 = vand.u32 %v6092, 65535
        %v6094 = vshra.s32 %v6092, 16
        %v6095 = vcvt.s32.f32 %v6093
        %v6096 = vcvt.s32.f32 %v6094
        %6097 = vmin.xlane.f32.xlu0 %v6096
        %v6098 = vpop.xlane.xlu0 %6097
        %vm6099 = vcmp.eq.f32.partialorder %v6096, %v6098
        %v6100 = vsel %vm6099, %v6095, inf
        %6101 = vmin.xlane.f32.xlu0 %v6100
        %v6102 = vpop.xlane.xlu0 %6101
        %v6103 = vcvt.f32.s32 %v6102
        %v6104 = vcvt.f32.s32 %v6098
        %v6105 = vshll.u32 %v6104, 16
        %v6106 = vadd.s32 %v6105, %v6103
        %v6107 = vsel %vm5277, %v5781, 2147483647
        %v6108 = vand.u32 %v6107, 65535
        %v6109 = vshra.s32 %v6107, 16
        %v6110 = vcvt.s32.f32 %v6108
        %v6111 = vcvt.s32.f32 %v6109
        %6112 = vmin.xlane.f32.xlu0 %v6111
        %v6113 = vpop.xlane.xlu0 %6112
        %vm6114 = vcmp.eq.f32.partialorder %v6111, %v6113
        %v6115 = vsel %vm6114, %v6110, inf
        %6116 = vmin.xlane.f32.xlu0 %v6115
        %v6117 = vpop.xlane.xlu0 %6116
        %v6118 = vcvt.f32.s32 %v6117
        %v6119 = vcvt.f32.s32 %v6113
        %v6120 = vshll.u32 %v6119, 16
        %v6121 = vadd.s32 %v6120, %v6118
        %v6122 = vsel %vm5277, %v5782, 2147483647
        %v6123 = vand.u32 %v6122, 65535
        %v6124 = vshra.s32 %v6122, 16
        %v6125 = vcvt.s32.f32 %v6123
        %v6126 = vcvt.s32.f32 %v6124
        %6127 = vmin.xlane.f32.xlu0 %v6126
        %v6128 = vpop.xlane.xlu0 %6127
        %vm6129 = vcmp.eq.f32.partialorder %v6126, %v6128
        %v6130 = vsel %vm6129, %v6125, inf
        %6131 = vmin.xlane.f32.xlu0 %v6130
        %v6132 = vpop.xlane.xlu0 %6131
        %v6133 = vcvt.f32.s32 %v6132
        %v6134 = vcvt.f32.s32 %v6128
        %v6135 = vshll.u32 %v6134, 16
        %v6136 = vadd.s32 %v6135, %v6133
        %v6137 = vsel %vm5277, %v5783, 2147483647
        %v6138 = vand.u32 %v6137, 65535
        %v6139 = vshra.s32 %v6137, 16
        %v6140 = vcvt.s32.f32 %v6138
        %v6141 = vcvt.s32.f32 %v6139
        %6142 = vmin.xlane.f32.xlu0 %v6141
        %v6143 = vpop.xlane.xlu0 %6142
        %vm6144 = vcmp.eq.f32.partialorder %v6141, %v6143
        %v6145 = vsel %vm6144, %v6140, inf
        %6146 = vmin.xlane.f32.xlu0 %v6145
        %v6147 = vpop.xlane.xlu0 %6146
        %v6148 = vcvt.f32.s32 %v6147
        %v6149 = vcvt.f32.s32 %v6143
        %v6150 = vshll.u32 %v6149, 16
        %v6151 = vadd.s32 %v6150, %v6148
        %v6152 = vsel %vm5277, %v5784, 2147483647
        %v6153 = vand.u32 %v6152, 65535
        %v6154 = vshra.s32 %v6152, 16
        %v6155 = vcvt.s32.f32 %v6153
        %v6156 = vcvt.s32.f32 %v6154
        %6157 = vmin.xlane.f32.xlu0 %v6156
        %v6158 = vpop.xlane.xlu0 %6157
        %vm6159 = vcmp.eq.f32.partialorder %v6156, %v6158
        %v6160 = vsel %vm6159, %v6155, inf
        %6161 = vmin.xlane.f32.xlu0 %v6160
        %v6162 = vpop.xlane.xlu0 %6161
        %v6163 = vcvt.f32.s32 %v6162
        %v6164 = vcvt.f32.s32 %v6158
        %v6165 = vshll.u32 %v6164, 16
        %v6166 = vadd.s32 %v6165, %v6163
        %v6167 = vsel %vm5277, %v5785, 2147483647
        %v6168 = vand.u32 %v6167, 65535
        %v6169 = vshra.s32 %v6167, 16
        %v6170 = vcvt.s32.f32 %v6168
        %v6171 = vcvt.s32.f32 %v6169
        %6172 = vmin.xlane.f32.xlu0 %v6171
        %v6173 = vpop.xlane.xlu0 %6172
        %vm6174 = vcmp.eq.f32.partialorder %v6171, %v6173
        %v6175 = vsel %vm6174, %v6170, inf
        %6176 = vmin.xlane.f32.xlu0 %v6175
        %v6177 = vpop.xlane.xlu0 %6176
        %v6178 = vcvt.f32.s32 %v6177
        %v6179 = vcvt.f32.s32 %v6173
        %v6180 = vshll.u32 %v6179, 16
        %v6181 = vadd.s32 %v6180, %v6178
        %v6182 = vsel %vm5277, %v5786, 2147483647
        %v6183 = vand.u32 %v6182, 65535
        %v6184 = vshra.s32 %v6182, 16
        %v6185 = vcvt.s32.f32 %v6183
        %v6186 = vcvt.s32.f32 %v6184
        %6187 = vmin.xlane.f32.xlu0 %v6186
        %v6188 = vpop.xlane.xlu0 %6187
        %vm6189 = vcmp.eq.f32.partialorder %v6186, %v6188
        %v6190 = vsel %vm6189, %v6185, inf
        %6191 = vmin.xlane.f32.xlu0 %v6190
        %v6192 = vpop.xlane.xlu0 %6191
        %v6193 = vcvt.f32.s32 %v6192
        %v6194 = vcvt.f32.s32 %v6188
        %v6195 = vshll.u32 %v6194, 16
        %v6196 = vadd.s32 %v6195, %v6193
        %v6197 = vsel %vm5277, %v5787, 2147483647
        %v6198 = vand.u32 %v6197, 65535
        %v6199 = vshra.s32 %v6197, 16
        %v6200 = vcvt.s32.f32 %v6198
        %v6201 = vcvt.s32.f32 %v6199
        %6202 = vmin.xlane.f32.xlu0 %v6201
        %v6203 = vpop.xlane.xlu0 %6202
        %vm6204 = vcmp.eq.f32.partialorder %v6201, %v6203
        %v6205 = vsel %vm6204, %v6200, inf
        %6206 = vmin.xlane.f32.xlu0 %v6205
        %v6207 = vpop.xlane.xlu0 %6206
        %v6208 = vcvt.f32.s32 %v6207
        %v6209 = vcvt.f32.s32 %v6203
        %v6210 = vshll.u32 %v6209, 16
        %v6211 = vadd.s32 %v6210, %v6208
        %v6212 = vsel %vm5277, %v5788, 2147483647
        %v6213 = vand.u32 %v6212, 65535
        %v6214 = vshra.s32 %v6212, 16
        %v6215 = vcvt.s32.f32 %v6213
        %v6216 = vcvt.s32.f32 %v6214
        %6217 = vmin.xlane.f32.xlu0 %v6216
        %v6218 = vpop.xlane.xlu0 %6217
        %vm6219 = vcmp.eq.f32.partialorder %v6216, %v6218
        %v6220 = vsel %vm6219, %v6215, inf
        %6221 = vmin.xlane.f32.xlu0 %v6220
        %v6222 = vpop.xlane.xlu0 %6221
        %v6223 = vcvt.f32.s32 %v6222
        %v6224 = vcvt.f32.s32 %v6218
        %v6225 = vshll.u32 %v6224, 16
        %v6226 = vadd.s32 %v6225, %v6223
        %v6227 = vsel %vm5277, %v5789, 2147483647
        %v6228 = vand.u32 %v6227, 65535
        %v6229 = vshra.s32 %v6227, 16
        %v6230 = vcvt.s32.f32 %v6228
        %v6231 = vcvt.s32.f32 %v6229
        %6232 = vmin.xlane.f32.xlu0 %v6231
        %v6233 = vpop.xlane.xlu0 %6232
        %vm6234 = vcmp.eq.f32.partialorder %v6231, %v6233
        %v6235 = vsel %vm6234, %v6230, inf
        %6236 = vmin.xlane.f32.xlu0 %v6235
        %v6237 = vpop.xlane.xlu0 %6236
        %v6238 = vcvt.f32.s32 %v6237
        %v6239 = vcvt.f32.s32 %v6233
        %v6240 = vshll.u32 %v6239, 16
        %v6241 = vadd.s32 %v6240, %v6238
        %v6242 = vsel %vm5277, %v5790, 2147483647
        %v6243 = vand.u32 %v6242, 65535
        %v6244 = vshra.s32 %v6242, 16
        %v6245 = vcvt.s32.f32 %v6243
        %v6246 = vcvt.s32.f32 %v6244
        %6247 = vmin.xlane.f32.xlu0 %v6246
        %v6248 = vpop.xlane.xlu0 %6247
        %vm6249 = vcmp.eq.f32.partialorder %v6246, %v6248
        %v6250 = vsel %vm6249, %v6245, inf
        %6251 = vmin.xlane.f32.xlu0 %v6250
        %v6252 = vpop.xlane.xlu0 %6251
        %v6253 = vcvt.f32.s32 %v6252
        %v6254 = vcvt.f32.s32 %v6248
        %v6255 = vshll.u32 %v6254, 16
        %v6256 = vadd.s32 %v6255, %v6253
        %v6257 = vsel %vm5277, %v5791, 2147483647
        %v6258 = vand.u32 %v6257, 65535
        %v6259 = vshra.s32 %v6257, 16
        %v6260 = vcvt.s32.f32 %v6258
        %v6261 = vcvt.s32.f32 %v6259
        %6262 = vmin.xlane.f32.xlu0 %v6261
        %v6263 = vpop.xlane.xlu0 %6262
        %vm6264 = vcmp.eq.f32.partialorder %v6261, %v6263
        %v6265 = vsel %vm6264, %v6260, inf
        %6266 = vmin.xlane.f32.xlu0 %v6265
        %v6267 = vpop.xlane.xlu0 %6266
        %v6268 = vcvt.f32.s32 %v6267
        %v6269 = vcvt.f32.s32 %v6263
        %v6270 = vshll.u32 %v6269, 16
        %v6271 = vadd.s32 %v6270, %v6268
        %vm6272 = vcmp.eq.s32.totalorder %v5631, %v5806
        %vm6273 = vcmp.eq.s32.totalorder %v5631, %v5821
        %vm6274 = vcmp.eq.s32.totalorder %v5631, %v5836
        %vm6275 = vcmp.eq.s32.totalorder %v5631, %v5851
        %vm6276 = vcmp.eq.s32.totalorder %v5631, %v5866
        %vm6277 = vcmp.eq.s32.totalorder %v5631, %v5881
        %vm6278 = vcmp.eq.s32.totalorder %v5631, %v5896
        %vm6279 = vcmp.eq.s32.totalorder %v5631, %v5911
        %vm6280 = vcmp.eq.s32.totalorder %v5631, %v5926
        %vm6281 = vcmp.eq.s32.totalorder %v5631, %v5941
        %vm6282 = vcmp.eq.s32.totalorder %v5631, %v5956
        %vm6283 = vcmp.eq.s32.totalorder %v5631, %v5971
        %vm6284 = vcmp.eq.s32.totalorder %v5631, %v5986
        %vm6285 = vcmp.eq.s32.totalorder %v5631, %v6001
        %vm6286 = vcmp.eq.s32.totalorder %v5631, %v6016
        %vm6287 = vcmp.eq.s32.totalorder %v5631, %v6031
        %vm6288 = vcmp.eq.s32.totalorder %v5631, %v6046
        %vm6289 = vcmp.eq.s32.totalorder %v5631, %v6061
        %vm6290 = vcmp.eq.s32.totalorder %v5631, %v6076
        %vm6291 = vcmp.eq.s32.totalorder %v5631, %v6091
        %vm6292 = vcmp.eq.s32.totalorder %v5631, %v6106
        %vm6293 = vcmp.eq.s32.totalorder %v5631, %v6121
        %vm6294 = vcmp.eq.s32.totalorder %v5631, %v6136
        %vm6295 = vcmp.eq.s32.totalorder %v5631, %v6151
        %vm6296 = vcmp.eq.s32.totalorder %v5631, %v6166
        %vm6297 = vcmp.eq.s32.totalorder %v5631, %v6181
        %vm6298 = vcmp.eq.s32.totalorder %v5631, %v6196
        %vm6299 = vcmp.eq.s32.totalorder %v5631, %v6211
        %vm6300 = vcmp.eq.s32.totalorder %v5631, %v6226
        %vm6301 = vcmp.eq.s32.totalorder %v5631, %v6241
        %vm6302 = vcmp.eq.s32.totalorder %v5631, %v6256
        %vm6303 = vcmp.eq.s32.totalorder %v5631, %v6271
        %v6304 = vsel %vm6272, -1.0, %v5598
        %v6305 = vsel %vm6273, -1.0, %v5599
        %v6306 = vsel %vm6274, -1.0, %v5600
        %v6307 = vsel %vm6275, -1.0, %v5601
        %v6308 = vsel %vm6276, -1.0, %v5602
        %v6309 = vsel %vm6277, -1.0, %v5603
        %v6310 = vsel %vm6278, -1.0, %v5604
        %v6311 = vsel %vm6279, -1.0, %v5605
        %v6312 = vsel %vm6280, -1.0, %v5606
        %v6313 = vsel %vm6281, -1.0, %v5607
        %v6314 = vsel %vm6282, -1.0, %v5608
        %v6315 = vsel %vm6283, -1.0, %v5609
        %v6316 = vsel %vm6284, -1.0, %v5610
        %v6317 = vsel %vm6285, -1.0, %v5611
        %v6318 = vsel %vm6286, -1.0, %v5612
        %v6319 = vsel %vm6287, -1.0, %v5613
        %v6320 = vsel %vm6288, -1.0, %v5614
        %v6321 = vsel %vm6289, -1.0, %v5615
        %v6322 = vsel %vm6290, -1.0, %v5616
        %v6323 = vsel %vm6291, -1.0, %v5617
        %v6324 = vsel %vm6292, -1.0, %v5618
        %v6325 = vsel %vm6293, -1.0, %v5619
        %v6326 = vsel %vm6294, -1.0, %v5620
        %v6327 = vsel %vm6295, -1.0, %v5621
        %v6328 = vsel %vm6296, -1.0, %v5622
        %v6329 = vsel %vm6297, -1.0, %v5623
        %v6330 = vsel %vm6298, -1.0, %v5624
        %v6331 = vsel %vm6299, -1.0, %v5625
        %v6332 = vsel %vm6300, -1.0, %v5626
        %v6333 = vsel %vm6301, -1.0, %v5627
        %v6334 = vsel %vm6302, -1.0, %v5628
        %v6335 = vsel %vm6303, -1.0, %v5629
        %v6336 = vsel %vm5277, %v6304, -inf
        %6337 = vmax.xlane.f32.xlu0 %v6336
        %v6338 = vpop.xlane.xlu0 %6337
        %v6339 = vsel %vm5277, %v6305, -inf
        %6340 = vmax.xlane.f32.xlu0 %v6339
        %v6341 = vpop.xlane.xlu0 %6340
        %v6342 = vsel %vm5277, %v6306, -inf
        %6343 = vmax.xlane.f32.xlu0 %v6342
        %v6344 = vpop.xlane.xlu0 %6343
        %v6345 = vsel %vm5277, %v6307, -inf
        %6346 = vmax.xlane.f32.xlu0 %v6345
        %v6347 = vpop.xlane.xlu0 %6346
        %v6348 = vsel %vm5277, %v6308, -inf
        %6349 = vmax.xlane.f32.xlu0 %v6348
        %v6350 = vpop.xlane.xlu0 %6349
        %v6351 = vsel %vm5277, %v6309, -inf
        %6352 = vmax.xlane.f32.xlu0 %v6351
        %v6353 = vpop.xlane.xlu0 %6352
        %v6354 = vsel %vm5277, %v6310, -inf
        %6355 = vmax.xlane.f32.xlu0 %v6354
        %v6356 = vpop.xlane.xlu0 %6355
        %v6357 = vsel %vm5277, %v6311, -inf
        %6358 = vmax.xlane.f32.xlu0 %v6357
        %v6359 = vpop.xlane.xlu0 %6358
        %v6360 = vsel %vm5277, %v6312, -inf
        %6361 = vmax.xlane.f32.xlu0 %v6360
        %v6362 = vpop.xlane.xlu0 %6361
        %v6363 = vsel %vm5277, %v6313, -inf
        %6364 = vmax.xlane.f32.xlu0 %v6363
        %v6365 = vpop.xlane.xlu0 %6364
        %v6366 = vsel %vm5277, %v6314, -inf
        %6367 = vmax.xlane.f32.xlu0 %v6366
        %v6368 = vpop.xlane.xlu0 %6367
        %v6369 = vsel %vm5277, %v6315, -inf
        %6370 = vmax.xlane.f32.xlu0 %v6369
        %v6371 = vpop.xlane.xlu0 %6370
        %v6372 = vsel %vm5277, %v6316, -inf
        %6373 = vmax.xlane.f32.xlu0 %v6372
        %v6374 = vpop.xlane.xlu0 %6373
        %v6375 = vsel %vm5277, %v6317, -inf
        %6376 = vmax.xlane.f32.xlu0 %v6375
        %v6377 = vpop.xlane.xlu0 %6376
        %v6378 = vsel %vm5277, %v6318, -inf
        %6379 = vmax.xlane.f32.xlu0 %v6378
        %v6380 = vpop.xlane.xlu0 %6379
        %v6381 = vsel %vm5277, %v6319, -inf
        %6382 = vmax.xlane.f32.xlu0 %v6381
        %v6383 = vpop.xlane.xlu0 %6382
        %v6384 = vsel %vm5277, %v6320, -inf
        %6385 = vmax.xlane.f32.xlu0 %v6384
        %v6386 = vpop.xlane.xlu0 %6385
        %v6387 = vsel %vm5277, %v6321, -inf
        %6388 = vmax.xlane.f32.xlu0 %v6387
        %v6389 = vpop.xlane.xlu0 %6388
        %v6390 = vsel %vm5277, %v6322, -inf
        %6391 = vmax.xlane.f32.xlu0 %v6390
        %v6392 = vpop.xlane.xlu0 %6391
        %v6393 = vsel %vm5277, %v6323, -inf
        %6394 = vmax.xlane.f32.xlu0 %v6393
        %v6395 = vpop.xlane.xlu0 %6394
        %v6396 = vsel %vm5277, %v6324, -inf
        %6397 = vmax.xlane.f32.xlu0 %v6396
        %v6398 = vpop.xlane.xlu0 %6397
        %v6399 = vsel %vm5277, %v6325, -inf
        %6400 = vmax.xlane.f32.xlu0 %v6399
        %v6401 = vpop.xlane.xlu0 %6400
        %v6402 = vsel %vm5277, %v6326, -inf
        %6403 = vmax.xlane.f32.xlu0 %v6402
        %v6404 = vpop.xlane.xlu0 %6403
        %v6405 = vsel %vm5277, %v6327, -inf
        %6406 = vmax.xlane.f32.xlu0 %v6405
        %v6407 = vpop.xlane.xlu0 %6406
        %v6408 = vsel %vm5277, %v6328, -inf
        %6409 = vmax.xlane.f32.xlu0 %v6408
        %v6410 = vpop.xlane.xlu0 %6409
        %v6411 = vsel %vm5277, %v6329, -inf
        %6412 = vmax.xlane.f32.xlu0 %v6411
        %v6413 = vpop.xlane.xlu0 %6412
        %v6414 = vsel %vm5277, %v6330, -inf
        %6415 = vmax.xlane.f32.xlu0 %v6414
        %v6416 = vpop.xlane.xlu0 %6415
        %v6417 = vsel %vm5277, %v6331, -inf
        %6418 = vmax.xlane.f32.xlu0 %v6417
        %v6419 = vpop.xlane.xlu0 %6418
        %v6420 = vsel %vm5277, %v6332, -inf
        %6421 = vmax.xlane.f32.xlu0 %v6420
        %v6422 = vpop.xlane.xlu0 %6421
        %v6423 = vsel %vm5277, %v6333, -inf
        %6424 = vmax.xlane.f32.xlu0 %v6423
        %v6425 = vpop.xlane.xlu0 %6424
        %v6426 = vsel %vm5277, %v6334, -inf
        %6427 = vmax.xlane.f32.xlu0 %v6426
        %v6428 = vpop.xlane.xlu0 %6427
        %v6429 = vsel %vm5277, %v6335, -inf
        %6430 = vmax.xlane.f32.xlu0 %v6429
        %v6431 = vpop.xlane.xlu0 %6430
        %vm6432 = vcmp.eq.f32.partialorder %v6304, %v6338
        %vm6433 = vcmp.eq.f32.partialorder %v6305, %v6341
        %vm6434 = vcmp.eq.f32.partialorder %v6306, %v6344
        %vm6435 = vcmp.eq.f32.partialorder %v6307, %v6347
        %vm6436 = vcmp.eq.f32.partialorder %v6308, %v6350
        %vm6437 = vcmp.eq.f32.partialorder %v6309, %v6353
        %vm6438 = vcmp.eq.f32.partialorder %v6310, %v6356
        %vm6439 = vcmp.eq.f32.partialorder %v6311, %v6359
        %vm6440 = vcmp.eq.f32.partialorder %v6312, %v6362
        %vm6441 = vcmp.eq.f32.partialorder %v6313, %v6365
        %vm6442 = vcmp.eq.f32.partialorder %v6314, %v6368
        %vm6443 = vcmp.eq.f32.partialorder %v6315, %v6371
        %vm6444 = vcmp.eq.f32.partialorder %v6316, %v6374
        %vm6445 = vcmp.eq.f32.partialorder %v6317, %v6377
        %vm6446 = vcmp.eq.f32.partialorder %v6318, %v6380
        %vm6447 = vcmp.eq.f32.partialorder %v6319, %v6383
        %vm6448 = vcmp.eq.f32.partialorder %v6320, %v6386
        %vm6449 = vcmp.eq.f32.partialorder %v6321, %v6389
        %vm6450 = vcmp.eq.f32.partialorder %v6322, %v6392
        %vm6451 = vcmp.eq.f32.partialorder %v6323, %v6395
        %vm6452 = vcmp.eq.f32.partialorder %v6324, %v6398
        %vm6453 = vcmp.eq.f32.partialorder %v6325, %v6401
        %vm6454 = vcmp.eq.f32.partialorder %v6326, %v6404
        %vm6455 = vcmp.eq.f32.partialorder %v6327, %v6407
        %vm6456 = vcmp.eq.f32.partialorder %v6328, %v6410
        %vm6457 = vcmp.eq.f32.partialorder %v6329, %v6413
        %vm6458 = vcmp.eq.f32.partialorder %v6330, %v6416
        %vm6459 = vcmp.eq.f32.partialorder %v6331, %v6419
        %vm6460 = vcmp.eq.f32.partialorder %v6332, %v6422
        %vm6461 = vcmp.eq.f32.partialorder %v6333, %v6425
        %vm6462 = vcmp.eq.f32.partialorder %v6334, %v6428
        %vm6463 = vcmp.eq.f32.partialorder %v6335, %v6431
        %v6464 = vsel %vm6432, %v5631, 17
        %v6465 = vsel %vm6433, %v5631, 17
        %v6466 = vsel %vm6434, %v5631, 17
        %v6467 = vsel %vm6435, %v5631, 17
        %v6468 = vsel %vm6436, %v5631, 17
        %v6469 = vsel %vm6437, %v5631, 17
        %v6470 = vsel %vm6438, %v5631, 17
        %v6471 = vsel %vm6439, %v5631, 17
        %v6472 = vsel %vm6440, %v5631, 17
        %v6473 = vsel %vm6441, %v5631, 17
        %v6474 = vsel %vm6442, %v5631, 17
        %v6475 = vsel %vm6443, %v5631, 17
        %v6476 = vsel %vm6444, %v5631, 17
        %v6477 = vsel %vm6445, %v5631, 17
        %v6478 = vsel %vm6446, %v5631, 17
        %v6479 = vsel %vm6447, %v5631, 17
        %v6480 = vsel %vm6448, %v5631, 17
        %v6481 = vsel %vm6449, %v5631, 17
        %v6482 = vsel %vm6450, %v5631, 17
        %v6483 = vsel %vm6451, %v5631, 17
        %v6484 = vsel %vm6452, %v5631, 17
        %v6485 = vsel %vm6453, %v5631, 17
        %v6486 = vsel %vm6454, %v5631, 17
        %v6487 = vsel %vm6455, %v5631, 17
        %v6488 = vsel %vm6456, %v5631, 17
        %v6489 = vsel %vm6457, %v5631, 17
        %v6490 = vsel %vm6458, %v5631, 17
        %v6491 = vsel %vm6459, %v5631, 17
        %v6492 = vsel %vm6460, %v5631, 17
        %v6493 = vsel %vm6461, %v5631, 17
        %v6494 = vsel %vm6462, %v5631, 17
        %v6495 = vsel %vm6463, %v5631, 17
        %v6496 = vsel %vm5277, %v6464, 2147483647
        %v6497 = vand.u32 %v6496, 65535
        %v6498 = vshra.s32 %v6496, 16
        %v6499 = vcvt.s32.f32 %v6497
        %v6500 = vcvt.s32.f32 %v6498
        %6501 = vmin.xlane.f32.xlu0 %v6500
        %v6502 = vpop.xlane.xlu0 %6501
        %vm6503 = vcmp.eq.f32.partialorder %v6500, %v6502
        %v6504 = vsel %vm6503, %v6499, inf
        %6505 = vmin.xlane.f32.xlu0 %v6504
        %v6506 = vpop.xlane.xlu0 %6505
        %v6507 = vcvt.f32.s32 %v6506
        %v6508 = vcvt.f32.s32 %v6502
        %v6509 = vshll.u32 %v6508, 16
        %v6510 = vadd.s32 %v6509, %v6507
        %v6511 = vsel %vm5277, %v6465, 2147483647
        %v6512 = vand.u32 %v6511, 65535
        %v6513 = vshra.s32 %v6511, 16
        %v6514 = vcvt.s32.f32 %v6512
        %v6515 = vcvt.s32.f32 %v6513
        %6516 = vmin.xlane.f32.xlu0 %v6515
        %v6517 = vpop.xlane.xlu0 %6516
        %vm6518 = vcmp.eq.f32.partialorder %v6515, %v6517
        %v6519 = vsel %vm6518, %v6514, inf
        %6520 = vmin.xlane.f32.xlu0 %v6519
        %v6521 = vpop.xlane.xlu0 %6520
        %v6522 = vcvt.f32.s32 %v6521
        %v6523 = vcvt.f32.s32 %v6517
        %v6524 = vshll.u32 %v6523, 16
        %v6525 = vadd.s32 %v6524, %v6522
        %v6526 = vsel %vm5277, %v6466, 2147483647
        %v6527 = vand.u32 %v6526, 65535
        %v6528 = vshra.s32 %v6526, 16
        %v6529 = vcvt.s32.f32 %v6527
        %v6530 = vcvt.s32.f32 %v6528
        %6531 = vmin.xlane.f32.xlu0 %v6530
        %v6532 = vpop.xlane.xlu0 %6531
        %vm6533 = vcmp.eq.f32.partialorder %v6530, %v6532
        %v6534 = vsel %vm6533, %v6529, inf
        %6535 = vmin.xlane.f32.xlu0 %v6534
        %v6536 = vpop.xlane.xlu0 %6535
        %v6537 = vcvt.f32.s32 %v6536
        %v6538 = vcvt.f32.s32 %v6532
        %v6539 = vshll.u32 %v6538, 16
        %v6540 = vadd.s32 %v6539, %v6537
        %v6541 = vsel %vm5277, %v6467, 2147483647
        %v6542 = vand.u32 %v6541, 65535
        %v6543 = vshra.s32 %v6541, 16
        %v6544 = vcvt.s32.f32 %v6542
        %v6545 = vcvt.s32.f32 %v6543
        %6546 = vmin.xlane.f32.xlu0 %v6545
        %v6547 = vpop.xlane.xlu0 %6546
        %vm6548 = vcmp.eq.f32.partialorder %v6545, %v6547
        %v6549 = vsel %vm6548, %v6544, inf
        %6550 = vmin.xlane.f32.xlu0 %v6549
        %v6551 = vpop.xlane.xlu0 %6550
        %v6552 = vcvt.f32.s32 %v6551
        %v6553 = vcvt.f32.s32 %v6547
        %v6554 = vshll.u32 %v6553, 16
        %v6555 = vadd.s32 %v6554, %v6552
        %v6556 = vsel %vm5277, %v6468, 2147483647
        %v6557 = vand.u32 %v6556, 65535
        %v6558 = vshra.s32 %v6556, 16
        %v6559 = vcvt.s32.f32 %v6557
        %v6560 = vcvt.s32.f32 %v6558
        %6561 = vmin.xlane.f32.xlu0 %v6560
        %v6562 = vpop.xlane.xlu0 %6561
        %vm6563 = vcmp.eq.f32.partialorder %v6560, %v6562
        %v6564 = vsel %vm6563, %v6559, inf
        %6565 = vmin.xlane.f32.xlu0 %v6564
        %v6566 = vpop.xlane.xlu0 %6565
        %v6567 = vcvt.f32.s32 %v6566
        %v6568 = vcvt.f32.s32 %v6562
        %v6569 = vshll.u32 %v6568, 16
        %v6570 = vadd.s32 %v6569, %v6567
        %v6571 = vsel %vm5277, %v6469, 2147483647
        %v6572 = vand.u32 %v6571, 65535
        %v6573 = vshra.s32 %v6571, 16
        %v6574 = vcvt.s32.f32 %v6572
        %v6575 = vcvt.s32.f32 %v6573
        %6576 = vmin.xlane.f32.xlu0 %v6575
        %v6577 = vpop.xlane.xlu0 %6576
        %vm6578 = vcmp.eq.f32.partialorder %v6575, %v6577
        %v6579 = vsel %vm6578, %v6574, inf
        %6580 = vmin.xlane.f32.xlu0 %v6579
        %v6581 = vpop.xlane.xlu0 %6580
        %v6582 = vcvt.f32.s32 %v6581
        %v6583 = vcvt.f32.s32 %v6577
        %v6584 = vshll.u32 %v6583, 16
        %v6585 = vadd.s32 %v6584, %v6582
        %v6586 = vsel %vm5277, %v6470, 2147483647
        %v6587 = vand.u32 %v6586, 65535
        %v6588 = vshra.s32 %v6586, 16
        %v6589 = vcvt.s32.f32 %v6587
        %v6590 = vcvt.s32.f32 %v6588
        %6591 = vmin.xlane.f32.xlu0 %v6590
        %v6592 = vpop.xlane.xlu0 %6591
        %vm6593 = vcmp.eq.f32.partialorder %v6590, %v6592
        %v6594 = vsel %vm6593, %v6589, inf
        %6595 = vmin.xlane.f32.xlu0 %v6594
        %v6596 = vpop.xlane.xlu0 %6595
        %v6597 = vcvt.f32.s32 %v6596
        %v6598 = vcvt.f32.s32 %v6592
        %v6599 = vshll.u32 %v6598, 16
        %v6600 = vadd.s32 %v6599, %v6597
        %v6601 = vsel %vm5277, %v6471, 2147483647
        %v6602 = vand.u32 %v6601, 65535
        %v6603 = vshra.s32 %v6601, 16
        %v6604 = vcvt.s32.f32 %v6602
        %v6605 = vcvt.s32.f32 %v6603
        %6606 = vmin.xlane.f32.xlu0 %v6605
        %v6607 = vpop.xlane.xlu0 %6606
        %vm6608 = vcmp.eq.f32.partialorder %v6605, %v6607
        %v6609 = vsel %vm6608, %v6604, inf
        %6610 = vmin.xlane.f32.xlu0 %v6609
        %v6611 = vpop.xlane.xlu0 %6610
        %v6612 = vcvt.f32.s32 %v6611
        %v6613 = vcvt.f32.s32 %v6607
        %v6614 = vshll.u32 %v6613, 16
        %v6615 = vadd.s32 %v6614, %v6612
        %v6616 = vsel %vm5277, %v6472, 2147483647
        %v6617 = vand.u32 %v6616, 65535
        %v6618 = vshra.s32 %v6616, 16
        %v6619 = vcvt.s32.f32 %v6617
        %v6620 = vcvt.s32.f32 %v6618
        %6621 = vmin.xlane.f32.xlu0 %v6620
        %v6622 = vpop.xlane.xlu0 %6621
        %vm6623 = vcmp.eq.f32.partialorder %v6620, %v6622
        %v6624 = vsel %vm6623, %v6619, inf
        %6625 = vmin.xlane.f32.xlu0 %v6624
        %v6626 = vpop.xlane.xlu0 %6625
        %v6627 = vcvt.f32.s32 %v6626
        %v6628 = vcvt.f32.s32 %v6622
        %v6629 = vshll.u32 %v6628, 16
        %v6630 = vadd.s32 %v6629, %v6627
        %v6631 = vsel %vm5277, %v6473, 2147483647
        %v6632 = vand.u32 %v6631, 65535
        %v6633 = vshra.s32 %v6631, 16
        %v6634 = vcvt.s32.f32 %v6632
        %v6635 = vcvt.s32.f32 %v6633
        %6636 = vmin.xlane.f32.xlu0 %v6635
        %v6637 = vpop.xlane.xlu0 %6636
        %vm6638 = vcmp.eq.f32.partialorder %v6635, %v6637
        %v6639 = vsel %vm6638, %v6634, inf
        %6640 = vmin.xlane.f32.xlu0 %v6639
        %v6641 = vpop.xlane.xlu0 %6640
        %v6642 = vcvt.f32.s32 %v6641
        %v6643 = vcvt.f32.s32 %v6637
        %v6644 = vshll.u32 %v6643, 16
        %v6645 = vadd.s32 %v6644, %v6642
        %v6646 = vsel %vm5277, %v6474, 2147483647
        %v6647 = vand.u32 %v6646, 65535
        %v6648 = vshra.s32 %v6646, 16
        %v6649 = vcvt.s32.f32 %v6647
        %v6650 = vcvt.s32.f32 %v6648
        %6651 = vmin.xlane.f32.xlu0 %v6650
        %v6652 = vpop.xlane.xlu0 %6651
        %vm6653 = vcmp.eq.f32.partialorder %v6650, %v6652
        %v6654 = vsel %vm6653, %v6649, inf
        %6655 = vmin.xlane.f32.xlu0 %v6654
        %v6656 = vpop.xlane.xlu0 %6655
        %v6657 = vcvt.f32.s32 %v6656
        %v6658 = vcvt.f32.s32 %v6652
        %v6659 = vshll.u32 %v6658, 16
        %v6660 = vadd.s32 %v6659, %v6657
        %v6661 = vsel %vm5277, %v6475, 2147483647
        %v6662 = vand.u32 %v6661, 65535
        %v6663 = vshra.s32 %v6661, 16
        %v6664 = vcvt.s32.f32 %v6662
        %v6665 = vcvt.s32.f32 %v6663
        %6666 = vmin.xlane.f32.xlu0 %v6665
        %v6667 = vpop.xlane.xlu0 %6666
        %vm6668 = vcmp.eq.f32.partialorder %v6665, %v6667
        %v6669 = vsel %vm6668, %v6664, inf
        %6670 = vmin.xlane.f32.xlu0 %v6669
        %v6671 = vpop.xlane.xlu0 %6670
        %v6672 = vcvt.f32.s32 %v6671
        %v6673 = vcvt.f32.s32 %v6667
        %v6674 = vshll.u32 %v6673, 16
        %v6675 = vadd.s32 %v6674, %v6672
        %v6676 = vsel %vm5277, %v6476, 2147483647
        %v6677 = vand.u32 %v6676, 65535
        %v6678 = vshra.s32 %v6676, 16
        %v6679 = vcvt.s32.f32 %v6677
        %v6680 = vcvt.s32.f32 %v6678
        %6681 = vmin.xlane.f32.xlu0 %v6680
        %v6682 = vpop.xlane.xlu0 %6681
        %vm6683 = vcmp.eq.f32.partialorder %v6680, %v6682
        %v6684 = vsel %vm6683, %v6679, inf
        %6685 = vmin.xlane.f32.xlu0 %v6684
        %v6686 = vpop.xlane.xlu0 %6685
        %v6687 = vcvt.f32.s32 %v6686
        %v6688 = vcvt.f32.s32 %v6682
        %v6689 = vshll.u32 %v6688, 16
        %v6690 = vadd.s32 %v6689, %v6687
        %v6691 = vsel %vm5277, %v6477, 2147483647
        %v6692 = vand.u32 %v6691, 65535
        %v6693 = vshra.s32 %v6691, 16
        %v6694 = vcvt.s32.f32 %v6692
        %v6695 = vcvt.s32.f32 %v6693
        %6696 = vmin.xlane.f32.xlu0 %v6695
        %v6697 = vpop.xlane.xlu0 %6696
        %vm6698 = vcmp.eq.f32.partialorder %v6695, %v6697
        %v6699 = vsel %vm6698, %v6694, inf
        %6700 = vmin.xlane.f32.xlu0 %v6699
        %v6701 = vpop.xlane.xlu0 %6700
        %v6702 = vcvt.f32.s32 %v6701
        %v6703 = vcvt.f32.s32 %v6697
        %v6704 = vshll.u32 %v6703, 16
        %v6705 = vadd.s32 %v6704, %v6702
        %v6706 = vsel %vm5277, %v6478, 2147483647
        %v6707 = vand.u32 %v6706, 65535
        %v6708 = vshra.s32 %v6706, 16
        %v6709 = vcvt.s32.f32 %v6707
        %v6710 = vcvt.s32.f32 %v6708
        %6711 = vmin.xlane.f32.xlu0 %v6710
        %v6712 = vpop.xlane.xlu0 %6711
        %vm6713 = vcmp.eq.f32.partialorder %v6710, %v6712
        %v6714 = vsel %vm6713, %v6709, inf
        %6715 = vmin.xlane.f32.xlu0 %v6714
        %v6716 = vpop.xlane.xlu0 %6715
        %v6717 = vcvt.f32.s32 %v6716
        %v6718 = vcvt.f32.s32 %v6712
        %v6719 = vshll.u32 %v6718, 16
        %v6720 = vadd.s32 %v6719, %v6717
        %v6721 = vsel %vm5277, %v6479, 2147483647
        %v6722 = vand.u32 %v6721, 65535
        %v6723 = vshra.s32 %v6721, 16
        %v6724 = vcvt.s32.f32 %v6722
        %v6725 = vcvt.s32.f32 %v6723
        %6726 = vmin.xlane.f32.xlu0 %v6725
        %v6727 = vpop.xlane.xlu0 %6726
        %vm6728 = vcmp.eq.f32.partialorder %v6725, %v6727
        %v6729 = vsel %vm6728, %v6724, inf
        %6730 = vmin.xlane.f32.xlu0 %v6729
        %v6731 = vpop.xlane.xlu0 %6730
        %v6732 = vcvt.f32.s32 %v6731
        %v6733 = vcvt.f32.s32 %v6727
        %v6734 = vshll.u32 %v6733, 16
        %v6735 = vadd.s32 %v6734, %v6732
        %v6736 = vsel %vm5277, %v6480, 2147483647
        %v6737 = vand.u32 %v6736, 65535
        %v6738 = vshra.s32 %v6736, 16
        %v6739 = vcvt.s32.f32 %v6737
        %v6740 = vcvt.s32.f32 %v6738
        %6741 = vmin.xlane.f32.xlu0 %v6740
        %v6742 = vpop.xlane.xlu0 %6741
        %vm6743 = vcmp.eq.f32.partialorder %v6740, %v6742
        %v6744 = vsel %vm6743, %v6739, inf
        %6745 = vmin.xlane.f32.xlu0 %v6744
        %v6746 = vpop.xlane.xlu0 %6745
        %v6747 = vcvt.f32.s32 %v6746
        %v6748 = vcvt.f32.s32 %v6742
        %v6749 = vshll.u32 %v6748, 16
        %v6750 = vadd.s32 %v6749, %v6747
        %v6751 = vsel %vm5277, %v6481, 2147483647
        %v6752 = vand.u32 %v6751, 65535
        %v6753 = vshra.s32 %v6751, 16
        %v6754 = vcvt.s32.f32 %v6752
        %v6755 = vcvt.s32.f32 %v6753
        %6756 = vmin.xlane.f32.xlu0 %v6755
        %v6757 = vpop.xlane.xlu0 %6756
        %vm6758 = vcmp.eq.f32.partialorder %v6755, %v6757
        %v6759 = vsel %vm6758, %v6754, inf
        %6760 = vmin.xlane.f32.xlu0 %v6759
        %v6761 = vpop.xlane.xlu0 %6760
        %v6762 = vcvt.f32.s32 %v6761
        %v6763 = vcvt.f32.s32 %v6757
        %v6764 = vshll.u32 %v6763, 16
        %v6765 = vadd.s32 %v6764, %v6762
        %v6766 = vsel %vm5277, %v6482, 2147483647
        %v6767 = vand.u32 %v6766, 65535
        %v6768 = vshra.s32 %v6766, 16
        %v6769 = vcvt.s32.f32 %v6767
        %v6770 = vcvt.s32.f32 %v6768
        %6771 = vmin.xlane.f32.xlu0 %v6770
        %v6772 = vpop.xlane.xlu0 %6771
        %vm6773 = vcmp.eq.f32.partialorder %v6770, %v6772
        %v6774 = vsel %vm6773, %v6769, inf
        %6775 = vmin.xlane.f32.xlu0 %v6774
        %v6776 = vpop.xlane.xlu0 %6775
        %v6777 = vcvt.f32.s32 %v6776
        %v6778 = vcvt.f32.s32 %v6772
        %v6779 = vshll.u32 %v6778, 16
        %v6780 = vadd.s32 %v6779, %v6777
        %v6781 = vsel %vm5277, %v6483, 2147483647
        %v6782 = vand.u32 %v6781, 65535
        %v6783 = vshra.s32 %v6781, 16
        %v6784 = vcvt.s32.f32 %v6782
        %v6785 = vcvt.s32.f32 %v6783
        %6786 = vmin.xlane.f32.xlu0 %v6785
        %v6787 = vpop.xlane.xlu0 %6786
        %vm6788 = vcmp.eq.f32.partialorder %v6785, %v6787
        %v6789 = vsel %vm6788, %v6784, inf
        %6790 = vmin.xlane.f32.xlu0 %v6789
        %v6791 = vpop.xlane.xlu0 %6790
        %v6792 = vcvt.f32.s32 %v6791
        %v6793 = vcvt.f32.s32 %v6787
        %v6794 = vshll.u32 %v6793, 16
        %v6795 = vadd.s32 %v6794, %v6792
        %v6796 = vsel %vm5277, %v6484, 2147483647
        %v6797 = vand.u32 %v6796, 65535
        %v6798 = vshra.s32 %v6796, 16
        %v6799 = vcvt.s32.f32 %v6797
        %v6800 = vcvt.s32.f32 %v6798
        %6801 = vmin.xlane.f32.xlu0 %v6800
        %v6802 = vpop.xlane.xlu0 %6801
        %vm6803 = vcmp.eq.f32.partialorder %v6800, %v6802
        %v6804 = vsel %vm6803, %v6799, inf
        %6805 = vmin.xlane.f32.xlu0 %v6804
        %v6806 = vpop.xlane.xlu0 %6805
        %v6807 = vcvt.f32.s32 %v6806
        %v6808 = vcvt.f32.s32 %v6802
        %v6809 = vshll.u32 %v6808, 16
        %v6810 = vadd.s32 %v6809, %v6807
        %v6811 = vsel %vm5277, %v6485, 2147483647
        %v6812 = vand.u32 %v6811, 65535
        %v6813 = vshra.s32 %v6811, 16
        %v6814 = vcvt.s32.f32 %v6812
        %v6815 = vcvt.s32.f32 %v6813
        %6816 = vmin.xlane.f32.xlu0 %v6815
        %v6817 = vpop.xlane.xlu0 %6816
        %vm6818 = vcmp.eq.f32.partialorder %v6815, %v6817
        %v6819 = vsel %vm6818, %v6814, inf
        %6820 = vmin.xlane.f32.xlu0 %v6819
        %v6821 = vpop.xlane.xlu0 %6820
        %v6822 = vcvt.f32.s32 %v6821
        %v6823 = vcvt.f32.s32 %v6817
        %v6824 = vshll.u32 %v6823, 16
        %v6825 = vadd.s32 %v6824, %v6822
        %v6826 = vsel %vm5277, %v6486, 2147483647
        %v6827 = vand.u32 %v6826, 65535
        %v6828 = vshra.s32 %v6826, 16
        %v6829 = vcvt.s32.f32 %v6827
        %v6830 = vcvt.s32.f32 %v6828
        %6831 = vmin.xlane.f32.xlu0 %v6830
        %v6832 = vpop.xlane.xlu0 %6831
        %vm6833 = vcmp.eq.f32.partialorder %v6830, %v6832
        %v6834 = vsel %vm6833, %v6829, inf
        %6835 = vmin.xlane.f32.xlu0 %v6834
        %v6836 = vpop.xlane.xlu0 %6835
        %v6837 = vcvt.f32.s32 %v6836
        %v6838 = vcvt.f32.s32 %v6832
        %v6839 = vshll.u32 %v6838, 16
        %v6840 = vadd.s32 %v6839, %v6837
        %v6841 = vsel %vm5277, %v6487, 2147483647
        %v6842 = vand.u32 %v6841, 65535
        %v6843 = vshra.s32 %v6841, 16
        %v6844 = vcvt.s32.f32 %v6842
        %v6845 = vcvt.s32.f32 %v6843
        %6846 = vmin.xlane.f32.xlu0 %v6845
        %v6847 = vpop.xlane.xlu0 %6846
        %vm6848 = vcmp.eq.f32.partialorder %v6845, %v6847
        %v6849 = vsel %vm6848, %v6844, inf
        %6850 = vmin.xlane.f32.xlu0 %v6849
        %v6851 = vpop.xlane.xlu0 %6850
        %v6852 = vcvt.f32.s32 %v6851
        %v6853 = vcvt.f32.s32 %v6847
        %v6854 = vshll.u32 %v6853, 16
        %v6855 = vadd.s32 %v6854, %v6852
        %v6856 = vsel %vm5277, %v6488, 2147483647
        %v6857 = vand.u32 %v6856, 65535
        %v6858 = vshra.s32 %v6856, 16
        %v6859 = vcvt.s32.f32 %v6857
        %v6860 = vcvt.s32.f32 %v6858
        %6861 = vmin.xlane.f32.xlu0 %v6860
        %v6862 = vpop.xlane.xlu0 %6861
        %vm6863 = vcmp.eq.f32.partialorder %v6860, %v6862
        %v6864 = vsel %vm6863, %v6859, inf
        %6865 = vmin.xlane.f32.xlu0 %v6864
        %v6866 = vpop.xlane.xlu0 %6865
        %v6867 = vcvt.f32.s32 %v6866
        %v6868 = vcvt.f32.s32 %v6862
        %v6869 = vshll.u32 %v6868, 16
        %v6870 = vadd.s32 %v6869, %v6867
        %v6871 = vsel %vm5277, %v6489, 2147483647
        %v6872 = vand.u32 %v6871, 65535
        %v6873 = vshra.s32 %v6871, 16
        %v6874 = vcvt.s32.f32 %v6872
        %v6875 = vcvt.s32.f32 %v6873
        %6876 = vmin.xlane.f32.xlu0 %v6875
        %v6877 = vpop.xlane.xlu0 %6876
        %vm6878 = vcmp.eq.f32.partialorder %v6875, %v6877
        %v6879 = vsel %vm6878, %v6874, inf
        %6880 = vmin.xlane.f32.xlu0 %v6879
        %v6881 = vpop.xlane.xlu0 %6880
        %v6882 = vcvt.f32.s32 %v6881
        %v6883 = vcvt.f32.s32 %v6877
        %v6884 = vshll.u32 %v6883, 16
        %v6885 = vadd.s32 %v6884, %v6882
        %v6886 = vsel %vm5277, %v6490, 2147483647
        %v6887 = vand.u32 %v6886, 65535
        %v6888 = vshra.s32 %v6886, 16
        %v6889 = vcvt.s32.f32 %v6887
        %v6890 = vcvt.s32.f32 %v6888
        %6891 = vmin.xlane.f32.xlu0 %v6890
        %v6892 = vpop.xlane.xlu0 %6891
        %vm6893 = vcmp.eq.f32.partialorder %v6890, %v6892
        %v6894 = vsel %vm6893, %v6889, inf
        %6895 = vmin.xlane.f32.xlu0 %v6894
        %v6896 = vpop.xlane.xlu0 %6895
        %v6897 = vcvt.f32.s32 %v6896
        %v6898 = vcvt.f32.s32 %v6892
        %v6899 = vshll.u32 %v6898, 16
        %v6900 = vadd.s32 %v6899, %v6897
        %v6901 = vsel %vm5277, %v6491, 2147483647
        %v6902 = vand.u32 %v6901, 65535
        %v6903 = vshra.s32 %v6901, 16
        %v6904 = vcvt.s32.f32 %v6902
        %v6905 = vcvt.s32.f32 %v6903
        %6906 = vmin.xlane.f32.xlu0 %v6905
        %v6907 = vpop.xlane.xlu0 %6906
        %vm6908 = vcmp.eq.f32.partialorder %v6905, %v6907
        %v6909 = vsel %vm6908, %v6904, inf
        %6910 = vmin.xlane.f32.xlu0 %v6909
        %v6911 = vpop.xlane.xlu0 %6910
        %v6912 = vcvt.f32.s32 %v6911
        %v6913 = vcvt.f32.s32 %v6907
        %v6914 = vshll.u32 %v6913, 16
        %v6915 = vadd.s32 %v6914, %v6912
        %v6916 = vsel %vm5277, %v6492, 2147483647
        %v6917 = vand.u32 %v6916, 65535
        %v6918 = vshra.s32 %v6916, 16
        %v6919 = vcvt.s32.f32 %v6917
        %v6920 = vcvt.s32.f32 %v6918
        %6921 = vmin.xlane.f32.xlu0 %v6920
        %v6922 = vpop.xlane.xlu0 %6921
        %vm6923 = vcmp.eq.f32.partialorder %v6920, %v6922
        %v6924 = vsel %vm6923, %v6919, inf
        %6925 = vmin.xlane.f32.xlu0 %v6924
        %v6926 = vpop.xlane.xlu0 %6925
        %v6927 = vcvt.f32.s32 %v6926
        %v6928 = vcvt.f32.s32 %v6922
        %v6929 = vshll.u32 %v6928, 16
        %v6930 = vadd.s32 %v6929, %v6927
        %v6931 = vsel %vm5277, %v6493, 2147483647
        %v6932 = vand.u32 %v6931, 65535
        %v6933 = vshra.s32 %v6931, 16
        %v6934 = vcvt.s32.f32 %v6932
        %v6935 = vcvt.s32.f32 %v6933
        %6936 = vmin.xlane.f32.xlu0 %v6935
        %v6937 = vpop.xlane.xlu0 %6936
        %vm6938 = vcmp.eq.f32.partialorder %v6935, %v6937
        %v6939 = vsel %vm6938, %v6934, inf
        %6940 = vmin.xlane.f32.xlu0 %v6939
        %v6941 = vpop.xlane.xlu0 %6940
        %v6942 = vcvt.f32.s32 %v6941
        %v6943 = vcvt.f32.s32 %v6937
        %v6944 = vshll.u32 %v6943, 16
        %v6945 = vadd.s32 %v6944, %v6942
        %v6946 = vsel %vm5277, %v6494, 2147483647
        %v6947 = vand.u32 %v6946, 65535
        %v6948 = vshra.s32 %v6946, 16
        %v6949 = vcvt.s32.f32 %v6947
        %v6950 = vcvt.s32.f32 %v6948
        %6951 = vmin.xlane.f32.xlu0 %v6950
        %v6952 = vpop.xlane.xlu0 %6951
        %vm6953 = vcmp.eq.f32.partialorder %v6950, %v6952
        %v6954 = vsel %vm6953, %v6949, inf
        %6955 = vmin.xlane.f32.xlu0 %v6954
        %v6956 = vpop.xlane.xlu0 %6955
        %v6957 = vcvt.f32.s32 %v6956
        %v6958 = vcvt.f32.s32 %v6952
        %v6959 = vshll.u32 %v6958, 16
        %v6960 = vadd.s32 %v6959, %v6957
        %v6961 = vsel %vm5277, %v6495, 2147483647
        %v6962 = vand.u32 %v6961, 65535
        %v6963 = vshra.s32 %v6961, 16
        %v6964 = vcvt.s32.f32 %v6962
        %v6965 = vcvt.s32.f32 %v6963
        %6966 = vmin.xlane.f32.xlu0 %v6965
        %v6967 = vpop.xlane.xlu0 %6966
        %vm6968 = vcmp.eq.f32.partialorder %v6965, %v6967
        %v6969 = vsel %vm6968, %v6964, inf
        %6970 = vmin.xlane.f32.xlu0 %v6969
        %v6971 = vpop.xlane.xlu0 %6970
        %v6972 = vcvt.f32.s32 %v6971
        %v6973 = vcvt.f32.s32 %v6967
        %v6974 = vshll.u32 %v6973, 16
        %v6975 = vadd.s32 %v6974, %v6972
        %vm6976 = vcmp.eq.s32.totalorder %v5631, %v6510
        %vm6977 = vcmp.eq.s32.totalorder %v5631, %v6525
        %vm6978 = vcmp.eq.s32.totalorder %v5631, %v6540
        %vm6979 = vcmp.eq.s32.totalorder %v5631, %v6555
        %vm6980 = vcmp.eq.s32.totalorder %v5631, %v6570
        %vm6981 = vcmp.eq.s32.totalorder %v5631, %v6585
        %vm6982 = vcmp.eq.s32.totalorder %v5631, %v6600
        %vm6983 = vcmp.eq.s32.totalorder %v5631, %v6615
        %vm6984 = vcmp.eq.s32.totalorder %v5631, %v6630
        %vm6985 = vcmp.eq.s32.totalorder %v5631, %v6645
        %vm6986 = vcmp.eq.s32.totalorder %v5631, %v6660
        %vm6987 = vcmp.eq.s32.totalorder %v5631, %v6675
        %vm6988 = vcmp.eq.s32.totalorder %v5631, %v6690
        %vm6989 = vcmp.eq.s32.totalorder %v5631, %v6705
        %vm6990 = vcmp.eq.s32.totalorder %v5631, %v6720
        %vm6991 = vcmp.eq.s32.totalorder %v5631, %v6735
        %vm6992 = vcmp.eq.s32.totalorder %v5631, %v6750
        %vm6993 = vcmp.eq.s32.totalorder %v5631, %v6765
        %vm6994 = vcmp.eq.s32.totalorder %v5631, %v6780
        %vm6995 = vcmp.eq.s32.totalorder %v5631, %v6795
        %vm6996 = vcmp.eq.s32.totalorder %v5631, %v6810
        %vm6997 = vcmp.eq.s32.totalorder %v5631, %v6825
        %vm6998 = vcmp.eq.s32.totalorder %v5631, %v6840
        %vm6999 = vcmp.eq.s32.totalorder %v5631, %v6855
        %vm7000 = vcmp.eq.s32.totalorder %v5631, %v6870
        %vm7001 = vcmp.eq.s32.totalorder %v5631, %v6885
        %vm7002 = vcmp.eq.s32.totalorder %v5631, %v6900
        %vm7003 = vcmp.eq.s32.totalorder %v5631, %v6915
        %vm7004 = vcmp.eq.s32.totalorder %v5631, %v6930
        %vm7005 = vcmp.eq.s32.totalorder %v5631, %v6945
        %vm7006 = vcmp.eq.s32.totalorder %v5631, %v6960
        %vm7007 = vcmp.eq.s32.totalorder %v5631, %v6975
        %v7008 = vsel %vm6976, -1.0, %v6304
        %v7009 = vsel %vm6977, -1.0, %v6305
        %v7010 = vsel %vm6978, -1.0, %v6306
        %v7011 = vsel %vm6979, -1.0, %v6307
        %v7012 = vsel %vm6980, -1.0, %v6308
        %v7013 = vsel %vm6981, -1.0, %v6309
        %v7014 = vsel %vm6982, -1.0, %v6310
        %v7015 = vsel %vm6983, -1.0, %v6311
        %v7016 = vsel %vm6984, -1.0, %v6312
        %v7017 = vsel %vm6985, -1.0, %v6313
        %v7018 = vsel %vm6986, -1.0, %v6314
        %v7019 = vsel %vm6987, -1.0, %v6315
        %v7020 = vsel %vm6988, -1.0, %v6316
        %v7021 = vsel %vm6989, -1.0, %v6317
        %v7022 = vsel %vm6990, -1.0, %v6318
        %v7023 = vsel %vm6991, -1.0, %v6319
        %v7024 = vsel %vm6992, -1.0, %v6320
        %v7025 = vsel %vm6993, -1.0, %v6321
        %v7026 = vsel %vm6994, -1.0, %v6322
        %v7027 = vsel %vm6995, -1.0, %v6323
        %v7028 = vsel %vm6996, -1.0, %v6324
        %v7029 = vsel %vm6997, -1.0, %v6325
        %v7030 = vsel %vm6998, -1.0, %v6326
        %v7031 = vsel %vm6999, -1.0, %v6327
        %v7032 = vsel %vm7000, -1.0, %v6328
        %v7033 = vsel %vm7001, -1.0, %v6329
        %v7034 = vsel %vm7002, -1.0, %v6330
        %v7035 = vsel %vm7003, -1.0, %v6331
        %v7036 = vsel %vm7004, -1.0, %v6332
        %v7037 = vsel %vm7005, -1.0, %v6333
        %v7038 = vsel %vm7006, -1.0, %v6334
        %v7039 = vsel %vm7007, -1.0, %v6335
        %v7040 = vsel %vm5277, %v7008, -inf
        %7041 = vmax.xlane.f32.xlu0 %v7040
        %v7042 = vpop.xlane.xlu0 %7041
        %v7043 = vsel %vm5277, %v7009, -inf
        %7044 = vmax.xlane.f32.xlu0 %v7043
        %v7045 = vpop.xlane.xlu0 %7044
        %v7046 = vsel %vm5277, %v7010, -inf
        %7047 = vmax.xlane.f32.xlu0 %v7046
        %v7048 = vpop.xlane.xlu0 %7047
        %v7049 = vsel %vm5277, %v7011, -inf
        %7050 = vmax.xlane.f32.xlu0 %v7049
        %v7051 = vpop.xlane.xlu0 %7050
        %v7052 = vsel %vm5277, %v7012, -inf
        %7053 = vmax.xlane.f32.xlu0 %v7052
        %v7054 = vpop.xlane.xlu0 %7053
        %v7055 = vsel %vm5277, %v7013, -inf
        %7056 = vmax.xlane.f32.xlu0 %v7055
        %v7057 = vpop.xlane.xlu0 %7056
        %v7058 = vsel %vm5277, %v7014, -inf
        %7059 = vmax.xlane.f32.xlu0 %v7058
        %v7060 = vpop.xlane.xlu0 %7059
        %v7061 = vsel %vm5277, %v7015, -inf
        %7062 = vmax.xlane.f32.xlu0 %v7061
        %v7063 = vpop.xlane.xlu0 %7062
        %v7064 = vsel %vm5277, %v7016, -inf
        %7065 = vmax.xlane.f32.xlu0 %v7064
        %v7066 = vpop.xlane.xlu0 %7065
        %v7067 = vsel %vm5277, %v7017, -inf
        %7068 = vmax.xlane.f32.xlu0 %v7067
        %v7069 = vpop.xlane.xlu0 %7068
        %v7070 = vsel %vm5277, %v7018, -inf
        %7071 = vmax.xlane.f32.xlu0 %v7070
        %v7072 = vpop.xlane.xlu0 %7071
        %v7073 = vsel %vm5277, %v7019, -inf
        %7074 = vmax.xlane.f32.xlu0 %v7073
        %v7075 = vpop.xlane.xlu0 %7074
        %v7076 = vsel %vm5277, %v7020, -inf
        %7077 = vmax.xlane.f32.xlu0 %v7076
        %v7078 = vpop.xlane.xlu0 %7077
        %v7079 = vsel %vm5277, %v7021, -inf
        %7080 = vmax.xlane.f32.xlu0 %v7079
        %v7081 = vpop.xlane.xlu0 %7080
        %v7082 = vsel %vm5277, %v7022, -inf
        %7083 = vmax.xlane.f32.xlu0 %v7082
        %v7084 = vpop.xlane.xlu0 %7083
        %v7085 = vsel %vm5277, %v7023, -inf
        %7086 = vmax.xlane.f32.xlu0 %v7085
        %v7087 = vpop.xlane.xlu0 %7086
        %v7088 = vsel %vm5277, %v7024, -inf
        %7089 = vmax.xlane.f32.xlu0 %v7088
        %v7090 = vpop.xlane.xlu0 %7089
        %v7091 = vsel %vm5277, %v7025, -inf
        %7092 = vmax.xlane.f32.xlu0 %v7091
        %v7093 = vpop.xlane.xlu0 %7092
        %v7094 = vsel %vm5277, %v7026, -inf
        %7095 = vmax.xlane.f32.xlu0 %v7094
        %v7096 = vpop.xlane.xlu0 %7095
        %v7097 = vsel %vm5277, %v7027, -inf
        %7098 = vmax.xlane.f32.xlu0 %v7097
        %v7099 = vpop.xlane.xlu0 %7098
        %v7100 = vsel %vm5277, %v7028, -inf
        %7101 = vmax.xlane.f32.xlu0 %v7100
        %v7102 = vpop.xlane.xlu0 %7101
        %v7103 = vsel %vm5277, %v7029, -inf
        %7104 = vmax.xlane.f32.xlu0 %v7103
        %v7105 = vpop.xlane.xlu0 %7104
        %v7106 = vsel %vm5277, %v7030, -inf
        %7107 = vmax.xlane.f32.xlu0 %v7106
        %v7108 = vpop.xlane.xlu0 %7107
        %v7109 = vsel %vm5277, %v7031, -inf
        %7110 = vmax.xlane.f32.xlu0 %v7109
        %v7111 = vpop.xlane.xlu0 %7110
        %v7112 = vsel %vm5277, %v7032, -inf
        %7113 = vmax.xlane.f32.xlu0 %v7112
        %v7114 = vpop.xlane.xlu0 %7113
        %v7115 = vsel %vm5277, %v7033, -inf
        %7116 = vmax.xlane.f32.xlu0 %v7115
        %v7117 = vpop.xlane.xlu0 %7116
        %v7118 = vsel %vm5277, %v7034, -inf
        %7119 = vmax.xlane.f32.xlu0 %v7118
        %v7120 = vpop.xlane.xlu0 %7119
        %v7121 = vsel %vm5277, %v7035, -inf
        %7122 = vmax.xlane.f32.xlu0 %v7121
        %v7123 = vpop.xlane.xlu0 %7122
        %v7124 = vsel %vm5277, %v7036, -inf
        %7125 = vmax.xlane.f32.xlu0 %v7124
        %v7126 = vpop.xlane.xlu0 %7125
        %v7127 = vsel %vm5277, %v7037, -inf
        %7128 = vmax.xlane.f32.xlu0 %v7127
        %v7129 = vpop.xlane.xlu0 %7128
        %v7130 = vsel %vm5277, %v7038, -inf
        %7131 = vmax.xlane.f32.xlu0 %v7130
        %v7132 = vpop.xlane.xlu0 %7131
        %v7133 = vsel %vm5277, %v7039, -inf
        %7134 = vmax.xlane.f32.xlu0 %v7133
        %v7135 = vpop.xlane.xlu0 %7134
        %vm7136 = vcmp.eq.f32.partialorder %v7008, %v7042
        %vm7137 = vcmp.eq.f32.partialorder %v7009, %v7045
        %vm7138 = vcmp.eq.f32.partialorder %v7010, %v7048
        %vm7139 = vcmp.eq.f32.partialorder %v7011, %v7051
        %vm7140 = vcmp.eq.f32.partialorder %v7012, %v7054
        %vm7141 = vcmp.eq.f32.partialorder %v7013, %v7057
        %vm7142 = vcmp.eq.f32.partialorder %v7014, %v7060
        %vm7143 = vcmp.eq.f32.partialorder %v7015, %v7063
        %vm7144 = vcmp.eq.f32.partialorder %v7016, %v7066
        %vm7145 = vcmp.eq.f32.partialorder %v7017, %v7069
        %vm7146 = vcmp.eq.f32.partialorder %v7018, %v7072
        %vm7147 = vcmp.eq.f32.partialorder %v7019, %v7075
        %vm7148 = vcmp.eq.f32.partialorder %v7020, %v7078
        %vm7149 = vcmp.eq.f32.partialorder %v7021, %v7081
        %vm7150 = vcmp.eq.f32.partialorder %v7022, %v7084
        %vm7151 = vcmp.eq.f32.partialorder %v7023, %v7087
        %vm7152 = vcmp.eq.f32.partialorder %v7024, %v7090
        %vm7153 = vcmp.eq.f32.partialorder %v7025, %v7093
        %vm7154 = vcmp.eq.f32.partialorder %v7026, %v7096
        %vm7155 = vcmp.eq.f32.partialorder %v7027, %v7099
        %vm7156 = vcmp.eq.f32.partialorder %v7028, %v7102
        %vm7157 = vcmp.eq.f32.partialorder %v7029, %v7105
        %vm7158 = vcmp.eq.f32.partialorder %v7030, %v7108
        %vm7159 = vcmp.eq.f32.partialorder %v7031, %v7111
        %vm7160 = vcmp.eq.f32.partialorder %v7032, %v7114
        %vm7161 = vcmp.eq.f32.partialorder %v7033, %v7117
        %vm7162 = vcmp.eq.f32.partialorder %v7034, %v7120
        %vm7163 = vcmp.eq.f32.partialorder %v7035, %v7123
        %vm7164 = vcmp.eq.f32.partialorder %v7036, %v7126
        %vm7165 = vcmp.eq.f32.partialorder %v7037, %v7129
        %vm7166 = vcmp.eq.f32.partialorder %v7038, %v7132
        %vm7167 = vcmp.eq.f32.partialorder %v7039, %v7135
        %v7168 = vsel %vm7136, %v5631, 17
        %v7169 = vsel %vm7137, %v5631, 17
        %v7170 = vsel %vm7138, %v5631, 17
        %v7171 = vsel %vm7139, %v5631, 17
        %v7172 = vsel %vm7140, %v5631, 17
        %v7173 = vsel %vm7141, %v5631, 17
        %v7174 = vsel %vm7142, %v5631, 17
        %v7175 = vsel %vm7143, %v5631, 17
        %v7176 = vsel %vm7144, %v5631, 17
        %v7177 = vsel %vm7145, %v5631, 17
        %v7178 = vsel %vm7146, %v5631, 17
        %v7179 = vsel %vm7147, %v5631, 17
        %v7180 = vsel %vm7148, %v5631, 17
        %v7181 = vsel %vm7149, %v5631, 17
        %v7182 = vsel %vm7150, %v5631, 17
        %v7183 = vsel %vm7151, %v5631, 17
        %v7184 = vsel %vm7152, %v5631, 17
        %v7185 = vsel %vm7153, %v5631, 17
        %v7186 = vsel %vm7154, %v5631, 17
        %v7187 = vsel %vm7155, %v5631, 17
        %v7188 = vsel %vm7156, %v5631, 17
        %v7189 = vsel %vm7157, %v5631, 17
        %v7190 = vsel %vm7158, %v5631, 17
        %v7191 = vsel %vm7159, %v5631, 17
        %v7192 = vsel %vm7160, %v5631, 17
        %v7193 = vsel %vm7161, %v5631, 17
        %v7194 = vsel %vm7162, %v5631, 17
        %v7195 = vsel %vm7163, %v5631, 17
        %v7196 = vsel %vm7164, %v5631, 17
        %v7197 = vsel %vm7165, %v5631, 17
        %v7198 = vsel %vm7166, %v5631, 17
        %v7199 = vsel %vm7167, %v5631, 17
        %v7200 = vsel %vm5277, %v7168, 2147483647
        %v7201 = vand.u32 %v7200, 65535
        %v7202 = vshra.s32 %v7200, 16
        %v7203 = vcvt.s32.f32 %v7201
        %v7204 = vcvt.s32.f32 %v7202
        %7205 = vmin.xlane.f32.xlu0 %v7204
        %v7206 = vpop.xlane.xlu0 %7205
        %vm7207 = vcmp.eq.f32.partialorder %v7204, %v7206
        %v7208 = vsel %vm7207, %v7203, inf
        %7209 = vmin.xlane.f32.xlu0 %v7208
        %v7210 = vpop.xlane.xlu0 %7209
        %v7211 = vcvt.f32.s32 %v7210
        %v7212 = vcvt.f32.s32 %v7206
        %v7213 = vshll.u32 %v7212, 16
        %v7214 = vadd.s32 %v7213, %v7211
        %v7215 = vsel %vm5277, %v7169, 2147483647
        %v7216 = vand.u32 %v7215, 65535
        %v7217 = vshra.s32 %v7215, 16
        %v7218 = vcvt.s32.f32 %v7216
        %v7219 = vcvt.s32.f32 %v7217
        %7220 = vmin.xlane.f32.xlu0 %v7219
        %v7221 = vpop.xlane.xlu0 %7220
        %vm7222 = vcmp.eq.f32.partialorder %v7219, %v7221
        %v7223 = vsel %vm7222, %v7218, inf
        %7224 = vmin.xlane.f32.xlu0 %v7223
        %v7225 = vpop.xlane.xlu0 %7224
        %v7226 = vcvt.f32.s32 %v7225
        %v7227 = vcvt.f32.s32 %v7221
        %v7228 = vshll.u32 %v7227, 16
        %v7229 = vadd.s32 %v7228, %v7226
        %v7230 = vsel %vm5277, %v7170, 2147483647
        %v7231 = vand.u32 %v7230, 65535
        %v7232 = vshra.s32 %v7230, 16
        %v7233 = vcvt.s32.f32 %v7231
        %v7234 = vcvt.s32.f32 %v7232
        %7235 = vmin.xlane.f32.xlu0 %v7234
        %v7236 = vpop.xlane.xlu0 %7235
        %vm7237 = vcmp.eq.f32.partialorder %v7234, %v7236
        %v7238 = vsel %vm7237, %v7233, inf
        %7239 = vmin.xlane.f32.xlu0 %v7238
        %v7240 = vpop.xlane.xlu0 %7239
        %v7241 = vcvt.f32.s32 %v7240
        %v7242 = vcvt.f32.s32 %v7236
        %v7243 = vshll.u32 %v7242, 16
        %v7244 = vadd.s32 %v7243, %v7241
        %v7245 = vsel %vm5277, %v7171, 2147483647
        %v7246 = vand.u32 %v7245, 65535
        %v7247 = vshra.s32 %v7245, 16
        %v7248 = vcvt.s32.f32 %v7246
        %v7249 = vcvt.s32.f32 %v7247
        %7250 = vmin.xlane.f32.xlu0 %v7249
        %v7251 = vpop.xlane.xlu0 %7250
        %vm7252 = vcmp.eq.f32.partialorder %v7249, %v7251
        %v7253 = vsel %vm7252, %v7248, inf
        %7254 = vmin.xlane.f32.xlu0 %v7253
        %v7255 = vpop.xlane.xlu0 %7254
        %v7256 = vcvt.f32.s32 %v7255
        %v7257 = vcvt.f32.s32 %v7251
        %v7258 = vshll.u32 %v7257, 16
        %v7259 = vadd.s32 %v7258, %v7256
        %v7260 = vsel %vm5277, %v7172, 2147483647
        %v7261 = vand.u32 %v7260, 65535
        %v7262 = vshra.s32 %v7260, 16
        %v7263 = vcvt.s32.f32 %v7261
        %v7264 = vcvt.s32.f32 %v7262
        %7265 = vmin.xlane.f32.xlu0 %v7264
        %v7266 = vpop.xlane.xlu0 %7265
        %vm7267 = vcmp.eq.f32.partialorder %v7264, %v7266
        %v7268 = vsel %vm7267, %v7263, inf
        %7269 = vmin.xlane.f32.xlu0 %v7268
        %v7270 = vpop.xlane.xlu0 %7269
        %v7271 = vcvt.f32.s32 %v7270
        %v7272 = vcvt.f32.s32 %v7266
        %v7273 = vshll.u32 %v7272, 16
        %v7274 = vadd.s32 %v7273, %v7271
        %v7275 = vsel %vm5277, %v7173, 2147483647
        %v7276 = vand.u32 %v7275, 65535
        %v7277 = vshra.s32 %v7275, 16
        %v7278 = vcvt.s32.f32 %v7276
        %v7279 = vcvt.s32.f32 %v7277
        %7280 = vmin.xlane.f32.xlu0 %v7279
        %v7281 = vpop.xlane.xlu0 %7280
        %vm7282 = vcmp.eq.f32.partialorder %v7279, %v7281
        %v7283 = vsel %vm7282, %v7278, inf
        %7284 = vmin.xlane.f32.xlu0 %v7283
        %v7285 = vpop.xlane.xlu0 %7284
        %v7286 = vcvt.f32.s32 %v7285
        %v7287 = vcvt.f32.s32 %v7281
        %v7288 = vshll.u32 %v7287, 16
        %v7289 = vadd.s32 %v7288, %v7286
        %v7290 = vsel %vm5277, %v7174, 2147483647
        %v7291 = vand.u32 %v7290, 65535
        %v7292 = vshra.s32 %v7290, 16
        %v7293 = vcvt.s32.f32 %v7291
        %v7294 = vcvt.s32.f32 %v7292
        %7295 = vmin.xlane.f32.xlu0 %v7294
        %v7296 = vpop.xlane.xlu0 %7295
        %vm7297 = vcmp.eq.f32.partialorder %v7294, %v7296
        %v7298 = vsel %vm7297, %v7293, inf
        %7299 = vmin.xlane.f32.xlu0 %v7298
        %v7300 = vpop.xlane.xlu0 %7299
        %v7301 = vcvt.f32.s32 %v7300
        %v7302 = vcvt.f32.s32 %v7296
        %v7303 = vshll.u32 %v7302, 16
        %v7304 = vadd.s32 %v7303, %v7301
        %v7305 = vsel %vm5277, %v7175, 2147483647
        %v7306 = vand.u32 %v7305, 65535
        %v7307 = vshra.s32 %v7305, 16
        %v7308 = vcvt.s32.f32 %v7306
        %v7309 = vcvt.s32.f32 %v7307
        %7310 = vmin.xlane.f32.xlu0 %v7309
        %v7311 = vpop.xlane.xlu0 %7310
        %vm7312 = vcmp.eq.f32.partialorder %v7309, %v7311
        %v7313 = vsel %vm7312, %v7308, inf
        %7314 = vmin.xlane.f32.xlu0 %v7313
        %v7315 = vpop.xlane.xlu0 %7314
        %v7316 = vcvt.f32.s32 %v7315
        %v7317 = vcvt.f32.s32 %v7311
        %v7318 = vshll.u32 %v7317, 16
        %v7319 = vadd.s32 %v7318, %v7316
        %v7320 = vsel %vm5277, %v7176, 2147483647
        %v7321 = vand.u32 %v7320, 65535
        %v7322 = vshra.s32 %v7320, 16
        %v7323 = vcvt.s32.f32 %v7321
        %v7324 = vcvt.s32.f32 %v7322
        %7325 = vmin.xlane.f32.xlu0 %v7324
        %v7326 = vpop.xlane.xlu0 %7325
        %vm7327 = vcmp.eq.f32.partialorder %v7324, %v7326
        %v7328 = vsel %vm7327, %v7323, inf
        %7329 = vmin.xlane.f32.xlu0 %v7328
        %v7330 = vpop.xlane.xlu0 %7329
        %v7331 = vcvt.f32.s32 %v7330
        %v7332 = vcvt.f32.s32 %v7326
        %v7333 = vshll.u32 %v7332, 16
        %v7334 = vadd.s32 %v7333, %v7331
        %v7335 = vsel %vm5277, %v7177, 2147483647
        %v7336 = vand.u32 %v7335, 65535
        %v7337 = vshra.s32 %v7335, 16
        %v7338 = vcvt.s32.f32 %v7336
        %v7339 = vcvt.s32.f32 %v7337
        %7340 = vmin.xlane.f32.xlu0 %v7339
        %v7341 = vpop.xlane.xlu0 %7340
        %vm7342 = vcmp.eq.f32.partialorder %v7339, %v7341
        %v7343 = vsel %vm7342, %v7338, inf
        %7344 = vmin.xlane.f32.xlu0 %v7343
        %v7345 = vpop.xlane.xlu0 %7344
        %v7346 = vcvt.f32.s32 %v7345
        %v7347 = vcvt.f32.s32 %v7341
        %v7348 = vshll.u32 %v7347, 16
        %v7349 = vadd.s32 %v7348, %v7346
        %v7350 = vsel %vm5277, %v7178, 2147483647
        %v7351 = vand.u32 %v7350, 65535
        %v7352 = vshra.s32 %v7350, 16
        %v7353 = vcvt.s32.f32 %v7351
        %v7354 = vcvt.s32.f32 %v7352
        %7355 = vmin.xlane.f32.xlu0 %v7354
        %v7356 = vpop.xlane.xlu0 %7355
        %vm7357 = vcmp.eq.f32.partialorder %v7354, %v7356
        %v7358 = vsel %vm7357, %v7353, inf
        %7359 = vmin.xlane.f32.xlu0 %v7358
        %v7360 = vpop.xlane.xlu0 %7359
        %v7361 = vcvt.f32.s32 %v7360
        %v7362 = vcvt.f32.s32 %v7356
        %v7363 = vshll.u32 %v7362, 16
        %v7364 = vadd.s32 %v7363, %v7361
        %v7365 = vsel %vm5277, %v7179, 2147483647
        %v7366 = vand.u32 %v7365, 65535
        %v7367 = vshra.s32 %v7365, 16
        %v7368 = vcvt.s32.f32 %v7366
        %v7369 = vcvt.s32.f32 %v7367
        %7370 = vmin.xlane.f32.xlu0 %v7369
        %v7371 = vpop.xlane.xlu0 %7370
        %vm7372 = vcmp.eq.f32.partialorder %v7369, %v7371
        %v7373 = vsel %vm7372, %v7368, inf
        %7374 = vmin.xlane.f32.xlu0 %v7373
        %v7375 = vpop.xlane.xlu0 %7374
        %v7376 = vcvt.f32.s32 %v7375
        %v7377 = vcvt.f32.s32 %v7371
        %v7378 = vshll.u32 %v7377, 16
        %v7379 = vadd.s32 %v7378, %v7376
        %v7380 = vsel %vm5277, %v7180, 2147483647
        %v7381 = vand.u32 %v7380, 65535
        %v7382 = vshra.s32 %v7380, 16
        %v7383 = vcvt.s32.f32 %v7381
        %v7384 = vcvt.s32.f32 %v7382
        %7385 = vmin.xlane.f32.xlu0 %v7384
        %v7386 = vpop.xlane.xlu0 %7385
        %vm7387 = vcmp.eq.f32.partialorder %v7384, %v7386
        %v7388 = vsel %vm7387, %v7383, inf
        %7389 = vmin.xlane.f32.xlu0 %v7388
        %v7390 = vpop.xlane.xlu0 %7389
        %v7391 = vcvt.f32.s32 %v7390
        %v7392 = vcvt.f32.s32 %v7386
        %v7393 = vshll.u32 %v7392, 16
        %v7394 = vadd.s32 %v7393, %v7391
        %v7395 = vsel %vm5277, %v7181, 2147483647
        %v7396 = vand.u32 %v7395, 65535
        %v7397 = vshra.s32 %v7395, 16
        %v7398 = vcvt.s32.f32 %v7396
        %v7399 = vcvt.s32.f32 %v7397
        %7400 = vmin.xlane.f32.xlu0 %v7399
        %v7401 = vpop.xlane.xlu0 %7400
        %vm7402 = vcmp.eq.f32.partialorder %v7399, %v7401
        %v7403 = vsel %vm7402, %v7398, inf
        %7404 = vmin.xlane.f32.xlu0 %v7403
        %v7405 = vpop.xlane.xlu0 %7404
        %v7406 = vcvt.f32.s32 %v7405
        %v7407 = vcvt.f32.s32 %v7401
        %v7408 = vshll.u32 %v7407, 16
        %v7409 = vadd.s32 %v7408, %v7406
        %v7410 = vsel %vm5277, %v7182, 2147483647
        %v7411 = vand.u32 %v7410, 65535
        %v7412 = vshra.s32 %v7410, 16
        %v7413 = vcvt.s32.f32 %v7411
        %v7414 = vcvt.s32.f32 %v7412
        %7415 = vmin.xlane.f32.xlu0 %v7414
        %v7416 = vpop.xlane.xlu0 %7415
        %vm7417 = vcmp.eq.f32.partialorder %v7414, %v7416
        %v7418 = vsel %vm7417, %v7413, inf
        %7419 = vmin.xlane.f32.xlu0 %v7418
        %v7420 = vpop.xlane.xlu0 %7419
        %v7421 = vcvt.f32.s32 %v7420
        %v7422 = vcvt.f32.s32 %v7416
        %v7423 = vshll.u32 %v7422, 16
        %v7424 = vadd.s32 %v7423, %v7421
        %v7425 = vsel %vm5277, %v7183, 2147483647
        %v7426 = vand.u32 %v7425, 65535
        %v7427 = vshra.s32 %v7425, 16
        %v7428 = vcvt.s32.f32 %v7426
        %v7429 = vcvt.s32.f32 %v7427
        %7430 = vmin.xlane.f32.xlu0 %v7429
        %v7431 = vpop.xlane.xlu0 %7430
        %vm7432 = vcmp.eq.f32.partialorder %v7429, %v7431
        %v7433 = vsel %vm7432, %v7428, inf
        %7434 = vmin.xlane.f32.xlu0 %v7433
        %v7435 = vpop.xlane.xlu0 %7434
        %v7436 = vcvt.f32.s32 %v7435
        %v7437 = vcvt.f32.s32 %v7431
        %v7438 = vshll.u32 %v7437, 16
        %v7439 = vadd.s32 %v7438, %v7436
        %v7440 = vsel %vm5277, %v7184, 2147483647
        %v7441 = vand.u32 %v7440, 65535
        %v7442 = vshra.s32 %v7440, 16
        %v7443 = vcvt.s32.f32 %v7441
        %v7444 = vcvt.s32.f32 %v7442
        %7445 = vmin.xlane.f32.xlu0 %v7444
        %v7446 = vpop.xlane.xlu0 %7445
        %vm7447 = vcmp.eq.f32.partialorder %v7444, %v7446
        %v7448 = vsel %vm7447, %v7443, inf
        %7449 = vmin.xlane.f32.xlu0 %v7448
        %v7450 = vpop.xlane.xlu0 %7449
        %v7451 = vcvt.f32.s32 %v7450
        %v7452 = vcvt.f32.s32 %v7446
        %v7453 = vshll.u32 %v7452, 16
        %v7454 = vadd.s32 %v7453, %v7451
        %v7455 = vsel %vm5277, %v7185, 2147483647
        %v7456 = vand.u32 %v7455, 65535
        %v7457 = vshra.s32 %v7455, 16
        %v7458 = vcvt.s32.f32 %v7456
        %v7459 = vcvt.s32.f32 %v7457
        %7460 = vmin.xlane.f32.xlu0 %v7459
        %v7461 = vpop.xlane.xlu0 %7460
        %vm7462 = vcmp.eq.f32.partialorder %v7459, %v7461
        %v7463 = vsel %vm7462, %v7458, inf
        %7464 = vmin.xlane.f32.xlu0 %v7463
        %v7465 = vpop.xlane.xlu0 %7464
        %v7466 = vcvt.f32.s32 %v7465
        %v7467 = vcvt.f32.s32 %v7461
        %v7468 = vshll.u32 %v7467, 16
        %v7469 = vadd.s32 %v7468, %v7466
        %v7470 = vsel %vm5277, %v7186, 2147483647
        %v7471 = vand.u32 %v7470, 65535
        %v7472 = vshra.s32 %v7470, 16
        %v7473 = vcvt.s32.f32 %v7471
        %v7474 = vcvt.s32.f32 %v7472
        %7475 = vmin.xlane.f32.xlu0 %v7474
        %v7476 = vpop.xlane.xlu0 %7475
        %vm7477 = vcmp.eq.f32.partialorder %v7474, %v7476
        %v7478 = vsel %vm7477, %v7473, inf
        %7479 = vmin.xlane.f32.xlu0 %v7478
        %v7480 = vpop.xlane.xlu0 %7479
        %v7481 = vcvt.f32.s32 %v7480
        %v7482 = vcvt.f32.s32 %v7476
        %v7483 = vshll.u32 %v7482, 16
        %v7484 = vadd.s32 %v7483, %v7481
        %v7485 = vsel %vm5277, %v7187, 2147483647
        %v7486 = vand.u32 %v7485, 65535
        %v7487 = vshra.s32 %v7485, 16
        %v7488 = vcvt.s32.f32 %v7486
        %v7489 = vcvt.s32.f32 %v7487
        %7490 = vmin.xlane.f32.xlu0 %v7489
        %v7491 = vpop.xlane.xlu0 %7490
        %vm7492 = vcmp.eq.f32.partialorder %v7489, %v7491
        %v7493 = vsel %vm7492, %v7488, inf
        %7494 = vmin.xlane.f32.xlu0 %v7493
        %v7495 = vpop.xlane.xlu0 %7494
        %v7496 = vcvt.f32.s32 %v7495
        %v7497 = vcvt.f32.s32 %v7491
        %v7498 = vshll.u32 %v7497, 16
        %v7499 = vadd.s32 %v7498, %v7496
        %v7500 = vsel %vm5277, %v7188, 2147483647
        %v7501 = vand.u32 %v7500, 65535
        %v7502 = vshra.s32 %v7500, 16
        %v7503 = vcvt.s32.f32 %v7501
        %v7504 = vcvt.s32.f32 %v7502
        %7505 = vmin.xlane.f32.xlu0 %v7504
        %v7506 = vpop.xlane.xlu0 %7505
        %vm7507 = vcmp.eq.f32.partialorder %v7504, %v7506
        %v7508 = vsel %vm7507, %v7503, inf
        %7509 = vmin.xlane.f32.xlu0 %v7508
        %v7510 = vpop.xlane.xlu0 %7509
        %v7511 = vcvt.f32.s32 %v7510
        %v7512 = vcvt.f32.s32 %v7506
        %v7513 = vshll.u32 %v7512, 16
        %v7514 = vadd.s32 %v7513, %v7511
        %v7515 = vsel %vm5277, %v7189, 2147483647
        %v7516 = vand.u32 %v7515, 65535
        %v7517 = vshra.s32 %v7515, 16
        %v7518 = vcvt.s32.f32 %v7516
        %v7519 = vcvt.s32.f32 %v7517
        %7520 = vmin.xlane.f32.xlu0 %v7519
        %v7521 = vpop.xlane.xlu0 %7520
        %vm7522 = vcmp.eq.f32.partialorder %v7519, %v7521
        %v7523 = vsel %vm7522, %v7518, inf
        %7524 = vmin.xlane.f32.xlu0 %v7523
        %v7525 = vpop.xlane.xlu0 %7524
        %v7526 = vcvt.f32.s32 %v7525
        %v7527 = vcvt.f32.s32 %v7521
        %v7528 = vshll.u32 %v7527, 16
        %v7529 = vadd.s32 %v7528, %v7526
        %v7530 = vsel %vm5277, %v7190, 2147483647
        %v7531 = vand.u32 %v7530, 65535
        %v7532 = vshra.s32 %v7530, 16
        %v7533 = vcvt.s32.f32 %v7531
        %v7534 = vcvt.s32.f32 %v7532
        %7535 = vmin.xlane.f32.xlu0 %v7534
        %v7536 = vpop.xlane.xlu0 %7535
        %vm7537 = vcmp.eq.f32.partialorder %v7534, %v7536
        %v7538 = vsel %vm7537, %v7533, inf
        %7539 = vmin.xlane.f32.xlu0 %v7538
        %v7540 = vpop.xlane.xlu0 %7539
        %v7541 = vcvt.f32.s32 %v7540
        %v7542 = vcvt.f32.s32 %v7536
        %v7543 = vshll.u32 %v7542, 16
        %v7544 = vadd.s32 %v7543, %v7541
        %v7545 = vsel %vm5277, %v7191, 2147483647
        %v7546 = vand.u32 %v7545, 65535
        %v7547 = vshra.s32 %v7545, 16
        %v7548 = vcvt.s32.f32 %v7546
        %v7549 = vcvt.s32.f32 %v7547
        %7550 = vmin.xlane.f32.xlu0 %v7549
        %v7551 = vpop.xlane.xlu0 %7550
        %vm7552 = vcmp.eq.f32.partialorder %v7549, %v7551
        %v7553 = vsel %vm7552, %v7548, inf
        %7554 = vmin.xlane.f32.xlu0 %v7553
        %v7555 = vpop.xlane.xlu0 %7554
        %v7556 = vcvt.f32.s32 %v7555
        %v7557 = vcvt.f32.s32 %v7551
        %v7558 = vshll.u32 %v7557, 16
        %v7559 = vadd.s32 %v7558, %v7556
        %v7560 = vsel %vm5277, %v7192, 2147483647
        %v7561 = vand.u32 %v7560, 65535
        %v7562 = vshra.s32 %v7560, 16
        %v7563 = vcvt.s32.f32 %v7561
        %v7564 = vcvt.s32.f32 %v7562
        %7565 = vmin.xlane.f32.xlu0 %v7564
        %v7566 = vpop.xlane.xlu0 %7565
        %vm7567 = vcmp.eq.f32.partialorder %v7564, %v7566
        %v7568 = vsel %vm7567, %v7563, inf
        %7569 = vmin.xlane.f32.xlu0 %v7568
        %v7570 = vpop.xlane.xlu0 %7569
        %v7571 = vcvt.f32.s32 %v7570
        %v7572 = vcvt.f32.s32 %v7566
        %v7573 = vshll.u32 %v7572, 16
        %v7574 = vadd.s32 %v7573, %v7571
        %v7575 = vsel %vm5277, %v7193, 2147483647
        %v7576 = vand.u32 %v7575, 65535
        %v7577 = vshra.s32 %v7575, 16
        %v7578 = vcvt.s32.f32 %v7576
        %v7579 = vcvt.s32.f32 %v7577
        %7580 = vmin.xlane.f32.xlu0 %v7579
        %v7581 = vpop.xlane.xlu0 %7580
        %vm7582 = vcmp.eq.f32.partialorder %v7579, %v7581
        %v7583 = vsel %vm7582, %v7578, inf
        %7584 = vmin.xlane.f32.xlu0 %v7583
        %v7585 = vpop.xlane.xlu0 %7584
        %v7586 = vcvt.f32.s32 %v7585
        %v7587 = vcvt.f32.s32 %v7581
        %v7588 = vshll.u32 %v7587, 16
        %v7589 = vadd.s32 %v7588, %v7586
        %v7590 = vsel %vm5277, %v7194, 2147483647
        %v7591 = vand.u32 %v7590, 65535
        %v7592 = vshra.s32 %v7590, 16
        %v7593 = vcvt.s32.f32 %v7591
        %v7594 = vcvt.s32.f32 %v7592
        %7595 = vmin.xlane.f32.xlu0 %v7594
        %v7596 = vpop.xlane.xlu0 %7595
        %vm7597 = vcmp.eq.f32.partialorder %v7594, %v7596
        %v7598 = vsel %vm7597, %v7593, inf
        %7599 = vmin.xlane.f32.xlu0 %v7598
        %v7600 = vpop.xlane.xlu0 %7599
        %v7601 = vcvt.f32.s32 %v7600
        %v7602 = vcvt.f32.s32 %v7596
        %v7603 = vshll.u32 %v7602, 16
        %v7604 = vadd.s32 %v7603, %v7601
        %v7605 = vsel %vm5277, %v7195, 2147483647
        %v7606 = vand.u32 %v7605, 65535
        %v7607 = vshra.s32 %v7605, 16
        %v7608 = vcvt.s32.f32 %v7606
        %v7609 = vcvt.s32.f32 %v7607
        %7610 = vmin.xlane.f32.xlu0 %v7609
        %v7611 = vpop.xlane.xlu0 %7610
        %vm7612 = vcmp.eq.f32.partialorder %v7609, %v7611
        %v7613 = vsel %vm7612, %v7608, inf
        %7614 = vmin.xlane.f32.xlu0 %v7613
        %v7615 = vpop.xlane.xlu0 %7614
        %v7616 = vcvt.f32.s32 %v7615
        %v7617 = vcvt.f32.s32 %v7611
        %v7618 = vshll.u32 %v7617, 16
        %v7619 = vadd.s32 %v7618, %v7616
        %v7620 = vsel %vm5277, %v7196, 2147483647
        %v7621 = vand.u32 %v7620, 65535
        %v7622 = vshra.s32 %v7620, 16
        %v7623 = vcvt.s32.f32 %v7621
        %v7624 = vcvt.s32.f32 %v7622
        %7625 = vmin.xlane.f32.xlu0 %v7624
        %v7626 = vpop.xlane.xlu0 %7625
        %vm7627 = vcmp.eq.f32.partialorder %v7624, %v7626
        %v7628 = vsel %vm7627, %v7623, inf
        %7629 = vmin.xlane.f32.xlu0 %v7628
        %v7630 = vpop.xlane.xlu0 %7629
        %v7631 = vcvt.f32.s32 %v7630
        %v7632 = vcvt.f32.s32 %v7626
        %v7633 = vshll.u32 %v7632, 16
        %v7634 = vadd.s32 %v7633, %v7631
        %v7635 = vsel %vm5277, %v7197, 2147483647
        %v7636 = vand.u32 %v7635, 65535
        %v7637 = vshra.s32 %v7635, 16
        %v7638 = vcvt.s32.f32 %v7636
        %v7639 = vcvt.s32.f32 %v7637
        %7640 = vmin.xlane.f32.xlu0 %v7639
        %v7641 = vpop.xlane.xlu0 %7640
        %vm7642 = vcmp.eq.f32.partialorder %v7639, %v7641
        %v7643 = vsel %vm7642, %v7638, inf
        %7644 = vmin.xlane.f32.xlu0 %v7643
        %v7645 = vpop.xlane.xlu0 %7644
        %v7646 = vcvt.f32.s32 %v7645
        %v7647 = vcvt.f32.s32 %v7641
        %v7648 = vshll.u32 %v7647, 16
        %v7649 = vadd.s32 %v7648, %v7646
        %v7650 = vsel %vm5277, %v7198, 2147483647
        %v7651 = vand.u32 %v7650, 65535
        %v7652 = vshra.s32 %v7650, 16
        %v7653 = vcvt.s32.f32 %v7651
        %v7654 = vcvt.s32.f32 %v7652
        %7655 = vmin.xlane.f32.xlu0 %v7654
        %v7656 = vpop.xlane.xlu0 %7655
        %vm7657 = vcmp.eq.f32.partialorder %v7654, %v7656
        %v7658 = vsel %vm7657, %v7653, inf
        %7659 = vmin.xlane.f32.xlu0 %v7658
        %v7660 = vpop.xlane.xlu0 %7659
        %v7661 = vcvt.f32.s32 %v7660
        %v7662 = vcvt.f32.s32 %v7656
        %v7663 = vshll.u32 %v7662, 16
        %v7664 = vadd.s32 %v7663, %v7661
        %v7665 = vsel %vm5277, %v7199, 2147483647
        %v7666 = vand.u32 %v7665, 65535
        %v7667 = vshra.s32 %v7665, 16
        %v7668 = vcvt.s32.f32 %v7666
        %v7669 = vcvt.s32.f32 %v7667
        %7670 = vmin.xlane.f32.xlu0 %v7669
        %v7671 = vpop.xlane.xlu0 %7670
        %vm7672 = vcmp.eq.f32.partialorder %v7669, %v7671
        %v7673 = vsel %vm7672, %v7668, inf
        %7674 = vmin.xlane.f32.xlu0 %v7673
        %v7675 = vpop.xlane.xlu0 %7674
        %v7676 = vcvt.f32.s32 %v7675
        %v7677 = vcvt.f32.s32 %v7671
        %v7678 = vshll.u32 %v7677, 16
        %v7679 = vadd.s32 %v7678, %v7676
        %vm7680 = vcmp.eq.s32.totalorder %v5631, %v7214
        %vm7681 = vcmp.eq.s32.totalorder %v5631, %v7229
        %vm7682 = vcmp.eq.s32.totalorder %v5631, %v7244
        %vm7683 = vcmp.eq.s32.totalorder %v5631, %v7259
        %vm7684 = vcmp.eq.s32.totalorder %v5631, %v7274
        %vm7685 = vcmp.eq.s32.totalorder %v5631, %v7289
        %vm7686 = vcmp.eq.s32.totalorder %v5631, %v7304
        %vm7687 = vcmp.eq.s32.totalorder %v5631, %v7319
        %vm7688 = vcmp.eq.s32.totalorder %v5631, %v7334
        %vm7689 = vcmp.eq.s32.totalorder %v5631, %v7349
        %vm7690 = vcmp.eq.s32.totalorder %v5631, %v7364
        %vm7691 = vcmp.eq.s32.totalorder %v5631, %v7379
        %vm7692 = vcmp.eq.s32.totalorder %v5631, %v7394
        %vm7693 = vcmp.eq.s32.totalorder %v5631, %v7409
        %vm7694 = vcmp.eq.s32.totalorder %v5631, %v7424
        %vm7695 = vcmp.eq.s32.totalorder %v5631, %v7439
        %vm7696 = vcmp.eq.s32.totalorder %v5631, %v7454
        %vm7697 = vcmp.eq.s32.totalorder %v5631, %v7469
        %vm7698 = vcmp.eq.s32.totalorder %v5631, %v7484
        %vm7699 = vcmp.eq.s32.totalorder %v5631, %v7499
        %vm7700 = vcmp.eq.s32.totalorder %v5631, %v7514
        %vm7701 = vcmp.eq.s32.totalorder %v5631, %v7529
        %vm7702 = vcmp.eq.s32.totalorder %v5631, %v7544
        %vm7703 = vcmp.eq.s32.totalorder %v5631, %v7559
        %vm7704 = vcmp.eq.s32.totalorder %v5631, %v7574
        %vm7705 = vcmp.eq.s32.totalorder %v5631, %v7589
        %vm7706 = vcmp.eq.s32.totalorder %v5631, %v7604
        %vm7707 = vcmp.eq.s32.totalorder %v5631, %v7619
        %vm7708 = vcmp.eq.s32.totalorder %v5631, %v7634
        %vm7709 = vcmp.eq.s32.totalorder %v5631, %v7649
        %vm7710 = vcmp.eq.s32.totalorder %v5631, %v7664
        %vm7711 = vcmp.eq.s32.totalorder %v5631, %v7679
        %v7712 = vsel %vm7680, -1.0, %v7008
        %v7713 = vsel %vm7681, -1.0, %v7009
        %v7714 = vsel %vm7682, -1.0, %v7010
        %v7715 = vsel %vm7683, -1.0, %v7011
        %v7716 = vsel %vm7684, -1.0, %v7012
        %v7717 = vsel %vm7685, -1.0, %v7013
        %v7718 = vsel %vm7686, -1.0, %v7014
        %v7719 = vsel %vm7687, -1.0, %v7015
        %v7720 = vsel %vm7688, -1.0, %v7016
        %v7721 = vsel %vm7689, -1.0, %v7017
        %v7722 = vsel %vm7690, -1.0, %v7018
        %v7723 = vsel %vm7691, -1.0, %v7019
        %v7724 = vsel %vm7692, -1.0, %v7020
        %v7725 = vsel %vm7693, -1.0, %v7021
        %v7726 = vsel %vm7694, -1.0, %v7022
        %v7727 = vsel %vm7695, -1.0, %v7023
        %v7728 = vsel %vm7696, -1.0, %v7024
        %v7729 = vsel %vm7697, -1.0, %v7025
        %v7730 = vsel %vm7698, -1.0, %v7026
        %v7731 = vsel %vm7699, -1.0, %v7027
        %v7732 = vsel %vm7700, -1.0, %v7028
        %v7733 = vsel %vm7701, -1.0, %v7029
        %v7734 = vsel %vm7702, -1.0, %v7030
        %v7735 = vsel %vm7703, -1.0, %v7031
        %v7736 = vsel %vm7704, -1.0, %v7032
        %v7737 = vsel %vm7705, -1.0, %v7033
        %v7738 = vsel %vm7706, -1.0, %v7034
        %v7739 = vsel %vm7707, -1.0, %v7035
        %v7740 = vsel %vm7708, -1.0, %v7036
        %v7741 = vsel %vm7709, -1.0, %v7037
        %v7742 = vsel %vm7710, -1.0, %v7038
        %v7743 = vsel %vm7711, -1.0, %v7039
        %v7744 = vsel %vm5277, %v7712, -inf
        %7745 = vmax.xlane.f32.xlu0 %v7744
        %v7746 = vpop.xlane.xlu0 %7745
        %v7747 = vsel %vm5277, %v7713, -inf
        %7748 = vmax.xlane.f32.xlu0 %v7747
        %v7749 = vpop.xlane.xlu0 %7748
        %v7750 = vsel %vm5277, %v7714, -inf
        %7751 = vmax.xlane.f32.xlu0 %v7750
        %v7752 = vpop.xlane.xlu0 %7751
        %v7753 = vsel %vm5277, %v7715, -inf
        %7754 = vmax.xlane.f32.xlu0 %v7753
        %v7755 = vpop.xlane.xlu0 %7754
        %v7756 = vsel %vm5277, %v7716, -inf
        %7757 = vmax.xlane.f32.xlu0 %v7756
        %v7758 = vpop.xlane.xlu0 %7757
        %v7759 = vsel %vm5277, %v7717, -inf
        %7760 = vmax.xlane.f32.xlu0 %v7759
        %v7761 = vpop.xlane.xlu0 %7760
        %v7762 = vsel %vm5277, %v7718, -inf
        %7763 = vmax.xlane.f32.xlu0 %v7762
        %v7764 = vpop.xlane.xlu0 %7763
        %v7765 = vsel %vm5277, %v7719, -inf
        %7766 = vmax.xlane.f32.xlu0 %v7765
        %v7767 = vpop.xlane.xlu0 %7766
        %v7768 = vsel %vm5277, %v7720, -inf
        %7769 = vmax.xlane.f32.xlu0 %v7768
        %v7770 = vpop.xlane.xlu0 %7769
        %v7771 = vsel %vm5277, %v7721, -inf
        %7772 = vmax.xlane.f32.xlu0 %v7771
        %v7773 = vpop.xlane.xlu0 %7772
        %v7774 = vsel %vm5277, %v7722, -inf
        %7775 = vmax.xlane.f32.xlu0 %v7774
        %v7776 = vpop.xlane.xlu0 %7775
        %v7777 = vsel %vm5277, %v7723, -inf
        %7778 = vmax.xlane.f32.xlu0 %v7777
        %v7779 = vpop.xlane.xlu0 %7778
        %v7780 = vsel %vm5277, %v7724, -inf
        %7781 = vmax.xlane.f32.xlu0 %v7780
        %v7782 = vpop.xlane.xlu0 %7781
        %v7783 = vsel %vm5277, %v7725, -inf
        %7784 = vmax.xlane.f32.xlu0 %v7783
        %v7785 = vpop.xlane.xlu0 %7784
        %v7786 = vsel %vm5277, %v7726, -inf
        %7787 = vmax.xlane.f32.xlu0 %v7786
        %v7788 = vpop.xlane.xlu0 %7787
        %v7789 = vsel %vm5277, %v7727, -inf
        %7790 = vmax.xlane.f32.xlu0 %v7789
        %v7791 = vpop.xlane.xlu0 %7790
        %v7792 = vsel %vm5277, %v7728, -inf
        %7793 = vmax.xlane.f32.xlu0 %v7792
        %v7794 = vpop.xlane.xlu0 %7793
        %v7795 = vsel %vm5277, %v7729, -inf
        %7796 = vmax.xlane.f32.xlu0 %v7795
        %v7797 = vpop.xlane.xlu0 %7796
        %v7798 = vsel %vm5277, %v7730, -inf
        %7799 = vmax.xlane.f32.xlu0 %v7798
        %v7800 = vpop.xlane.xlu0 %7799
        %v7801 = vsel %vm5277, %v7731, -inf
        %7802 = vmax.xlane.f32.xlu0 %v7801
        %v7803 = vpop.xlane.xlu0 %7802
        %v7804 = vsel %vm5277, %v7732, -inf
        %7805 = vmax.xlane.f32.xlu0 %v7804
        %v7806 = vpop.xlane.xlu0 %7805
        %v7807 = vsel %vm5277, %v7733, -inf
        %7808 = vmax.xlane.f32.xlu0 %v7807
        %v7809 = vpop.xlane.xlu0 %7808
        %v7810 = vsel %vm5277, %v7734, -inf
        %7811 = vmax.xlane.f32.xlu0 %v7810
        %v7812 = vpop.xlane.xlu0 %7811
        %v7813 = vsel %vm5277, %v7735, -inf
        %7814 = vmax.xlane.f32.xlu0 %v7813
        %v7815 = vpop.xlane.xlu0 %7814
        %v7816 = vsel %vm5277, %v7736, -inf
        %7817 = vmax.xlane.f32.xlu0 %v7816
        %v7818 = vpop.xlane.xlu0 %7817
        %v7819 = vsel %vm5277, %v7737, -inf
        %7820 = vmax.xlane.f32.xlu0 %v7819
        %v7821 = vpop.xlane.xlu0 %7820
        %v7822 = vsel %vm5277, %v7738, -inf
        %7823 = vmax.xlane.f32.xlu0 %v7822
        %v7824 = vpop.xlane.xlu0 %7823
        %v7825 = vsel %vm5277, %v7739, -inf
        %7826 = vmax.xlane.f32.xlu0 %v7825
        %v7827 = vpop.xlane.xlu0 %7826
        %v7828 = vsel %vm5277, %v7740, -inf
        %7829 = vmax.xlane.f32.xlu0 %v7828
        %v7830 = vpop.xlane.xlu0 %7829
        %v7831 = vsel %vm5277, %v7741, -inf
        %7832 = vmax.xlane.f32.xlu0 %v7831
        %v7833 = vpop.xlane.xlu0 %7832
        %v7834 = vsel %vm5277, %v7742, -inf
        %7835 = vmax.xlane.f32.xlu0 %v7834
        %v7836 = vpop.xlane.xlu0 %7835
        %v7837 = vsel %vm5277, %v7743, -inf
        %7838 = vmax.xlane.f32.xlu0 %v7837
        %v7839 = vpop.xlane.xlu0 %7838
        %vm7840 = vcmask 7168
        %v7841 = vsel %vm7840, %v5634, %v6338
        %v7842 = vsel %vm7840, %v5637, %v6341
        %v7843 = vsel %vm7840, %v5640, %v6344
        %v7844 = vsel %vm7840, %v5643, %v6347
        %v7845 = vsel %vm7840, %v5646, %v6350
        %v7846 = vsel %vm7840, %v5649, %v6353
        %v7847 = vsel %vm7840, %v5652, %v6356
        %v7848 = vsel %vm7840, %v5655, %v6359
        %v7849 = vsel %vm7840, %v5658, %v6362
        %v7850 = vsel %vm7840, %v5661, %v6365
        %v7851 = vsel %vm7840, %v5664, %v6368
        %v7852 = vsel %vm7840, %v5667, %v6371
        %v7853 = vsel %vm7840, %v5670, %v6374
        %v7854 = vsel %vm7840, %v5673, %v6377
        %v7855 = vsel %vm7840, %v5676, %v6380
        %v7856 = vsel %vm7840, %v5679, %v6383
        %v7857 = vsel %vm7840, %v5682, %v6386
        %v7858 = vsel %vm7840, %v5685, %v6389
        %v7859 = vsel %vm7840, %v5688, %v6392
        %v7860 = vsel %vm7840, %v5691, %v6395
        %v7861 = vsel %vm7840, %v5694, %v6398
        %v7862 = vsel %vm7840, %v5697, %v6401
        %v7863 = vsel %vm7840, %v5700, %v6404
        %v7864 = vsel %vm7840, %v5703, %v6407
        %v7865 = vsel %vm7840, %v5706, %v6410
        %v7866 = vsel %vm7840, %v5709, %v6413
        %v7867 = vsel %vm7840, %v5712, %v6416
        %v7868 = vsel %vm7840, %v5715, %v6419
        %v7869 = vsel %vm7840, %v5718, %v6422
        %v7870 = vsel %vm7840, %v5721, %v6425
        %v7871 = vsel %vm7840, %v5724, %v6428
        %v7872 = vsel %vm7840, %v5727, %v6431
        %vm7873 = vcmask 15360
        %v7874 = vsel %vm7873, %v7841, %v7042
        %v7875 = vsel %vm7873, %v7842, %v7045
        %v7876 = vsel %vm7873, %v7843, %v7048
        %v7877 = vsel %vm7873, %v7844, %v7051
        %v7878 = vsel %vm7873, %v7845, %v7054
        %v7879 = vsel %vm7873, %v7846, %v7057
        %v7880 = vsel %vm7873, %v7847, %v7060
        %v7881 = vsel %vm7873, %v7848, %v7063
        %v7882 = vsel %vm7873, %v7849, %v7066
        %v7883 = vsel %vm7873, %v7850, %v7069
        %v7884 = vsel %vm7873, %v7851, %v7072
        %v7885 = vsel %vm7873, %v7852, %v7075
        %v7886 = vsel %vm7873, %v7853, %v7078
        %v7887 = vsel %vm7873, %v7854, %v7081
        %v7888 = vsel %vm7873, %v7855, %v7084
        %v7889 = vsel %vm7873, %v7856, %v7087
        %v7890 = vsel %vm7873, %v7857, %v7090
        %v7891 = vsel %vm7873, %v7858, %v7093
        %v7892 = vsel %vm7873, %v7859, %v7096
        %v7893 = vsel %vm7873, %v7860, %v7099
        %v7894 = vsel %vm7873, %v7861, %v7102
        %v7895 = vsel %vm7873, %v7862, %v7105
        %v7896 = vsel %vm7873, %v7863, %v7108
        %v7897 = vsel %vm7873, %v7864, %v7111
        %v7898 = vsel %vm7873, %v7865, %v7114
        %v7899 = vsel %vm7873, %v7866, %v7117
        %v7900 = vsel %vm7873, %v7867, %v7120
        %v7901 = vsel %vm7873, %v7868, %v7123
        %v7902 = vsel %vm7873, %v7869, %v7126
        %v7903 = vsel %vm7873, %v7870, %v7129
        %v7904 = vsel %vm7873, %v7871, %v7132
        %v7905 = vsel %vm7873, %v7872, %v7135
        %vm7906 = vcmask 23552
        %v7907 = vsel %vm7906, %v7874, %v7746
        %v7908 = vsel %vm7906, %v7875, %v7749
        %v7909 = vsel %vm7906, %v7876, %v7752
        %v7910 = vsel %vm7906, %v7877, %v7755
        %v7911 = vsel %vm7906, %v7878, %v7758
        %v7912 = vsel %vm7906, %v7879, %v7761
        %v7913 = vsel %vm7906, %v7880, %v7764
        %v7914 = vsel %vm7906, %v7881, %v7767
        %v7915 = vsel %vm7906, %v7882, %v7770
        %v7916 = vsel %vm7906, %v7883, %v7773
        %v7917 = vsel %vm7906, %v7884, %v7776
        %v7918 = vsel %vm7906, %v7885, %v7779
        %v7919 = vsel %vm7906, %v7886, %v7782
        %v7920 = vsel %vm7906, %v7887, %v7785
        %v7921 = vsel %vm7906, %v7888, %v7788
        %v7922 = vsel %vm7906, %v7889, %v7791
        %v7923 = vsel %vm7906, %v7890, %v7794
        %v7924 = vsel %vm7906, %v7891, %v7797
        %v7925 = vsel %vm7906, %v7892, %v7800
        %v7926 = vsel %vm7906, %v7893, %v7803
        %v7927 = vsel %vm7906, %v7894, %v7806
        %v7928 = vsel %vm7906, %v7895, %v7809
        %v7929 = vsel %vm7906, %v7896, %v7812
        %v7930 = vsel %vm7906, %v7897, %v7815
        %v7931 = vsel %vm7906, %v7898, %v7818
        %v7932 = vsel %vm7906, %v7899, %v7821
        %v7933 = vsel %vm7906, %v7900, %v7824
        %v7934 = vsel %vm7906, %v7901, %v7827
        %v7935 = vsel %vm7906, %v7902, %v7830
        %v7936 = vsel %vm7906, %v7903, %v7833
        %v7937 = vsel %vm7906, %v7904, %v7836
        %v7938 = vsel %vm7906, %v7905, %v7839
        %vm7939 = vcmask 31744
        %v7940 = vsel %vm7939, %v7907, 0.0
        %7941 = vadd.xlane.f32.xlu0 %v7940
        %v7942 = vpop.xlane.xlu0 %7941
        %v7943 = vsel %vm7939, %v7908, 0.0
        %7944 = vadd.xlane.f32.xlu0 %v7943
        %v7945 = vpop.xlane.xlu0 %7944
        %v7946 = vsel %vm7939, %v7909, 0.0
        %7947 = vadd.xlane.f32.xlu0 %v7946
        %v7948 = vpop.xlane.xlu0 %7947
        %v7949 = vsel %vm7939, %v7910, 0.0
        %7950 = vadd.xlane.f32.xlu0 %v7949
        %v7951 = vpop.xlane.xlu0 %7950
        %v7952 = vsel %vm7939, %v7911, 0.0
        %7953 = vadd.xlane.f32.xlu0 %v7952
        %v7954 = vpop.xlane.xlu0 %7953
        %v7955 = vsel %vm7939, %v7912, 0.0
        %7956 = vadd.xlane.f32.xlu0 %v7955
        %v7957 = vpop.xlane.xlu0 %7956
        %v7958 = vsel %vm7939, %v7913, 0.0
        %7959 = vadd.xlane.f32.xlu0 %v7958
        %v7960 = vpop.xlane.xlu0 %7959
        %v7961 = vsel %vm7939, %v7914, 0.0
        %7962 = vadd.xlane.f32.xlu0 %v7961
        %v7963 = vpop.xlane.xlu0 %7962
        %v7964 = vsel %vm7939, %v7915, 0.0
        %7965 = vadd.xlane.f32.xlu0 %v7964
        %v7966 = vpop.xlane.xlu0 %7965
        %v7967 = vsel %vm7939, %v7916, 0.0
        %7968 = vadd.xlane.f32.xlu0 %v7967
        %v7969 = vpop.xlane.xlu0 %7968
        %v7970 = vsel %vm7939, %v7917, 0.0
        %7971 = vadd.xlane.f32.xlu0 %v7970
        %v7972 = vpop.xlane.xlu0 %7971
        %v7973 = vsel %vm7939, %v7918, 0.0
        %7974 = vadd.xlane.f32.xlu0 %v7973
        %v7975 = vpop.xlane.xlu0 %7974
        %v7976 = vsel %vm7939, %v7919, 0.0
        %7977 = vadd.xlane.f32.xlu0 %v7976
        %v7978 = vpop.xlane.xlu0 %7977
        %v7979 = vsel %vm7939, %v7920, 0.0
        %7980 = vadd.xlane.f32.xlu0 %v7979
        %v7981 = vpop.xlane.xlu0 %7980
        %v7982 = vsel %vm7939, %v7921, 0.0
        %7983 = vadd.xlane.f32.xlu0 %v7982
        %v7984 = vpop.xlane.xlu0 %7983
        %v7985 = vsel %vm7939, %v7922, 0.0
        %7986 = vadd.xlane.f32.xlu0 %v7985
        %v7987 = vpop.xlane.xlu0 %7986
        %v7988 = vsel %vm7939, %v7923, 0.0
        %7989 = vadd.xlane.f32.xlu0 %v7988
        %v7990 = vpop.xlane.xlu0 %7989
        %v7991 = vsel %vm7939, %v7924, 0.0
        %7992 = vadd.xlane.f32.xlu0 %v7991
        %v7993 = vpop.xlane.xlu0 %7992
        %v7994 = vsel %vm7939, %v7925, 0.0
        %7995 = vadd.xlane.f32.xlu0 %v7994
        %v7996 = vpop.xlane.xlu0 %7995
        %v7997 = vsel %vm7939, %v7926, 0.0
        %7998 = vadd.xlane.f32.xlu0 %v7997
        %v7999 = vpop.xlane.xlu0 %7998
        %v8000 = vsel %vm7939, %v7927, 0.0
        %8001 = vadd.xlane.f32.xlu0 %v8000
        %v8002 = vpop.xlane.xlu0 %8001
        %v8003 = vsel %vm7939, %v7928, 0.0
        %8004 = vadd.xlane.f32.xlu0 %v8003
        %v8005 = vpop.xlane.xlu0 %8004
        %v8006 = vsel %vm7939, %v7929, 0.0
        %8007 = vadd.xlane.f32.xlu0 %v8006
        %v8008 = vpop.xlane.xlu0 %8007
        %v8009 = vsel %vm7939, %v7930, 0.0
        %8010 = vadd.xlane.f32.xlu0 %v8009
        %v8011 = vpop.xlane.xlu0 %8010
        %v8012 = vsel %vm7939, %v7931, 0.0
        %8013 = vadd.xlane.f32.xlu0 %v8012
        %v8014 = vpop.xlane.xlu0 %8013
        %v8015 = vsel %vm7939, %v7932, 0.0
        %8016 = vadd.xlane.f32.xlu0 %v8015
        %v8017 = vpop.xlane.xlu0 %8016
        %v8018 = vsel %vm7939, %v7933, 0.0
        %8019 = vadd.xlane.f32.xlu0 %v8018
        %v8020 = vpop.xlane.xlu0 %8019
        %v8021 = vsel %vm7939, %v7934, 0.0
        %8022 = vadd.xlane.f32.xlu0 %v8021
        %v8023 = vpop.xlane.xlu0 %8022
        %v8024 = vsel %vm7939, %v7935, 0.0
        %8025 = vadd.xlane.f32.xlu0 %v8024
        %v8026 = vpop.xlane.xlu0 %8025
        %v8027 = vsel %vm7939, %v7936, 0.0
        %8028 = vadd.xlane.f32.xlu0 %v8027
        %v8029 = vpop.xlane.xlu0 %8028
        %v8030 = vsel %vm7939, %v7937, 0.0
        %8031 = vadd.xlane.f32.xlu0 %v8030
        %v8032 = vpop.xlane.xlu0 %8031
        %v8033 = vsel %vm7939, %v7938, 0.0
        %8034 = vadd.xlane.f32.xlu0 %v8033
        %v8035 = vpop.xlane.xlu0 %8034
        %v8036 = vrcp.pop 4.0
        %v8037 = vmul.f32 %v7942, %v8036
        %v8038 = vmul.f32 %v7945, %v8036
        %v8039 = vmul.f32 %v7948, %v8036
        %v8040 = vmul.f32 %v7951, %v8036
        %v8041 = vmul.f32 %v7954, %v8036
        %v8042 = vmul.f32 %v7957, %v8036
        %v8043 = vmul.f32 %v7960, %v8036
        %v8044 = vmul.f32 %v7963, %v8036
        %v8045 = vmul.f32 %v7966, %v8036
        %v8046 = vmul.f32 %v7969, %v8036
        %v8047 = vmul.f32 %v7972, %v8036
        %v8048 = vmul.f32 %v7975, %v8036
        %v8049 = vmul.f32 %v7978, %v8036
        %v8050 = vmul.f32 %v7981, %v8036
        %v8051 = vmul.f32 %v7984, %v8036
        %v8052 = vmul.f32 %v7987, %v8036
        %v8053 = vmul.f32 %v7990, %v8036
        %v8054 = vmul.f32 %v7993, %v8036
        %v8055 = vmul.f32 %v7996, %v8036
        %v8056 = vmul.f32 %v7999, %v8036
        %v8057 = vmul.f32 %v8002, %v8036
        %v8058 = vmul.f32 %v8005, %v8036
        %v8059 = vmul.f32 %v8008, %v8036
        %v8060 = vmul.f32 %v8011, %v8036
        %v8061 = vmul.f32 %v8014, %v8036
        %v8062 = vmul.f32 %v8017, %v8036
        %v8063 = vmul.f32 %v8020, %v8036
        %v8064 = vmul.f32 %v8023, %v8036
        %v8065 = vmul.f32 %v8026, %v8036
        %v8066 = vmul.f32 %v8029, %v8036
        %v8067 = vmul.f32 %v8032, %v8036
        %v8068 = vmul.f32 %v8035, %v8036
        %v8069 = vsel %vm7939, %v7907, %v8037
        %v8070 = vsel %vm7939, %v7908, %v8038
        %v8071 = vsel %vm7939, %v7909, %v8039
        %v8072 = vsel %vm7939, %v7910, %v8040
        %v8073 = vsel %vm7939, %v7911, %v8041
        %v8074 = vsel %vm7939, %v7912, %v8042
        %v8075 = vsel %vm7939, %v7913, %v8043
        %v8076 = vsel %vm7939, %v7914, %v8044
        %v8077 = vsel %vm7939, %v7915, %v8045
        %v8078 = vsel %vm7939, %v7916, %v8046
        %v8079 = vsel %vm7939, %v7917, %v8047
        %v8080 = vsel %vm7939, %v7918, %v8048
        %v8081 = vsel %vm7939, %v7919, %v8049
        %v8082 = vsel %vm7939, %v7920, %v8050
        %v8083 = vsel %vm7939, %v7921, %v8051
        %v8084 = vsel %vm7939, %v7922, %v8052
        %v8085 = vsel %vm7939, %v7923, %v8053
        %v8086 = vsel %vm7939, %v7924, %v8054
        %v8087 = vsel %vm7939, %v7925, %v8055
        %v8088 = vsel %vm7939, %v7926, %v8056
        %v8089 = vsel %vm7939, %v7927, %v8057
        %v8090 = vsel %vm7939, %v7928, %v8058
        %v8091 = vsel %vm7939, %v7929, %v8059
        %v8092 = vsel %vm7939, %v7930, %v8060
        %v8093 = vsel %vm7939, %v7931, %v8061
        %v8094 = vsel %vm7939, %v7932, %v8062
        %v8095 = vsel %vm7939, %v7933, %v8063
        %v8096 = vsel %vm7939, %v7934, %v8064
        %v8097 = vsel %vm7939, %v7935, %v8065
        %v8098 = vsel %vm7939, %v7936, %v8066
        %v8099 = vsel %vm7939, %v7937, %v8067
        %v8100 = vsel %vm7939, %v7938, %v8068
        %8109 = vrot.lane.b32.xlu0 %v8077, 5
        %v8110 = vpop.permute.xlu0 %8109
        %8111 = vrot.lane.b32.xlu0 %v8078, 5
        %v8112 = vpop.permute.xlu0 %8111
        %8113 = vrot.lane.b32.xlu0 %v8079, 5
        %v8114 = vpop.permute.xlu0 %8113
        %8115 = vrot.lane.b32.xlu0 %v8080, 5
        %v8116 = vpop.permute.xlu0 %8115
        %8117 = vrot.lane.b32.xlu0 %v8081, 5
        %v8118 = vpop.permute.xlu0 %8117
        %8119 = vrot.lane.b32.xlu0 %v8082, 5
        %v8120 = vpop.permute.xlu0 %8119
        %8121 = vrot.lane.b32.xlu0 %v8083, 5
        %v8122 = vpop.permute.xlu0 %8121
        %8123 = vrot.lane.b32.xlu0 %v8084, 5
        %v8124 = vpop.permute.xlu0 %8123
        %8141 = vrot.lane.b32.xlu0 %v8085, 10
        %v8142 = vpop.permute.xlu0 %8141
        %8143 = vrot.lane.b32.xlu0 %v8086, 10
        %v8144 = vpop.permute.xlu0 %8143
        %8145 = vrot.lane.b32.xlu0 %v8087, 10
        %v8146 = vpop.permute.xlu0 %8145
        %8147 = vrot.lane.b32.xlu0 %v8088, 10
        %v8148 = vpop.permute.xlu0 %8147
        %8149 = vrot.lane.b32.xlu0 %v8089, 10
        %v8150 = vpop.permute.xlu0 %8149
        %8151 = vrot.lane.b32.xlu0 %v8090, 10
        %v8152 = vpop.permute.xlu0 %8151
        %8153 = vrot.lane.b32.xlu0 %v8091, 10
        %v8154 = vpop.permute.xlu0 %8153
        %8155 = vrot.lane.b32.xlu0 %v8092, 10
        %v8156 = vpop.permute.xlu0 %8155
        %8173 = vrot.lane.b32.xlu0 %v8093, 15
        %v8174 = vpop.permute.xlu0 %8173
        %8175 = vrot.lane.b32.xlu0 %v8094, 15
        %v8176 = vpop.permute.xlu0 %8175
        %8177 = vrot.lane.b32.xlu0 %v8095, 15
        %v8178 = vpop.permute.xlu0 %8177
        %8179 = vrot.lane.b32.xlu0 %v8096, 15
        %v8180 = vpop.permute.xlu0 %8179
        %8181 = vrot.lane.b32.xlu0 %v8097, 15
        %v8182 = vpop.permute.xlu0 %8181
        %8183 = vrot.lane.b32.xlu0 %v8098, 15
        %v8184 = vpop.permute.xlu0 %8183
        %8185 = vrot.lane.b32.xlu0 %v8099, 15
        %v8186 = vpop.permute.xlu0 %8185
        %8187 = vrot.lane.b32.xlu0 %v8100, 15
        %v8188 = vpop.permute.xlu0 %8187
        %vm8197 = vcmask 39936
        %v8198 = vsel %vm8197, %v8069, %v8110
        %v8199 = vsel %vm8197, %v8070, %v8112
        %v8200 = vsel %vm8197, %v8071, %v8114
        %v8201 = vsel %vm8197, %v8072, %v8116
        %v8202 = vsel %vm8197, %v8073, %v8118
        %v8203 = vsel %vm8197, %v8074, %v8120
        %v8204 = vsel %vm8197, %v8075, %v8122
        %v8205 = vsel %vm8197, %v8076, %v8124
        %vm8206 = vcmask 80896
        %v8207 = vsel %vm8206, %v8198, %v8142
        %v8208 = vsel %vm8206, %v8199, %v8144
        %v8209 = vsel %vm8206, %v8200, %v8146
        %v8210 = vsel %vm8206, %v8201, %v8148
        %v8211 = vsel %vm8206, %v8202, %v8150
        %v8212 = vsel %vm8206, %v8203, %v8152
        %v8213 = vsel %vm8206, %v8204, %v8154
        %v8214 = vsel %vm8206, %v8205, %v8156
        %vm8215 = vcmask 121856
        %v8216 = vsel %vm8215, %v8207, %v8174
        %v8217 = vsel %vm8215, %v8208, %v8176
        %v8218 = vsel %vm8215, %v8209, %v8178
        %v8219 = vsel %vm8215, %v8210, %v8180
        %v8220 = vsel %vm8215, %v8211, %v8182
        %v8221 = vsel %vm8215, %v8212, %v8184
        %v8222 = vsel %vm8215, %v8213, %v8186
        %v8223 = vsel %vm8215, %v8214, %v8188
        %v8224 = vld [vmem:[%s11] sm:$0xff]
        %v8225 = vld [vmem:[%s11 + $0x8] sm:$0xff]
        %v8226 = vld [vmem:[%s11 + $0x10] sm:$0xf]
        %v8227 = vld [vmem:[%s12] sm:$0x1]
        %v8229 = vlaneseq
        %v8230 = vshrl.u32 %v8229, 7
        %v8231 = vsub.s32 0, %v8230
        %v8232 = vrot.slane %v8227, %v8231
        %vm8234 = vcmask 162816
        %v8236 = vsel %vm8234, %v8216, 0
        %v8239 = vsel %vm8234, %v8217, 0
        %v8242 = vsel %vm8234, %v8218, 0
        %v8245 = vsel %vm8234, %v8219, 0
        %v8248 = vsel %vm8234, %v8220, 0
        %v8251 = vsel %vm8234, %v8221, 0
        %v8254 = vsel %vm8234, %v8222, 0
        %v8257 = vsel %vm8234, %v8223, 0
        %vm8259 = vcmask 1043456
        %v8261 = vsel %vm8259, %v8226, 0
        %8263 = vmatprep.subr.mxu0 0.0
        %8264 = vmatpush1.msra.mxu0 0.0
        %8265 = vmatprep.subr.mxu0 0.0
        %8266 = vmatpush1.msra.mxu0 0.0
        %8267 = vmatprep.subr.mxu0 0.0
        %8268 = vmatpush1.msra.mxu0 0.0
        %8269 = vmatprep.subr.mxu0 0.0
        %8270 = vmatpush1.msra.mxu0 0.0
        %8271 = vmatprep.subr.mxu0 0.0
        %8272 = vmatpush1.msra.mxu0 0.0
        %8273 = vmatprep.subr.mxu0 0.0
        %8274 = vmatpush1.msra.mxu0 0.0
        %8275 = vmatprep.subr.mxu0 0.0
        %8276 = vmatpush1.msra.mxu0 0.0
        %8277 = vmatprep.subr.mxu0 0.0
        %8278 = vmatpush1.msra.mxu0 0.0
        %8279 = vmatprep.subr.mxu0 0.0
        %8280 = vmatpush1.msra.mxu0 0.0
        %8281 = vmatprep.subr.mxu0 0.0
        %8282 = vmatpush1.msra.mxu0 0.0
        %8283 = vmatprep.subr.mxu0 0.0
        %8284 = vmatpush1.msra.mxu0 0.0
        %8285 = vmatprep.subr.mxu0 0.0
        %8286 = vmatpush1.msra.mxu0 0.0
        %8287 = vmatprep.subr.mxu0 0.0
        %8288 = vmatpush1.msra.mxu0 0.0
        %8289 = vmatprep.subr.mxu0 0.0
        %8290 = vmatpush1.msra.mxu0 %v8261
        %8291 = vmatprep.subr.mxu0 0.0
        %8292 = vmatpush1.msra.mxu0 %v8225
        %8293 = vmatprep.subr.mxu0 0.0
        %8294 = vmatpush1.msra.mxu0 %v8224
        %8295 = vmatprep.subr.mxu0 0.0
        %8296 = vmatpush2.msra.mxu0 0.0
        %8297 = vmatprep.subr.mxu0 0.0
        %8298 = vmatpush2.msra.mxu0 0.0
        %8299 = vmatprep.subr.mxu0 0.0
        %8300 = vmatpush2.msra.mxu0 0.0
        %8301 = vmatprep.subr.mxu0 0.0
        %8302 = vmatpush2.msra.mxu0 0.0
        %8303 = vmatprep.subr.mxu0 0.0
        %8304 = vmatpush2.msra.mxu0 0.0
        %8305 = vmatprep.subr.mxu0 0.0
        %8306 = vmatpush2.msra.mxu0 0.0
        %8307 = vmatprep.subr.mxu0 0.0
        %8308 = vmatpush2.msra.mxu0 0.0
        %8309 = vmatprep.subr.mxu0 0.0
        %8310 = vmatpush2.msra.mxu0 0.0
        %8311 = vmatprep.subr.mxu0 0.0
        %8312 = vmatpush2.msra.mxu0 0.0
        %8313 = vmatprep.subr.mxu0 0.0
        %8314 = vmatpush2.msra.mxu0 0.0
        %8315 = vmatprep.subr.mxu0 0.0
        %8316 = vmatpush2.msra.mxu0 0.0
        %8317 = vmatprep.subr.mxu0 0.0
        %8318 = vmatpush2.msra.mxu0 0.0
        %8319 = vmatprep.subr.mxu0 0.0
        %8320 = vmatpush2.msra.mxu0 0.0
        %8321 = vmatprep.subr.mxu0 0.0
        %8322 = vmatpush2.msra.mxu0 0.0
        %8323 = vmatprep.subr.mxu0 0.0
        %8324 = vmatpush2.msra.mxu0 0.0
        %8325 = vmatprep.subr.mxu0 0.0
        %8326 = vmatpush2.msra.mxu0 0.0
        %8327 = vmatprep.mubr.f32.mxu0 0.0
        %8328 = vmatmul.mubr.f32.gmra.mxu0 %v8236
        %v8329 = vpop.f32.mrf.mxu0
        %v8330 = vadd.f32 %v8232, %v8329
        %v8331 = vpop.f32.mrf.mxu0
        %8332 = vmatprep.mubr.f32.mxu0 0.0
        %8333 = vmatmul.mubr.f32.gmra.mxu0 %v8239
        %v8334 = vpop.f32.mrf.mxu0
        %v8335 = vadd.f32 %v8232, %v8334
        %v8336 = vpop.f32.mrf.mxu0
        %8337 = vmatprep.mubr.f32.mxu0 0.0
        %8338 = vmatmul.mubr.f32.gmra.mxu0 %v8242
        %v8339 = vpop.f32.mrf.mxu0
        %v8340 = vadd.f32 %v8232, %v8339
        %v8341 = vpop.f32.mrf.mxu0
        %8342 = vmatprep.mubr.f32.mxu0 0.0
        %8343 = vmatmul.mubr.f32.gmra.mxu0 %v8245
        %v8344 = vpop.f32.mrf.mxu0
        %v8345 = vadd.f32 %v8232, %v8344
        %v8346 = vpop.f32.mrf.mxu0
        %8347 = vmatprep.mubr.f32.mxu0 0.0
        %8348 = vmatmul.mubr.f32.gmra.mxu0 %v8248
        %v8349 = vpop.f32.mrf.mxu0
        %v8350 = vadd.f32 %v8232, %v8349
        %v8351 = vpop.f32.mrf.mxu0
        %8352 = vmatprep.mubr.f32.mxu0 0.0
        %8353 = vmatmul.mubr.f32.gmra.mxu0 %v8251
        %v8354 = vpop.f32.mrf.mxu0
        %v8355 = vadd.f32 %v8232, %v8354
        %v8356 = vpop.f32.mrf.mxu0
        %8357 = vmatprep.mubr.f32.mxu0 0.0
        %8358 = vmatmul.mubr.f32.gmra.mxu0 %v8254
        %v8359 = vpop.f32.mrf.mxu0
        %v8360 = vadd.f32 %v8232, %v8359
        %v8361 = vpop.f32.mrf.mxu0
        %8362 = vmatprep.mubr.f32.mxu0 0.0
        %8363 = vmatmul.mubr.f32.gmra.mxu0 %v8257
        %v8364 = vpop.f32.mrf.mxu0
        %v8365 = vadd.f32 %v8232, %v8364
        %v8366 = vpop.f32.mrf.mxu0
        %8367 = vdwg.mxu0
        %v8368 = vmax.f32 %v8330, 0.0
        %v8369 = vmax.f32 %v8335, 0.0
        %v8370 = vmax.f32 %v8340, 0.0
        %v8371 = vmax.f32 %v8345, 0.0
        %v8372 = vmax.f32 %v8350, 0.0
        %v8373 = vmax.f32 %v8355, 0.0
        %v8374 = vmax.f32 %v8360, 0.0
        %v8375 = vmax.f32 %v8365, 0.0
        %v8376 = vld [vmem:[%s13] sm:$0xff]
        %v8377 = vld [vmem:[%s13 + $0x8] sm:$0xff]
        %v8378 = vld [vmem:[%s13 + $0x10] sm:$0xff]
        %v8379 = vld [vmem:[%s13 + $0x18] sm:$0xff]
        %v8380 = vld [vmem:[#allocation4] sm:$0x1]
        %v8382 = vlaneseq
        %v8383 = vshrl.u32 %v8382, 7
        %v8384 = vsub.s32 0, %v8383
        %v8385 = vrot.slane %v8380, %v8384
        %v8388 = vsel %vm497, %v8368, 0
        %v8391 = vsel %vm497, %v8369, 0
        %v8394 = vsel %vm497, %v8370, 0
        %v8397 = vsel %vm497, %v8371, 0
        %v8400 = vsel %vm497, %v8372, 0
        %v8403 = vsel %vm497, %v8373, 0
        %v8406 = vsel %vm497, %v8374, 0
        %v8409 = vsel %vm497, %v8375, 0
        %8411 = vmatprep.subr.mxu0 0.0
        %8412 = vmatpush1.msra.mxu0 0.0
        %8413 = vmatprep.subr.mxu0 0.0
        %8414 = vmatpush1.msra.mxu0 0.0
        %8415 = vmatprep.subr.mxu0 0.0
        %8416 = vmatpush1.msra.mxu0 0.0
        %8417 = vmatprep.subr.mxu0 0.0
        %8418 = vmatpush1.msra.mxu0 0.0
        %8419 = vmatprep.subr.mxu0 0.0
        %8420 = vmatpush1.msra.mxu0 0.0
        %8421 = vmatprep.subr.mxu0 0.0
        %8422 = vmatpush1.msra.mxu0 0.0
        %8423 = vmatprep.subr.mxu0 0.0
        %8424 = vmatpush1.msra.mxu0 0.0
        %8425 = vmatprep.subr.mxu0 0.0
        %8426 = vmatpush1.msra.mxu0 0.0
        %8427 = vmatprep.subr.mxu0 0.0
        %8428 = vmatpush1.msra.mxu0 0.0
        %8429 = vmatprep.subr.mxu0 0.0
        %8430 = vmatpush1.msra.mxu0 0.0
        %8431 = vmatprep.subr.mxu0 0.0
        %8432 = vmatpush1.msra.mxu0 0.0
        %8433 = vmatprep.subr.mxu0 0.0
        %8434 = vmatpush1.msra.mxu0 0.0
        %8435 = vmatprep.subr.mxu0 0.0
        %8436 = vmatpush1.msra.mxu0 %v8379
        %8437 = vmatprep.subr.mxu0 0.0
        %8438 = vmatpush1.msra.mxu0 %v8378
        %8439 = vmatprep.subr.mxu0 0.0
        %8440 = vmatpush1.msra.mxu0 %v8377
        %8441 = vmatprep.subr.mxu0 0.0
        %8442 = vmatpush1.msra.mxu0 %v8376
        %8443 = vmatprep.subr.mxu0 0.0
        %8444 = vmatpush2.msra.mxu0 0.0
        %8445 = vmatprep.subr.mxu0 0.0
        %8446 = vmatpush2.msra.mxu0 0.0
        %8447 = vmatprep.subr.mxu0 0.0
        %8448 = vmatpush2.msra.mxu0 0.0
        %8449 = vmatprep.subr.mxu0 0.0
        %8450 = vmatpush2.msra.mxu0 0.0
        %8451 = vmatprep.subr.mxu0 0.0
        %8452 = vmatpush2.msra.mxu0 0.0
        %8453 = vmatprep.subr.mxu0 0.0
        %8454 = vmatpush2.msra.mxu0 0.0
        %8455 = vmatprep.subr.mxu0 0.0
        %8456 = vmatpush2.msra.mxu0 0.0
        %8457 = vmatprep.subr.mxu0 0.0
        %8458 = vmatpush2.msra.mxu0 0.0
        %8459 = vmatprep.subr.mxu0 0.0
        %8460 = vmatpush2.msra.mxu0 0.0
        %8461 = vmatprep.subr.mxu0 0.0
        %8462 = vmatpush2.msra.mxu0 0.0
        %8463 = vmatprep.subr.mxu0 0.0
        %8464 = vmatpush2.msra.mxu0 0.0
        %8465 = vmatprep.subr.mxu0 0.0
        %8466 = vmatpush2.msra.mxu0 0.0
        %8467 = vmatprep.subr.mxu0 0.0
        %8468 = vmatpush2.msra.mxu0 0.0
        %8469 = vmatprep.subr.mxu0 0.0
        %8470 = vmatpush2.msra.mxu0 0.0
        %8471 = vmatprep.subr.mxu0 0.0
        %8472 = vmatpush2.msra.mxu0 0.0
        %8473 = vmatprep.subr.mxu0 0.0
        %8474 = vmatpush2.msra.mxu0 0.0
        %8475 = vmatprep.mubr.f32.mxu0 0.0
        %8476 = vmatmul.mubr.f32.gmra.mxu0 %v8388
        %v8477 = vpop.f32.mrf.mxu0
        %v8478 = vadd.f32 %v8385, %v8477
        %v8479 = vpop.f32.mrf.mxu0
        %8480 = vmatprep.mubr.f32.mxu0 0.0
        %8481 = vmatmul.mubr.f32.gmra.mxu0 %v8391
        %v8482 = vpop.f32.mrf.mxu0
        %v8483 = vadd.f32 %v8385, %v8482
        %v8484 = vpop.f32.mrf.mxu0
        %8485 = vmatprep.mubr.f32.mxu0 0.0
        %8486 = vmatmul.mubr.f32.gmra.mxu0 %v8394
        %v8487 = vpop.f32.mrf.mxu0
        %v8488 = vadd.f32 %v8385, %v8487
        %v8489 = vpop.f32.mrf.mxu0
        %8490 = vmatprep.mubr.f32.mxu0 0.0
        %8491 = vmatmul.mubr.f32.gmra.mxu0 %v8397
        %v8492 = vpop.f32.mrf.mxu0
        %v8493 = vadd.f32 %v8385, %v8492
        %v8494 = vpop.f32.mrf.mxu0
        %8495 = vmatprep.mubr.f32.mxu0 0.0
        %8496 = vmatmul.mubr.f32.gmra.mxu0 %v8400
        %v8497 = vpop.f32.mrf.mxu0
        %v8498 = vadd.f32 %v8385, %v8497
        %v8499 = vpop.f32.mrf.mxu0
        %8500 = vmatprep.mubr.f32.mxu0 0.0
        %8501 = vmatmul.mubr.f32.gmra.mxu0 %v8403
        %v8502 = vpop.f32.mrf.mxu0
        %v8503 = vadd.f32 %v8385, %v8502
        %v8504 = vpop.f32.mrf.mxu0
        %8505 = vmatprep.mubr.f32.mxu0 0.0
        %8506 = vmatmul.mubr.f32.gmra.mxu0 %v8406
        %v8507 = vpop.f32.mrf.mxu0
        %v8508 = vadd.f32 %v8385, %v8507
        %v8509 = vpop.f32.mrf.mxu0
        %8510 = vmatprep.mubr.f32.mxu0 0.0
        %8511 = vmatmul.mubr.f32.gmra.mxu0 %v8409
        %v8512 = vpop.f32.mrf.mxu0
        %v8513 = vadd.f32 %v8385, %v8512
        %v8514 = vpop.f32.mrf.mxu0
        %8515 = vdwg.mxu0
        %v8516 = vxor.u32 %v4551, 2147483648
        %v8517 = vxor.u32 %v4556, 2147483648
        %v8518 = vxor.u32 %v4561, 2147483648
        %v8519 = vxor.u32 %v4566, 2147483648
        %v8520 = vxor.u32 %v4571, 2147483648
        %v8521 = vxor.u32 %v4576, 2147483648
        %v8522 = vxor.u32 %v4581, 2147483648
        %v8523 = vxor.u32 %v4586, 2147483648
        %v8524 = vmul.f32 %v8516, 1.442695
        %v8525 = vpow.pop %v8524
        %v8526 = vmul.f32 %v8517, 1.442695
        %v8527 = vpow.pop %v8526
        %v8528 = vmul.f32 %v8518, 1.442695
        %v8529 = vpow.pop %v8528
        %v8530 = vmul.f32 %v8519, 1.442695
        %v8531 = vpow.pop %v8530
        %v8532 = vmul.f32 %v8520, 1.442695
        %v8533 = vpow.pop %v8532
        %v8534 = vmul.f32 %v8521, 1.442695
        %v8535 = vpow.pop %v8534
        %v8536 = vmul.f32 %v8522, 1.442695
        %v8537 = vpow.pop %v8536
        %v8538 = vmul.f32 %v8523, 1.442695
        %v8539 = vpow.pop %v8538
        %v8540 = vadd.f32 %v8525, 1.0
        %v8541 = vadd.f32 %v8527, 1.0
        %v8542 = vadd.f32 %v8529, 1.0
        %v8543 = vadd.f32 %v8531, 1.0
        %v8544 = vadd.f32 %v8533, 1.0
        %v8545 = vadd.f32 %v8535, 1.0
        %v8546 = vadd.f32 %v8537, 1.0
        %v8547 = vadd.f32 %v8539, 1.0
        %v8548 = vrcp.pop %v8540
        %v8549 = vmul.f32 1.0, %v8548
        %v8550 = vrcp.pop %v8541
        %v8551 = vmul.f32 1.0, %v8550
        %v8552 = vrcp.pop %v8542
        %v8553 = vmul.f32 1.0, %v8552
        %v8554 = vrcp.pop %v8543
        %v8555 = vmul.f32 1.0, %v8554
        %v8556 = vrcp.pop %v8544
        %v8557 = vmul.f32 1.0, %v8556
        %v8558 = vrcp.pop %v8545
        %v8559 = vmul.f32 1.0, %v8558
        %v8560 = vrcp.pop %v8546
        %v8561 = vmul.f32 1.0, %v8560
        %v8562 = vrcp.pop %v8547
        %v8563 = vmul.f32 1.0, %v8562
        %v8564 = vxor.u32 %v8478, 2147483648
        %v8565 = vxor.u32 %v8483, 2147483648
        %v8566 = vxor.u32 %v8488, 2147483648
        %v8567 = vxor.u32 %v8493, 2147483648
        %v8568 = vxor.u32 %v8498, 2147483648
        %v8569 = vxor.u32 %v8503, 2147483648
        %v8570 = vxor.u32 %v8508, 2147483648
        %v8571 = vxor.u32 %v8513, 2147483648
        %v8572 = vmul.f32 %v8564, 1.442695
        %v8573 = vpow.pop %v8572
        %v8574 = vmul.f32 %v8565, 1.442695
        %v8575 = vpow.pop %v8574
        %v8576 = vmul.f32 %v8566, 1.442695
        %v8577 = vpow.pop %v8576
        %v8578 = vmul.f32 %v8567, 1.442695
        %v8579 = vpow.pop %v8578
        %v8580 = vmul.f32 %v8568, 1.442695
        %v8581 = vpow.pop %v8580
        %v8582 = vmul.f32 %v8569, 1.442695
        %v8583 = vpow.pop %v8582
        %v8584 = vmul.f32 %v8570, 1.442695
        %v8585 = vpow.pop %v8584
        %v8586 = vmul.f32 %v8571, 1.442695
        %v8587 = vpow.pop %v8586
        %v8588 = vadd.f32 %v8573, 1.0
        %v8589 = vadd.f32 %v8575, 1.0
        %v8590 = vadd.f32 %v8577, 1.0
        %v8591 = vadd.f32 %v8579, 1.0
        %v8592 = vadd.f32 %v8581, 1.0
        %v8593 = vadd.f32 %v8583, 1.0
        %v8594 = vadd.f32 %v8585, 1.0
        %v8595 = vadd.f32 %v8587, 1.0
        %v8596 = vrcp.pop %v8588
        %v8597 = vmul.f32 1.0, %v8596
        %v8598 = vrcp.pop %v8589
        %v8599 = vmul.f32 1.0, %v8598
        %v8600 = vrcp.pop %v8590
        %v8601 = vmul.f32 1.0, %v8600
        %v8602 = vrcp.pop %v8591
        %v8603 = vmul.f32 1.0, %v8602
        %v8604 = vrcp.pop %v8592
        %v8605 = vmul.f32 1.0, %v8604
        %v8606 = vrcp.pop %v8593
        %v8607 = vmul.f32 1.0, %v8606
        %v8608 = vrcp.pop %v8594
        %v8609 = vmul.f32 1.0, %v8608
        %v8610 = vrcp.pop %v8595
        %v8611 = vmul.f32 1.0, %v8610
        %8613 = vset.pattern.permute.xlu0 0
        %8614 = vperm.xlu0 %8613, %v8597
        %v8615 = vpop.permute.xlu0 %8614
        %8618 = vset.pattern.permute.xlu0 0
        %8619 = vperm.xlu0 %8618, %v8599
        %v8620 = vpop.permute.xlu0 %8619
        %8623 = vset.pattern.permute.xlu0 0
        %8624 = vperm.xlu0 %8623, %v8601
        %v8625 = vpop.permute.xlu0 %8624
        %8628 = vset.pattern.permute.xlu0 0
        %8629 = vperm.xlu0 %8628, %v8603
        %v8630 = vpop.permute.xlu0 %8629
        %8633 = vset.pattern.permute.xlu0 0
        %8634 = vperm.xlu0 %8633, %v8605
        %v8635 = vpop.permute.xlu0 %8634
        %8638 = vset.pattern.permute.xlu0 0
        %8639 = vperm.xlu0 %8638, %v8607
        %v8640 = vpop.permute.xlu0 %8639
        %8643 = vset.pattern.permute.xlu0 0
        %8644 = vperm.xlu0 %8643, %v8609
        %v8645 = vpop.permute.xlu0 %8644
        %8648 = vset.pattern.permute.xlu0 0
        %8649 = vperm.xlu0 %8648, %v8611
        %v8650 = vpop.permute.xlu0 %8649
        %v8652 = vmul.f32 %v8549, %v8615
        %v8653 = vmul.f32 %v8551, %v8620
        %v8654 = vmul.f32 %v8553, %v8625
        %v8655 = vmul.f32 %v8555, %v8630
        %v8656 = vmul.f32 %v8557, %v8635
        %v8657 = vmul.f32 %v8559, %v8640
        %v8658 = vmul.f32 %v8561, %v8645
        %v8659 = vmul.f32 %v8563, %v8650
        %8660 = vrot.lane.b32.xlu0 %v5189, 16
        %v8661 = vpop.permute.xlu0 %8660
        %8662 = vrot.lane.b32.xlu0 %v5190, 16
        %v8663 = vpop.permute.xlu0 %8662
        %8664 = vrot.lane.b32.xlu0 %v5191, 16
        %v8665 = vpop.permute.xlu0 %8664
        %8666 = vrot.lane.b32.xlu0 %v5192, 16
        %v8667 = vpop.permute.xlu0 %8666
        %8668 = vrot.lane.b32.xlu0 %v5193, 16
        %v8669 = vpop.permute.xlu0 %8668
        %8670 = vrot.lane.b32.xlu0 %v5194, 16
        %v8671 = vpop.permute.xlu0 %8670
        %8672 = vrot.lane.b32.xlu0 %v5195, 16
        %v8673 = vpop.permute.xlu0 %8672
        %8674 = vrot.lane.b32.xlu0 %v5196, 16
        %v8675 = vpop.permute.xlu0 %8674
        %v8684 = vsel %vm527, %v8652, %v8661
        %v8685 = vsel %vm527, %v8653, %v8663
        %v8686 = vsel %vm527, %v8654, %v8665
        %v8687 = vsel %vm527, %v8655, %v8667
        %v8688 = vsel %vm527, %v8656, %v8669
        %v8689 = vsel %vm527, %v8657, %v8671
        %v8690 = vsel %vm527, %v8658, %v8673
        %v8691 = vsel %vm527, %v8659, %v8675
        %vm8692 = vcmask 687104
        %v8693 = vsel %vm8692, %v8684, 0.0
        %v8694 = vsel %vm8692, %v8685, 0.0
        %v8695 = vsel %vm8692, %v8686, 0.0
        %v8696 = vsel %vm8692, %v8687, 0.0
        %v8697 = vsel %vm8692, %v8688, 0.0
        %v8698 = vsel %vm8692, %v8689, 0.0
        %v8699 = vsel %vm8692, %v8690, 0.0
        %v8700 = vsel %vm8692, %v8691, 0.0
        %8701 = vst [vmem:[%s491] sm:$0xff] %v8693
        %8702 = vst [vmem:[%s491 + $0x8] sm:$0xff] %v8694
        %8703 = vst [vmem:[%s491 + $0x10] sm:$0xff] %v8695
        %8704 = vst [vmem:[%s491 + $0x18] sm:$0xff] %v8696
        %8705 = vst [vmem:[%s491 + $0x20] sm:$0xff] %v8697
        %8706 = vst [vmem:[%s491 + $0x28] sm:$0xff] %v8698
        %8707 = vst [vmem:[%s491 + $0x30] sm:$0xff] %v8699
        %8708 = vst [vmem:[%s491 + $0x38] sm:$0xff] %v8700
        %s8709 = sand.u32 %s361, 1
        %s8710 = scalar_lea.sflag [#allocation6], %s8709
        %s8711 = sand.u32 %s361, 1
        %s8712 = smul.addr %s8711, 64
        %s8713 = scalar_lea.vmem [#allocation5], %s8712
        // Predicated region
        $region81: #{tpu_custom_call.1} parent=79 // pred_check
          %p8714 = pneg %p371
        $region82: #{tpu_custom_call.1} parent=79 // pred_check_branch
          %8716 = sbr.rel (%p8714) target = $region84
        $region83: #{tpu_custom_call.1} parent=79 // pred_region
          %s8718 = ssub.s32 1024, 1024
          %8719 = vsyncadd %s8710, %s8718
          %s8720 = smul.addr %s33, 8
          %s8721 = smul.addr %s8720, 128
          %s8722 = scalar_lea.hbm %s15, %s8721
          %s8723 = sshll.u32 %s8713, 4
          %s8724 = int_to_ptr.vmem [resolvable:$true] %s8723
          %8729 = dma.vmem_to_hbm [thread:$0]  %s8724, 1024, %s8722, %s8710, 128, 128, 8
        $region84: #{tpu_custom_call.1} parent=79 // pred_fallthru
          _
      $region80: #{tpu_custom_call.1} parent=5 // pred_fallthru
        _
      %p8730 = scmp.le.s32.totalorder 2, %s28
      // Predicated region
      $region85: #{tpu_custom_call.1} parent=5 // pred_check
        %p8731 = pneg %p8730
      $region86: #{tpu_custom_call.1} parent=5 // pred_check_branch
        %8733 = sbr.rel (%p8731) target = $region88
      $region87: #{tpu_custom_call.1} parent=5 // pred_region
        %s8734 = ssub.s32 %s28, 2
        // Predicated region
        $region89: #{tpu_custom_call.1} parent=87 // pred_check
          %p8735 = pneg %p377
        $region90: #{tpu_custom_call.1} parent=87 // pred_check_branch
          %8737 = sbr.rel (%p8735) target = $region92
        $region91: #{tpu_custom_call.1} parent=87 // pred_region
          %s8738 = sand.u32 %s362, 1
          %s8739 = scalar_lea.sflag [#allocation6], %s8738
          %s8740 = sand.u32 %s362, 1
          %s8741 = smul.addr %s8740, 64
          %s8742 = scalar_lea.vmem [#allocation5], %s8741
          %8743 = dma.done %s8739, 1024
        $region92: #{tpu_custom_call.1} parent=87 // pred_fallthru
          _
      $region88: #{tpu_custom_call.1} parent=5 // pred_fallthru
        _
    $region6: #{tpu_custom_call.1} parent=1 // loop_footer
      %s32 = sadd.s32 1, %s28
    $region7: #{tpu_custom_call.1} parent=1 // loop_footer_branch
      %27 = sbr.rel target = $region3
    $region8: #{tpu_custom_call.1} parent=1 // loop_exit
      _
    %8744 = vsyncpa [#allocation6], 1
    %s8745 = scalar_lea.sflag [#allocation6], 1
    %8746 = vsyncpa %s8745, 1

</llo_original>
